<compile_context>
chip_gen: v5e
topology: v5e:2x2
jax: 0.10.0
libtpu: 0.0.40
codegen_flags: <defaults>
</compile_context>

<pallas_src>
import jax
import jax.numpy as jnp
from jax.experimental import pallas as pl
from jax.experimental.pallas import tpu as pltpu

INPUT_SIZE = 34
LINEAR_SIZE = 512
OUTPUT_SIZE = 72
OUTPUT_PAD = 128          # pad 72 -> 128 lanes for unmasked vector stores
NUM_STAGE = 3
BN_EPS = 1e-5
NUM_HIDDEN = 2 * NUM_STAGE + 1   # 6 stage weights + 1 folded (w2@w3 + bn3)


# ----------------------------------------------------------------------------
# Kernel
# ----------------------------------------------------------------------------
def keypoints_kernel(x_ref, w_in_ref, b_in_ref, W_ref, Bv_ref,
                     w_fin_ref, b_fin_ref, out_ref):
    """Fused, BN-folded KeypointsNet forward for one batch tile.

    x_ref    : (TB, 34)   bf16 activations tile
    w_in_ref : (34, 512)  bf16 ,   b_in_ref : (1, 512) f32   (bn1 folded in)
    W_ref    : (7, 512, 512) bf16  hidden weights, order:
               [s0.w1, s0.w2, s1.w1, s1.w2, s2.w1, s2.w2, (w2@w3 with bn3)]
    Bv_ref   : (7, 1, 512) f32     matching (BN-folded) biases
    w_fin_ref: (512, 128) bf16 (padded from 72), b_fin_ref : (1, 128) f32
    out_ref  : (TB, 128)  f32 (cols 72..127 are padding)
    """
    def mm(a_bf16, w_bf16):
        # bf16 operands on the MXU, f32 accumulation.
        return jnp.dot(a_bf16, w_bf16, preferred_element_type=jnp.float32)

    def relu_bf16(acc_f32):
        # f32 bias-add/ReLU, then one cast for the next MXU input.
        return jnp.maximum(acc_f32, 0.0).astype(jnp.bfloat16)

    # y = relu(bn1(w1 x))   (BN folded, dropout == identity in eval)
    # y stays f32 (residual accumulator); y_bf is its bf16 copy fed to the MXU.
    y = jnp.maximum(mm(x_ref[...], w_in_ref[...]) + b_in_ref[...], 0.0)
    y_bf = y.astype(jnp.bfloat16)

    # 3 residual MyLinearSimple stages (each linear has its BN pre-folded)
    for s in range(NUM_STAGE):
        h_bf = relu_bf16(mm(y_bf, W_ref[2 * s]) + Bv_ref[2 * s])
        h = jnp.maximum(mm(h_bf, W_ref[2 * s + 1]) + Bv_ref[2 * s + 1], 0.0)
        y = y + h
        y_bf = y.astype(jnp.bfloat16)

    # (w2 @ w3) and bn3 pre-folded into a single matrix/bias -> relu -> w_fin
    top_bf = relu_bf16(mm(y_bf, W_ref[2 * NUM_STAGE]) + Bv_ref[2 * NUM_STAGE])
    out_ref[...] = mm(top_bf, w_fin_ref[...]) + b_fin_ref[...]


# ----------------------------------------------------------------------------
# Wrapper
# ----------------------------------------------------------------------------
def _round_up(v, m):
    return (v + m - 1) // m * m


def _pick_batch_tile(B, batch_tile):
    """Batch-tile heuristic (per perf review).

    - B <= 128 : one tile (splitting tiny batches only adds per-step overhead).
    - 128 < B <= 1024 : split into exactly 2 tiles so the "parallel" grid axis
      can shard across v7x's 2 TensorCores.
    - larger B : 512-row tiles (1024 for very large B) to fill the 256-wide MXU
      and amortize the ~0.35us per-grid-step overhead.
    Tiles are multiples of 16 rows (bf16/f32 sublane packing).
    """
    if batch_tile is not None:
        return min(_round_up(batch_tile, 16), _round_up(B, 16))
    if B <= 128:
        return _round_up(B, 16)
    if B <= 1024:
        return _round_up(pl.cdiv(B, 2), 16)
    if B <= 8192:
        return 512
    return 1024


def keypoints_net(x, fp, *, batch_tile=None):
    """x: (B, 34) f32 (or bf16), fp: folded params (see fold_params). Returns (B, 72) f32."""
    B = x.shape[0]
    tb = _pick_batch_tile(B, batch_tile)
    b_pad = pl.cdiv(B, tb) * tb

    # Cast the input to bf16 host-side (weights are bf16; identical rounding to an
    # in-kernel cast, half the x DMA) and pad the batch to a whole number of tiles.
    x = x.astype(jnp.bfloat16)
    if b_pad != B:
        x = jnp.pad(x, ((0, b_pad - B), (0, 0)))
    grid = (b_pad // tb,)

    def resident(arr):
        # Full-array block with constant index map: DMA'd once, stays in VMEM
        # across all batch tiles.
        return pl.BlockSpec(arr.shape, lambda i, _n=arr.ndim: (0,) * _n)

    # Weights (~3.9 MB bf16, x2 pipeline buffers) + activations at tb<=512 stay well
    # under 32 MiB; only bump the scoped limit if a bigger tile is explicitly requested.
    vmem_limit = (48 << 20) if tb > 512 else (32 << 20)

    out = pl.pallas_call(
        keypoints_kernel,
        out_shape=jax.ShapeDtypeStruct((b_pad, OUTPUT_PAD), jnp.float32),
        grid=grid,
        in_specs=[
            pl.BlockSpec((tb, INPUT_SIZE), lambda i: (i, 0)),   # x: tiled on batch
            resident(fp["w_in"]), resident(fp["b_in"]),
            resident(fp["W"]), resident(fp["Bv"]),
            resident(fp["w_fin"]), resident(fp["b_fin"]),
        ],
        out_specs=pl.BlockSpec((tb, OUTPUT_PAD), lambda i: (i, 0)),
        compiler_params=pltpu.CompilerParams(
            dimension_semantics=("parallel",),
            vmem_limit_bytes=vmem_limit,
        ),
    )(x, fp["w_in"], fp["b_in"], fp["W"], fp["Bv"], fp["w_fin"], fp["b_fin"])

    # Only the (cheap) column slice remains when b_pad == B.
    if b_pad == B:
        return out[:, :OUTPUT_SIZE]
    return out[:B, :OUTPUT_SIZE]


# ----------------------------------------------------------------------------
# Parameter construction (synthetic, torch-layout semantics) and host-side fold
# ----------------------------------------------------------------------------
def make_raw_params(key):
    """Deterministic synthetic parameters in (in, out) layout, eval-mode BN stats."""
    ks = iter(jax.random.split(key, 64))

    def lin(n_in, n_out, w_std=0.02, b_std=0.01):
        w = jax.random.normal(next(ks), (n_in, n_out), jnp.float32) * w_std
        b = jax.random.normal(next(ks), (1, n_out), jnp.float32) * b_std
        return w, b

    def bn(n):
        return dict(
            gamma=1.0 + 0.1 * jax.random.normal(next(ks), (1, n), jnp.float32),
            beta=0.05 * jax.random.normal(next(ks), (1, n), jnp.float32),
            mean=0.05 * jax.random.normal(next(ks), (1, n), jnp.float32),
            var=1.0 + jax.nn.softplus(jax.random.normal(next(ks), (1, n), jnp.float32)),
        )

    p = {}
    p["w1"], p["b1"] = lin(INPUT_SIZE, LINEAR_SIZE, w_std=0.05)
    p["bn1"] = bn(LINEAR_SIZE)
    p["stages"] = []
    for _ in range(NUM_STAGE):
        sw1, sb1 = lin(LINEAR_SIZE, LINEAR_SIZE)
        sw2, sb2 = lin(LINEAR_SIZE, LINEAR_SIZE)
        p["stages"].append(dict(w1=sw1, b1=sb1, bn1=bn(LINEAR_SIZE),
                                w2=sw2, b2=sb2, bn2=bn(LINEAR_SIZE)))
    p["w2"], p["b2"] = lin(LINEAR_SIZE, LINEAR_SIZE)
    p["w3"], p["b3"] = lin(LINEAR_SIZE, LINEAR_SIZE)
    p["bn3"] = bn(LINEAR_SIZE)
    p["w_fin"], p["b_fin"] = lin(LINEAR_SIZE, OUTPUT_SIZE, w_std=0.05)
    # NOTE: w_aux exists in the PyTorch module but is unused in forward(); omitted.
    return p


def fold_params(p, weight_dtype=jnp.bfloat16):
    """Host-side, one-time fold: BN -> linear, w2@w3 -> single matrix, pad w_fin."""
    def bn_scale_shift(b):
        scale = b["gamma"] * jax.lax.rsqrt(b["var"] + BN_EPS)
        shift = b["beta"] - b["mean"] * scale
        return scale, shift

    def fold_linear_bn(w, b, bn):
        scale, shift = bn_scale_shift(bn)
        return w * scale, b * scale + shift

    w_in, b_in = fold_linear_bn(p["w1"], p["b1"], p["bn1"])

    Ws, Bs = [], []
    for s in p["stages"]:
        w, b = fold_linear_bn(s["w1"], s["b1"], s["bn1"]); Ws.append(w); Bs.append(b)
        w, b = fold_linear_bn(s["w2"], s["b2"], s["bn2"]); Ws.append(w); Bs.append(b)

    # w2 -> w3 with no nonlinearity in between (per the original forward):
    #   (x @ w2 + b2) @ w3 + b3 == x @ (w2 @ w3) + (b2 @ w3 + b3); then fold bn3.
    w_top = p["w2"] @ p["w3"]
    b_top = p["b2"] @ p["w3"] + p["b3"]
    w_top, b_top = fold_linear_bn(w_top, b_top, p["bn3"])
    Ws.append(w_top); Bs.append(b_top)

    w_fin = jnp.pad(p["w_fin"], ((0, 0), (0, OUTPUT_PAD - OUTPUT_SIZE)))
    b_fin = jnp.pad(p["b_fin"], ((0, 0), (0, OUTPUT_PAD - OUTPUT_SIZE)))

    return dict(
        w_in=w_in.astype(weight_dtype),
        b_in=b_in,
        W=jnp.stack(Ws).astype(weight_dtype),      # (7, 512, 512)
        Bv=jnp.stack(Bs),                          # (7, 1, 512) f32
        w_fin=w_fin.astype(weight_dtype),          # (512, 128)
        b_fin=b_fin,                               # (1, 128) f32
    )


# ----------------------------------------------------------------------------
# Pure-JAX references
# ----------------------------------------------------------------------------
def keypoints_net_torch_ref(x, p):
    """Original eval-mode forward semantics, unfolded, full f32."""
    def bn_relu(y, b):
        scale = b["gamma"] * jax.lax.rsqrt(b["var"] + BN_EPS)
        return jnp.maximum(y * scale + (b["beta"] - b["mean"] * scale), 0.0)

    y = bn_relu(x @ p["w1"] + p["b1"], p["bn1"])
    for s in p["stages"]:
        h = bn_relu(y @ s["w1"] + s["b1"], s["bn1"])
        h = bn_relu(h @ s["w2"] + s["b2"], s["bn2"])
        y = y + h
    y = y @ p["w2"] + p["b2"]
    y = y @ p["w3"] + p["b3"]
    y = bn_relu(y, p["bn3"])
    return y @ p["w_fin"] + p["b_fin"]


def keypoints_net_folded_ref(x, fp):
    """Same math as the kernel (folded bf16 weights/activations, f32 accumulation)."""
    def mm(a_bf, w):
        return jnp.dot(a_bf, w, preferred_element_type=jnp.float32)

    def relu_bf16(acc):
        return jnp.maximum(acc, 0.0).astype(jnp.bfloat16)

    x_bf = x.astype(jnp.bfloat16)
    y = jnp.maximum(mm(x_bf, fp["w_in"]) + fp["b_in"], 0.0)
    y_bf = y.astype(jnp.bfloat16)
    for s in range(NUM_STAGE):
        h_bf = relu_bf16(mm(y_bf, fp["W"][2 * s]) + fp["Bv"][2 * s])
        h = jnp.maximum(mm(h_bf, fp["W"][2 * s + 1]) + fp["Bv"][2 * s + 1], 0.0)
        y = y + h
        y_bf = y.astype(jnp.bfloat16)
    top_bf = relu_bf16(mm(y_bf, fp["W"][2 * NUM_STAGE]) + fp["Bv"][2 * NUM_STAGE])
    return (mm(top_bf, fp["w_fin"]) + fp["b_fin"])[:, :OUTPUT_SIZE]


# ----------------------------------------------------------------------------
if __name__ == "__main__":
    key = jax.random.PRNGKey(0)
    k_x, k_x2, k_p = jax.random.split(key, 3)

    raw = make_raw_params(k_p)
    folded = fold_params(raw)

    ok = True
    # Small batch (single tile) and a mid-size batch (grid == 2, padded rows).
    for B, kx in ((8, k_x), (200, k_x2)):
        x = jax.random.normal(kx, (B, INPUT_SIZE), jnp.float32)

        out = keypoints_net(x, folded)
        out = jax.block_until_ready(out)
        assert out.shape == (B, OUTPUT_SIZE)

        # Tight check: kernel vs identical-math (folded, bf16) JAX reference.
        ref_bf16 = keypoints_net_folded_ref(x, folded)
        assert jnp.allclose(out, ref_bf16, atol=2e-3, rtol=2e-3), \
            f"kernel mismatch vs folded bf16 reference (B={B})"

        # Looser check: folding + bf16 vs the original f32 eval-mode forward.
        ref_f32 = keypoints_net_torch_ref(x, raw)
        assert jnp.allclose(out, ref_f32, atol=2e-2, rtol=2e-2), \
            f"mismatch vs original-semantics f32 reference (B={B})"

    if ok:
        print("KERNEL_OK")
</pallas_src>

<mosaic_0001>
module attributes {stable_mosaic.version = 11 : i64} {
  func.func @keypoints_kernel(%arg0: i32, %arg1: memref<16x34xbf16, #tpu.memory_space<vmem>>, %arg2: memref<34x512xbf16, #tpu.memory_space<vmem>>, %arg3: memref<1x512xf32, #tpu.memory_space<vmem>>, %arg4: memref<7x512x512xbf16, #tpu.memory_space<vmem>>, %arg5: memref<7x1x512xf32, #tpu.memory_space<vmem>>, %arg6: memref<512x128xbf16, #tpu.memory_space<vmem>>, %arg7: memref<1x128xf32, #tpu.memory_space<vmem>>, %arg8: memref<16x128xf32, #tpu.memory_space<vmem>>) attributes {dimension_semantics = [#tpu.dimension_semantics<parallel>], iteration_bounds = array<i64: 1>, scalar_prefetch = 0 : i64, scratch_operands = 0 : i64, tpu.core_type = #tpu.core_type<tc>, window_params = [{transform_indices = @transform_0, window_bounds = array<i64: 16, 34>}, {pipeline_mode = #tpu.pipeline_mode<synchronous>, transform_indices = @transform_1, window_bounds = array<i64: 34, 512>}, {pipeline_mode = #tpu.pipeline_mode<synchronous>, transform_indices = @transform_2, window_bounds = array<i64: 1, 512>}, {pipeline_mode = #tpu.pipeline_mode<synchronous>, transform_indices = @transform_3, window_bounds = array<i64: 7, 512, 512>}, {pipeline_mode = #tpu.pipeline_mode<synchronous>, transform_indices = @transform_4, window_bounds = array<i64: 7, 1, 512>}, {pipeline_mode = #tpu.pipeline_mode<synchronous>, transform_indices = @transform_5, window_bounds = array<i64: 512, 128>}, {pipeline_mode = #tpu.pipeline_mode<synchronous>, transform_indices = @transform_6, window_bounds = array<i64: 1, 128>}, {transform_indices = @transform_7, window_bounds = array<i64: 16, 128>}]} {
    %c0 = arith.constant 0 : index
    %c0_0 = arith.constant 0 : index
    %0 = vector.load %arg1[%c0, %c0_0] : memref<16x34xbf16, #tpu.memory_space<vmem>>, vector<16x34xbf16>
    %c0_1 = arith.constant 0 : index
    %c0_2 = arith.constant 0 : index
    %1 = vector.load %arg2[%c0_1, %c0_2] : memref<34x512xbf16, #tpu.memory_space<vmem>>, vector<34x512xbf16>
    %cst = arith.constant dense<0.000000e+00> : vector<16x512xf32>
    %2 = tpu.matmul %0, %1, %cst {dimension_numbers = #tpu.dot_dimension_numbers<[1], [0], [0], [1], [0, 0, 1, 1], [], []>} : vector<16x34xbf16>, vector<34x512xbf16>, vector<16x512xf32> -> vector<16x512xf32>
    %c0_3 = arith.constant 0 : index
    %c0_4 = arith.constant 0 : index
    %3 = vector.load %arg3[%c0_3, %c0_4] : memref<1x512xf32, #tpu.memory_space<vmem>>, vector<1x512xf32>
    %4 = vector.broadcast %3 : vector<1x512xf32> to vector<16x512xf32>
    %5 = arith.addf %2, %4 : vector<16x512xf32>
    %cst_5 = arith.constant 0.000000e+00 : f32
    %6 = vector.broadcast %cst_5 : f32 to vector<16x512xf32>
    %7 = arith.maximumf %5, %6 : vector<16x512xf32>
    %8 = arith.truncf %7 : vector<16x512xf32> to vector<16x512xbf16>
    %c0_6 = arith.constant 0 : index
    %c0_7 = arith.constant 0 : index
    %c0_8 = arith.constant 0 : index
    %9 = vector.load %arg4[%c0_6, %c0_7, %c0_8] : memref<7x512x512xbf16, #tpu.memory_space<vmem>>, vector<1x512x512xbf16>
    %10 = vector.shape_cast %9 : vector<1x512x512xbf16> to vector<512x512xbf16>
    %cst_9 = arith.constant dense<0.000000e+00> : vector<16x512xf32>
    %11 = tpu.matmul %8, %10, %cst_9 {dimension_numbers = #tpu.dot_dimension_numbers<[1], [0], [0], [1], [0, 0, 1, 1], [], []>} : vector<16x512xbf16>, vector<512x512xbf16>, vector<16x512xf32> -> vector<16x512xf32>
    %c0_10 = arith.constant 0 : index
    %c0_11 = arith.constant 0 : index
    %c0_12 = arith.constant 0 : index
    %12 = vector.load %arg5[%c0_10, %c0_11, %c0_12] : memref<7x1x512xf32, #tpu.memory_space<vmem>>, vector<1x1x512xf32>
    %13 = vector.shape_cast %12 : vector<1x1x512xf32> to vector<1x512xf32>
    %14 = vector.broadcast %13 : vector<1x512xf32> to vector<16x512xf32>
    %15 = arith.addf %11, %14 : vector<16x512xf32>
    %cst_13 = arith.constant 0.000000e+00 : f32
    %16 = vector.broadcast %cst_13 : f32 to vector<16x512xf32>
    %17 = arith.maximumf %15, %16 : vector<16x512xf32>
    %18 = arith.truncf %17 : vector<16x512xf32> to vector<16x512xbf16>
    %c1 = arith.constant 1 : index
    %c0_14 = arith.constant 0 : index
    %c0_15 = arith.constant 0 : index
    %19 = vector.load %arg4[%c1, %c0_14, %c0_15] : memref<7x512x512xbf16, #tpu.memory_space<vmem>>, vector<1x512x512xbf16>
    %20 = vector.shape_cast %19 : vector<1x512x512xbf16> to vector<512x512xbf16>
    %cst_16 = arith.constant dense<0.000000e+00> : vector<16x512xf32>
    %21 = tpu.matmul %18, %20, %cst_16 {dimension_numbers = #tpu.dot_dimension_numbers<[1], [0], [0], [1], [0, 0, 1, 1], [], []>} : vector<16x512xbf16>, vector<512x512xbf16>, vector<16x512xf32> -> vector<16x512xf32>
    %c1_17 = arith.constant 1 : index
    %c0_18 = arith.constant 0 : index
    %c0_19 = arith.constant 0 : index
    %22 = vector.load %arg5[%c1_17, %c0_18, %c0_19] : memref<7x1x512xf32, #tpu.memory_space<vmem>>, vector<1x1x512xf32>
    %23 = vector.shape_cast %22 : vector<1x1x512xf32> to vector<1x512xf32>
    %24 = vector.broadcast %23 : vector<1x512xf32> to vector<16x512xf32>
    %25 = arith.addf %21, %24 : vector<16x512xf32>
    %cst_20 = arith.constant 0.000000e+00 : f32
    %26 = vector.broadcast %cst_20 : f32 to vector<16x512xf32>
    %27 = arith.maximumf %25, %26 : vector<16x512xf32>
    %28 = arith.addf %7, %27 : vector<16x512xf32>
    %29 = arith.truncf %28 : vector<16x512xf32> to vector<16x512xbf16>
    %c2 = arith.constant 2 : index
    %c0_21 = arith.constant 0 : index
    %c0_22 = arith.constant 0 : index
    %30 = vector.load %arg4[%c2, %c0_21, %c0_22] : memref<7x512x512xbf16, #tpu.memory_space<vmem>>, vector<1x512x512xbf16>
    %31 = vector.shape_cast %30 : vector<1x512x512xbf16> to vector<512x512xbf16>
    %cst_23 = arith.constant dense<0.000000e+00> : vector<16x512xf32>
    %32 = tpu.matmul %29, %31, %cst_23 {dimension_numbers = #tpu.dot_dimension_numbers<[1], [0], [0], [1], [0, 0, 1, 1], [], []>} : vector<16x512xbf16>, vector<512x512xbf16>, vector<16x512xf32> -> vector<16x512xf32>
    %c2_24 = arith.constant 2 : index
    %c0_25 = arith.constant 0 : index
    %c0_26 = arith.constant 0 : index
    %33 = vector.load %arg5[%c2_24, %c0_25, %c0_26] : memref<7x1x512xf32, #tpu.memory_space<vmem>>, vector<1x1x512xf32>
    %34 = vector.shape_cast %33 : vector<1x1x512xf32> to vector<1x512xf32>
    %35 = vector.broadcast %34 : vector<1x512xf32> to vector<16x512xf32>
    %36 = arith.addf %32, %35 : vector<16x512xf32>
    %cst_27 = arith.constant 0.000000e+00 : f32
    %37 = vector.broadcast %cst_27 : f32 to vector<16x512xf32>
    %38 = arith.maximumf %36, %37 : vector<16x512xf32>
    %39 = arith.truncf %38 : vector<16x512xf32> to vector<16x512xbf16>
    %c3 = arith.constant 3 : index
    %c0_28 = arith.constant 0 : index
    %c0_29 = arith.constant 0 : index
    %40 = vector.load %arg4[%c3, %c0_28, %c0_29] : memref<7x512x512xbf16, #tpu.memory_space<vmem>>, vector<1x512x512xbf16>
    %41 = vector.shape_cast %40 : vector<1x512x512xbf16> to vector<512x512xbf16>
    %cst_30 = arith.constant dense<0.000000e+00> : vector<16x512xf32>
    %42 = tpu.matmul %39, %41, %cst_30 {dimension_numbers = #tpu.dot_dimension_numbers<[1], [0], [0], [1], [0, 0, 1, 1], [], []>} : vector<16x512xbf16>, vector<512x512xbf16>, vector<16x512xf32> -> vector<16x512xf32>
    %c3_31 = arith.constant 3 : index
    %c0_32 = arith.constant 0 : index
    %c0_33 = arith.constant 0 : index
    %43 = vector.load %arg5[%c3_31, %c0_32, %c0_33] : memref<7x1x512xf32, #tpu.memory_space<vmem>>, vector<1x1x512xf32>
    %44 = vector.shape_cast %43 : vector<1x1x512xf32> to vector<1x512xf32>
    %45 = vector.broadcast %44 : vector<1x512xf32> to vector<16x512xf32>
    %46 = arith.addf %42, %45 : vector<16x512xf32>
    %cst_34 = arith.constant 0.000000e+00 : f32
    %47 = vector.broadcast %cst_34 : f32 to vector<16x512xf32>
    %48 = arith.maximumf %46, %47 : vector<16x512xf32>
    %49 = arith.addf %28, %48 : vector<16x512xf32>
    %50 = arith.truncf %49 : vector<16x512xf32> to vector<16x512xbf16>
    %c4 = arith.constant 4 : index
    %c0_35 = arith.constant 0 : index
    %c0_36 = arith.constant 0 : index
    %51 = vector.load %arg4[%c4, %c0_35, %c0_36] : memref<7x512x512xbf16, #tpu.memory_space<vmem>>, vector<1x512x512xbf16>
    %52 = vector.shape_cast %51 : vector<1x512x512xbf16> to vector<512x512xbf16>
    %cst_37 = arith.constant dense<0.000000e+00> : vector<16x512xf32>
    %53 = tpu.matmul %50, %52, %cst_37 {dimension_numbers = #tpu.dot_dimension_numbers<[1], [0], [0], [1], [0, 0, 1, 1], [], []>} : vector<16x512xbf16>, vector<512x512xbf16>, vector<16x512xf32> -> vector<16x512xf32>
    %c4_38 = arith.constant 4 : index
    %c0_39 = arith.constant 0 : index
    %c0_40 = arith.constant 0 : index
    %54 = vector.load %arg5[%c4_38, %c0_39, %c0_40] : memref<7x1x512xf32, #tpu.memory_space<vmem>>, vector<1x1x512xf32>
    %55 = vector.shape_cast %54 : vector<1x1x512xf32> to vector<1x512xf32>
    %56 = vector.broadcast %55 : vector<1x512xf32> to vector<16x512xf32>
    %57 = arith.addf %53, %56 : vector<16x512xf32>
    %cst_41 = arith.constant 0.000000e+00 : f32
    %58 = vector.broadcast %cst_41 : f32 to vector<16x512xf32>
    %59 = arith.maximumf %57, %58 : vector<16x512xf32>
    %60 = arith.truncf %59 : vector<16x512xf32> to vector<16x512xbf16>
    %c5 = arith.constant 5 : index
    %c0_42 = arith.constant 0 : index
    %c0_43 = arith.constant 0 : index
    %61 = vector.load %arg4[%c5, %c0_42, %c0_43] : memref<7x512x512xbf16, #tpu.memory_space<vmem>>, vector<1x512x512xbf16>
    %62 = vector.shape_cast %61 : vector<1x512x512xbf16> to vector<512x512xbf16>
    %cst_44 = arith.constant dense<0.000000e+00> : vector<16x512xf32>
    %63 = tpu.matmul %60, %62, %cst_44 {dimension_numbers = #tpu.dot_dimension_numbers<[1], [0], [0], [1], [0, 0, 1, 1], [], []>} : vector<16x512xbf16>, vector<512x512xbf16>, vector<16x512xf32> -> vector<16x512xf32>
    %c5_45 = arith.constant 5 : index
    %c0_46 = arith.constant 0 : index
    %c0_47 = arith.constant 0 : index
    %64 = vector.load %arg5[%c5_45, %c0_46, %c0_47] : memref<7x1x512xf32, #tpu.memory_space<vmem>>, vector<1x1x512xf32>
    %65 = vector.shape_cast %64 : vector<1x1x512xf32> to vector<1x512xf32>
    %66 = vector.broadcast %65 : vector<1x512xf32> to vector<16x512xf32>
    %67 = arith.addf %63, %66 : vector<16x512xf32>
    %cst_48 = arith.constant 0.000000e+00 : f32
    %68 = vector.broadcast %cst_48 : f32 to vector<16x512xf32>
    %69 = arith.maximumf %67, %68 : vector<16x512xf32>
    %70 = arith.addf %49, %69 : vector<16x512xf32>
    %71 = arith.truncf %70 : vector<16x512xf32> to vector<16x512xbf16>
    %c6 = arith.constant 6 : index
    %c0_49 = arith.constant 0 : index
    %c0_50 = arith.constant 0 : index
    %72 = vector.load %arg4[%c6, %c0_49, %c0_50] : memref<7x512x512xbf16, #tpu.memory_space<vmem>>, vector<1x512x512xbf16>
    %73 = vector.shape_cast %72 : vector<1x512x512xbf16> to vector<512x512xbf16>
    %cst_51 = arith.constant dense<0.000000e+00> : vector<16x512xf32>
    %74 = tpu.matmul %71, %73, %cst_51 {dimension_numbers = #tpu.dot_dimension_numbers<[1], [0], [0], [1], [0, 0, 1, 1], [], []>} : vector<16x512xbf16>, vector<512x512xbf16>, vector<16x512xf32> -> vector<16x512xf32>
    %c6_52 = arith.constant 6 : index
    %c0_53 = arith.constant 0 : index
    %c0_54 = arith.constant 0 : index
    %75 = vector.load %arg5[%c6_52, %c0_53, %c0_54] : memref<7x1x512xf32, #tpu.memory_space<vmem>>, vector<1x1x512xf32>
    %76 = vector.shape_cast %75 : vector<1x1x512xf32> to vector<1x512xf32>
    %77 = vector.broadcast %76 : vector<1x512xf32> to vector<16x512xf32>
    %78 = arith.addf %74, %77 : vector<16x512xf32>
    %cst_55 = arith.constant 0.000000e+00 : f32
    %79 = vector.broadcast %cst_55 : f32 to vector<16x512xf32>
    %80 = arith.maximumf %78, %79 : vector<16x512xf32>
    %81 = arith.truncf %80 : vector<16x512xf32> to vector<16x512xbf16>
    %c0_56 = arith.constant 0 : index
    %c0_57 = arith.constant 0 : index
    %82 = vector.load %arg6[%c0_56, %c0_57] : memref<512x128xbf16, #tpu.memory_space<vmem>>, vector<512x128xbf16>
    %cst_58 = arith.constant dense<0.000000e+00> : vector<16x128xf32>
    %83 = tpu.matmul %81, %82, %cst_58 {dimension_numbers = #tpu.dot_dimension_numbers<[1], [0], [0], [1], [0, 0, 1, 1], [], []>} : vector<16x512xbf16>, vector<512x128xbf16>, vector<16x128xf32> -> vector<16x128xf32>
    %c0_59 = arith.constant 0 : index
    %c0_60 = arith.constant 0 : index
    %84 = vector.load %arg7[%c0_59, %c0_60] : memref<1x128xf32, #tpu.memory_space<vmem>>, vector<1x128xf32>
    %85 = vector.broadcast %84 : vector<1x128xf32> to vector<16x128xf32>
    %86 = arith.addf %83, %85 : vector<16x128xf32>
    %c0_61 = arith.constant 0 : index
    %c0_62 = arith.constant 0 : index
    %87 = vector.load %arg8[%c0_61, %c0_62] : memref<16x128xf32, #tpu.memory_space<vmem>>, vector<16x128xf32>
    tpu.vector_store %arg8[%c0_61, %c0_62], %86 {strides = array<i32>} : memref<16x128xf32, #tpu.memory_space<vmem>>, vector<16x128xf32>,
    return
  }
  func.func @transform_0(%arg0: i32) -> (i32, i32) {
    %c0_i32 = arith.constant 0 : i32
    %c0_i32_0 = arith.constant 0 : i32
    return %arg0, %c0_i32 : i32, i32
  }
  func.func @transform_1(%arg0: i32) -> (i32, i32) {
    %c0_i32 = arith.constant 0 : i32
    %c0_i32_0 = arith.constant 0 : i32
    %c0_i32_1 = arith.constant 0 : i32
    return %c0_i32, %c0_i32_0 : i32, i32
  }
  func.func @transform_2(%arg0: i32) -> (i32, i32) {
    %c0_i32 = arith.constant 0 : i32
    %c0_i32_0 = arith.constant 0 : i32
    %c0_i32_1 = arith.constant 0 : i32
    return %c0_i32, %c0_i32_0 : i32, i32
  }
  func.func @transform_3(%arg0: i32) -> (i32, i32, i32) {
    %c0_i32 = arith.constant 0 : i32
    %c0_i32_0 = arith.constant 0 : i32
    %c0_i32_1 = arith.constant 0 : i32
    %c0_i32_2 = arith.constant 0 : i32
    return %c0_i32, %c0_i32_0, %c0_i32_1 : i32, i32, i32
  }
  func.func @transform_4(%arg0: i32) -> (i32, i32, i32) {
    %c0_i32 = arith.constant 0 : i32
    %c0_i32_0 = arith.constant 0 : i32
    %c0_i32_1 = arith.constant 0 : i32
    %c0_i32_2 = arith.constant 0 : i32
    return %c0_i32, %c0_i32_0, %c0_i32_1 : i32, i32, i32
  }
  func.func @transform_5(%arg0: i32) -> (i32, i32) {
    %c0_i32 = arith.constant 0 : i32
    %c0_i32_0 = arith.constant 0 : i32
    %c0_i32_1 = arith.constant 0 : i32
    return %c0_i32, %c0_i32_0 : i32, i32
  }
  func.func @transform_6(%arg0: i32) -> (i32, i32) {
    %c0_i32 = arith.constant 0 : i32
    %c0_i32_0 = arith.constant 0 : i32
    %c0_i32_1 = arith.constant 0 : i32
    return %c0_i32, %c0_i32_0 : i32, i32
  }
  func.func @transform_7(%arg0: i32) -> (i32, i32) {
    %c0_i32 = arith.constant 0 : i32
    %c0_i32_0 = arith.constant 0 : i32
    return %arg0, %c0_i32 : i32, i32
  }
}

</mosaic_0001>

<llo_original>
// kernel: tpu_custom_call.1
$region0: #{tpu_custom_call.1}
  #allocation0 [shape = 'u32[]', space=smem, size = 0x4, offset = 0x4, fixed_abs, tag = 'smem constant byte address 0x4 - core index']
  #allocation1 [shape = 'u32[72,128]{1,0:T(1,128)}', space=vmem, size = 0x9000, scoped, tag = 'internal scratch']
  %s0 = inlined_call_operand.hbm [shape: bf16[16,34], index: 0, kind: input, shape index: {}]
  %s1 = inlined_call_operand.hbm [shape: bf16[34,512], index: 1, kind: input, shape index: {}]
  %s2 = inlined_call_operand.hbm [shape: f32[1,512], index: 2, kind: input, shape index: {}]
  %s3 = inlined_call_operand.hbm [shape: bf16[7,512,512], index: 3, kind: input, shape index: {}]
  %s4 = inlined_call_operand.hbm [shape: f32[7,1,512], index: 4, kind: input, shape index: {}]
  %s5 = inlined_call_operand.hbm [shape: bf16[512,128], index: 5, kind: input, shape index: {}]
  %s6 = inlined_call_operand.hbm [shape: f32[1,128], index: 6, kind: input, shape index: {}]
  %s7 = inlined_call_operand.hbm [shape: f32[16,128], index: 7, kind: output, shape index: {}]
  %s8 = sld [smem:[#allocation0]]
  $region66: #{tpu_custom_call.1} parent=0
    _
  %s10 = ssub.s32 1, %s8
  %s11 = scalar_select 0, %s10, %s8
  $region1: #{tpu_custom_call.1} parent=0
    #allocation2 [shape = 'u8[4096]{0}', space=vmem, size = 0x1000, scoped, tag = 'input window, operand 0, single buffered']
    #allocation3 [shape = 's32[1]{0}', space=sflag, size = 0x4, scoped, tag = 'scoped memory for tpu_custom_call.1']
    #allocation4 [shape = 's32[1]{0}', space=sflag, size = 0x4, scoped, tag = 'scoped memory for tpu_custom_call.1']
    #allocation5 [shape = 'u8[40960]{0}', space=vmem, size = 0xa000, scoped, tag = 'input window, operand 1, single buffered']
    #allocation6 [shape = 's32[1]{0}', space=sflag, size = 0x4, scoped, tag = 'scoped memory for tpu_custom_call.1']
    #allocation7 [shape = 'u8[2048]{0}', space=vmem, size = 0x800, scoped, tag = 'input window, operand 2, single buffered']
    #allocation8 [shape = 'u8[3670016]{0}', space=vmem, size = 0x380000, scoped, tag = 'input window, operand 3, single buffered']
    #allocation9 [shape = 's32[1]{0}', space=sflag, size = 0x4, scoped, tag = 'scoped memory for tpu_custom_call.1']
    #allocation10 [shape = 'u8[14336]{0}', space=vmem, size = 0x3800, scoped, tag = 'input window, operand 4, single buffered']
    #allocation11 [shape = 'u8[131072]{0}', space=vmem, size = 0x20000, scoped, tag = 'input window, operand 5, single buffered']
    #allocation12 [shape = 's32[1]{0}', space=sflag, size = 0x4, scoped, tag = 'scoped memory for tpu_custom_call.1']
    #allocation13 [shape = 'u8[512]{0}', space=vmem, size = 0x400, scoped, tag = 'input window, operand 6, single buffered']
    #allocation14 [shape = 'u8[8192]{0}', space=vmem, size = 0x2000, scoped, tag = 'output window, operand 0, single buffered']
    %12 = vsyncpa [#allocation3], 0
    %13 = vsyncpa [#allocation6], 0
    %14 = vsyncpa [#allocation9], 0
    %15 = vsyncpa [#allocation12], 0
    %16 = vsyncpa [#allocation4], 0
    // Predicated region
    $region2: #{tpu_custom_call.1} parent=1 // pred_check
      _
    $region3: #{tpu_custom_call.1} parent=1 // pred_check_branch
      %18 = sbr.rel (0) target = $region5
    $region4: #{tpu_custom_call.1} parent=1 // pred_region
      %20 = vsyncadd [#allocation3], 0
      %s21 = sshll.u32 %s0, 4
      %s22 = int_to_ptr.hbm [resolvable:$true] %s21
      %s23 = sshll.u32 [#allocation2], 4
      %s24 = int_to_ptr.vmem [resolvable:$true] %s23
      %29 = dma.hbm_to_vmem [thread:$0]  %s22, 128, %s24, [#allocation3], 64, 64, 4
    $region5: #{tpu_custom_call.1} parent=1 // pred_fallthru
      _
    // Predicated region
    $region6: #{tpu_custom_call.1} parent=1 // pred_check
      _
    $region7: #{tpu_custom_call.1} parent=1 // pred_check_branch
      %31 = sbr.rel (0) target = $region9
    $region8: #{tpu_custom_call.1} parent=1 // pred_region
      %33 = vsyncadd [#allocation6], 0
      %s34 = sshll.u32 %s1, 4
      %s35 = int_to_ptr.hbm [resolvable:$true] %s34
      %s36 = sshll.u32 [#allocation5], 4
      %s37 = int_to_ptr.vmem [resolvable:$true] %s36
      %42 = dma.hbm_to_vmem [thread:$0]  %s35, 1280, %s37, [#allocation6], 256, 256, 16
    $region9: #{tpu_custom_call.1} parent=1 // pred_fallthru
      _
    // Predicated region
    $region10: #{tpu_custom_call.1} parent=1 // pred_check
      _
    $region11: #{tpu_custom_call.1} parent=1 // pred_check_branch
      %44 = sbr.rel (0) target = $region13
    $region12: #{tpu_custom_call.1} parent=1 // pred_region
      %46 = vsyncadd [#allocation6], 0
      %s48 = sshll.u32 %s2, 4
      %s49 = int_to_ptr.hbm [resolvable:$true] %s48
      %s50 = sshll.u32 [#allocation7], 4
      %s51 = int_to_ptr.vmem [resolvable:$true] %s50
      %53 = dma.hbm_to_vmem [thread:$0]  %s49, 64, %s51, [#allocation6]
    $region13: #{tpu_custom_call.1} parent=1 // pred_fallthru
      _
    // Predicated region
    $region14: #{tpu_custom_call.1} parent=1 // pred_check
      _
    $region15: #{tpu_custom_call.1} parent=1 // pred_check_branch
      %55 = sbr.rel (0) target = $region17
    $region16: #{tpu_custom_call.1} parent=1 // pred_region
      %57 = vsyncadd [#allocation9], 0
      %s58 = sshll.u32 %s3, 4
      %s59 = int_to_ptr.hbm [resolvable:$true] %s58
      %s60 = sshll.u32 [#allocation8], 4
      %s61 = int_to_ptr.vmem [resolvable:$true] %s60
      %66 = dma.hbm_to_vmem [thread:$0]  %s59, 114688, %s61, [#allocation9], 256, 256, 16
    $region17: #{tpu_custom_call.1} parent=1 // pred_fallthru
      _
    // Predicated region
    $region18: #{tpu_custom_call.1} parent=1 // pred_check
      _
    $region19: #{tpu_custom_call.1} parent=1 // pred_check_branch
      %68 = sbr.rel (0) target = $region21
    $region20: #{tpu_custom_call.1} parent=1 // pred_region
      %70 = vsyncadd [#allocation9], 0
      %s71 = sshll.u32 %s4, 4
      %s72 = int_to_ptr.hbm [resolvable:$true] %s71
      %s73 = sshll.u32 [#allocation10], 4
      %s74 = int_to_ptr.vmem [resolvable:$true] %s73
      %79 = dma.hbm_to_vmem [thread:$0]  %s72, 448, %s74, [#allocation9], 64, 64, 4
    $region21: #{tpu_custom_call.1} parent=1 // pred_fallthru
      _
    // Predicated region
    $region22: #{tpu_custom_call.1} parent=1 // pred_check
      _
    $region23: #{tpu_custom_call.1} parent=1 // pred_check_branch
      %81 = sbr.rel (0) target = $region25
    $region24: #{tpu_custom_call.1} parent=1 // pred_region
      %83 = vsyncadd [#allocation12], 0
      %s84 = sshll.u32 %s5, 4
      %s85 = int_to_ptr.hbm [resolvable:$true] %s84
      %s86 = sshll.u32 [#allocation11], 4
      %s87 = int_to_ptr.vmem [resolvable:$true] %s86
      %92 = dma.hbm_to_vmem [thread:$0]  %s85, 4096, %s87, [#allocation12], 64, 64, 4
    $region25: #{tpu_custom_call.1} parent=1 // pred_fallthru
      _
    // Predicated region
    $region26: #{tpu_custom_call.1} parent=1 // pred_check
      _
    $region27: #{tpu_custom_call.1} parent=1 // pred_check_branch
      %94 = sbr.rel (0) target = $region29
    $region28: #{tpu_custom_call.1} parent=1 // pred_region
      %96 = vsyncadd [#allocation12], 0
      %s98 = sshll.u32 %s6, 4
      %s99 = int_to_ptr.hbm [resolvable:$true] %s98
      %s100 = sshll.u32 [#allocation13], 4
      %s101 = int_to_ptr.vmem [resolvable:$true] %s100
      %103 = dma.hbm_to_vmem [thread:$0]  %s99, 16, %s101, [#allocation12]
    $region29: #{tpu_custom_call.1} parent=1 // pred_fallthru
      _
    // Predicated region
    $region30: #{tpu_custom_call.1} parent=1 // pred_check
      _
    $region31: #{tpu_custom_call.1} parent=1 // pred_check_branch
      %105 = sbr.rel (0) target = $region33
    $region32: #{tpu_custom_call.1} parent=1 // pred_region
      %107 = dma.done [#allocation3], 128
    $region33: #{tpu_custom_call.1} parent=1 // pred_fallthru
      _
    // Predicated region
    $region34: #{tpu_custom_call.1} parent=1 // pred_check
      _
    $region35: #{tpu_custom_call.1} parent=1 // pred_check_branch
      %109 = sbr.rel (0) target = $region37
    $region36: #{tpu_custom_call.1} parent=1 // pred_region
      %111 = dma.done [#allocation6], 1280
    $region37: #{tpu_custom_call.1} parent=1 // pred_fallthru
      _
    // Predicated region
    $region38: #{tpu_custom_call.1} parent=1 // pred_check
      _
    $region39: #{tpu_custom_call.1} parent=1 // pred_check_branch
      %113 = sbr.rel (0) target = $region41
    $region40: #{tpu_custom_call.1} parent=1 // pred_region
      %115 = dma.done [#allocation6], 64
    $region41: #{tpu_custom_call.1} parent=1 // pred_fallthru
      _
    // Predicated region
    $region42: #{tpu_custom_call.1} parent=1 // pred_check
      _
    $region43: #{tpu_custom_call.1} parent=1 // pred_check_branch
      %117 = sbr.rel (0) target = $region45
    $region44: #{tpu_custom_call.1} parent=1 // pred_region
      %119 = dma.done [#allocation9], 114688
    $region45: #{tpu_custom_call.1} parent=1 // pred_fallthru
      _
    // Predicated region
    $region46: #{tpu_custom_call.1} parent=1 // pred_check
      _
    $region47: #{tpu_custom_call.1} parent=1 // pred_check_branch
      %121 = sbr.rel (0) target = $region49
    $region48: #{tpu_custom_call.1} parent=1 // pred_region
      %123 = dma.done [#allocation9], 448
    $region49: #{tpu_custom_call.1} parent=1 // pred_fallthru
      _
    // Predicated region
    $region50: #{tpu_custom_call.1} parent=1 // pred_check
      _
    $region51: #{tpu_custom_call.1} parent=1 // pred_check_branch
      %125 = sbr.rel (0) target = $region53
    $region52: #{tpu_custom_call.1} parent=1 // pred_region
      %127 = dma.done [#allocation12], 4096
    $region53: #{tpu_custom_call.1} parent=1 // pred_fallthru
      _
    // Predicated region
    $region54: #{tpu_custom_call.1} parent=1 // pred_check
      _
    $region55: #{tpu_custom_call.1} parent=1 // pred_check_branch
      %129 = sbr.rel (0) target = $region57
    $region56: #{tpu_custom_call.1} parent=1 // pred_region
      %131 = dma.done [#allocation12], 16
    $region57: #{tpu_custom_call.1} parent=1 // pred_fallthru
      _
    %v133 = vld [vmem:[#allocation2] sm:$0xf]
    %v134 = vld [vmem:[#allocation2 + $0x4] sm:$0xf]
    %v135 = vld [vmem:[#allocation5] sm:$0xff]
    %v136 = vld [vmem:[#allocation5 + $0x8] sm:$0xff]
    %v137 = vld [vmem:[#allocation5 + $0x10] sm:$0xff]
    %v138 = vld [vmem:[#allocation5 + $0x18] sm:$0xff]
    %v139 = vld [vmem:[#allocation5 + $0x20] sm:$0xff]
    %v140 = vld [vmem:[#allocation5 + $0x28] sm:$0xff]
    %v141 = vld [vmem:[#allocation5 + $0x30] sm:$0xff]
    %v142 = vld [vmem:[#allocation5 + $0x38] sm:$0xff]
    %v143 = vld [vmem:[#allocation5 + $0x40] sm:$0x11]
    %v144 = vld [vmem:[#allocation5 + $0x48] sm:$0x11]
    %v145 = vld [vmem:[#allocation7] sm:$0xf]
    %v147 = vperm.slane %v145, 0
    %v148 = vperm.slane %v145, 1
    %v149 = vperm.slane %v145, 2
    %v150 = vperm.slane %v145, 3
    %v157 = vunpack.c.l.b16 %v133
    %v158 = vunpack.c.l.b16 %v134
    %v159 = vpack.c.b16 %v158, %v157
    %v170 = vunpack.c.l.b16 %v135
    %v171 = vunpack.c.h.b16 %v135
    %v172 = vunpack.c.l.b16 %v136
    %v173 = vunpack.c.h.b16 %v136
    %v174 = vunpack.c.l.b16 %v137
    %v175 = vunpack.c.h.b16 %v137
    %v176 = vunpack.c.l.b16 %v138
    %v177 = vunpack.c.h.b16 %v138
    %v178 = vunpack.c.l.b16 %v139
    %v179 = vunpack.c.h.b16 %v139
    %v180 = vunpack.c.l.b16 %v140
    %v181 = vunpack.c.h.b16 %v140
    %v182 = vunpack.c.l.b16 %v141
    %v183 = vunpack.c.h.b16 %v141
    %v184 = vunpack.c.l.b16 %v142
    %v185 = vunpack.c.h.b16 %v142
    %v186 = vunpack.c.l.b16 %v143
    %v187 = vunpack.c.h.b16 %v143
    %v188 = vunpack.c.l.b16 %v144
    %v189 = vunpack.c.h.b16 %v144
    %v190 = vpack.c.b16 %v174, %v170
    %v191 = vpack.c.b16 %v175, %v171
    %v192 = vpack.c.b16 %v176, %v172
    %v193 = vpack.c.b16 %v177, %v173
    %v194 = vpack.c.b16 %v182, %v178
    %v195 = vpack.c.b16 %v183, %v179
    %v196 = vpack.c.b16 %v184, %v180
    %v197 = vpack.c.b16 %v185, %v181
    %v198 = vpack.c.b16 %v186, %v186
    %v199 = vpack.c.b16 %v187, %v187
    %v200 = vpack.c.b16 %v188, %v188
    %v201 = vpack.c.b16 %v189, %v189
    %vm210 = vcmask 277504
    %v212 = vsel %vm210, %v159, 0
    %vm214 = vcmask 1040384
    %v216 = vsel %vm214, %v198, 0
    %v219 = vsel %vm214, %v199, 0
    %v222 = vsel %vm214, %v200, 0
    %v225 = vsel %vm214, %v201, 0
    %227 = vmatpush.bf16.msra.mxu0 0
    %228 = vmatpush.bf16.msra.mxu0 0
    %229 = vmatpush.bf16.msra.mxu0 0
    %230 = vmatpush.bf16.msra.mxu0 0
    %231 = vmatpush.bf16.msra.mxu0 0
    %232 = vmatpush.bf16.msra.mxu0 %v216
    %233 = vmatpush.bf16.msra.mxu0 %v194
    %234 = vmatpush.bf16.msra.mxu0 %v190
    %235 = vmatmul.bf16.gmra.mxu0 %v212
    %v236 = vpop.f32.mrf.mxu0
    %v237 = vadd.f32 %v147, %v236
    %v238 = vpop.f32.mrf.mxu0
    %v239 = vadd.f32 %v147, %v238
    %240 = vdwg.mxu0
    %241 = vmatpush.bf16.msra.mxu0 0
    %242 = vmatpush.bf16.msra.mxu0 0
    %243 = vmatpush.bf16.msra.mxu0 0
    %244 = vmatpush.bf16.msra.mxu0 0
    %245 = vmatpush.bf16.msra.mxu0 0
    %246 = vmatpush.bf16.msra.mxu0 %v219
    %247 = vmatpush.bf16.msra.mxu0 %v195
    %248 = vmatpush.bf16.msra.mxu0 %v191
    %249 = vmatmul.bf16.gmra.mxu0 %v212
    %v250 = vpop.f32.mrf.mxu0
    %v251 = vadd.f32 %v148, %v250
    %v252 = vpop.f32.mrf.mxu0
    %v253 = vadd.f32 %v148, %v252
    %254 = vdwg.mxu0
    %255 = vmatpush.bf16.msra.mxu0 0
    %256 = vmatpush.bf16.msra.mxu0 0
    %257 = vmatpush.bf16.msra.mxu0 0
    %258 = vmatpush.bf16.msra.mxu0 0
    %259 = vmatpush.bf16.msra.mxu0 0
    %260 = vmatpush.bf16.msra.mxu0 %v222
    %261 = vmatpush.bf16.msra.mxu0 %v196
    %262 = vmatpush.bf16.msra.mxu0 %v192
    %263 = vmatmul.bf16.gmra.mxu0 %v212
    %v264 = vpop.f32.mrf.mxu0
    %v265 = vadd.f32 %v149, %v264
    %v266 = vpop.f32.mrf.mxu0
    %v267 = vadd.f32 %v149, %v266
    %268 = vdwg.mxu0
    %269 = vmatpush.bf16.msra.mxu0 0
    %270 = vmatpush.bf16.msra.mxu0 0
    %271 = vmatpush.bf16.msra.mxu0 0
    %272 = vmatpush.bf16.msra.mxu0 0
    %273 = vmatpush.bf16.msra.mxu0 0
    %274 = vmatpush.bf16.msra.mxu0 %v225
    %275 = vmatpush.bf16.msra.mxu0 %v197
    %276 = vmatpush.bf16.msra.mxu0 %v193
    %277 = vmatmul.bf16.gmra.mxu0 %v212
    %v278 = vpop.f32.mrf.mxu0
    %v279 = vadd.f32 %v150, %v278
    %v280 = vpop.f32.mrf.mxu0
    %v281 = vadd.f32 %v150, %v280
    %282 = vdwg.mxu0
    %v283 = vmax.f32 %v237, 0.0
    %v284 = vmax.f32 %v251, 0.0
    %v285 = vmax.f32 %v265, 0.0
    %v286 = vmax.f32 %v279, 0.0
    %v287 = vmax.f32 %v239, 0.0
    %v288 = vmax.f32 %v253, 0.0
    %v289 = vmax.f32 %v267, 0.0
    %v290 = vmax.f32 %v281, 0.0
    %v291 = vpack.c.bf16 %v287, %v283
    %v292 = vpack.c.bf16 %v288, %v284
    %v293 = vpack.c.bf16 %v289, %v285
    %v294 = vpack.c.bf16 %v290, %v286
    %v295 = vld [vmem:[#allocation8] sm:$0xff]
    %v296 = vld [vmem:[#allocation8 + $0x8] sm:$0xff]
    %v297 = vld [vmem:[#allocation8 + $0x10] sm:$0xff]
    %v298 = vld [vmem:[#allocation8 + $0x18] sm:$0xff]
    %v299 = vld [vmem:[#allocation8 + $0x20] sm:$0xff]
    %v300 = vld [vmem:[#allocation8 + $0x28] sm:$0xff]
    %v301 = vld [vmem:[#allocation8 + $0x30] sm:$0xff]
    %v302 = vld [vmem:[#allocation8 + $0x38] sm:$0xff]
    %v303 = vld [vmem:[#allocation8 + $0x40] sm:$0xff]
    %v304 = vld [vmem:[#allocation8 + $0x48] sm:$0xff]
    %v305 = vld [vmem:[#allocation8 + $0x50] sm:$0xff]
    %v306 = vld [vmem:[#allocation8 + $0x58] sm:$0xff]
    %v307 = vld [vmem:[#allocation8 + $0x60] sm:$0xff]
    %v308 = vld [vmem:[#allocation8 + $0x68] sm:$0xff]
    %v309 = vld [vmem:[#allocation8 + $0x70] sm:$0xff]
    %v310 = vld [vmem:[#allocation8 + $0x78] sm:$0xff]
    %v311 = vld [vmem:[#allocation8 + $0x80] sm:$0xff]
    %v312 = vld [vmem:[#allocation8 + $0x88] sm:$0xff]
    %v313 = vld [vmem:[#allocation8 + $0x90] sm:$0xff]
    %v314 = vld [vmem:[#allocation8 + $0x98] sm:$0xff]
    %v315 = vld [vmem:[#allocation8 + $0xa0] sm:$0xff]
    %v316 = vld [vmem:[#allocation8 + $0xa8] sm:$0xff]
    %v317 = vld [vmem:[#allocation8 + $0xb0] sm:$0xff]
    %v318 = vld [vmem:[#allocation8 + $0xb8] sm:$0xff]
    %v319 = vld [vmem:[#allocation8 + $0xc0] sm:$0xff]
    %v320 = vld [vmem:[#allocation8 + $0xc8] sm:$0xff]
    %v321 = vld [vmem:[#allocation8 + $0xd0] sm:$0xff]
    %v322 = vld [vmem:[#allocation8 + $0xd8] sm:$0xff]
    %v323 = vld [vmem:[#allocation8 + $0xe0] sm:$0xff]
    %v324 = vld [vmem:[#allocation8 + $0xe8] sm:$0xff]
    %v325 = vld [vmem:[#allocation8 + $0xf0] sm:$0xff]
    %v326 = vld [vmem:[#allocation8 + $0xf8] sm:$0xff]
    %v327 = vld [vmem:[#allocation8 + $0x100] sm:$0xff]
    %v328 = vld [vmem:[#allocation8 + $0x108] sm:$0xff]
    %v329 = vld [vmem:[#allocation8 + $0x110] sm:$0xff]
    %v330 = vld [vmem:[#allocation8 + $0x118] sm:$0xff]
    %v331 = vld [vmem:[#allocation8 + $0x120] sm:$0xff]
    %v332 = vld [vmem:[#allocation8 + $0x128] sm:$0xff]
    %v333 = vld [vmem:[#allocation8 + $0x130] sm:$0xff]
    %v334 = vld [vmem:[#allocation8 + $0x138] sm:$0xff]
    %v335 = vld [vmem:[#allocation8 + $0x140] sm:$0xff]
    %v336 = vld [vmem:[#allocation8 + $0x148] sm:$0xff]
    %v337 = vld [vmem:[#allocation8 + $0x150] sm:$0xff]
    %v338 = vld [vmem:[#allocation8 + $0x158] sm:$0xff]
    %v339 = vld [vmem:[#allocation8 + $0x160] sm:$0xff]
    %v340 = vld [vmem:[#allocation8 + $0x168] sm:$0xff]
    %v341 = vld [vmem:[#allocation8 + $0x170] sm:$0xff]
    %v342 = vld [vmem:[#allocation8 + $0x178] sm:$0xff]
    %v343 = vld [vmem:[#allocation8 + $0x180] sm:$0xff]
    %v344 = vld [vmem:[#allocation8 + $0x188] sm:$0xff]
    %v345 = vld [vmem:[#allocation8 + $0x190] sm:$0xff]
    %v346 = vld [vmem:[#allocation8 + $0x198] sm:$0xff]
    %v347 = vld [vmem:[#allocation8 + $0x1a0] sm:$0xff]
    %v348 = vld [vmem:[#allocation8 + $0x1a8] sm:$0xff]
    %v349 = vld [vmem:[#allocation8 + $0x1b0] sm:$0xff]
    %v350 = vld [vmem:[#allocation8 + $0x1b8] sm:$0xff]
    %v351 = vld [vmem:[#allocation8 + $0x1c0] sm:$0xff]
    %v352 = vld [vmem:[#allocation8 + $0x1c8] sm:$0xff]
    %v353 = vld [vmem:[#allocation8 + $0x1d0] sm:$0xff]
    %v354 = vld [vmem:[#allocation8 + $0x1d8] sm:$0xff]
    %v355 = vld [vmem:[#allocation8 + $0x1e0] sm:$0xff]
    %v356 = vld [vmem:[#allocation8 + $0x1e8] sm:$0xff]
    %v357 = vld [vmem:[#allocation8 + $0x1f0] sm:$0xff]
    %v358 = vld [vmem:[#allocation8 + $0x1f8] sm:$0xff]
    %v359 = vld [vmem:[#allocation8 + $0x200] sm:$0xff]
    %v360 = vld [vmem:[#allocation8 + $0x208] sm:$0xff]
    %v361 = vld [vmem:[#allocation8 + $0x210] sm:$0xff]
    %v362 = vld [vmem:[#allocation8 + $0x218] sm:$0xff]
    %v363 = vld [vmem:[#allocation8 + $0x220] sm:$0xff]
    %v364 = vld [vmem:[#allocation8 + $0x228] sm:$0xff]
    %v365 = vld [vmem:[#allocation8 + $0x230] sm:$0xff]
    %v366 = vld [vmem:[#allocation8 + $0x238] sm:$0xff]
    %v367 = vld [vmem:[#allocation8 + $0x240] sm:$0xff]
    %v368 = vld [vmem:[#allocation8 + $0x248] sm:$0xff]
    %v369 = vld [vmem:[#allocation8 + $0x250] sm:$0xff]
    %v370 = vld [vmem:[#allocation8 + $0x258] sm:$0xff]
    %v371 = vld [vmem:[#allocation8 + $0x260] sm:$0xff]
    %v372 = vld [vmem:[#allocation8 + $0x268] sm:$0xff]
    %v373 = vld [vmem:[#allocation8 + $0x270] sm:$0xff]
    %v374 = vld [vmem:[#allocation8 + $0x278] sm:$0xff]
    %v375 = vld [vmem:[#allocation8 + $0x280] sm:$0xff]
    %v376 = vld [vmem:[#allocation8 + $0x288] sm:$0xff]
    %v377 = vld [vmem:[#allocation8 + $0x290] sm:$0xff]
    %v378 = vld [vmem:[#allocation8 + $0x298] sm:$0xff]
    %v379 = vld [vmem:[#allocation8 + $0x2a0] sm:$0xff]
    %v380 = vld [vmem:[#allocation8 + $0x2a8] sm:$0xff]
    %v381 = vld [vmem:[#allocation8 + $0x2b0] sm:$0xff]
    %v382 = vld [vmem:[#allocation8 + $0x2b8] sm:$0xff]
    %v383 = vld [vmem:[#allocation8 + $0x2c0] sm:$0xff]
    %v384 = vld [vmem:[#allocation8 + $0x2c8] sm:$0xff]
    %v385 = vld [vmem:[#allocation8 + $0x2d0] sm:$0xff]
    %v386 = vld [vmem:[#allocation8 + $0x2d8] sm:$0xff]
    %v387 = vld [vmem:[#allocation8 + $0x2e0] sm:$0xff]
    %v388 = vld [vmem:[#allocation8 + $0x2e8] sm:$0xff]
    %v389 = vld [vmem:[#allocation8 + $0x2f0] sm:$0xff]
    %v390 = vld [vmem:[#allocation8 + $0x2f8] sm:$0xff]
    %v391 = vld [vmem:[#allocation8 + $0x300] sm:$0xff]
    %v392 = vld [vmem:[#allocation8 + $0x308] sm:$0xff]
    %v393 = vld [vmem:[#allocation8 + $0x310] sm:$0xff]
    %v394 = vld [vmem:[#allocation8 + $0x318] sm:$0xff]
    %v395 = vld [vmem:[#allocation8 + $0x320] sm:$0xff]
    %v396 = vld [vmem:[#allocation8 + $0x328] sm:$0xff]
    %v397 = vld [vmem:[#allocation8 + $0x330] sm:$0xff]
    %v398 = vld [vmem:[#allocation8 + $0x338] sm:$0xff]
    %v399 = vld [vmem:[#allocation8 + $0x340] sm:$0xff]
    %v400 = vld [vmem:[#allocation8 + $0x348] sm:$0xff]
    %v401 = vld [vmem:[#allocation8 + $0x350] sm:$0xff]
    %v402 = vld [vmem:[#allocation8 + $0x358] sm:$0xff]
    %v403 = vld [vmem:[#allocation8 + $0x360] sm:$0xff]
    %v404 = vld [vmem:[#allocation8 + $0x368] sm:$0xff]
    %v405 = vld [vmem:[#allocation8 + $0x370] sm:$0xff]
    %v406 = vld [vmem:[#allocation8 + $0x378] sm:$0xff]
    %v407 = vld [vmem:[#allocation8 + $0x380] sm:$0xff]
    %v408 = vld [vmem:[#allocation8 + $0x388] sm:$0xff]
    %v409 = vld [vmem:[#allocation8 + $0x390] sm:$0xff]
    %v410 = vld [vmem:[#allocation8 + $0x398] sm:$0xff]
    %v411 = vld [vmem:[#allocation8 + $0x3a0] sm:$0xff]
    %v412 = vld [vmem:[#allocation8 + $0x3a8] sm:$0xff]
    %v413 = vld [vmem:[#allocation8 + $0x3b0] sm:$0xff]
    %v414 = vld [vmem:[#allocation8 + $0x3b8] sm:$0xff]
    %v415 = vld [vmem:[#allocation8 + $0x3c0] sm:$0xff]
    %v416 = vld [vmem:[#allocation8 + $0x3c8] sm:$0xff]
    %v417 = vld [vmem:[#allocation8 + $0x3d0] sm:$0xff]
    %v418 = vld [vmem:[#allocation8 + $0x3d8] sm:$0xff]
    %v419 = vld [vmem:[#allocation8 + $0x3e0] sm:$0xff]
    %v420 = vld [vmem:[#allocation8 + $0x3e8] sm:$0xff]
    %v421 = vld [vmem:[#allocation8 + $0x3f0] sm:$0xff]
    %v422 = vld [vmem:[#allocation8 + $0x3f8] sm:$0xff]
    %v423 = vld [vmem:[#allocation10] sm:$0xf]
    %v425 = vperm.slane %v423, 0
    %v426 = vperm.slane %v423, 1
    %v427 = vperm.slane %v423, 2
    %v428 = vperm.slane %v423, 3
    %v561 = vunpack.c.l.b16 %v295
    %v562 = vunpack.c.h.b16 %v295
    %v563 = vunpack.c.l.b16 %v296
    %v564 = vunpack.c.h.b16 %v296
    %v565 = vunpack.c.l.b16 %v297
    %v566 = vunpack.c.h.b16 %v297
    %v567 = vunpack.c.l.b16 %v298
    %v568 = vunpack.c.h.b16 %v298
    %v569 = vunpack.c.l.b16 %v299
    %v570 = vunpack.c.h.b16 %v299
    %v571 = vunpack.c.l.b16 %v300
    %v572 = vunpack.c.h.b16 %v300
    %v573 = vunpack.c.l.b16 %v301
    %v574 = vunpack.c.h.b16 %v301
    %v575 = vunpack.c.l.b16 %v302
    %v576 = vunpack.c.h.b16 %v302
    %v577 = vunpack.c.l.b16 %v303
    %v578 = vunpack.c.h.b16 %v303
    %v579 = vunpack.c.l.b16 %v304
    %v580 = vunpack.c.h.b16 %v304
    %v581 = vunpack.c.l.b16 %v305
    %v582 = vunpack.c.h.b16 %v305
    %v583 = vunpack.c.l.b16 %v306
    %v584 = vunpack.c.h.b16 %v306
    %v585 = vunpack.c.l.b16 %v307
    %v586 = vunpack.c.h.b16 %v307
    %v587 = vunpack.c.l.b16 %v308
    %v588 = vunpack.c.h.b16 %v308
    %v589 = vunpack.c.l.b16 %v309
    %v590 = vunpack.c.h.b16 %v309
    %v591 = vunpack.c.l.b16 %v310
    %v592 = vunpack.c.h.b16 %v310
    %v593 = vunpack.c.l.b16 %v311
    %v594 = vunpack.c.h.b16 %v311
    %v595 = vunpack.c.l.b16 %v312
    %v596 = vunpack.c.h.b16 %v312
    %v597 = vunpack.c.l.b16 %v313
    %v598 = vunpack.c.h.b16 %v313
    %v599 = vunpack.c.l.b16 %v314
    %v600 = vunpack.c.h.b16 %v314
    %v601 = vunpack.c.l.b16 %v315
    %v602 = vunpack.c.h.b16 %v315
    %v603 = vunpack.c.l.b16 %v316
    %v604 = vunpack.c.h.b16 %v316
    %v605 = vunpack.c.l.b16 %v317
    %v606 = vunpack.c.h.b16 %v317
    %v607 = vunpack.c.l.b16 %v318
    %v608 = vunpack.c.h.b16 %v318
    %v609 = vunpack.c.l.b16 %v319
    %v610 = vunpack.c.h.b16 %v319
    %v611 = vunpack.c.l.b16 %v320
    %v612 = vunpack.c.h.b16 %v320
    %v613 = vunpack.c.l.b16 %v321
    %v614 = vunpack.c.h.b16 %v321
    %v615 = vunpack.c.l.b16 %v322
    %v616 = vunpack.c.h.b16 %v322
    %v617 = vunpack.c.l.b16 %v323
    %v618 = vunpack.c.h.b16 %v323
    %v619 = vunpack.c.l.b16 %v324
    %v620 = vunpack.c.h.b16 %v324
    %v621 = vunpack.c.l.b16 %v325
    %v622 = vunpack.c.h.b16 %v325
    %v623 = vunpack.c.l.b16 %v326
    %v624 = vunpack.c.h.b16 %v326
    %v625 = vunpack.c.l.b16 %v327
    %v626 = vunpack.c.h.b16 %v327
    %v627 = vunpack.c.l.b16 %v328
    %v628 = vunpack.c.h.b16 %v328
    %v629 = vunpack.c.l.b16 %v329
    %v630 = vunpack.c.h.b16 %v329
    %v631 = vunpack.c.l.b16 %v330
    %v632 = vunpack.c.h.b16 %v330
    %v633 = vunpack.c.l.b16 %v331
    %v634 = vunpack.c.h.b16 %v331
    %v635 = vunpack.c.l.b16 %v332
    %v636 = vunpack.c.h.b16 %v332
    %v637 = vunpack.c.l.b16 %v333
    %v638 = vunpack.c.h.b16 %v333
    %v639 = vunpack.c.l.b16 %v334
    %v640 = vunpack.c.h.b16 %v334
    %v641 = vunpack.c.l.b16 %v335
    %v642 = vunpack.c.h.b16 %v335
    %v643 = vunpack.c.l.b16 %v336
    %v644 = vunpack.c.h.b16 %v336
    %v645 = vunpack.c.l.b16 %v337
    %v646 = vunpack.c.h.b16 %v337
    %v647 = vunpack.c.l.b16 %v338
    %v648 = vunpack.c.h.b16 %v338
    %v649 = vunpack.c.l.b16 %v339
    %v650 = vunpack.c.h.b16 %v339
    %v651 = vunpack.c.l.b16 %v340
    %v652 = vunpack.c.h.b16 %v340
    %v653 = vunpack.c.l.b16 %v341
    %v654 = vunpack.c.h.b16 %v341
    %v655 = vunpack.c.l.b16 %v342
    %v656 = vunpack.c.h.b16 %v342
    %v657 = vunpack.c.l.b16 %v343
    %v658 = vunpack.c.h.b16 %v343
    %v659 = vunpack.c.l.b16 %v344
    %v660 = vunpack.c.h.b16 %v344
    %v661 = vunpack.c.l.b16 %v345
    %v662 = vunpack.c.h.b16 %v345
    %v663 = vunpack.c.l.b16 %v346
    %v664 = vunpack.c.h.b16 %v346
    %v665 = vunpack.c.l.b16 %v347
    %v666 = vunpack.c.h.b16 %v347
    %v667 = vunpack.c.l.b16 %v348
    %v668 = vunpack.c.h.b16 %v348
    %v669 = vunpack.c.l.b16 %v349
    %v670 = vunpack.c.h.b16 %v349
    %v671 = vunpack.c.l.b16 %v350
    %v672 = vunpack.c.h.b16 %v350
    %v673 = vunpack.c.l.b16 %v351
    %v674 = vunpack.c.h.b16 %v351
    %v675 = vunpack.c.l.b16 %v352
    %v676 = vunpack.c.h.b16 %v352
    %v677 = vunpack.c.l.b16 %v353
    %v678 = vunpack.c.h.b16 %v353
    %v679 = vunpack.c.l.b16 %v354
    %v680 = vunpack.c.h.b16 %v354
    %v681 = vunpack.c.l.b16 %v355
    %v682 = vunpack.c.h.b16 %v355
    %v683 = vunpack.c.l.b16 %v356
    %v684 = vunpack.c.h.b16 %v356
    %v685 = vunpack.c.l.b16 %v357
    %v686 = vunpack.c.h.b16 %v357
    %v687 = vunpack.c.l.b16 %v358
    %v688 = vunpack.c.h.b16 %v358
    %v689 = vunpack.c.l.b16 %v359
    %v690 = vunpack.c.h.b16 %v359
    %v691 = vunpack.c.l.b16 %v360
    %v692 = vunpack.c.h.b16 %v360
    %v693 = vunpack.c.l.b16 %v361
    %v694 = vunpack.c.h.b16 %v361
    %v695 = vunpack.c.l.b16 %v362
    %v696 = vunpack.c.h.b16 %v362
    %v697 = vunpack.c.l.b16 %v363
    %v698 = vunpack.c.h.b16 %v363
    %v699 = vunpack.c.l.b16 %v364
    %v700 = vunpack.c.h.b16 %v364
    %v701 = vunpack.c.l.b16 %v365
    %v702 = vunpack.c.h.b16 %v365
    %v703 = vunpack.c.l.b16 %v366
    %v704 = vunpack.c.h.b16 %v366
    %v705 = vunpack.c.l.b16 %v367
    %v706 = vunpack.c.h.b16 %v367
    %v707 = vunpack.c.l.b16 %v368
    %v708 = vunpack.c.h.b16 %v368
    %v709 = vunpack.c.l.b16 %v369
    %v710 = vunpack.c.h.b16 %v369
    %v711 = vunpack.c.l.b16 %v370
    %v712 = vunpack.c.h.b16 %v370
    %v713 = vunpack.c.l.b16 %v371
    %v714 = vunpack.c.h.b16 %v371
    %v715 = vunpack.c.l.b16 %v372
    %v716 = vunpack.c.h.b16 %v372
    %v717 = vunpack.c.l.b16 %v373
    %v718 = vunpack.c.h.b16 %v373
    %v719 = vunpack.c.l.b16 %v374
    %v720 = vunpack.c.h.b16 %v374
    %v721 = vunpack.c.l.b16 %v375
    %v722 = vunpack.c.h.b16 %v375
    %v723 = vunpack.c.l.b16 %v376
    %v724 = vunpack.c.h.b16 %v376
    %v725 = vunpack.c.l.b16 %v377
    %v726 = vunpack.c.h.b16 %v377
    %v727 = vunpack.c.l.b16 %v378
    %v728 = vunpack.c.h.b16 %v378
    %v729 = vunpack.c.l.b16 %v379
    %v730 = vunpack.c.h.b16 %v379
    %v731 = vunpack.c.l.b16 %v380
    %v732 = vunpack.c.h.b16 %v380
    %v733 = vunpack.c.l.b16 %v381
    %v734 = vunpack.c.h.b16 %v381
    %v735 = vunpack.c.l.b16 %v382
    %v736 = vunpack.c.h.b16 %v382
    %v737 = vunpack.c.l.b16 %v383
    %v738 = vunpack.c.h.b16 %v383
    %v739 = vunpack.c.l.b16 %v384
    %v740 = vunpack.c.h.b16 %v384
    %v741 = vunpack.c.l.b16 %v385
    %v742 = vunpack.c.h.b16 %v385
    %v743 = vunpack.c.l.b16 %v386
    %v744 = vunpack.c.h.b16 %v386
    %v745 = vunpack.c.l.b16 %v387
    %v746 = vunpack.c.h.b16 %v387
    %v747 = vunpack.c.l.b16 %v388
    %v748 = vunpack.c.h.b16 %v388
    %v749 = vunpack.c.l.b16 %v389
    %v750 = vunpack.c.h.b16 %v389
    %v751 = vunpack.c.l.b16 %v390
    %v752 = vunpack.c.h.b16 %v390
    %v753 = vunpack.c.l.b16 %v391
    %v754 = vunpack.c.h.b16 %v391
    %v755 = vunpack.c.l.b16 %v392
    %v756 = vunpack.c.h.b16 %v392
    %v757 = vunpack.c.l.b16 %v393
    %v758 = vunpack.c.h.b16 %v393
    %v759 = vunpack.c.l.b16 %v394
    %v760 = vunpack.c.h.b16 %v394
    %v761 = vunpack.c.l.b16 %v395
    %v762 = vunpack.c.h.b16 %v395
    %v763 = vunpack.c.l.b16 %v396
    %v764 = vunpack.c.h.b16 %v396
    %v765 = vunpack.c.l.b16 %v397
    %v766 = vunpack.c.h.b16 %v397
    %v767 = vunpack.c.l.b16 %v398
    %v768 = vunpack.c.h.b16 %v398
    %v769 = vunpack.c.l.b16 %v399
    %v770 = vunpack.c.h.b16 %v399
    %v771 = vunpack.c.l.b16 %v400
    %v772 = vunpack.c.h.b16 %v400
    %v773 = vunpack.c.l.b16 %v401
    %v774 = vunpack.c.h.b16 %v401
    %v775 = vunpack.c.l.b16 %v402
    %v776 = vunpack.c.h.b16 %v402
    %v777 = vunpack.c.l.b16 %v403
    %v778 = vunpack.c.h.b16 %v403
    %v779 = vunpack.c.l.b16 %v404
    %v780 = vunpack.c.h.b16 %v404
    %v781 = vunpack.c.l.b16 %v405
    %v782 = vunpack.c.h.b16 %v405
    %v783 = vunpack.c.l.b16 %v406
    %v784 = vunpack.c.h.b16 %v406
    %v785 = vunpack.c.l.b16 %v407
    %v786 = vunpack.c.h.b16 %v407
    %v787 = vunpack.c.l.b16 %v408
    %v788 = vunpack.c.h.b16 %v408
    %v789 = vunpack.c.l.b16 %v409
    %v790 = vunpack.c.h.b16 %v409
    %v791 = vunpack.c.l.b16 %v410
    %v792 = vunpack.c.h.b16 %v410
    %v793 = vunpack.c.l.b16 %v411
    %v794 = vunpack.c.h.b16 %v411
    %v795 = vunpack.c.l.b16 %v412
    %v796 = vunpack.c.h.b16 %v412
    %v797 = vunpack.c.l.b16 %v413
    %v798 = vunpack.c.h.b16 %v413
    %v799 = vunpack.c.l.b16 %v414
    %v800 = vunpack.c.h.b16 %v414
    %v801 = vunpack.c.l.b16 %v415
    %v802 = vunpack.c.h.b16 %v415
    %v803 = vunpack.c.l.b16 %v416
    %v804 = vunpack.c.h.b16 %v416
    %v805 = vunpack.c.l.b16 %v417
    %v806 = vunpack.c.h.b16 %v417
    %v807 = vunpack.c.l.b16 %v418
    %v808 = vunpack.c.h.b16 %v418
    %v809 = vunpack.c.l.b16 %v419
    %v810 = vunpack.c.h.b16 %v419
    %v811 = vunpack.c.l.b16 %v420
    %v812 = vunpack.c.h.b16 %v420
    %v813 = vunpack.c.l.b16 %v421
    %v814 = vunpack.c.h.b16 %v421
    %v815 = vunpack.c.l.b16 %v422
    %v816 = vunpack.c.h.b16 %v422
    %v817 = vpack.c.b16 %v565, %v561
    %v818 = vpack.c.b16 %v566, %v562
    %v819 = vpack.c.b16 %v567, %v563
    %v820 = vpack.c.b16 %v568, %v564
    %v821 = vpack.c.b16 %v573, %v569
    %v822 = vpack.c.b16 %v574, %v570
    %v823 = vpack.c.b16 %v575, %v571
    %v824 = vpack.c.b16 %v576, %v572
    %v825 = vpack.c.b16 %v581, %v577
    %v826 = vpack.c.b16 %v582, %v578
    %v827 = vpack.c.b16 %v583, %v579
    %v828 = vpack.c.b16 %v584, %v580
    %v829 = vpack.c.b16 %v589, %v585
    %v830 = vpack.c.b16 %v590, %v586
    %v831 = vpack.c.b16 %v591, %v587
    %v832 = vpack.c.b16 %v592, %v588
    %v833 = vpack.c.b16 %v597, %v593
    %v834 = vpack.c.b16 %v598, %v594
    %v835 = vpack.c.b16 %v599, %v595
    %v836 = vpack.c.b16 %v600, %v596
    %v837 = vpack.c.b16 %v605, %v601
    %v838 = vpack.c.b16 %v606, %v602
    %v839 = vpack.c.b16 %v607, %v603
    %v840 = vpack.c.b16 %v608, %v604
    %v841 = vpack.c.b16 %v613, %v609
    %v842 = vpack.c.b16 %v614, %v610
    %v843 = vpack.c.b16 %v615, %v611
    %v844 = vpack.c.b16 %v616, %v612
    %v845 = vpack.c.b16 %v621, %v617
    %v846 = vpack.c.b16 %v622, %v618
    %v847 = vpack.c.b16 %v623, %v619
    %v848 = vpack.c.b16 %v624, %v620
    %v849 = vpack.c.b16 %v629, %v625
    %v850 = vpack.c.b16 %v630, %v626
    %v851 = vpack.c.b16 %v631, %v627
    %v852 = vpack.c.b16 %v632, %v628
    %v853 = vpack.c.b16 %v637, %v633
    %v854 = vpack.c.b16 %v638, %v634
    %v855 = vpack.c.b16 %v639, %v635
    %v856 = vpack.c.b16 %v640, %v636
    %v857 = vpack.c.b16 %v645, %v641
    %v858 = vpack.c.b16 %v646, %v642
    %v859 = vpack.c.b16 %v647, %v643
    %v860 = vpack.c.b16 %v648, %v644
    %v861 = vpack.c.b16 %v653, %v649
    %v862 = vpack.c.b16 %v654, %v650
    %v863 = vpack.c.b16 %v655, %v651
    %v864 = vpack.c.b16 %v656, %v652
    %v865 = vpack.c.b16 %v661, %v657
    %v866 = vpack.c.b16 %v662, %v658
    %v867 = vpack.c.b16 %v663, %v659
    %v868 = vpack.c.b16 %v664, %v660
    %v869 = vpack.c.b16 %v669, %v665
    %v870 = vpack.c.b16 %v670, %v666
    %v871 = vpack.c.b16 %v671, %v667
    %v872 = vpack.c.b16 %v672, %v668
    %v873 = vpack.c.b16 %v677, %v673
    %v874 = vpack.c.b16 %v678, %v674
    %v875 = vpack.c.b16 %v679, %v675
    %v876 = vpack.c.b16 %v680, %v676
    %v877 = vpack.c.b16 %v685, %v681
    %v878 = vpack.c.b16 %v686, %v682
    %v879 = vpack.c.b16 %v687, %v683
    %v880 = vpack.c.b16 %v688, %v684
    %v881 = vpack.c.b16 %v693, %v689
    %v882 = vpack.c.b16 %v694, %v690
    %v883 = vpack.c.b16 %v695, %v691
    %v884 = vpack.c.b16 %v696, %v692
    %v885 = vpack.c.b16 %v701, %v697
    %v886 = vpack.c.b16 %v702, %v698
    %v887 = vpack.c.b16 %v703, %v699
    %v888 = vpack.c.b16 %v704, %v700
    %v889 = vpack.c.b16 %v709, %v705
    %v890 = vpack.c.b16 %v710, %v706
    %v891 = vpack.c.b16 %v711, %v707
    %v892 = vpack.c.b16 %v712, %v708
    %v893 = vpack.c.b16 %v717, %v713
    %v894 = vpack.c.b16 %v718, %v714
    %v895 = vpack.c.b16 %v719, %v715
    %v896 = vpack.c.b16 %v720, %v716
    %v897 = vpack.c.b16 %v725, %v721
    %v898 = vpack.c.b16 %v726, %v722
    %v899 = vpack.c.b16 %v727, %v723
    %v900 = vpack.c.b16 %v728, %v724
    %v901 = vpack.c.b16 %v733, %v729
    %v902 = vpack.c.b16 %v734, %v730
    %v903 = vpack.c.b16 %v735, %v731
    %v904 = vpack.c.b16 %v736, %v732
    %v905 = vpack.c.b16 %v741, %v737
    %v906 = vpack.c.b16 %v742, %v738
    %v907 = vpack.c.b16 %v743, %v739
    %v908 = vpack.c.b16 %v744, %v740
    %v909 = vpack.c.b16 %v749, %v745
    %v910 = vpack.c.b16 %v750, %v746
    %v911 = vpack.c.b16 %v751, %v747
    %v912 = vpack.c.b16 %v752, %v748
    %v913 = vpack.c.b16 %v757, %v753
    %v914 = vpack.c.b16 %v758, %v754
    %v915 = vpack.c.b16 %v759, %v755
    %v916 = vpack.c.b16 %v760, %v756
    %v917 = vpack.c.b16 %v765, %v761
    %v918 = vpack.c.b16 %v766, %v762
    %v919 = vpack.c.b16 %v767, %v763
    %v920 = vpack.c.b16 %v768, %v764
    %v921 = vpack.c.b16 %v773, %v769
    %v922 = vpack.c.b16 %v774, %v770
    %v923 = vpack.c.b16 %v775, %v771
    %v924 = vpack.c.b16 %v776, %v772
    %v925 = vpack.c.b16 %v781, %v777
    %v926 = vpack.c.b16 %v782, %v778
    %v927 = vpack.c.b16 %v783, %v779
    %v928 = vpack.c.b16 %v784, %v780
    %v929 = vpack.c.b16 %v789, %v785
    %v930 = vpack.c.b16 %v790, %v786
    %v931 = vpack.c.b16 %v791, %v787
    %v932 = vpack.c.b16 %v792, %v788
    %v933 = vpack.c.b16 %v797, %v793
    %v934 = vpack.c.b16 %v798, %v794
    %v935 = vpack.c.b16 %v799, %v795
    %v936 = vpack.c.b16 %v800, %v796
    %v937 = vpack.c.b16 %v805, %v801
    %v938 = vpack.c.b16 %v806, %v802
    %v939 = vpack.c.b16 %v807, %v803
    %v940 = vpack.c.b16 %v808, %v804
    %v941 = vpack.c.b16 %v813, %v809
    %v942 = vpack.c.b16 %v814, %v810
    %v943 = vpack.c.b16 %v815, %v811
    %v944 = vpack.c.b16 %v816, %v812
    %1073 = vmatpush.bf16.msra.mxu0 %v845
    %1074 = vmatpush.bf16.msra.mxu0 %v841
    %1075 = vmatpush.bf16.msra.mxu0 %v837
    %1076 = vmatpush.bf16.msra.mxu0 %v833
    %1077 = vmatpush.bf16.msra.mxu0 %v829
    %1078 = vmatpush.bf16.msra.mxu0 %v825
    %1079 = vmatpush.bf16.msra.mxu0 %v821
    %1080 = vmatpush.bf16.msra.mxu0 %v817
    %1081 = vmatmul.bf16.gmra.mxu0 %v291
    %v1082 = vpop.f32.mrf.mxu0
    %v1083 = vadd.f32 %v425, %v1082
    %v1084 = vpop.f32.mrf.mxu0
    %v1085 = vadd.f32 %v425, %v1084
    %1086 = vdwg.mxu0
    %1087 = vmatpush.bf16.msra.mxu0 %v877
    %1088 = vmatpush.bf16.msra.mxu0 %v873
    %1089 = vmatpush.bf16.msra.mxu0 %v869
    %1090 = vmatpush.bf16.msra.mxu0 %v865
    %1091 = vmatpush.bf16.msra.mxu0 %v861
    %1092 = vmatpush.bf16.msra.mxu0 %v857
    %1093 = vmatpush.bf16.msra.mxu0 %v853
    %1094 = vmatpush.bf16.msra.mxu0 %v849
    %1095 = vmatmul.bf16.gmra.mxu0 %v292
    %v1096 = vpop.f32.mrf.mxu0
    %v1097 = vadd.f32 %v1083, %v1096
    %v1098 = vpop.f32.mrf.mxu0
    %v1099 = vadd.f32 %v1085, %v1098
    %1100 = vdwg.mxu0
    %1101 = vmatpush.bf16.msra.mxu0 %v909
    %1102 = vmatpush.bf16.msra.mxu0 %v905
    %1103 = vmatpush.bf16.msra.mxu0 %v901
    %1104 = vmatpush.bf16.msra.mxu0 %v897
    %1105 = vmatpush.bf16.msra.mxu0 %v893
    %1106 = vmatpush.bf16.msra.mxu0 %v889
    %1107 = vmatpush.bf16.msra.mxu0 %v885
    %1108 = vmatpush.bf16.msra.mxu0 %v881
    %1109 = vmatmul.bf16.gmra.mxu0 %v293
    %v1110 = vpop.f32.mrf.mxu0
    %v1111 = vadd.f32 %v1097, %v1110
    %v1112 = vpop.f32.mrf.mxu0
    %v1113 = vadd.f32 %v1099, %v1112
    %1114 = vdwg.mxu0
    %1115 = vmatpush.bf16.msra.mxu0 %v941
    %1116 = vmatpush.bf16.msra.mxu0 %v937
    %1117 = vmatpush.bf16.msra.mxu0 %v933
    %1118 = vmatpush.bf16.msra.mxu0 %v929
    %1119 = vmatpush.bf16.msra.mxu0 %v925
    %1120 = vmatpush.bf16.msra.mxu0 %v921
    %1121 = vmatpush.bf16.msra.mxu0 %v917
    %1122 = vmatpush.bf16.msra.mxu0 %v913
    %1123 = vmatmul.bf16.gmra.mxu0 %v294
    %v1124 = vpop.f32.mrf.mxu0
    %v1125 = vadd.f32 %v1111, %v1124
    %v1126 = vpop.f32.mrf.mxu0
    %v1127 = vadd.f32 %v1113, %v1126
    %1128 = vdwg.mxu0
    %1129 = vmatpush.bf16.msra.mxu0 %v846
    %1130 = vmatpush.bf16.msra.mxu0 %v842
    %1131 = vmatpush.bf16.msra.mxu0 %v838
    %1132 = vmatpush.bf16.msra.mxu0 %v834
    %1133 = vmatpush.bf16.msra.mxu0 %v830
    %1134 = vmatpush.bf16.msra.mxu0 %v826
    %1135 = vmatpush.bf16.msra.mxu0 %v822
    %1136 = vmatpush.bf16.msra.mxu0 %v818
    %1137 = vmatmul.bf16.gmra.mxu0 %v291
    %v1138 = vpop.f32.mrf.mxu0
    %v1139 = vadd.f32 %v426, %v1138
    %v1140 = vpop.f32.mrf.mxu0
    %v1141 = vadd.f32 %v426, %v1140
    %1142 = vdwg.mxu0
    %1143 = vmatpush.bf16.msra.mxu0 %v878
    %1144 = vmatpush.bf16.msra.mxu0 %v874
    %1145 = vmatpush.bf16.msra.mxu0 %v870
    %1146 = vmatpush.bf16.msra.mxu0 %v866
    %1147 = vmatpush.bf16.msra.mxu0 %v862
    %1148 = vmatpush.bf16.msra.mxu0 %v858
    %1149 = vmatpush.bf16.msra.mxu0 %v854
    %1150 = vmatpush.bf16.msra.mxu0 %v850
    %1151 = vmatmul.bf16.gmra.mxu0 %v292
    %v1152 = vpop.f32.mrf.mxu0
    %v1153 = vadd.f32 %v1139, %v1152
    %v1154 = vpop.f32.mrf.mxu0
    %v1155 = vadd.f32 %v1141, %v1154
    %1156 = vdwg.mxu0
    %1157 = vmatpush.bf16.msra.mxu0 %v910
    %1158 = vmatpush.bf16.msra.mxu0 %v906
    %1159 = vmatpush.bf16.msra.mxu0 %v902
    %1160 = vmatpush.bf16.msra.mxu0 %v898
    %1161 = vmatpush.bf16.msra.mxu0 %v894
    %1162 = vmatpush.bf16.msra.mxu0 %v890
    %1163 = vmatpush.bf16.msra.mxu0 %v886
    %1164 = vmatpush.bf16.msra.mxu0 %v882
    %1165 = vmatmul.bf16.gmra.mxu0 %v293
    %v1166 = vpop.f32.mrf.mxu0
    %v1167 = vadd.f32 %v1153, %v1166
    %v1168 = vpop.f32.mrf.mxu0
    %v1169 = vadd.f32 %v1155, %v1168
    %1170 = vdwg.mxu0
    %1171 = vmatpush.bf16.msra.mxu0 %v942
    %1172 = vmatpush.bf16.msra.mxu0 %v938
    %1173 = vmatpush.bf16.msra.mxu0 %v934
    %1174 = vmatpush.bf16.msra.mxu0 %v930
    %1175 = vmatpush.bf16.msra.mxu0 %v926
    %1176 = vmatpush.bf16.msra.mxu0 %v922
    %1177 = vmatpush.bf16.msra.mxu0 %v918
    %1178 = vmatpush.bf16.msra.mxu0 %v914
    %1179 = vmatmul.bf16.gmra.mxu0 %v294
    %v1180 = vpop.f32.mrf.mxu0
    %v1181 = vadd.f32 %v1167, %v1180
    %v1182 = vpop.f32.mrf.mxu0
    %v1183 = vadd.f32 %v1169, %v1182
    %1184 = vdwg.mxu0
    %1185 = vmatpush.bf16.msra.mxu0 %v847
    %1186 = vmatpush.bf16.msra.mxu0 %v843
    %1187 = vmatpush.bf16.msra.mxu0 %v839
    %1188 = vmatpush.bf16.msra.mxu0 %v835
    %1189 = vmatpush.bf16.msra.mxu0 %v831
    %1190 = vmatpush.bf16.msra.mxu0 %v827
    %1191 = vmatpush.bf16.msra.mxu0 %v823
    %1192 = vmatpush.bf16.msra.mxu0 %v819
    %1193 = vmatmul.bf16.gmra.mxu0 %v291
    %v1194 = vpop.f32.mrf.mxu0
    %v1195 = vadd.f32 %v427, %v1194
    %v1196 = vpop.f32.mrf.mxu0
    %v1197 = vadd.f32 %v427, %v1196
    %1198 = vdwg.mxu0
    %1199 = vmatpush.bf16.msra.mxu0 %v879
    %1200 = vmatpush.bf16.msra.mxu0 %v875
    %1201 = vmatpush.bf16.msra.mxu0 %v871
    %1202 = vmatpush.bf16.msra.mxu0 %v867
    %1203 = vmatpush.bf16.msra.mxu0 %v863
    %1204 = vmatpush.bf16.msra.mxu0 %v859
    %1205 = vmatpush.bf16.msra.mxu0 %v855
    %1206 = vmatpush.bf16.msra.mxu0 %v851
    %1207 = vmatmul.bf16.gmra.mxu0 %v292
    %v1208 = vpop.f32.mrf.mxu0
    %v1209 = vadd.f32 %v1195, %v1208
    %v1210 = vpop.f32.mrf.mxu0
    %v1211 = vadd.f32 %v1197, %v1210
    %1212 = vdwg.mxu0
    %1213 = vmatpush.bf16.msra.mxu0 %v911
    %1214 = vmatpush.bf16.msra.mxu0 %v907
    %1215 = vmatpush.bf16.msra.mxu0 %v903
    %1216 = vmatpush.bf16.msra.mxu0 %v899
    %1217 = vmatpush.bf16.msra.mxu0 %v895
    %1218 = vmatpush.bf16.msra.mxu0 %v891
    %1219 = vmatpush.bf16.msra.mxu0 %v887
    %1220 = vmatpush.bf16.msra.mxu0 %v883
    %1221 = vmatmul.bf16.gmra.mxu0 %v293
    %v1222 = vpop.f32.mrf.mxu0
    %v1223 = vadd.f32 %v1209, %v1222
    %v1224 = vpop.f32.mrf.mxu0
    %v1225 = vadd.f32 %v1211, %v1224
    %1226 = vdwg.mxu0
    %1227 = vmatpush.bf16.msra.mxu0 %v943
    %1228 = vmatpush.bf16.msra.mxu0 %v939
    %1229 = vmatpush.bf16.msra.mxu0 %v935
    %1230 = vmatpush.bf16.msra.mxu0 %v931
    %1231 = vmatpush.bf16.msra.mxu0 %v927
    %1232 = vmatpush.bf16.msra.mxu0 %v923
    %1233 = vmatpush.bf16.msra.mxu0 %v919
    %1234 = vmatpush.bf16.msra.mxu0 %v915
    %1235 = vmatmul.bf16.gmra.mxu0 %v294
    %v1236 = vpop.f32.mrf.mxu0
    %v1237 = vadd.f32 %v1223, %v1236
    %v1238 = vpop.f32.mrf.mxu0
    %v1239 = vadd.f32 %v1225, %v1238
    %1240 = vdwg.mxu0
    %1241 = vmatpush.bf16.msra.mxu0 %v848
    %1242 = vmatpush.bf16.msra.mxu0 %v844
    %1243 = vmatpush.bf16.msra.mxu0 %v840
    %1244 = vmatpush.bf16.msra.mxu0 %v836
    %1245 = vmatpush.bf16.msra.mxu0 %v832
    %1246 = vmatpush.bf16.msra.mxu0 %v828
    %1247 = vmatpush.bf16.msra.mxu0 %v824
    %1248 = vmatpush.bf16.msra.mxu0 %v820
    %1249 = vmatmul.bf16.gmra.mxu0 %v291
    %v1250 = vpop.f32.mrf.mxu0
    %v1251 = vadd.f32 %v428, %v1250
    %v1252 = vpop.f32.mrf.mxu0
    %v1253 = vadd.f32 %v428, %v1252
    %1254 = vdwg.mxu0
    %1255 = vmatpush.bf16.msra.mxu0 %v880
    %1256 = vmatpush.bf16.msra.mxu0 %v876
    %1257 = vmatpush.bf16.msra.mxu0 %v872
    %1258 = vmatpush.bf16.msra.mxu0 %v868
    %1259 = vmatpush.bf16.msra.mxu0 %v864
    %1260 = vmatpush.bf16.msra.mxu0 %v860
    %1261 = vmatpush.bf16.msra.mxu0 %v856
    %1262 = vmatpush.bf16.msra.mxu0 %v852
    %1263 = vmatmul.bf16.gmra.mxu0 %v292
    %v1264 = vpop.f32.mrf.mxu0
    %v1265 = vadd.f32 %v1251, %v1264
    %v1266 = vpop.f32.mrf.mxu0
    %v1267 = vadd.f32 %v1253, %v1266
    %1268 = vdwg.mxu0
    %1269 = vmatpush.bf16.msra.mxu0 %v912
    %1270 = vmatpush.bf16.msra.mxu0 %v908
    %1271 = vmatpush.bf16.msra.mxu0 %v904
    %1272 = vmatpush.bf16.msra.mxu0 %v900
    %1273 = vmatpush.bf16.msra.mxu0 %v896
    %1274 = vmatpush.bf16.msra.mxu0 %v892
    %1275 = vmatpush.bf16.msra.mxu0 %v888
    %1276 = vmatpush.bf16.msra.mxu0 %v884
    %1277 = vmatmul.bf16.gmra.mxu0 %v293
    %v1278 = vpop.f32.mrf.mxu0
    %v1279 = vadd.f32 %v1265, %v1278
    %v1280 = vpop.f32.mrf.mxu0
    %v1281 = vadd.f32 %v1267, %v1280
    %1282 = vdwg.mxu0
    %1283 = vmatpush.bf16.msra.mxu0 %v944
    %1284 = vmatpush.bf16.msra.mxu0 %v940
    %1285 = vmatpush.bf16.msra.mxu0 %v936
    %1286 = vmatpush.bf16.msra.mxu0 %v932
    %1287 = vmatpush.bf16.msra.mxu0 %v928
    %1288 = vmatpush.bf16.msra.mxu0 %v924
    %1289 = vmatpush.bf16.msra.mxu0 %v920
    %1290 = vmatpush.bf16.msra.mxu0 %v916
    %1291 = vmatmul.bf16.gmra.mxu0 %v294
    %v1292 = vpop.f32.mrf.mxu0
    %v1293 = vadd.f32 %v1279, %v1292
    %v1294 = vpop.f32.mrf.mxu0
    %v1295 = vadd.f32 %v1281, %v1294
    %1296 = vdwg.mxu0
    %v1297 = vmax.f32 %v1125, 0.0
    %v1298 = vmax.f32 %v1181, 0.0
    %v1299 = vmax.f32 %v1237, 0.0
    %v1300 = vmax.f32 %v1293, 0.0
    %v1301 = vmax.f32 %v1127, 0.0
    %v1302 = vmax.f32 %v1183, 0.0
    %v1303 = vmax.f32 %v1239, 0.0
    %v1304 = vmax.f32 %v1295, 0.0
    %v1305 = vpack.c.bf16 %v1301, %v1297
    %v1306 = vpack.c.bf16 %v1302, %v1298
    %v1307 = vpack.c.bf16 %v1303, %v1299
    %v1308 = vpack.c.bf16 %v1304, %v1300
    %s1309 = scalar_lea.vmem [#allocation8], 1024
    %v1310 = vld [vmem:[%s1309] sm:$0xff]
    %v1311 = vld [vmem:[%s1309 + $0x8] sm:$0xff]
    %v1312 = vld [vmem:[%s1309 + $0x10] sm:$0xff]
    %v1313 = vld [vmem:[%s1309 + $0x18] sm:$0xff]
    %v1314 = vld [vmem:[%s1309 + $0x20] sm:$0xff]
    %v1315 = vld [vmem:[%s1309 + $0x28] sm:$0xff]
    %v1316 = vld [vmem:[%s1309 + $0x30] sm:$0xff]
    %v1317 = vld [vmem:[%s1309 + $0x38] sm:$0xff]
    %v1318 = vld [vmem:[%s1309 + $0x40] sm:$0xff]
    %v1319 = vld [vmem:[%s1309 + $0x48] sm:$0xff]
    %v1320 = vld [vmem:[%s1309 + $0x50] sm:$0xff]
    %v1321 = vld [vmem:[%s1309 + $0x58] sm:$0xff]
    %v1322 = vld [vmem:[%s1309 + $0x60] sm:$0xff]
    %v1323 = vld [vmem:[%s1309 + $0x68] sm:$0xff]
    %v1324 = vld [vmem:[%s1309 + $0x70] sm:$0xff]
    %v1325 = vld [vmem:[%s1309 + $0x78] sm:$0xff]
    %v1326 = vld [vmem:[%s1309 + $0x80] sm:$0xff]
    %v1327 = vld [vmem:[%s1309 + $0x88] sm:$0xff]
    %v1328 = vld [vmem:[%s1309 + $0x90] sm:$0xff]
    %v1329 = vld [vmem:[%s1309 + $0x98] sm:$0xff]
    %v1330 = vld [vmem:[%s1309 + $0xa0] sm:$0xff]
    %v1331 = vld [vmem:[%s1309 + $0xa8] sm:$0xff]
    %v1332 = vld [vmem:[%s1309 + $0xb0] sm:$0xff]
    %v1333 = vld [vmem:[%s1309 + $0xb8] sm:$0xff]
    %v1334 = vld [vmem:[%s1309 + $0xc0] sm:$0xff]
    %v1335 = vld [vmem:[%s1309 + $0xc8] sm:$0xff]
    %v1336 = vld [vmem:[%s1309 + $0xd0] sm:$0xff]
    %v1337 = vld [vmem:[%s1309 + $0xd8] sm:$0xff]
    %v1338 = vld [vmem:[%s1309 + $0xe0] sm:$0xff]
    %v1339 = vld [vmem:[%s1309 + $0xe8] sm:$0xff]
    %v1340 = vld [vmem:[%s1309 + $0xf0] sm:$0xff]
    %v1341 = vld [vmem:[%s1309 + $0xf8] sm:$0xff]
    %v1342 = vld [vmem:[%s1309 + $0x100] sm:$0xff]
    %v1343 = vld [vmem:[%s1309 + $0x108] sm:$0xff]
    %v1344 = vld [vmem:[%s1309 + $0x110] sm:$0xff]
    %v1345 = vld [vmem:[%s1309 + $0x118] sm:$0xff]
    %v1346 = vld [vmem:[%s1309 + $0x120] sm:$0xff]
    %v1347 = vld [vmem:[%s1309 + $0x128] sm:$0xff]
    %v1348 = vld [vmem:[%s1309 + $0x130] sm:$0xff]
    %v1349 = vld [vmem:[%s1309 + $0x138] sm:$0xff]
    %v1350 = vld [vmem:[%s1309 + $0x140] sm:$0xff]
    %v1351 = vld [vmem:[%s1309 + $0x148] sm:$0xff]
    %v1352 = vld [vmem:[%s1309 + $0x150] sm:$0xff]
    %v1353 = vld [vmem:[%s1309 + $0x158] sm:$0xff]
    %v1354 = vld [vmem:[%s1309 + $0x160] sm:$0xff]
    %v1355 = vld [vmem:[%s1309 + $0x168] sm:$0xff]
    %v1356 = vld [vmem:[%s1309 + $0x170] sm:$0xff]
    %v1357 = vld [vmem:[%s1309 + $0x178] sm:$0xff]
    %v1358 = vld [vmem:[%s1309 + $0x180] sm:$0xff]
    %v1359 = vld [vmem:[%s1309 + $0x188] sm:$0xff]
    %v1360 = vld [vmem:[%s1309 + $0x190] sm:$0xff]
    %v1361 = vld [vmem:[%s1309 + $0x198] sm:$0xff]
    %v1362 = vld [vmem:[%s1309 + $0x1a0] sm:$0xff]
    %v1363 = vld [vmem:[%s1309 + $0x1a8] sm:$0xff]
    %v1364 = vld [vmem:[%s1309 + $0x1b0] sm:$0xff]
    %v1365 = vld [vmem:[%s1309 + $0x1b8] sm:$0xff]
    %v1366 = vld [vmem:[%s1309 + $0x1c0] sm:$0xff]
    %v1367 = vld [vmem:[%s1309 + $0x1c8] sm:$0xff]
    %v1368 = vld [vmem:[%s1309 + $0x1d0] sm:$0xff]
    %v1369 = vld [vmem:[%s1309 + $0x1d8] sm:$0xff]
    %v1370 = vld [vmem:[%s1309 + $0x1e0] sm:$0xff]
    %v1371 = vld [vmem:[%s1309 + $0x1e8] sm:$0xff]
    %v1372 = vld [vmem:[%s1309 + $0x1f0] sm:$0xff]
    %v1373 = vld [vmem:[%s1309 + $0x1f8] sm:$0xff]
    %v1374 = vld [vmem:[%s1309 + $0x200] sm:$0xff]
    %v1375 = vld [vmem:[%s1309 + $0x208] sm:$0xff]
    %v1376 = vld [vmem:[%s1309 + $0x210] sm:$0xff]
    %v1377 = vld [vmem:[%s1309 + $0x218] sm:$0xff]
    %v1378 = vld [vmem:[%s1309 + $0x220] sm:$0xff]
    %v1379 = vld [vmem:[%s1309 + $0x228] sm:$0xff]
    %v1380 = vld [vmem:[%s1309 + $0x230] sm:$0xff]
    %v1381 = vld [vmem:[%s1309 + $0x238] sm:$0xff]
    %v1382 = vld [vmem:[%s1309 + $0x240] sm:$0xff]
    %v1383 = vld [vmem:[%s1309 + $0x248] sm:$0xff]
    %v1384 = vld [vmem:[%s1309 + $0x250] sm:$0xff]
    %v1385 = vld [vmem:[%s1309 + $0x258] sm:$0xff]
    %v1386 = vld [vmem:[%s1309 + $0x260] sm:$0xff]
    %v1387 = vld [vmem:[%s1309 + $0x268] sm:$0xff]
    %v1388 = vld [vmem:[%s1309 + $0x270] sm:$0xff]
    %v1389 = vld [vmem:[%s1309 + $0x278] sm:$0xff]
    %v1390 = vld [vmem:[%s1309 + $0x280] sm:$0xff]
    %v1391 = vld [vmem:[%s1309 + $0x288] sm:$0xff]
    %v1392 = vld [vmem:[%s1309 + $0x290] sm:$0xff]
    %v1393 = vld [vmem:[%s1309 + $0x298] sm:$0xff]
    %v1394 = vld [vmem:[%s1309 + $0x2a0] sm:$0xff]
    %v1395 = vld [vmem:[%s1309 + $0x2a8] sm:$0xff]
    %v1396 = vld [vmem:[%s1309 + $0x2b0] sm:$0xff]
    %v1397 = vld [vmem:[%s1309 + $0x2b8] sm:$0xff]
    %v1398 = vld [vmem:[%s1309 + $0x2c0] sm:$0xff]
    %v1399 = vld [vmem:[%s1309 + $0x2c8] sm:$0xff]
    %v1400 = vld [vmem:[%s1309 + $0x2d0] sm:$0xff]
    %v1401 = vld [vmem:[%s1309 + $0x2d8] sm:$0xff]
    %v1402 = vld [vmem:[%s1309 + $0x2e0] sm:$0xff]
    %v1403 = vld [vmem:[%s1309 + $0x2e8] sm:$0xff]
    %v1404 = vld [vmem:[%s1309 + $0x2f0] sm:$0xff]
    %v1405 = vld [vmem:[%s1309 + $0x2f8] sm:$0xff]
    %v1406 = vld [vmem:[%s1309 + $0x300] sm:$0xff]
    %v1407 = vld [vmem:[%s1309 + $0x308] sm:$0xff]
    %v1408 = vld [vmem:[%s1309 + $0x310] sm:$0xff]
    %v1409 = vld [vmem:[%s1309 + $0x318] sm:$0xff]
    %v1410 = vld [vmem:[%s1309 + $0x320] sm:$0xff]
    %v1411 = vld [vmem:[%s1309 + $0x328] sm:$0xff]
    %v1412 = vld [vmem:[%s1309 + $0x330] sm:$0xff]
    %v1413 = vld [vmem:[%s1309 + $0x338] sm:$0xff]
    %v1414 = vld [vmem:[%s1309 + $0x340] sm:$0xff]
    %v1415 = vld [vmem:[%s1309 + $0x348] sm:$0xff]
    %v1416 = vld [vmem:[%s1309 + $0x350] sm:$0xff]
    %v1417 = vld [vmem:[%s1309 + $0x358] sm:$0xff]
    %v1418 = vld [vmem:[%s1309 + $0x360] sm:$0xff]
    %v1419 = vld [vmem:[%s1309 + $0x368] sm:$0xff]
    %v1420 = vld [vmem:[%s1309 + $0x370] sm:$0xff]
    %v1421 = vld [vmem:[%s1309 + $0x378] sm:$0xff]
    %v1422 = vld [vmem:[%s1309 + $0x380] sm:$0xff]
    %v1423 = vld [vmem:[%s1309 + $0x388] sm:$0xff]
    %v1424 = vld [vmem:[%s1309 + $0x390] sm:$0xff]
    %v1425 = vld [vmem:[%s1309 + $0x398] sm:$0xff]
    %v1426 = vld [vmem:[%s1309 + $0x3a0] sm:$0xff]
    %v1427 = vld [vmem:[%s1309 + $0x3a8] sm:$0xff]
    %v1428 = vld [vmem:[%s1309 + $0x3b0] sm:$0xff]
    %v1429 = vld [vmem:[%s1309 + $0x3b8] sm:$0xff]
    %v1430 = vld [vmem:[%s1309 + $0x3c0] sm:$0xff]
    %v1431 = vld [vmem:[%s1309 + $0x3c8] sm:$0xff]
    %v1432 = vld [vmem:[%s1309 + $0x3d0] sm:$0xff]
    %v1433 = vld [vmem:[%s1309 + $0x3d8] sm:$0xff]
    %v1434 = vld [vmem:[%s1309 + $0x3e0] sm:$0xff]
    %v1435 = vld [vmem:[%s1309 + $0x3e8] sm:$0xff]
    %v1436 = vld [vmem:[%s1309 + $0x3f0] sm:$0xff]
    %v1437 = vld [vmem:[%s1309 + $0x3f8] sm:$0xff]
    %s1438 = scalar_lea.vmem [#allocation10], 4
    %v1439 = vld [vmem:[%s1438] sm:$0xf]
    %v1441 = vperm.slane %v1439, 0
    %v1442 = vperm.slane %v1439, 1
    %v1443 = vperm.slane %v1439, 2
    %v1444 = vperm.slane %v1439, 3
    %v1577 = vunpack.c.l.b16 %v1310
    %v1578 = vunpack.c.h.b16 %v1310
    %v1579 = vunpack.c.l.b16 %v1311
    %v1580 = vunpack.c.h.b16 %v1311
    %v1581 = vunpack.c.l.b16 %v1312
    %v1582 = vunpack.c.h.b16 %v1312
    %v1583 = vunpack.c.l.b16 %v1313
    %v1584 = vunpack.c.h.b16 %v1313
    %v1585 = vunpack.c.l.b16 %v1314
    %v1586 = vunpack.c.h.b16 %v1314
    %v1587 = vunpack.c.l.b16 %v1315
    %v1588 = vunpack.c.h.b16 %v1315
    %v1589 = vunpack.c.l.b16 %v1316
    %v1590 = vunpack.c.h.b16 %v1316
    %v1591 = vunpack.c.l.b16 %v1317
    %v1592 = vunpack.c.h.b16 %v1317
    %v1593 = vunpack.c.l.b16 %v1318
    %v1594 = vunpack.c.h.b16 %v1318
    %v1595 = vunpack.c.l.b16 %v1319
    %v1596 = vunpack.c.h.b16 %v1319
    %v1597 = vunpack.c.l.b16 %v1320
    %v1598 = vunpack.c.h.b16 %v1320
    %v1599 = vunpack.c.l.b16 %v1321
    %v1600 = vunpack.c.h.b16 %v1321
    %v1601 = vunpack.c.l.b16 %v1322
    %v1602 = vunpack.c.h.b16 %v1322
    %v1603 = vunpack.c.l.b16 %v1323
    %v1604 = vunpack.c.h.b16 %v1323
    %v1605 = vunpack.c.l.b16 %v1324
    %v1606 = vunpack.c.h.b16 %v1324
    %v1607 = vunpack.c.l.b16 %v1325
    %v1608 = vunpack.c.h.b16 %v1325
    %v1609 = vunpack.c.l.b16 %v1326
    %v1610 = vunpack.c.h.b16 %v1326
    %v1611 = vunpack.c.l.b16 %v1327
    %v1612 = vunpack.c.h.b16 %v1327
    %v1613 = vunpack.c.l.b16 %v1328
    %v1614 = vunpack.c.h.b16 %v1328
    %v1615 = vunpack.c.l.b16 %v1329
    %v1616 = vunpack.c.h.b16 %v1329
    %v1617 = vunpack.c.l.b16 %v1330
    %v1618 = vunpack.c.h.b16 %v1330
    %v1619 = vunpack.c.l.b16 %v1331
    %v1620 = vunpack.c.h.b16 %v1331
    %v1621 = vunpack.c.l.b16 %v1332
    %v1622 = vunpack.c.h.b16 %v1332
    %v1623 = vunpack.c.l.b16 %v1333
    %v1624 = vunpack.c.h.b16 %v1333
    %v1625 = vunpack.c.l.b16 %v1334
    %v1626 = vunpack.c.h.b16 %v1334
    %v1627 = vunpack.c.l.b16 %v1335
    %v1628 = vunpack.c.h.b16 %v1335
    %v1629 = vunpack.c.l.b16 %v1336
    %v1630 = vunpack.c.h.b16 %v1336
    %v1631 = vunpack.c.l.b16 %v1337
    %v1632 = vunpack.c.h.b16 %v1337
    %v1633 = vunpack.c.l.b16 %v1338
    %v1634 = vunpack.c.h.b16 %v1338
    %v1635 = vunpack.c.l.b16 %v1339
    %v1636 = vunpack.c.h.b16 %v1339
    %v1637 = vunpack.c.l.b16 %v1340
    %v1638 = vunpack.c.h.b16 %v1340
    %v1639 = vunpack.c.l.b16 %v1341
    %v1640 = vunpack.c.h.b16 %v1341
    %v1641 = vunpack.c.l.b16 %v1342
    %v1642 = vunpack.c.h.b16 %v1342
    %v1643 = vunpack.c.l.b16 %v1343
    %v1644 = vunpack.c.h.b16 %v1343
    %v1645 = vunpack.c.l.b16 %v1344
    %v1646 = vunpack.c.h.b16 %v1344
    %v1647 = vunpack.c.l.b16 %v1345
    %v1648 = vunpack.c.h.b16 %v1345
    %v1649 = vunpack.c.l.b16 %v1346
    %v1650 = vunpack.c.h.b16 %v1346
    %v1651 = vunpack.c.l.b16 %v1347
    %v1652 = vunpack.c.h.b16 %v1347
    %v1653 = vunpack.c.l.b16 %v1348
    %v1654 = vunpack.c.h.b16 %v1348
    %v1655 = vunpack.c.l.b16 %v1349
    %v1656 = vunpack.c.h.b16 %v1349
    %v1657 = vunpack.c.l.b16 %v1350
    %v1658 = vunpack.c.h.b16 %v1350
    %v1659 = vunpack.c.l.b16 %v1351
    %v1660 = vunpack.c.h.b16 %v1351
    %v1661 = vunpack.c.l.b16 %v1352
    %v1662 = vunpack.c.h.b16 %v1352
    %v1663 = vunpack.c.l.b16 %v1353
    %v1664 = vunpack.c.h.b16 %v1353
    %v1665 = vunpack.c.l.b16 %v1354
    %v1666 = vunpack.c.h.b16 %v1354
    %v1667 = vunpack.c.l.b16 %v1355
    %v1668 = vunpack.c.h.b16 %v1355
    %v1669 = vunpack.c.l.b16 %v1356
    %v1670 = vunpack.c.h.b16 %v1356
    %v1671 = vunpack.c.l.b16 %v1357
    %v1672 = vunpack.c.h.b16 %v1357
    %v1673 = vunpack.c.l.b16 %v1358
    %v1674 = vunpack.c.h.b16 %v1358
    %v1675 = vunpack.c.l.b16 %v1359
    %v1676 = vunpack.c.h.b16 %v1359
    %v1677 = vunpack.c.l.b16 %v1360
    %v1678 = vunpack.c.h.b16 %v1360
    %v1679 = vunpack.c.l.b16 %v1361
    %v1680 = vunpack.c.h.b16 %v1361
    %v1681 = vunpack.c.l.b16 %v1362
    %v1682 = vunpack.c.h.b16 %v1362
    %v1683 = vunpack.c.l.b16 %v1363
    %v1684 = vunpack.c.h.b16 %v1363
    %v1685 = vunpack.c.l.b16 %v1364
    %v1686 = vunpack.c.h.b16 %v1364
    %v1687 = vunpack.c.l.b16 %v1365
    %v1688 = vunpack.c.h.b16 %v1365
    %v1689 = vunpack.c.l.b16 %v1366
    %v1690 = vunpack.c.h.b16 %v1366
    %v1691 = vunpack.c.l.b16 %v1367
    %v1692 = vunpack.c.h.b16 %v1367
    %v1693 = vunpack.c.l.b16 %v1368
    %v1694 = vunpack.c.h.b16 %v1368
    %v1695 = vunpack.c.l.b16 %v1369
    %v1696 = vunpack.c.h.b16 %v1369
    %v1697 = vunpack.c.l.b16 %v1370
    %v1698 = vunpack.c.h.b16 %v1370
    %v1699 = vunpack.c.l.b16 %v1371
    %v1700 = vunpack.c.h.b16 %v1371
    %v1701 = vunpack.c.l.b16 %v1372
    %v1702 = vunpack.c.h.b16 %v1372
    %v1703 = vunpack.c.l.b16 %v1373
    %v1704 = vunpack.c.h.b16 %v1373
    %v1705 = vunpack.c.l.b16 %v1374
    %v1706 = vunpack.c.h.b16 %v1374
    %v1707 = vunpack.c.l.b16 %v1375
    %v1708 = vunpack.c.h.b16 %v1375
    %v1709 = vunpack.c.l.b16 %v1376
    %v1710 = vunpack.c.h.b16 %v1376
    %v1711 = vunpack.c.l.b16 %v1377
    %v1712 = vunpack.c.h.b16 %v1377
    %v1713 = vunpack.c.l.b16 %v1378
    %v1714 = vunpack.c.h.b16 %v1378
    %v1715 = vunpack.c.l.b16 %v1379
    %v1716 = vunpack.c.h.b16 %v1379
    %v1717 = vunpack.c.l.b16 %v1380
    %v1718 = vunpack.c.h.b16 %v1380
    %v1719 = vunpack.c.l.b16 %v1381
    %v1720 = vunpack.c.h.b16 %v1381
    %v1721 = vunpack.c.l.b16 %v1382
    %v1722 = vunpack.c.h.b16 %v1382
    %v1723 = vunpack.c.l.b16 %v1383
    %v1724 = vunpack.c.h.b16 %v1383
    %v1725 = vunpack.c.l.b16 %v1384
    %v1726 = vunpack.c.h.b16 %v1384
    %v1727 = vunpack.c.l.b16 %v1385
    %v1728 = vunpack.c.h.b16 %v1385
    %v1729 = vunpack.c.l.b16 %v1386
    %v1730 = vunpack.c.h.b16 %v1386
    %v1731 = vunpack.c.l.b16 %v1387
    %v1732 = vunpack.c.h.b16 %v1387
    %v1733 = vunpack.c.l.b16 %v1388
    %v1734 = vunpack.c.h.b16 %v1388
    %v1735 = vunpack.c.l.b16 %v1389
    %v1736 = vunpack.c.h.b16 %v1389
    %v1737 = vunpack.c.l.b16 %v1390
    %v1738 = vunpack.c.h.b16 %v1390
    %v1739 = vunpack.c.l.b16 %v1391
    %v1740 = vunpack.c.h.b16 %v1391
    %v1741 = vunpack.c.l.b16 %v1392
    %v1742 = vunpack.c.h.b16 %v1392
    %v1743 = vunpack.c.l.b16 %v1393
    %v1744 = vunpack.c.h.b16 %v1393
    %v1745 = vunpack.c.l.b16 %v1394
    %v1746 = vunpack.c.h.b16 %v1394
    %v1747 = vunpack.c.l.b16 %v1395
    %v1748 = vunpack.c.h.b16 %v1395
    %v1749 = vunpack.c.l.b16 %v1396
    %v1750 = vunpack.c.h.b16 %v1396
    %v1751 = vunpack.c.l.b16 %v1397
    %v1752 = vunpack.c.h.b16 %v1397
    %v1753 = vunpack.c.l.b16 %v1398
    %v1754 = vunpack.c.h.b16 %v1398
    %v1755 = vunpack.c.l.b16 %v1399
    %v1756 = vunpack.c.h.b16 %v1399
    %v1757 = vunpack.c.l.b16 %v1400
    %v1758 = vunpack.c.h.b16 %v1400
    %v1759 = vunpack.c.l.b16 %v1401
    %v1760 = vunpack.c.h.b16 %v1401
    %v1761 = vunpack.c.l.b16 %v1402
    %v1762 = vunpack.c.h.b16 %v1402
    %v1763 = vunpack.c.l.b16 %v1403
    %v1764 = vunpack.c.h.b16 %v1403
    %v1765 = vunpack.c.l.b16 %v1404
    %v1766 = vunpack.c.h.b16 %v1404
    %v1767 = vunpack.c.l.b16 %v1405
    %v1768 = vunpack.c.h.b16 %v1405
    %v1769 = vunpack.c.l.b16 %v1406
    %v1770 = vunpack.c.h.b16 %v1406
    %v1771 = vunpack.c.l.b16 %v1407
    %v1772 = vunpack.c.h.b16 %v1407
    %v1773 = vunpack.c.l.b16 %v1408
    %v1774 = vunpack.c.h.b16 %v1408
    %v1775 = vunpack.c.l.b16 %v1409
    %v1776 = vunpack.c.h.b16 %v1409
    %v1777 = vunpack.c.l.b16 %v1410
    %v1778 = vunpack.c.h.b16 %v1410
    %v1779 = vunpack.c.l.b16 %v1411
    %v1780 = vunpack.c.h.b16 %v1411
    %v1781 = vunpack.c.l.b16 %v1412
    %v1782 = vunpack.c.h.b16 %v1412
    %v1783 = vunpack.c.l.b16 %v1413
    %v1784 = vunpack.c.h.b16 %v1413
    %v1785 = vunpack.c.l.b16 %v1414
    %v1786 = vunpack.c.h.b16 %v1414
    %v1787 = vunpack.c.l.b16 %v1415
    %v1788 = vunpack.c.h.b16 %v1415
    %v1789 = vunpack.c.l.b16 %v1416
    %v1790 = vunpack.c.h.b16 %v1416
    %v1791 = vunpack.c.l.b16 %v1417
    %v1792 = vunpack.c.h.b16 %v1417
    %v1793 = vunpack.c.l.b16 %v1418
    %v1794 = vunpack.c.h.b16 %v1418
    %v1795 = vunpack.c.l.b16 %v1419
    %v1796 = vunpack.c.h.b16 %v1419
    %v1797 = vunpack.c.l.b16 %v1420
    %v1798 = vunpack.c.h.b16 %v1420
    %v1799 = vunpack.c.l.b16 %v1421
    %v1800 = vunpack.c.h.b16 %v1421
    %v1801 = vunpack.c.l.b16 %v1422
    %v1802 = vunpack.c.h.b16 %v1422
    %v1803 = vunpack.c.l.b16 %v1423
    %v1804 = vunpack.c.h.b16 %v1423
    %v1805 = vunpack.c.l.b16 %v1424
    %v1806 = vunpack.c.h.b16 %v1424
    %v1807 = vunpack.c.l.b16 %v1425
    %v1808 = vunpack.c.h.b16 %v1425
    %v1809 = vunpack.c.l.b16 %v1426
    %v1810 = vunpack.c.h.b16 %v1426
    %v1811 = vunpack.c.l.b16 %v1427
    %v1812 = vunpack.c.h.b16 %v1427
    %v1813 = vunpack.c.l.b16 %v1428
    %v1814 = vunpack.c.h.b16 %v1428
    %v1815 = vunpack.c.l.b16 %v1429
    %v1816 = vunpack.c.h.b16 %v1429
    %v1817 = vunpack.c.l.b16 %v1430
    %v1818 = vunpack.c.h.b16 %v1430
    %v1819 = vunpack.c.l.b16 %v1431
    %v1820 = vunpack.c.h.b16 %v1431
    %v1821 = vunpack.c.l.b16 %v1432
    %v1822 = vunpack.c.h.b16 %v1432
    %v1823 = vunpack.c.l.b16 %v1433
    %v1824 = vunpack.c.h.b16 %v1433
    %v1825 = vunpack.c.l.b16 %v1434
    %v1826 = vunpack.c.h.b16 %v1434
    %v1827 = vunpack.c.l.b16 %v1435
    %v1828 = vunpack.c.h.b16 %v1435
    %v1829 = vunpack.c.l.b16 %v1436
    %v1830 = vunpack.c.h.b16 %v1436
    %v1831 = vunpack.c.l.b16 %v1437
    %v1832 = vunpack.c.h.b16 %v1437
    %v1833 = vpack.c.b16 %v1581, %v1577
    %v1834 = vpack.c.b16 %v1582, %v1578
    %v1835 = vpack.c.b16 %v1583, %v1579
    %v1836 = vpack.c.b16 %v1584, %v1580
    %v1837 = vpack.c.b16 %v1589, %v1585
    %v1838 = vpack.c.b16 %v1590, %v1586
    %v1839 = vpack.c.b16 %v1591, %v1587
    %v1840 = vpack.c.b16 %v1592, %v1588
    %v1841 = vpack.c.b16 %v1597, %v1593
    %v1842 = vpack.c.b16 %v1598, %v1594
    %v1843 = vpack.c.b16 %v1599, %v1595
    %v1844 = vpack.c.b16 %v1600, %v1596
    %v1845 = vpack.c.b16 %v1605, %v1601
    %v1846 = vpack.c.b16 %v1606, %v1602
    %v1847 = vpack.c.b16 %v1607, %v1603
    %v1848 = vpack.c.b16 %v1608, %v1604
    %v1849 = vpack.c.b16 %v1613, %v1609
    %v1850 = vpack.c.b16 %v1614, %v1610
    %v1851 = vpack.c.b16 %v1615, %v1611
    %v1852 = vpack.c.b16 %v1616, %v1612
    %v1853 = vpack.c.b16 %v1621, %v1617
    %v1854 = vpack.c.b16 %v1622, %v1618
    %v1855 = vpack.c.b16 %v1623, %v1619
    %v1856 = vpack.c.b16 %v1624, %v1620
    %v1857 = vpack.c.b16 %v1629, %v1625
    %v1858 = vpack.c.b16 %v1630, %v1626
    %v1859 = vpack.c.b16 %v1631, %v1627
    %v1860 = vpack.c.b16 %v1632, %v1628
    %v1861 = vpack.c.b16 %v1637, %v1633
    %v1862 = vpack.c.b16 %v1638, %v1634
    %v1863 = vpack.c.b16 %v1639, %v1635
    %v1864 = vpack.c.b16 %v1640, %v1636
    %v1865 = vpack.c.b16 %v1645, %v1641
    %v1866 = vpack.c.b16 %v1646, %v1642
    %v1867 = vpack.c.b16 %v1647, %v1643
    %v1868 = vpack.c.b16 %v1648, %v1644
    %v1869 = vpack.c.b16 %v1653, %v1649
    %v1870 = vpack.c.b16 %v1654, %v1650
    %v1871 = vpack.c.b16 %v1655, %v1651
    %v1872 = vpack.c.b16 %v1656, %v1652
    %v1873 = vpack.c.b16 %v1661, %v1657
    %v1874 = vpack.c.b16 %v1662, %v1658
    %v1875 = vpack.c.b16 %v1663, %v1659
    %v1876 = vpack.c.b16 %v1664, %v1660
    %v1877 = vpack.c.b16 %v1669, %v1665
    %v1878 = vpack.c.b16 %v1670, %v1666
    %v1879 = vpack.c.b16 %v1671, %v1667
    %v1880 = vpack.c.b16 %v1672, %v1668
    %v1881 = vpack.c.b16 %v1677, %v1673
    %v1882 = vpack.c.b16 %v1678, %v1674
    %v1883 = vpack.c.b16 %v1679, %v1675
    %v1884 = vpack.c.b16 %v1680, %v1676
    %v1885 = vpack.c.b16 %v1685, %v1681
    %v1886 = vpack.c.b16 %v1686, %v1682
    %v1887 = vpack.c.b16 %v1687, %v1683
    %v1888 = vpack.c.b16 %v1688, %v1684
    %v1889 = vpack.c.b16 %v1693, %v1689
    %v1890 = vpack.c.b16 %v1694, %v1690
    %v1891 = vpack.c.b16 %v1695, %v1691
    %v1892 = vpack.c.b16 %v1696, %v1692
    %v1893 = vpack.c.b16 %v1701, %v1697
    %v1894 = vpack.c.b16 %v1702, %v1698
    %v1895 = vpack.c.b16 %v1703, %v1699
    %v1896 = vpack.c.b16 %v1704, %v1700
    %v1897 = vpack.c.b16 %v1709, %v1705
    %v1898 = vpack.c.b16 %v1710, %v1706
    %v1899 = vpack.c.b16 %v1711, %v1707
    %v1900 = vpack.c.b16 %v1712, %v1708
    %v1901 = vpack.c.b16 %v1717, %v1713
    %v1902 = vpack.c.b16 %v1718, %v1714
    %v1903 = vpack.c.b16 %v1719, %v1715
    %v1904 = vpack.c.b16 %v1720, %v1716
    %v1905 = vpack.c.b16 %v1725, %v1721
    %v1906 = vpack.c.b16 %v1726, %v1722
    %v1907 = vpack.c.b16 %v1727, %v1723
    %v1908 = vpack.c.b16 %v1728, %v1724
    %v1909 = vpack.c.b16 %v1733, %v1729
    %v1910 = vpack.c.b16 %v1734, %v1730
    %v1911 = vpack.c.b16 %v1735, %v1731
    %v1912 = vpack.c.b16 %v1736, %v1732
    %v1913 = vpack.c.b16 %v1741, %v1737
    %v1914 = vpack.c.b16 %v1742, %v1738
    %v1915 = vpack.c.b16 %v1743, %v1739
    %v1916 = vpack.c.b16 %v1744, %v1740
    %v1917 = vpack.c.b16 %v1749, %v1745
    %v1918 = vpack.c.b16 %v1750, %v1746
    %v1919 = vpack.c.b16 %v1751, %v1747
    %v1920 = vpack.c.b16 %v1752, %v1748
    %v1921 = vpack.c.b16 %v1757, %v1753
    %v1922 = vpack.c.b16 %v1758, %v1754
    %v1923 = vpack.c.b16 %v1759, %v1755
    %v1924 = vpack.c.b16 %v1760, %v1756
    %v1925 = vpack.c.b16 %v1765, %v1761
    %v1926 = vpack.c.b16 %v1766, %v1762
    %v1927 = vpack.c.b16 %v1767, %v1763
    %v1928 = vpack.c.b16 %v1768, %v1764
    %v1929 = vpack.c.b16 %v1773, %v1769
    %v1930 = vpack.c.b16 %v1774, %v1770
    %v1931 = vpack.c.b16 %v1775, %v1771
    %v1932 = vpack.c.b16 %v1776, %v1772
    %v1933 = vpack.c.b16 %v1781, %v1777
    %v1934 = vpack.c.b16 %v1782, %v1778
    %v1935 = vpack.c.b16 %v1783, %v1779
    %v1936 = vpack.c.b16 %v1784, %v1780
    %v1937 = vpack.c.b16 %v1789, %v1785
    %v1938 = vpack.c.b16 %v1790, %v1786
    %v1939 = vpack.c.b16 %v1791, %v1787
    %v1940 = vpack.c.b16 %v1792, %v1788
    %v1941 = vpack.c.b16 %v1797, %v1793
    %v1942 = vpack.c.b16 %v1798, %v1794
    %v1943 = vpack.c.b16 %v1799, %v1795
    %v1944 = vpack.c.b16 %v1800, %v1796
    %v1945 = vpack.c.b16 %v1805, %v1801
    %v1946 = vpack.c.b16 %v1806, %v1802
    %v1947 = vpack.c.b16 %v1807, %v1803
    %v1948 = vpack.c.b16 %v1808, %v1804
    %v1949 = vpack.c.b16 %v1813, %v1809
    %v1950 = vpack.c.b16 %v1814, %v1810
    %v1951 = vpack.c.b16 %v1815, %v1811
    %v1952 = vpack.c.b16 %v1816, %v1812
    %v1953 = vpack.c.b16 %v1821, %v1817
    %v1954 = vpack.c.b16 %v1822, %v1818
    %v1955 = vpack.c.b16 %v1823, %v1819
    %v1956 = vpack.c.b16 %v1824, %v1820
    %v1957 = vpack.c.b16 %v1829, %v1825
    %v1958 = vpack.c.b16 %v1830, %v1826
    %v1959 = vpack.c.b16 %v1831, %v1827
    %v1960 = vpack.c.b16 %v1832, %v1828
    %2089 = vmatpush.bf16.msra.mxu0 %v1861
    %2090 = vmatpush.bf16.msra.mxu0 %v1857
    %2091 = vmatpush.bf16.msra.mxu0 %v1853
    %2092 = vmatpush.bf16.msra.mxu0 %v1849
    %2093 = vmatpush.bf16.msra.mxu0 %v1845
    %2094 = vmatpush.bf16.msra.mxu0 %v1841
    %2095 = vmatpush.bf16.msra.mxu0 %v1837
    %2096 = vmatpush.bf16.msra.mxu0 %v1833
    %2097 = vmatmul.bf16.gmra.mxu0 %v1305
    %v2098 = vpop.f32.mrf.mxu0
    %v2099 = vadd.f32 %v1441, %v2098
    %v2100 = vpop.f32.mrf.mxu0
    %v2101 = vadd.f32 %v1441, %v2100
    %2102 = vdwg.mxu0
    %2103 = vmatpush.bf16.msra.mxu0 %v1893
    %2104 = vmatpush.bf16.msra.mxu0 %v1889
    %2105 = vmatpush.bf16.msra.mxu0 %v1885
    %2106 = vmatpush.bf16.msra.mxu0 %v1881
    %2107 = vmatpush.bf16.msra.mxu0 %v1877
    %2108 = vmatpush.bf16.msra.mxu0 %v1873
    %2109 = vmatpush.bf16.msra.mxu0 %v1869
    %2110 = vmatpush.bf16.msra.mxu0 %v1865
    %2111 = vmatmul.bf16.gmra.mxu0 %v1306
    %v2112 = vpop.f32.mrf.mxu0
    %v2113 = vadd.f32 %v2099, %v2112
    %v2114 = vpop.f32.mrf.mxu0
    %v2115 = vadd.f32 %v2101, %v2114
    %2116 = vdwg.mxu0
    %2117 = vmatpush.bf16.msra.mxu0 %v1925
    %2118 = vmatpush.bf16.msra.mxu0 %v1921
    %2119 = vmatpush.bf16.msra.mxu0 %v1917
    %2120 = vmatpush.bf16.msra.mxu0 %v1913
    %2121 = vmatpush.bf16.msra.mxu0 %v1909
    %2122 = vmatpush.bf16.msra.mxu0 %v1905
    %2123 = vmatpush.bf16.msra.mxu0 %v1901
    %2124 = vmatpush.bf16.msra.mxu0 %v1897
    %2125 = vmatmul.bf16.gmra.mxu0 %v1307
    %v2126 = vpop.f32.mrf.mxu0
    %v2127 = vadd.f32 %v2113, %v2126
    %v2128 = vpop.f32.mrf.mxu0
    %v2129 = vadd.f32 %v2115, %v2128
    %2130 = vdwg.mxu0
    %2131 = vmatpush.bf16.msra.mxu0 %v1957
    %2132 = vmatpush.bf16.msra.mxu0 %v1953
    %2133 = vmatpush.bf16.msra.mxu0 %v1949
    %2134 = vmatpush.bf16.msra.mxu0 %v1945
    %2135 = vmatpush.bf16.msra.mxu0 %v1941
    %2136 = vmatpush.bf16.msra.mxu0 %v1937
    %2137 = vmatpush.bf16.msra.mxu0 %v1933
    %2138 = vmatpush.bf16.msra.mxu0 %v1929
    %2139 = vmatmul.bf16.gmra.mxu0 %v1308
    %v2140 = vpop.f32.mrf.mxu0
    %v2141 = vadd.f32 %v2127, %v2140
    %v2142 = vpop.f32.mrf.mxu0
    %v2143 = vadd.f32 %v2129, %v2142
    %2144 = vdwg.mxu0
    %2145 = vmatpush.bf16.msra.mxu0 %v1862
    %2146 = vmatpush.bf16.msra.mxu0 %v1858
    %2147 = vmatpush.bf16.msra.mxu0 %v1854
    %2148 = vmatpush.bf16.msra.mxu0 %v1850
    %2149 = vmatpush.bf16.msra.mxu0 %v1846
    %2150 = vmatpush.bf16.msra.mxu0 %v1842
    %2151 = vmatpush.bf16.msra.mxu0 %v1838
    %2152 = vmatpush.bf16.msra.mxu0 %v1834
    %2153 = vmatmul.bf16.gmra.mxu0 %v1305
    %v2154 = vpop.f32.mrf.mxu0
    %v2155 = vadd.f32 %v1442, %v2154
    %v2156 = vpop.f32.mrf.mxu0
    %v2157 = vadd.f32 %v1442, %v2156
    %2158 = vdwg.mxu0
    %2159 = vmatpush.bf16.msra.mxu0 %v1894
    %2160 = vmatpush.bf16.msra.mxu0 %v1890
    %2161 = vmatpush.bf16.msra.mxu0 %v1886
    %2162 = vmatpush.bf16.msra.mxu0 %v1882
    %2163 = vmatpush.bf16.msra.mxu0 %v1878
    %2164 = vmatpush.bf16.msra.mxu0 %v1874
    %2165 = vmatpush.bf16.msra.mxu0 %v1870
    %2166 = vmatpush.bf16.msra.mxu0 %v1866
    %2167 = vmatmul.bf16.gmra.mxu0 %v1306
    %v2168 = vpop.f32.mrf.mxu0
    %v2169 = vadd.f32 %v2155, %v2168
    %v2170 = vpop.f32.mrf.mxu0
    %v2171 = vadd.f32 %v2157, %v2170
    %2172 = vdwg.mxu0
    %2173 = vmatpush.bf16.msra.mxu0 %v1926
    %2174 = vmatpush.bf16.msra.mxu0 %v1922
    %2175 = vmatpush.bf16.msra.mxu0 %v1918
    %2176 = vmatpush.bf16.msra.mxu0 %v1914
    %2177 = vmatpush.bf16.msra.mxu0 %v1910
    %2178 = vmatpush.bf16.msra.mxu0 %v1906
    %2179 = vmatpush.bf16.msra.mxu0 %v1902
    %2180 = vmatpush.bf16.msra.mxu0 %v1898
    %2181 = vmatmul.bf16.gmra.mxu0 %v1307
    %v2182 = vpop.f32.mrf.mxu0
    %v2183 = vadd.f32 %v2169, %v2182
    %v2184 = vpop.f32.mrf.mxu0
    %v2185 = vadd.f32 %v2171, %v2184
    %2186 = vdwg.mxu0
    %2187 = vmatpush.bf16.msra.mxu0 %v1958
    %2188 = vmatpush.bf16.msra.mxu0 %v1954
    %2189 = vmatpush.bf16.msra.mxu0 %v1950
    %2190 = vmatpush.bf16.msra.mxu0 %v1946
    %2191 = vmatpush.bf16.msra.mxu0 %v1942
    %2192 = vmatpush.bf16.msra.mxu0 %v1938
    %2193 = vmatpush.bf16.msra.mxu0 %v1934
    %2194 = vmatpush.bf16.msra.mxu0 %v1930
    %2195 = vmatmul.bf16.gmra.mxu0 %v1308
    %v2196 = vpop.f32.mrf.mxu0
    %v2197 = vadd.f32 %v2183, %v2196
    %v2198 = vpop.f32.mrf.mxu0
    %v2199 = vadd.f32 %v2185, %v2198
    %2200 = vdwg.mxu0
    %2201 = vmatpush.bf16.msra.mxu0 %v1863
    %2202 = vmatpush.bf16.msra.mxu0 %v1859
    %2203 = vmatpush.bf16.msra.mxu0 %v1855
    %2204 = vmatpush.bf16.msra.mxu0 %v1851
    %2205 = vmatpush.bf16.msra.mxu0 %v1847
    %2206 = vmatpush.bf16.msra.mxu0 %v1843
    %2207 = vmatpush.bf16.msra.mxu0 %v1839
    %2208 = vmatpush.bf16.msra.mxu0 %v1835
    %2209 = vmatmul.bf16.gmra.mxu0 %v1305
    %v2210 = vpop.f32.mrf.mxu0
    %v2211 = vadd.f32 %v1443, %v2210
    %v2212 = vpop.f32.mrf.mxu0
    %v2213 = vadd.f32 %v1443, %v2212
    %2214 = vdwg.mxu0
    %2215 = vmatpush.bf16.msra.mxu0 %v1895
    %2216 = vmatpush.bf16.msra.mxu0 %v1891
    %2217 = vmatpush.bf16.msra.mxu0 %v1887
    %2218 = vmatpush.bf16.msra.mxu0 %v1883
    %2219 = vmatpush.bf16.msra.mxu0 %v1879
    %2220 = vmatpush.bf16.msra.mxu0 %v1875
    %2221 = vmatpush.bf16.msra.mxu0 %v1871
    %2222 = vmatpush.bf16.msra.mxu0 %v1867
    %2223 = vmatmul.bf16.gmra.mxu0 %v1306
    %v2224 = vpop.f32.mrf.mxu0
    %v2225 = vadd.f32 %v2211, %v2224
    %v2226 = vpop.f32.mrf.mxu0
    %v2227 = vadd.f32 %v2213, %v2226
    %2228 = vdwg.mxu0
    %2229 = vmatpush.bf16.msra.mxu0 %v1927
    %2230 = vmatpush.bf16.msra.mxu0 %v1923
    %2231 = vmatpush.bf16.msra.mxu0 %v1919
    %2232 = vmatpush.bf16.msra.mxu0 %v1915
    %2233 = vmatpush.bf16.msra.mxu0 %v1911
    %2234 = vmatpush.bf16.msra.mxu0 %v1907
    %2235 = vmatpush.bf16.msra.mxu0 %v1903
    %2236 = vmatpush.bf16.msra.mxu0 %v1899
    %2237 = vmatmul.bf16.gmra.mxu0 %v1307
    %v2238 = vpop.f32.mrf.mxu0
    %v2239 = vadd.f32 %v2225, %v2238
    %v2240 = vpop.f32.mrf.mxu0
    %v2241 = vadd.f32 %v2227, %v2240
    %2242 = vdwg.mxu0
    %2243 = vmatpush.bf16.msra.mxu0 %v1959
    %2244 = vmatpush.bf16.msra.mxu0 %v1955
    %2245 = vmatpush.bf16.msra.mxu0 %v1951
    %2246 = vmatpush.bf16.msra.mxu0 %v1947
    %2247 = vmatpush.bf16.msra.mxu0 %v1943
    %2248 = vmatpush.bf16.msra.mxu0 %v1939
    %2249 = vmatpush.bf16.msra.mxu0 %v1935
    %2250 = vmatpush.bf16.msra.mxu0 %v1931
    %2251 = vmatmul.bf16.gmra.mxu0 %v1308
    %v2252 = vpop.f32.mrf.mxu0
    %v2253 = vadd.f32 %v2239, %v2252
    %v2254 = vpop.f32.mrf.mxu0
    %v2255 = vadd.f32 %v2241, %v2254
    %2256 = vdwg.mxu0
    %2257 = vmatpush.bf16.msra.mxu0 %v1864
    %2258 = vmatpush.bf16.msra.mxu0 %v1860
    %2259 = vmatpush.bf16.msra.mxu0 %v1856
    %2260 = vmatpush.bf16.msra.mxu0 %v1852
    %2261 = vmatpush.bf16.msra.mxu0 %v1848
    %2262 = vmatpush.bf16.msra.mxu0 %v1844
    %2263 = vmatpush.bf16.msra.mxu0 %v1840
    %2264 = vmatpush.bf16.msra.mxu0 %v1836
    %2265 = vmatmul.bf16.gmra.mxu0 %v1305
    %v2266 = vpop.f32.mrf.mxu0
    %v2267 = vadd.f32 %v1444, %v2266
    %v2268 = vpop.f32.mrf.mxu0
    %v2269 = vadd.f32 %v1444, %v2268
    %2270 = vdwg.mxu0
    %2271 = vmatpush.bf16.msra.mxu0 %v1896
    %2272 = vmatpush.bf16.msra.mxu0 %v1892
    %2273 = vmatpush.bf16.msra.mxu0 %v1888
    %2274 = vmatpush.bf16.msra.mxu0 %v1884
    %2275 = vmatpush.bf16.msra.mxu0 %v1880
    %2276 = vmatpush.bf16.msra.mxu0 %v1876
    %2277 = vmatpush.bf16.msra.mxu0 %v1872
    %2278 = vmatpush.bf16.msra.mxu0 %v1868
    %2279 = vmatmul.bf16.gmra.mxu0 %v1306
    %v2280 = vpop.f32.mrf.mxu0
    %v2281 = vadd.f32 %v2267, %v2280
    %v2282 = vpop.f32.mrf.mxu0
    %v2283 = vadd.f32 %v2269, %v2282
    %2284 = vdwg.mxu0
    %2285 = vmatpush.bf16.msra.mxu0 %v1928
    %2286 = vmatpush.bf16.msra.mxu0 %v1924
    %2287 = vmatpush.bf16.msra.mxu0 %v1920
    %2288 = vmatpush.bf16.msra.mxu0 %v1916
    %2289 = vmatpush.bf16.msra.mxu0 %v1912
    %2290 = vmatpush.bf16.msra.mxu0 %v1908
    %2291 = vmatpush.bf16.msra.mxu0 %v1904
    %2292 = vmatpush.bf16.msra.mxu0 %v1900
    %2293 = vmatmul.bf16.gmra.mxu0 %v1307
    %v2294 = vpop.f32.mrf.mxu0
    %v2295 = vadd.f32 %v2281, %v2294
    %v2296 = vpop.f32.mrf.mxu0
    %v2297 = vadd.f32 %v2283, %v2296
    %2298 = vdwg.mxu0
    %2299 = vmatpush.bf16.msra.mxu0 %v1960
    %2300 = vmatpush.bf16.msra.mxu0 %v1956
    %2301 = vmatpush.bf16.msra.mxu0 %v1952
    %2302 = vmatpush.bf16.msra.mxu0 %v1948
    %2303 = vmatpush.bf16.msra.mxu0 %v1944
    %2304 = vmatpush.bf16.msra.mxu0 %v1940
    %2305 = vmatpush.bf16.msra.mxu0 %v1936
    %2306 = vmatpush.bf16.msra.mxu0 %v1932
    %2307 = vmatmul.bf16.gmra.mxu0 %v1308
    %v2308 = vpop.f32.mrf.mxu0
    %v2309 = vadd.f32 %v2295, %v2308
    %v2310 = vpop.f32.mrf.mxu0
    %v2311 = vadd.f32 %v2297, %v2310
    %2312 = vdwg.mxu0
    %v2313 = vmax.f32 %v2141, 0.0
    %v2314 = vmax.f32 %v2197, 0.0
    %v2315 = vmax.f32 %v2253, 0.0
    %v2316 = vmax.f32 %v2309, 0.0
    %v2317 = vmax.f32 %v2143, 0.0
    %v2318 = vmax.f32 %v2199, 0.0
    %v2319 = vmax.f32 %v2255, 0.0
    %v2320 = vmax.f32 %v2311, 0.0
    %v2321 = vadd.f32 %v283, %v2313
    %v2322 = vadd.f32 %v284, %v2314
    %v2323 = vadd.f32 %v285, %v2315
    %v2324 = vadd.f32 %v286, %v2316
    %v2325 = vadd.f32 %v287, %v2317
    %v2326 = vadd.f32 %v288, %v2318
    %v2327 = vadd.f32 %v289, %v2319
    %v2328 = vadd.f32 %v290, %v2320
    %v2329 = vpack.c.bf16 %v2325, %v2321
    %v2330 = vpack.c.bf16 %v2326, %v2322
    %v2331 = vpack.c.bf16 %v2327, %v2323
    %v2332 = vpack.c.bf16 %v2328, %v2324
    %s2333 = scalar_lea.vmem [#allocation8], 2048
    %v2334 = vld [vmem:[%s2333] sm:$0xff]
    %v2335 = vld [vmem:[%s2333 + $0x8] sm:$0xff]
    %v2336 = vld [vmem:[%s2333 + $0x10] sm:$0xff]
    %v2337 = vld [vmem:[%s2333 + $0x18] sm:$0xff]
    %v2338 = vld [vmem:[%s2333 + $0x20] sm:$0xff]
    %v2339 = vld [vmem:[%s2333 + $0x28] sm:$0xff]
    %v2340 = vld [vmem:[%s2333 + $0x30] sm:$0xff]
    %v2341 = vld [vmem:[%s2333 + $0x38] sm:$0xff]
    %v2342 = vld [vmem:[%s2333 + $0x40] sm:$0xff]
    %v2343 = vld [vmem:[%s2333 + $0x48] sm:$0xff]
    %v2344 = vld [vmem:[%s2333 + $0x50] sm:$0xff]
    %v2345 = vld [vmem:[%s2333 + $0x58] sm:$0xff]
    %v2346 = vld [vmem:[%s2333 + $0x60] sm:$0xff]
    %v2347 = vld [vmem:[%s2333 + $0x68] sm:$0xff]
    %v2348 = vld [vmem:[%s2333 + $0x70] sm:$0xff]
    %v2349 = vld [vmem:[%s2333 + $0x78] sm:$0xff]
    %v2350 = vld [vmem:[%s2333 + $0x80] sm:$0xff]
    %v2351 = vld [vmem:[%s2333 + $0x88] sm:$0xff]
    %v2352 = vld [vmem:[%s2333 + $0x90] sm:$0xff]
    %v2353 = vld [vmem:[%s2333 + $0x98] sm:$0xff]
    %v2354 = vld [vmem:[%s2333 + $0xa0] sm:$0xff]
    %v2355 = vld [vmem:[%s2333 + $0xa8] sm:$0xff]
    %v2356 = vld [vmem:[%s2333 + $0xb0] sm:$0xff]
    %v2357 = vld [vmem:[%s2333 + $0xb8] sm:$0xff]
    %v2358 = vld [vmem:[%s2333 + $0xc0] sm:$0xff]
    %v2359 = vld [vmem:[%s2333 + $0xc8] sm:$0xff]
    %v2360 = vld [vmem:[%s2333 + $0xd0] sm:$0xff]
    %v2361 = vld [vmem:[%s2333 + $0xd8] sm:$0xff]
    %v2362 = vld [vmem:[%s2333 + $0xe0] sm:$0xff]
    %v2363 = vld [vmem:[%s2333 + $0xe8] sm:$0xff]
    %v2364 = vld [vmem:[%s2333 + $0xf0] sm:$0xff]
    %v2365 = vld [vmem:[%s2333 + $0xf8] sm:$0xff]
    %v2366 = vld [vmem:[%s2333 + $0x100] sm:$0xff]
    %v2367 = vld [vmem:[%s2333 + $0x108] sm:$0xff]
    %v2368 = vld [vmem:[%s2333 + $0x110] sm:$0xff]
    %v2369 = vld [vmem:[%s2333 + $0x118] sm:$0xff]
    %v2370 = vld [vmem:[%s2333 + $0x120] sm:$0xff]
    %v2371 = vld [vmem:[%s2333 + $0x128] sm:$0xff]
    %v2372 = vld [vmem:[%s2333 + $0x130] sm:$0xff]
    %v2373 = vld [vmem:[%s2333 + $0x138] sm:$0xff]
    %v2374 = vld [vmem:[%s2333 + $0x140] sm:$0xff]
    %v2375 = vld [vmem:[%s2333 + $0x148] sm:$0xff]
    %v2376 = vld [vmem:[%s2333 + $0x150] sm:$0xff]
    %v2377 = vld [vmem:[%s2333 + $0x158] sm:$0xff]
    %v2378 = vld [vmem:[%s2333 + $0x160] sm:$0xff]
    %v2379 = vld [vmem:[%s2333 + $0x168] sm:$0xff]
    %v2380 = vld [vmem:[%s2333 + $0x170] sm:$0xff]
    %v2381 = vld [vmem:[%s2333 + $0x178] sm:$0xff]
    %v2382 = vld [vmem:[%s2333 + $0x180] sm:$0xff]
    %v2383 = vld [vmem:[%s2333 + $0x188] sm:$0xff]
    %v2384 = vld [vmem:[%s2333 + $0x190] sm:$0xff]
    %v2385 = vld [vmem:[%s2333 + $0x198] sm:$0xff]
    %v2386 = vld [vmem:[%s2333 + $0x1a0] sm:$0xff]
    %v2387 = vld [vmem:[%s2333 + $0x1a8] sm:$0xff]
    %v2388 = vld [vmem:[%s2333 + $0x1b0] sm:$0xff]
    %v2389 = vld [vmem:[%s2333 + $0x1b8] sm:$0xff]
    %v2390 = vld [vmem:[%s2333 + $0x1c0] sm:$0xff]
    %v2391 = vld [vmem:[%s2333 + $0x1c8] sm:$0xff]
    %v2392 = vld [vmem:[%s2333 + $0x1d0] sm:$0xff]
    %v2393 = vld [vmem:[%s2333 + $0x1d8] sm:$0xff]
    %v2394 = vld [vmem:[%s2333 + $0x1e0] sm:$0xff]
    %v2395 = vld [vmem:[%s2333 + $0x1e8] sm:$0xff]
    %v2396 = vld [vmem:[%s2333 + $0x1f0] sm:$0xff]
    %v2397 = vld [vmem:[%s2333 + $0x1f8] sm:$0xff]
    %v2398 = vld [vmem:[%s2333 + $0x200] sm:$0xff]
    %v2399 = vld [vmem:[%s2333 + $0x208] sm:$0xff]
    %v2400 = vld [vmem:[%s2333 + $0x210] sm:$0xff]
    %v2401 = vld [vmem:[%s2333 + $0x218] sm:$0xff]
    %v2402 = vld [vmem:[%s2333 + $0x220] sm:$0xff]
    %v2403 = vld [vmem:[%s2333 + $0x228] sm:$0xff]
    %v2404 = vld [vmem:[%s2333 + $0x230] sm:$0xff]
    %v2405 = vld [vmem:[%s2333 + $0x238] sm:$0xff]
    %v2406 = vld [vmem:[%s2333 + $0x240] sm:$0xff]
    %v2407 = vld [vmem:[%s2333 + $0x248] sm:$0xff]
    %v2408 = vld [vmem:[%s2333 + $0x250] sm:$0xff]
    %v2409 = vld [vmem:[%s2333 + $0x258] sm:$0xff]
    %v2410 = vld [vmem:[%s2333 + $0x260] sm:$0xff]
    %v2411 = vld [vmem:[%s2333 + $0x268] sm:$0xff]
    %v2412 = vld [vmem:[%s2333 + $0x270] sm:$0xff]
    %v2413 = vld [vmem:[%s2333 + $0x278] sm:$0xff]
    %v2414 = vld [vmem:[%s2333 + $0x280] sm:$0xff]
    %v2415 = vld [vmem:[%s2333 + $0x288] sm:$0xff]
    %v2416 = vld [vmem:[%s2333 + $0x290] sm:$0xff]
    %v2417 = vld [vmem:[%s2333 + $0x298] sm:$0xff]
    %v2418 = vld [vmem:[%s2333 + $0x2a0] sm:$0xff]
    %v2419 = vld [vmem:[%s2333 + $0x2a8] sm:$0xff]
    %v2420 = vld [vmem:[%s2333 + $0x2b0] sm:$0xff]
    %v2421 = vld [vmem:[%s2333 + $0x2b8] sm:$0xff]
    %v2422 = vld [vmem:[%s2333 + $0x2c0] sm:$0xff]
    %v2423 = vld [vmem:[%s2333 + $0x2c8] sm:$0xff]
    %v2424 = vld [vmem:[%s2333 + $0x2d0] sm:$0xff]
    %v2425 = vld [vmem:[%s2333 + $0x2d8] sm:$0xff]
    %v2426 = vld [vmem:[%s2333 + $0x2e0] sm:$0xff]
    %v2427 = vld [vmem:[%s2333 + $0x2e8] sm:$0xff]
    %v2428 = vld [vmem:[%s2333 + $0x2f0] sm:$0xff]
    %v2429 = vld [vmem:[%s2333 + $0x2f8] sm:$0xff]
    %v2430 = vld [vmem:[%s2333 + $0x300] sm:$0xff]
    %v2431 = vld [vmem:[%s2333 + $0x308] sm:$0xff]
    %v2432 = vld [vmem:[%s2333 + $0x310] sm:$0xff]
    %v2433 = vld [vmem:[%s2333 + $0x318] sm:$0xff]
    %v2434 = vld [vmem:[%s2333 + $0x320] sm:$0xff]
    %v2435 = vld [vmem:[%s2333 + $0x328] sm:$0xff]
    %v2436 = vld [vmem:[%s2333 + $0x330] sm:$0xff]
    %v2437 = vld [vmem:[%s2333 + $0x338] sm:$0xff]
    %v2438 = vld [vmem:[%s2333 + $0x340] sm:$0xff]
    %v2439 = vld [vmem:[%s2333 + $0x348] sm:$0xff]
    %v2440 = vld [vmem:[%s2333 + $0x350] sm:$0xff]
    %v2441 = vld [vmem:[%s2333 + $0x358] sm:$0xff]
    %v2442 = vld [vmem:[%s2333 + $0x360] sm:$0xff]
    %v2443 = vld [vmem:[%s2333 + $0x368] sm:$0xff]
    %v2444 = vld [vmem:[%s2333 + $0x370] sm:$0xff]
    %v2445 = vld [vmem:[%s2333 + $0x378] sm:$0xff]
    %v2446 = vld [vmem:[%s2333 + $0x380] sm:$0xff]
    %v2447 = vld [vmem:[%s2333 + $0x388] sm:$0xff]
    %v2448 = vld [vmem:[%s2333 + $0x390] sm:$0xff]
    %v2449 = vld [vmem:[%s2333 + $0x398] sm:$0xff]
    %v2450 = vld [vmem:[%s2333 + $0x3a0] sm:$0xff]
    %v2451 = vld [vmem:[%s2333 + $0x3a8] sm:$0xff]
    %v2452 = vld [vmem:[%s2333 + $0x3b0] sm:$0xff]
    %v2453 = vld [vmem:[%s2333 + $0x3b8] sm:$0xff]
    %v2454 = vld [vmem:[%s2333 + $0x3c0] sm:$0xff]
    %v2455 = vld [vmem:[%s2333 + $0x3c8] sm:$0xff]
    %v2456 = vld [vmem:[%s2333 + $0x3d0] sm:$0xff]
    %v2457 = vld [vmem:[%s2333 + $0x3d8] sm:$0xff]
    %v2458 = vld [vmem:[%s2333 + $0x3e0] sm:$0xff]
    %v2459 = vld [vmem:[%s2333 + $0x3e8] sm:$0xff]
    %v2460 = vld [vmem:[%s2333 + $0x3f0] sm:$0xff]
    %v2461 = vld [vmem:[%s2333 + $0x3f8] sm:$0xff]
    %s2462 = scalar_lea.vmem [#allocation10], 8
    %v2463 = vld [vmem:[%s2462] sm:$0xf]
    %v2465 = vperm.slane %v2463, 0
    %v2466 = vperm.slane %v2463, 1
    %v2467 = vperm.slane %v2463, 2
    %v2468 = vperm.slane %v2463, 3
    %v2601 = vunpack.c.l.b16 %v2334
    %v2602 = vunpack.c.h.b16 %v2334
    %v2603 = vunpack.c.l.b16 %v2335
    %v2604 = vunpack.c.h.b16 %v2335
    %v2605 = vunpack.c.l.b16 %v2336
    %v2606 = vunpack.c.h.b16 %v2336
    %v2607 = vunpack.c.l.b16 %v2337
    %v2608 = vunpack.c.h.b16 %v2337
    %v2609 = vunpack.c.l.b16 %v2338
    %v2610 = vunpack.c.h.b16 %v2338
    %v2611 = vunpack.c.l.b16 %v2339
    %v2612 = vunpack.c.h.b16 %v2339
    %v2613 = vunpack.c.l.b16 %v2340
    %v2614 = vunpack.c.h.b16 %v2340
    %v2615 = vunpack.c.l.b16 %v2341
    %v2616 = vunpack.c.h.b16 %v2341
    %v2617 = vunpack.c.l.b16 %v2342
    %v2618 = vunpack.c.h.b16 %v2342
    %v2619 = vunpack.c.l.b16 %v2343
    %v2620 = vunpack.c.h.b16 %v2343
    %v2621 = vunpack.c.l.b16 %v2344
    %v2622 = vunpack.c.h.b16 %v2344
    %v2623 = vunpack.c.l.b16 %v2345
    %v2624 = vunpack.c.h.b16 %v2345
    %v2625 = vunpack.c.l.b16 %v2346
    %v2626 = vunpack.c.h.b16 %v2346
    %v2627 = vunpack.c.l.b16 %v2347
    %v2628 = vunpack.c.h.b16 %v2347
    %v2629 = vunpack.c.l.b16 %v2348
    %v2630 = vunpack.c.h.b16 %v2348
    %v2631 = vunpack.c.l.b16 %v2349
    %v2632 = vunpack.c.h.b16 %v2349
    %v2633 = vunpack.c.l.b16 %v2350
    %v2634 = vunpack.c.h.b16 %v2350
    %v2635 = vunpack.c.l.b16 %v2351
    %v2636 = vunpack.c.h.b16 %v2351
    %v2637 = vunpack.c.l.b16 %v2352
    %v2638 = vunpack.c.h.b16 %v2352
    %v2639 = vunpack.c.l.b16 %v2353
    %v2640 = vunpack.c.h.b16 %v2353
    %v2641 = vunpack.c.l.b16 %v2354
    %v2642 = vunpack.c.h.b16 %v2354
    %v2643 = vunpack.c.l.b16 %v2355
    %v2644 = vunpack.c.h.b16 %v2355
    %v2645 = vunpack.c.l.b16 %v2356
    %v2646 = vunpack.c.h.b16 %v2356
    %v2647 = vunpack.c.l.b16 %v2357
    %v2648 = vunpack.c.h.b16 %v2357
    %v2649 = vunpack.c.l.b16 %v2358
    %v2650 = vunpack.c.h.b16 %v2358
    %v2651 = vunpack.c.l.b16 %v2359
    %v2652 = vunpack.c.h.b16 %v2359
    %v2653 = vunpack.c.l.b16 %v2360
    %v2654 = vunpack.c.h.b16 %v2360
    %v2655 = vunpack.c.l.b16 %v2361
    %v2656 = vunpack.c.h.b16 %v2361
    %v2657 = vunpack.c.l.b16 %v2362
    %v2658 = vunpack.c.h.b16 %v2362
    %v2659 = vunpack.c.l.b16 %v2363
    %v2660 = vunpack.c.h.b16 %v2363
    %v2661 = vunpack.c.l.b16 %v2364
    %v2662 = vunpack.c.h.b16 %v2364
    %v2663 = vunpack.c.l.b16 %v2365
    %v2664 = vunpack.c.h.b16 %v2365
    %v2665 = vunpack.c.l.b16 %v2366
    %v2666 = vunpack.c.h.b16 %v2366
    %v2667 = vunpack.c.l.b16 %v2367
    %v2668 = vunpack.c.h.b16 %v2367
    %v2669 = vunpack.c.l.b16 %v2368
    %v2670 = vunpack.c.h.b16 %v2368
    %v2671 = vunpack.c.l.b16 %v2369
    %v2672 = vunpack.c.h.b16 %v2369
    %v2673 = vunpack.c.l.b16 %v2370
    %v2674 = vunpack.c.h.b16 %v2370
    %v2675 = vunpack.c.l.b16 %v2371
    %v2676 = vunpack.c.h.b16 %v2371
    %v2677 = vunpack.c.l.b16 %v2372
    %v2678 = vunpack.c.h.b16 %v2372
    %v2679 = vunpack.c.l.b16 %v2373
    %v2680 = vunpack.c.h.b16 %v2373
    %v2681 = vunpack.c.l.b16 %v2374
    %v2682 = vunpack.c.h.b16 %v2374
    %v2683 = vunpack.c.l.b16 %v2375
    %v2684 = vunpack.c.h.b16 %v2375
    %v2685 = vunpack.c.l.b16 %v2376
    %v2686 = vunpack.c.h.b16 %v2376
    %v2687 = vunpack.c.l.b16 %v2377
    %v2688 = vunpack.c.h.b16 %v2377
    %v2689 = vunpack.c.l.b16 %v2378
    %v2690 = vunpack.c.h.b16 %v2378
    %v2691 = vunpack.c.l.b16 %v2379
    %v2692 = vunpack.c.h.b16 %v2379
    %v2693 = vunpack.c.l.b16 %v2380
    %v2694 = vunpack.c.h.b16 %v2380
    %v2695 = vunpack.c.l.b16 %v2381
    %v2696 = vunpack.c.h.b16 %v2381
    %v2697 = vunpack.c.l.b16 %v2382
    %v2698 = vunpack.c.h.b16 %v2382
    %v2699 = vunpack.c.l.b16 %v2383
    %v2700 = vunpack.c.h.b16 %v2383
    %v2701 = vunpack.c.l.b16 %v2384
    %v2702 = vunpack.c.h.b16 %v2384
    %v2703 = vunpack.c.l.b16 %v2385
    %v2704 = vunpack.c.h.b16 %v2385
    %v2705 = vunpack.c.l.b16 %v2386
    %v2706 = vunpack.c.h.b16 %v2386
    %v2707 = vunpack.c.l.b16 %v2387
    %v2708 = vunpack.c.h.b16 %v2387
    %v2709 = vunpack.c.l.b16 %v2388
    %v2710 = vunpack.c.h.b16 %v2388
    %v2711 = vunpack.c.l.b16 %v2389
    %v2712 = vunpack.c.h.b16 %v2389
    %v2713 = vunpack.c.l.b16 %v2390
    %v2714 = vunpack.c.h.b16 %v2390
    %v2715 = vunpack.c.l.b16 %v2391
    %v2716 = vunpack.c.h.b16 %v2391
    %v2717 = vunpack.c.l.b16 %v2392
    %v2718 = vunpack.c.h.b16 %v2392
    %v2719 = vunpack.c.l.b16 %v2393
    %v2720 = vunpack.c.h.b16 %v2393
    %v2721 = vunpack.c.l.b16 %v2394
    %v2722 = vunpack.c.h.b16 %v2394
    %v2723 = vunpack.c.l.b16 %v2395
    %v2724 = vunpack.c.h.b16 %v2395
    %v2725 = vunpack.c.l.b16 %v2396
    %v2726 = vunpack.c.h.b16 %v2396
    %v2727 = vunpack.c.l.b16 %v2397
    %v2728 = vunpack.c.h.b16 %v2397
    %v2729 = vunpack.c.l.b16 %v2398
    %v2730 = vunpack.c.h.b16 %v2398
    %v2731 = vunpack.c.l.b16 %v2399
    %v2732 = vunpack.c.h.b16 %v2399
    %v2733 = vunpack.c.l.b16 %v2400
    %v2734 = vunpack.c.h.b16 %v2400
    %v2735 = vunpack.c.l.b16 %v2401
    %v2736 = vunpack.c.h.b16 %v2401
    %v2737 = vunpack.c.l.b16 %v2402
    %v2738 = vunpack.c.h.b16 %v2402
    %v2739 = vunpack.c.l.b16 %v2403
    %v2740 = vunpack.c.h.b16 %v2403
    %v2741 = vunpack.c.l.b16 %v2404
    %v2742 = vunpack.c.h.b16 %v2404
    %v2743 = vunpack.c.l.b16 %v2405
    %v2744 = vunpack.c.h.b16 %v2405
    %v2745 = vunpack.c.l.b16 %v2406
    %v2746 = vunpack.c.h.b16 %v2406
    %v2747 = vunpack.c.l.b16 %v2407
    %v2748 = vunpack.c.h.b16 %v2407
    %v2749 = vunpack.c.l.b16 %v2408
    %v2750 = vunpack.c.h.b16 %v2408
    %v2751 = vunpack.c.l.b16 %v2409
    %v2752 = vunpack.c.h.b16 %v2409
    %v2753 = vunpack.c.l.b16 %v2410
    %v2754 = vunpack.c.h.b16 %v2410
    %v2755 = vunpack.c.l.b16 %v2411
    %v2756 = vunpack.c.h.b16 %v2411
    %v2757 = vunpack.c.l.b16 %v2412
    %v2758 = vunpack.c.h.b16 %v2412
    %v2759 = vunpack.c.l.b16 %v2413
    %v2760 = vunpack.c.h.b16 %v2413
    %v2761 = vunpack.c.l.b16 %v2414
    %v2762 = vunpack.c.h.b16 %v2414
    %v2763 = vunpack.c.l.b16 %v2415
    %v2764 = vunpack.c.h.b16 %v2415
    %v2765 = vunpack.c.l.b16 %v2416
    %v2766 = vunpack.c.h.b16 %v2416
    %v2767 = vunpack.c.l.b16 %v2417
    %v2768 = vunpack.c.h.b16 %v2417
    %v2769 = vunpack.c.l.b16 %v2418
    %v2770 = vunpack.c.h.b16 %v2418
    %v2771 = vunpack.c.l.b16 %v2419
    %v2772 = vunpack.c.h.b16 %v2419
    %v2773 = vunpack.c.l.b16 %v2420
    %v2774 = vunpack.c.h.b16 %v2420
    %v2775 = vunpack.c.l.b16 %v2421
    %v2776 = vunpack.c.h.b16 %v2421
    %v2777 = vunpack.c.l.b16 %v2422
    %v2778 = vunpack.c.h.b16 %v2422
    %v2779 = vunpack.c.l.b16 %v2423
    %v2780 = vunpack.c.h.b16 %v2423
    %v2781 = vunpack.c.l.b16 %v2424
    %v2782 = vunpack.c.h.b16 %v2424
    %v2783 = vunpack.c.l.b16 %v2425
    %v2784 = vunpack.c.h.b16 %v2425
    %v2785 = vunpack.c.l.b16 %v2426
    %v2786 = vunpack.c.h.b16 %v2426
    %v2787 = vunpack.c.l.b16 %v2427
    %v2788 = vunpack.c.h.b16 %v2427
    %v2789 = vunpack.c.l.b16 %v2428
    %v2790 = vunpack.c.h.b16 %v2428
    %v2791 = vunpack.c.l.b16 %v2429
    %v2792 = vunpack.c.h.b16 %v2429
    %v2793 = vunpack.c.l.b16 %v2430
    %v2794 = vunpack.c.h.b16 %v2430
    %v2795 = vunpack.c.l.b16 %v2431
    %v2796 = vunpack.c.h.b16 %v2431
    %v2797 = vunpack.c.l.b16 %v2432
    %v2798 = vunpack.c.h.b16 %v2432
    %v2799 = vunpack.c.l.b16 %v2433
    %v2800 = vunpack.c.h.b16 %v2433
    %v2801 = vunpack.c.l.b16 %v2434
    %v2802 = vunpack.c.h.b16 %v2434
    %v2803 = vunpack.c.l.b16 %v2435
    %v2804 = vunpack.c.h.b16 %v2435
    %v2805 = vunpack.c.l.b16 %v2436
    %v2806 = vunpack.c.h.b16 %v2436
    %v2807 = vunpack.c.l.b16 %v2437
    %v2808 = vunpack.c.h.b16 %v2437
    %v2809 = vunpack.c.l.b16 %v2438
    %v2810 = vunpack.c.h.b16 %v2438
    %v2811 = vunpack.c.l.b16 %v2439
    %v2812 = vunpack.c.h.b16 %v2439
    %v2813 = vunpack.c.l.b16 %v2440
    %v2814 = vunpack.c.h.b16 %v2440
    %v2815 = vunpack.c.l.b16 %v2441
    %v2816 = vunpack.c.h.b16 %v2441
    %v2817 = vunpack.c.l.b16 %v2442
    %v2818 = vunpack.c.h.b16 %v2442
    %v2819 = vunpack.c.l.b16 %v2443
    %v2820 = vunpack.c.h.b16 %v2443
    %v2821 = vunpack.c.l.b16 %v2444
    %v2822 = vunpack.c.h.b16 %v2444
    %v2823 = vunpack.c.l.b16 %v2445
    %v2824 = vunpack.c.h.b16 %v2445
    %v2825 = vunpack.c.l.b16 %v2446
    %v2826 = vunpack.c.h.b16 %v2446
    %v2827 = vunpack.c.l.b16 %v2447
    %v2828 = vunpack.c.h.b16 %v2447
    %v2829 = vunpack.c.l.b16 %v2448
    %v2830 = vunpack.c.h.b16 %v2448
    %v2831 = vunpack.c.l.b16 %v2449
    %v2832 = vunpack.c.h.b16 %v2449
    %v2833 = vunpack.c.l.b16 %v2450
    %v2834 = vunpack.c.h.b16 %v2450
    %v2835 = vunpack.c.l.b16 %v2451
    %v2836 = vunpack.c.h.b16 %v2451
    %v2837 = vunpack.c.l.b16 %v2452
    %v2838 = vunpack.c.h.b16 %v2452
    %v2839 = vunpack.c.l.b16 %v2453
    %v2840 = vunpack.c.h.b16 %v2453
    %v2841 = vunpack.c.l.b16 %v2454
    %v2842 = vunpack.c.h.b16 %v2454
    %v2843 = vunpack.c.l.b16 %v2455
    %v2844 = vunpack.c.h.b16 %v2455
    %v2845 = vunpack.c.l.b16 %v2456
    %v2846 = vunpack.c.h.b16 %v2456
    %v2847 = vunpack.c.l.b16 %v2457
    %v2848 = vunpack.c.h.b16 %v2457
    %v2849 = vunpack.c.l.b16 %v2458
    %v2850 = vunpack.c.h.b16 %v2458
    %v2851 = vunpack.c.l.b16 %v2459
    %v2852 = vunpack.c.h.b16 %v2459
    %v2853 = vunpack.c.l.b16 %v2460
    %v2854 = vunpack.c.h.b16 %v2460
    %v2855 = vunpack.c.l.b16 %v2461
    %v2856 = vunpack.c.h.b16 %v2461
    %v2857 = vpack.c.b16 %v2605, %v2601
    %v2858 = vpack.c.b16 %v2606, %v2602
    %v2859 = vpack.c.b16 %v2607, %v2603
    %v2860 = vpack.c.b16 %v2608, %v2604
    %v2861 = vpack.c.b16 %v2613, %v2609
    %v2862 = vpack.c.b16 %v2614, %v2610
    %v2863 = vpack.c.b16 %v2615, %v2611
    %v2864 = vpack.c.b16 %v2616, %v2612
    %v2865 = vpack.c.b16 %v2621, %v2617
    %v2866 = vpack.c.b16 %v2622, %v2618
    %v2867 = vpack.c.b16 %v2623, %v2619
    %v2868 = vpack.c.b16 %v2624, %v2620
    %v2869 = vpack.c.b16 %v2629, %v2625
    %v2870 = vpack.c.b16 %v2630, %v2626
    %v2871 = vpack.c.b16 %v2631, %v2627
    %v2872 = vpack.c.b16 %v2632, %v2628
    %v2873 = vpack.c.b16 %v2637, %v2633
    %v2874 = vpack.c.b16 %v2638, %v2634
    %v2875 = vpack.c.b16 %v2639, %v2635
    %v2876 = vpack.c.b16 %v2640, %v2636
    %v2877 = vpack.c.b16 %v2645, %v2641
    %v2878 = vpack.c.b16 %v2646, %v2642
    %v2879 = vpack.c.b16 %v2647, %v2643
    %v2880 = vpack.c.b16 %v2648, %v2644
    %v2881 = vpack.c.b16 %v2653, %v2649
    %v2882 = vpack.c.b16 %v2654, %v2650
    %v2883 = vpack.c.b16 %v2655, %v2651
    %v2884 = vpack.c.b16 %v2656, %v2652
    %v2885 = vpack.c.b16 %v2661, %v2657
    %v2886 = vpack.c.b16 %v2662, %v2658
    %v2887 = vpack.c.b16 %v2663, %v2659
    %v2888 = vpack.c.b16 %v2664, %v2660
    %v2889 = vpack.c.b16 %v2669, %v2665
    %v2890 = vpack.c.b16 %v2670, %v2666
    %v2891 = vpack.c.b16 %v2671, %v2667
    %v2892 = vpack.c.b16 %v2672, %v2668
    %v2893 = vpack.c.b16 %v2677, %v2673
    %v2894 = vpack.c.b16 %v2678, %v2674
    %v2895 = vpack.c.b16 %v2679, %v2675
    %v2896 = vpack.c.b16 %v2680, %v2676
    %v2897 = vpack.c.b16 %v2685, %v2681
    %v2898 = vpack.c.b16 %v2686, %v2682
    %v2899 = vpack.c.b16 %v2687, %v2683
    %v2900 = vpack.c.b16 %v2688, %v2684
    %v2901 = vpack.c.b16 %v2693, %v2689
    %v2902 = vpack.c.b16 %v2694, %v2690
    %v2903 = vpack.c.b16 %v2695, %v2691
    %v2904 = vpack.c.b16 %v2696, %v2692
    %v2905 = vpack.c.b16 %v2701, %v2697
    %v2906 = vpack.c.b16 %v2702, %v2698
    %v2907 = vpack.c.b16 %v2703, %v2699
    %v2908 = vpack.c.b16 %v2704, %v2700
    %v2909 = vpack.c.b16 %v2709, %v2705
    %v2910 = vpack.c.b16 %v2710, %v2706
    %v2911 = vpack.c.b16 %v2711, %v2707
    %v2912 = vpack.c.b16 %v2712, %v2708
    %v2913 = vpack.c.b16 %v2717, %v2713
    %v2914 = vpack.c.b16 %v2718, %v2714
    %v2915 = vpack.c.b16 %v2719, %v2715
    %v2916 = vpack.c.b16 %v2720, %v2716
    %v2917 = vpack.c.b16 %v2725, %v2721
    %v2918 = vpack.c.b16 %v2726, %v2722
    %v2919 = vpack.c.b16 %v2727, %v2723
    %v2920 = vpack.c.b16 %v2728, %v2724
    %v2921 = vpack.c.b16 %v2733, %v2729
    %v2922 = vpack.c.b16 %v2734, %v2730
    %v2923 = vpack.c.b16 %v2735, %v2731
    %v2924 = vpack.c.b16 %v2736, %v2732
    %v2925 = vpack.c.b16 %v2741, %v2737
    %v2926 = vpack.c.b16 %v2742, %v2738
    %v2927 = vpack.c.b16 %v2743, %v2739
    %v2928 = vpack.c.b16 %v2744, %v2740
    %v2929 = vpack.c.b16 %v2749, %v2745
    %v2930 = vpack.c.b16 %v2750, %v2746
    %v2931 = vpack.c.b16 %v2751, %v2747
    %v2932 = vpack.c.b16 %v2752, %v2748
    %v2933 = vpack.c.b16 %v2757, %v2753
    %v2934 = vpack.c.b16 %v2758, %v2754
    %v2935 = vpack.c.b16 %v2759, %v2755
    %v2936 = vpack.c.b16 %v2760, %v2756
    %v2937 = vpack.c.b16 %v2765, %v2761
    %v2938 = vpack.c.b16 %v2766, %v2762
    %v2939 = vpack.c.b16 %v2767, %v2763
    %v2940 = vpack.c.b16 %v2768, %v2764
    %v2941 = vpack.c.b16 %v2773, %v2769
    %v2942 = vpack.c.b16 %v2774, %v2770
    %v2943 = vpack.c.b16 %v2775, %v2771
    %v2944 = vpack.c.b16 %v2776, %v2772
    %v2945 = vpack.c.b16 %v2781, %v2777
    %v2946 = vpack.c.b16 %v2782, %v2778
    %v2947 = vpack.c.b16 %v2783, %v2779
    %v2948 = vpack.c.b16 %v2784, %v2780
    %v2949 = vpack.c.b16 %v2789, %v2785
    %v2950 = vpack.c.b16 %v2790, %v2786
    %v2951 = vpack.c.b16 %v2791, %v2787
    %v2952 = vpack.c.b16 %v2792, %v2788
    %v2953 = vpack.c.b16 %v2797, %v2793
    %v2954 = vpack.c.b16 %v2798, %v2794
    %v2955 = vpack.c.b16 %v2799, %v2795
    %v2956 = vpack.c.b16 %v2800, %v2796
    %v2957 = vpack.c.b16 %v2805, %v2801
    %v2958 = vpack.c.b16 %v2806, %v2802
    %v2959 = vpack.c.b16 %v2807, %v2803
    %v2960 = vpack.c.b16 %v2808, %v2804
    %v2961 = vpack.c.b16 %v2813, %v2809
    %v2962 = vpack.c.b16 %v2814, %v2810
    %v2963 = vpack.c.b16 %v2815, %v2811
    %v2964 = vpack.c.b16 %v2816, %v2812
    %v2965 = vpack.c.b16 %v2821, %v2817
    %v2966 = vpack.c.b16 %v2822, %v2818
    %v2967 = vpack.c.b16 %v2823, %v2819
    %v2968 = vpack.c.b16 %v2824, %v2820
    %v2969 = vpack.c.b16 %v2829, %v2825
    %v2970 = vpack.c.b16 %v2830, %v2826
    %v2971 = vpack.c.b16 %v2831, %v2827
    %v2972 = vpack.c.b16 %v2832, %v2828
    %v2973 = vpack.c.b16 %v2837, %v2833
    %v2974 = vpack.c.b16 %v2838, %v2834
    %v2975 = vpack.c.b16 %v2839, %v2835
    %v2976 = vpack.c.b16 %v2840, %v2836
    %v2977 = vpack.c.b16 %v2845, %v2841
    %v2978 = vpack.c.b16 %v2846, %v2842
    %v2979 = vpack.c.b16 %v2847, %v2843
    %v2980 = vpack.c.b16 %v2848, %v2844
    %v2981 = vpack.c.b16 %v2853, %v2849
    %v2982 = vpack.c.b16 %v2854, %v2850
    %v2983 = vpack.c.b16 %v2855, %v2851
    %v2984 = vpack.c.b16 %v2856, %v2852
    %3113 = vmatpush.bf16.msra.mxu0 %v2885
    %3114 = vmatpush.bf16.msra.mxu0 %v2881
    %3115 = vmatpush.bf16.msra.mxu0 %v2877
    %3116 = vmatpush.bf16.msra.mxu0 %v2873
    %3117 = vmatpush.bf16.msra.mxu0 %v2869
    %3118 = vmatpush.bf16.msra.mxu0 %v2865
    %3119 = vmatpush.bf16.msra.mxu0 %v2861
    %3120 = vmatpush.bf16.msra.mxu0 %v2857
    %3121 = vmatmul.bf16.gmra.mxu0 %v2329
    %v3122 = vpop.f32.mrf.mxu0
    %v3123 = vadd.f32 %v2465, %v3122
    %v3124 = vpop.f32.mrf.mxu0
    %v3125 = vadd.f32 %v2465, %v3124
    %3126 = vdwg.mxu0
    %3127 = vmatpush.bf16.msra.mxu0 %v2917
    %3128 = vmatpush.bf16.msra.mxu0 %v2913
    %3129 = vmatpush.bf16.msra.mxu0 %v2909
    %3130 = vmatpush.bf16.msra.mxu0 %v2905
    %3131 = vmatpush.bf16.msra.mxu0 %v2901
    %3132 = vmatpush.bf16.msra.mxu0 %v2897
    %3133 = vmatpush.bf16.msra.mxu0 %v2893
    %3134 = vmatpush.bf16.msra.mxu0 %v2889
    %3135 = vmatmul.bf16.gmra.mxu0 %v2330
    %v3136 = vpop.f32.mrf.mxu0
    %v3137 = vadd.f32 %v3123, %v3136
    %v3138 = vpop.f32.mrf.mxu0
    %v3139 = vadd.f32 %v3125, %v3138
    %3140 = vdwg.mxu0
    %3141 = vmatpush.bf16.msra.mxu0 %v2949
    %3142 = vmatpush.bf16.msra.mxu0 %v2945
    %3143 = vmatpush.bf16.msra.mxu0 %v2941
    %3144 = vmatpush.bf16.msra.mxu0 %v2937
    %3145 = vmatpush.bf16.msra.mxu0 %v2933
    %3146 = vmatpush.bf16.msra.mxu0 %v2929
    %3147 = vmatpush.bf16.msra.mxu0 %v2925
    %3148 = vmatpush.bf16.msra.mxu0 %v2921
    %3149 = vmatmul.bf16.gmra.mxu0 %v2331
    %v3150 = vpop.f32.mrf.mxu0
    %v3151 = vadd.f32 %v3137, %v3150
    %v3152 = vpop.f32.mrf.mxu0
    %v3153 = vadd.f32 %v3139, %v3152
    %3154 = vdwg.mxu0
    %3155 = vmatpush.bf16.msra.mxu0 %v2981
    %3156 = vmatpush.bf16.msra.mxu0 %v2977
    %3157 = vmatpush.bf16.msra.mxu0 %v2973
    %3158 = vmatpush.bf16.msra.mxu0 %v2969
    %3159 = vmatpush.bf16.msra.mxu0 %v2965
    %3160 = vmatpush.bf16.msra.mxu0 %v2961
    %3161 = vmatpush.bf16.msra.mxu0 %v2957
    %3162 = vmatpush.bf16.msra.mxu0 %v2953
    %3163 = vmatmul.bf16.gmra.mxu0 %v2332
    %v3164 = vpop.f32.mrf.mxu0
    %v3165 = vadd.f32 %v3151, %v3164
    %v3166 = vpop.f32.mrf.mxu0
    %v3167 = vadd.f32 %v3153, %v3166
    %3168 = vdwg.mxu0
    %3169 = vmatpush.bf16.msra.mxu0 %v2886
    %3170 = vmatpush.bf16.msra.mxu0 %v2882
    %3171 = vmatpush.bf16.msra.mxu0 %v2878
    %3172 = vmatpush.bf16.msra.mxu0 %v2874
    %3173 = vmatpush.bf16.msra.mxu0 %v2870
    %3174 = vmatpush.bf16.msra.mxu0 %v2866
    %3175 = vmatpush.bf16.msra.mxu0 %v2862
    %3176 = vmatpush.bf16.msra.mxu0 %v2858
    %3177 = vmatmul.bf16.gmra.mxu0 %v2329
    %v3178 = vpop.f32.mrf.mxu0
    %v3179 = vadd.f32 %v2466, %v3178
    %v3180 = vpop.f32.mrf.mxu0
    %v3181 = vadd.f32 %v2466, %v3180
    %3182 = vdwg.mxu0
    %3183 = vmatpush.bf16.msra.mxu0 %v2918
    %3184 = vmatpush.bf16.msra.mxu0 %v2914
    %3185 = vmatpush.bf16.msra.mxu0 %v2910
    %3186 = vmatpush.bf16.msra.mxu0 %v2906
    %3187 = vmatpush.bf16.msra.mxu0 %v2902
    %3188 = vmatpush.bf16.msra.mxu0 %v2898
    %3189 = vmatpush.bf16.msra.mxu0 %v2894
    %3190 = vmatpush.bf16.msra.mxu0 %v2890
    %3191 = vmatmul.bf16.gmra.mxu0 %v2330
    %v3192 = vpop.f32.mrf.mxu0
    %v3193 = vadd.f32 %v3179, %v3192
    %v3194 = vpop.f32.mrf.mxu0
    %v3195 = vadd.f32 %v3181, %v3194
    %3196 = vdwg.mxu0
    %3197 = vmatpush.bf16.msra.mxu0 %v2950
    %3198 = vmatpush.bf16.msra.mxu0 %v2946
    %3199 = vmatpush.bf16.msra.mxu0 %v2942
    %3200 = vmatpush.bf16.msra.mxu0 %v2938
    %3201 = vmatpush.bf16.msra.mxu0 %v2934
    %3202 = vmatpush.bf16.msra.mxu0 %v2930
    %3203 = vmatpush.bf16.msra.mxu0 %v2926
    %3204 = vmatpush.bf16.msra.mxu0 %v2922
    %3205 = vmatmul.bf16.gmra.mxu0 %v2331
    %v3206 = vpop.f32.mrf.mxu0
    %v3207 = vadd.f32 %v3193, %v3206
    %v3208 = vpop.f32.mrf.mxu0
    %v3209 = vadd.f32 %v3195, %v3208
    %3210 = vdwg.mxu0
    %3211 = vmatpush.bf16.msra.mxu0 %v2982
    %3212 = vmatpush.bf16.msra.mxu0 %v2978
    %3213 = vmatpush.bf16.msra.mxu0 %v2974
    %3214 = vmatpush.bf16.msra.mxu0 %v2970
    %3215 = vmatpush.bf16.msra.mxu0 %v2966
    %3216 = vmatpush.bf16.msra.mxu0 %v2962
    %3217 = vmatpush.bf16.msra.mxu0 %v2958
    %3218 = vmatpush.bf16.msra.mxu0 %v2954
    %3219 = vmatmul.bf16.gmra.mxu0 %v2332
    %v3220 = vpop.f32.mrf.mxu0
    %v3221 = vadd.f32 %v3207, %v3220
    %v3222 = vpop.f32.mrf.mxu0
    %v3223 = vadd.f32 %v3209, %v3222
    %3224 = vdwg.mxu0
    %3225 = vmatpush.bf16.msra.mxu0 %v2887
    %3226 = vmatpush.bf16.msra.mxu0 %v2883
    %3227 = vmatpush.bf16.msra.mxu0 %v2879
    %3228 = vmatpush.bf16.msra.mxu0 %v2875
    %3229 = vmatpush.bf16.msra.mxu0 %v2871
    %3230 = vmatpush.bf16.msra.mxu0 %v2867
    %3231 = vmatpush.bf16.msra.mxu0 %v2863
    %3232 = vmatpush.bf16.msra.mxu0 %v2859
    %3233 = vmatmul.bf16.gmra.mxu0 %v2329
    %v3234 = vpop.f32.mrf.mxu0
    %v3235 = vadd.f32 %v2467, %v3234
    %v3236 = vpop.f32.mrf.mxu0
    %v3237 = vadd.f32 %v2467, %v3236
    %3238 = vdwg.mxu0
    %3239 = vmatpush.bf16.msra.mxu0 %v2919
    %3240 = vmatpush.bf16.msra.mxu0 %v2915
    %3241 = vmatpush.bf16.msra.mxu0 %v2911
    %3242 = vmatpush.bf16.msra.mxu0 %v2907
    %3243 = vmatpush.bf16.msra.mxu0 %v2903
    %3244 = vmatpush.bf16.msra.mxu0 %v2899
    %3245 = vmatpush.bf16.msra.mxu0 %v2895
    %3246 = vmatpush.bf16.msra.mxu0 %v2891
    %3247 = vmatmul.bf16.gmra.mxu0 %v2330
    %v3248 = vpop.f32.mrf.mxu0
    %v3249 = vadd.f32 %v3235, %v3248
    %v3250 = vpop.f32.mrf.mxu0
    %v3251 = vadd.f32 %v3237, %v3250
    %3252 = vdwg.mxu0
    %3253 = vmatpush.bf16.msra.mxu0 %v2951
    %3254 = vmatpush.bf16.msra.mxu0 %v2947
    %3255 = vmatpush.bf16.msra.mxu0 %v2943
    %3256 = vmatpush.bf16.msra.mxu0 %v2939
    %3257 = vmatpush.bf16.msra.mxu0 %v2935
    %3258 = vmatpush.bf16.msra.mxu0 %v2931
    %3259 = vmatpush.bf16.msra.mxu0 %v2927
    %3260 = vmatpush.bf16.msra.mxu0 %v2923
    %3261 = vmatmul.bf16.gmra.mxu0 %v2331
    %v3262 = vpop.f32.mrf.mxu0
    %v3263 = vadd.f32 %v3249, %v3262
    %v3264 = vpop.f32.mrf.mxu0
    %v3265 = vadd.f32 %v3251, %v3264
    %3266 = vdwg.mxu0
    %3267 = vmatpush.bf16.msra.mxu0 %v2983
    %3268 = vmatpush.bf16.msra.mxu0 %v2979
    %3269 = vmatpush.bf16.msra.mxu0 %v2975
    %3270 = vmatpush.bf16.msra.mxu0 %v2971
    %3271 = vmatpush.bf16.msra.mxu0 %v2967
    %3272 = vmatpush.bf16.msra.mxu0 %v2963
    %3273 = vmatpush.bf16.msra.mxu0 %v2959
    %3274 = vmatpush.bf16.msra.mxu0 %v2955
    %3275 = vmatmul.bf16.gmra.mxu0 %v2332
    %v3276 = vpop.f32.mrf.mxu0
    %v3277 = vadd.f32 %v3263, %v3276
    %v3278 = vpop.f32.mrf.mxu0
    %v3279 = vadd.f32 %v3265, %v3278
    %3280 = vdwg.mxu0
    %3281 = vmatpush.bf16.msra.mxu0 %v2888
    %3282 = vmatpush.bf16.msra.mxu0 %v2884
    %3283 = vmatpush.bf16.msra.mxu0 %v2880
    %3284 = vmatpush.bf16.msra.mxu0 %v2876
    %3285 = vmatpush.bf16.msra.mxu0 %v2872
    %3286 = vmatpush.bf16.msra.mxu0 %v2868
    %3287 = vmatpush.bf16.msra.mxu0 %v2864
    %3288 = vmatpush.bf16.msra.mxu0 %v2860
    %3289 = vmatmul.bf16.gmra.mxu0 %v2329
    %v3290 = vpop.f32.mrf.mxu0
    %v3291 = vadd.f32 %v2468, %v3290
    %v3292 = vpop.f32.mrf.mxu0
    %v3293 = vadd.f32 %v2468, %v3292
    %3294 = vdwg.mxu0
    %3295 = vmatpush.bf16.msra.mxu0 %v2920
    %3296 = vmatpush.bf16.msra.mxu0 %v2916
    %3297 = vmatpush.bf16.msra.mxu0 %v2912
    %3298 = vmatpush.bf16.msra.mxu0 %v2908
    %3299 = vmatpush.bf16.msra.mxu0 %v2904
    %3300 = vmatpush.bf16.msra.mxu0 %v2900
    %3301 = vmatpush.bf16.msra.mxu0 %v2896
    %3302 = vmatpush.bf16.msra.mxu0 %v2892
    %3303 = vmatmul.bf16.gmra.mxu0 %v2330
    %v3304 = vpop.f32.mrf.mxu0
    %v3305 = vadd.f32 %v3291, %v3304
    %v3306 = vpop.f32.mrf.mxu0
    %v3307 = vadd.f32 %v3293, %v3306
    %3308 = vdwg.mxu0
    %3309 = vmatpush.bf16.msra.mxu0 %v2952
    %3310 = vmatpush.bf16.msra.mxu0 %v2948
    %3311 = vmatpush.bf16.msra.mxu0 %v2944
    %3312 = vmatpush.bf16.msra.mxu0 %v2940
    %3313 = vmatpush.bf16.msra.mxu0 %v2936
    %3314 = vmatpush.bf16.msra.mxu0 %v2932
    %3315 = vmatpush.bf16.msra.mxu0 %v2928
    %3316 = vmatpush.bf16.msra.mxu0 %v2924
    %3317 = vmatmul.bf16.gmra.mxu0 %v2331
    %v3318 = vpop.f32.mrf.mxu0
    %v3319 = vadd.f32 %v3305, %v3318
    %v3320 = vpop.f32.mrf.mxu0
    %v3321 = vadd.f32 %v3307, %v3320
    %3322 = vdwg.mxu0
    %3323 = vmatpush.bf16.msra.mxu0 %v2984
    %3324 = vmatpush.bf16.msra.mxu0 %v2980
    %3325 = vmatpush.bf16.msra.mxu0 %v2976
    %3326 = vmatpush.bf16.msra.mxu0 %v2972
    %3327 = vmatpush.bf16.msra.mxu0 %v2968
    %3328 = vmatpush.bf16.msra.mxu0 %v2964
    %3329 = vmatpush.bf16.msra.mxu0 %v2960
    %3330 = vmatpush.bf16.msra.mxu0 %v2956
    %3331 = vmatmul.bf16.gmra.mxu0 %v2332
    %v3332 = vpop.f32.mrf.mxu0
    %v3333 = vadd.f32 %v3319, %v3332
    %v3334 = vpop.f32.mrf.mxu0
    %v3335 = vadd.f32 %v3321, %v3334
    %3336 = vdwg.mxu0
    %v3337 = vmax.f32 %v3165, 0.0
    %v3338 = vmax.f32 %v3221, 0.0
    %v3339 = vmax.f32 %v3277, 0.0
    %v3340 = vmax.f32 %v3333, 0.0
    %v3341 = vmax.f32 %v3167, 0.0
    %v3342 = vmax.f32 %v3223, 0.0
    %v3343 = vmax.f32 %v3279, 0.0
    %v3344 = vmax.f32 %v3335, 0.0
    %v3345 = vpack.c.bf16 %v3341, %v3337
    %v3346 = vpack.c.bf16 %v3342, %v3338
    %v3347 = vpack.c.bf16 %v3343, %v3339
    %v3348 = vpack.c.bf16 %v3344, %v3340
    %s3349 = scalar_lea.vmem [#allocation8], 3072
    %v3350 = vld [vmem:[%s3349] sm:$0xff]
    %v3351 = vld [vmem:[%s3349 + $0x8] sm:$0xff]
    %v3352 = vld [vmem:[%s3349 + $0x10] sm:$0xff]
    %v3353 = vld [vmem:[%s3349 + $0x18] sm:$0xff]
    %v3354 = vld [vmem:[%s3349 + $0x20] sm:$0xff]
    %v3355 = vld [vmem:[%s3349 + $0x28] sm:$0xff]
    %v3356 = vld [vmem:[%s3349 + $0x30] sm:$0xff]
    %v3357 = vld [vmem:[%s3349 + $0x38] sm:$0xff]
    %v3358 = vld [vmem:[%s3349 + $0x40] sm:$0xff]
    %v3359 = vld [vmem:[%s3349 + $0x48] sm:$0xff]
    %v3360 = vld [vmem:[%s3349 + $0x50] sm:$0xff]
    %v3361 = vld [vmem:[%s3349 + $0x58] sm:$0xff]
    %v3362 = vld [vmem:[%s3349 + $0x60] sm:$0xff]
    %v3363 = vld [vmem:[%s3349 + $0x68] sm:$0xff]
    %v3364 = vld [vmem:[%s3349 + $0x70] sm:$0xff]
    %v3365 = vld [vmem:[%s3349 + $0x78] sm:$0xff]
    %v3366 = vld [vmem:[%s3349 + $0x80] sm:$0xff]
    %v3367 = vld [vmem:[%s3349 + $0x88] sm:$0xff]
    %v3368 = vld [vmem:[%s3349 + $0x90] sm:$0xff]
    %v3369 = vld [vmem:[%s3349 + $0x98] sm:$0xff]
    %v3370 = vld [vmem:[%s3349 + $0xa0] sm:$0xff]
    %v3371 = vld [vmem:[%s3349 + $0xa8] sm:$0xff]
    %v3372 = vld [vmem:[%s3349 + $0xb0] sm:$0xff]
    %v3373 = vld [vmem:[%s3349 + $0xb8] sm:$0xff]
    %v3374 = vld [vmem:[%s3349 + $0xc0] sm:$0xff]
    %v3375 = vld [vmem:[%s3349 + $0xc8] sm:$0xff]
    %v3376 = vld [vmem:[%s3349 + $0xd0] sm:$0xff]
    %v3377 = vld [vmem:[%s3349 + $0xd8] sm:$0xff]
    %v3378 = vld [vmem:[%s3349 + $0xe0] sm:$0xff]
    %v3379 = vld [vmem:[%s3349 + $0xe8] sm:$0xff]
    %v3380 = vld [vmem:[%s3349 + $0xf0] sm:$0xff]
    %v3381 = vld [vmem:[%s3349 + $0xf8] sm:$0xff]
    %v3382 = vld [vmem:[%s3349 + $0x100] sm:$0xff]
    %v3383 = vld [vmem:[%s3349 + $0x108] sm:$0xff]
    %v3384 = vld [vmem:[%s3349 + $0x110] sm:$0xff]
    %v3385 = vld [vmem:[%s3349 + $0x118] sm:$0xff]
    %v3386 = vld [vmem:[%s3349 + $0x120] sm:$0xff]
    %v3387 = vld [vmem:[%s3349 + $0x128] sm:$0xff]
    %v3388 = vld [vmem:[%s3349 + $0x130] sm:$0xff]
    %v3389 = vld [vmem:[%s3349 + $0x138] sm:$0xff]
    %v3390 = vld [vmem:[%s3349 + $0x140] sm:$0xff]
    %v3391 = vld [vmem:[%s3349 + $0x148] sm:$0xff]
    %v3392 = vld [vmem:[%s3349 + $0x150] sm:$0xff]
    %v3393 = vld [vmem:[%s3349 + $0x158] sm:$0xff]
    %v3394 = vld [vmem:[%s3349 + $0x160] sm:$0xff]
    %v3395 = vld [vmem:[%s3349 + $0x168] sm:$0xff]
    %v3396 = vld [vmem:[%s3349 + $0x170] sm:$0xff]
    %v3397 = vld [vmem:[%s3349 + $0x178] sm:$0xff]
    %v3398 = vld [vmem:[%s3349 + $0x180] sm:$0xff]
    %v3399 = vld [vmem:[%s3349 + $0x188] sm:$0xff]
    %v3400 = vld [vmem:[%s3349 + $0x190] sm:$0xff]
    %v3401 = vld [vmem:[%s3349 + $0x198] sm:$0xff]
    %v3402 = vld [vmem:[%s3349 + $0x1a0] sm:$0xff]
    %v3403 = vld [vmem:[%s3349 + $0x1a8] sm:$0xff]
    %v3404 = vld [vmem:[%s3349 + $0x1b0] sm:$0xff]
    %v3405 = vld [vmem:[%s3349 + $0x1b8] sm:$0xff]
    %v3406 = vld [vmem:[%s3349 + $0x1c0] sm:$0xff]
    %v3407 = vld [vmem:[%s3349 + $0x1c8] sm:$0xff]
    %v3408 = vld [vmem:[%s3349 + $0x1d0] sm:$0xff]
    %v3409 = vld [vmem:[%s3349 + $0x1d8] sm:$0xff]
    %v3410 = vld [vmem:[%s3349 + $0x1e0] sm:$0xff]
    %v3411 = vld [vmem:[%s3349 + $0x1e8] sm:$0xff]
    %v3412 = vld [vmem:[%s3349 + $0x1f0] sm:$0xff]
    %v3413 = vld [vmem:[%s3349 + $0x1f8] sm:$0xff]
    %v3414 = vld [vmem:[%s3349 + $0x200] sm:$0xff]
    %v3415 = vld [vmem:[%s3349 + $0x208] sm:$0xff]
    %v3416 = vld [vmem:[%s3349 + $0x210] sm:$0xff]
    %v3417 = vld [vmem:[%s3349 + $0x218] sm:$0xff]
    %v3418 = vld [vmem:[%s3349 + $0x220] sm:$0xff]
    %v3419 = vld [vmem:[%s3349 + $0x228] sm:$0xff]
    %v3420 = vld [vmem:[%s3349 + $0x230] sm:$0xff]
    %v3421 = vld [vmem:[%s3349 + $0x238] sm:$0xff]
    %v3422 = vld [vmem:[%s3349 + $0x240] sm:$0xff]
    %v3423 = vld [vmem:[%s3349 + $0x248] sm:$0xff]
    %v3424 = vld [vmem:[%s3349 + $0x250] sm:$0xff]
    %v3425 = vld [vmem:[%s3349 + $0x258] sm:$0xff]
    %v3426 = vld [vmem:[%s3349 + $0x260] sm:$0xff]
    %v3427 = vld [vmem:[%s3349 + $0x268] sm:$0xff]
    %v3428 = vld [vmem:[%s3349 + $0x270] sm:$0xff]
    %v3429 = vld [vmem:[%s3349 + $0x278] sm:$0xff]
    %v3430 = vld [vmem:[%s3349 + $0x280] sm:$0xff]
    %v3431 = vld [vmem:[%s3349 + $0x288] sm:$0xff]
    %v3432 = vld [vmem:[%s3349 + $0x290] sm:$0xff]
    %v3433 = vld [vmem:[%s3349 + $0x298] sm:$0xff]
    %v3434 = vld [vmem:[%s3349 + $0x2a0] sm:$0xff]
    %v3435 = vld [vmem:[%s3349 + $0x2a8] sm:$0xff]
    %v3436 = vld [vmem:[%s3349 + $0x2b0] sm:$0xff]
    %v3437 = vld [vmem:[%s3349 + $0x2b8] sm:$0xff]
    %v3438 = vld [vmem:[%s3349 + $0x2c0] sm:$0xff]
    %v3439 = vld [vmem:[%s3349 + $0x2c8] sm:$0xff]
    %v3440 = vld [vmem:[%s3349 + $0x2d0] sm:$0xff]
    %v3441 = vld [vmem:[%s3349 + $0x2d8] sm:$0xff]
    %v3442 = vld [vmem:[%s3349 + $0x2e0] sm:$0xff]
    %v3443 = vld [vmem:[%s3349 + $0x2e8] sm:$0xff]
    %v3444 = vld [vmem:[%s3349 + $0x2f0] sm:$0xff]
    %v3445 = vld [vmem:[%s3349 + $0x2f8] sm:$0xff]
    %v3446 = vld [vmem:[%s3349 + $0x300] sm:$0xff]
    %v3447 = vld [vmem:[%s3349 + $0x308] sm:$0xff]
    %v3448 = vld [vmem:[%s3349 + $0x310] sm:$0xff]
    %v3449 = vld [vmem:[%s3349 + $0x318] sm:$0xff]
    %v3450 = vld [vmem:[%s3349 + $0x320] sm:$0xff]
    %v3451 = vld [vmem:[%s3349 + $0x328] sm:$0xff]
    %v3452 = vld [vmem:[%s3349 + $0x330] sm:$0xff]
    %v3453 = vld [vmem:[%s3349 + $0x338] sm:$0xff]
    %v3454 = vld [vmem:[%s3349 + $0x340] sm:$0xff]
    %v3455 = vld [vmem:[%s3349 + $0x348] sm:$0xff]
    %v3456 = vld [vmem:[%s3349 + $0x350] sm:$0xff]
    %v3457 = vld [vmem:[%s3349 + $0x358] sm:$0xff]
    %v3458 = vld [vmem:[%s3349 + $0x360] sm:$0xff]
    %v3459 = vld [vmem:[%s3349 + $0x368] sm:$0xff]
    %v3460 = vld [vmem:[%s3349 + $0x370] sm:$0xff]
    %v3461 = vld [vmem:[%s3349 + $0x378] sm:$0xff]
    %v3462 = vld [vmem:[%s3349 + $0x380] sm:$0xff]
    %v3463 = vld [vmem:[%s3349 + $0x388] sm:$0xff]
    %v3464 = vld [vmem:[%s3349 + $0x390] sm:$0xff]
    %v3465 = vld [vmem:[%s3349 + $0x398] sm:$0xff]
    %v3466 = vld [vmem:[%s3349 + $0x3a0] sm:$0xff]
    %v3467 = vld [vmem:[%s3349 + $0x3a8] sm:$0xff]
    %v3468 = vld [vmem:[%s3349 + $0x3b0] sm:$0xff]
    %v3469 = vld [vmem:[%s3349 + $0x3b8] sm:$0xff]
    %v3470 = vld [vmem:[%s3349 + $0x3c0] sm:$0xff]
    %v3471 = vld [vmem:[%s3349 + $0x3c8] sm:$0xff]
    %v3472 = vld [vmem:[%s3349 + $0x3d0] sm:$0xff]
    %v3473 = vld [vmem:[%s3349 + $0x3d8] sm:$0xff]
    %v3474 = vld [vmem:[%s3349 + $0x3e0] sm:$0xff]
    %v3475 = vld [vmem:[%s3349 + $0x3e8] sm:$0xff]
    %v3476 = vld [vmem:[%s3349 + $0x3f0] sm:$0xff]
    %v3477 = vld [vmem:[%s3349 + $0x3f8] sm:$0xff]
    %s3478 = scalar_lea.vmem [#allocation10], 12
    %v3479 = vld [vmem:[%s3478] sm:$0xf]
    %v3481 = vperm.slane %v3479, 0
    %v3482 = vperm.slane %v3479, 1
    %v3483 = vperm.slane %v3479, 2
    %v3484 = vperm.slane %v3479, 3
    %v3617 = vunpack.c.l.b16 %v3350
    %v3618 = vunpack.c.h.b16 %v3350
    %v3619 = vunpack.c.l.b16 %v3351
    %v3620 = vunpack.c.h.b16 %v3351
    %v3621 = vunpack.c.l.b16 %v3352
    %v3622 = vunpack.c.h.b16 %v3352
    %v3623 = vunpack.c.l.b16 %v3353
    %v3624 = vunpack.c.h.b16 %v3353
    %v3625 = vunpack.c.l.b16 %v3354
    %v3626 = vunpack.c.h.b16 %v3354
    %v3627 = vunpack.c.l.b16 %v3355
    %v3628 = vunpack.c.h.b16 %v3355
    %v3629 = vunpack.c.l.b16 %v3356
    %v3630 = vunpack.c.h.b16 %v3356
    %v3631 = vunpack.c.l.b16 %v3357
    %v3632 = vunpack.c.h.b16 %v3357
    %v3633 = vunpack.c.l.b16 %v3358
    %v3634 = vunpack.c.h.b16 %v3358
    %v3635 = vunpack.c.l.b16 %v3359
    %v3636 = vunpack.c.h.b16 %v3359
    %v3637 = vunpack.c.l.b16 %v3360
    %v3638 = vunpack.c.h.b16 %v3360
    %v3639 = vunpack.c.l.b16 %v3361
    %v3640 = vunpack.c.h.b16 %v3361
    %v3641 = vunpack.c.l.b16 %v3362
    %v3642 = vunpack.c.h.b16 %v3362
    %v3643 = vunpack.c.l.b16 %v3363
    %v3644 = vunpack.c.h.b16 %v3363
    %v3645 = vunpack.c.l.b16 %v3364
    %v3646 = vunpack.c.h.b16 %v3364
    %v3647 = vunpack.c.l.b16 %v3365
    %v3648 = vunpack.c.h.b16 %v3365
    %v3649 = vunpack.c.l.b16 %v3366
    %v3650 = vunpack.c.h.b16 %v3366
    %v3651 = vunpack.c.l.b16 %v3367
    %v3652 = vunpack.c.h.b16 %v3367
    %v3653 = vunpack.c.l.b16 %v3368
    %v3654 = vunpack.c.h.b16 %v3368
    %v3655 = vunpack.c.l.b16 %v3369
    %v3656 = vunpack.c.h.b16 %v3369
    %v3657 = vunpack.c.l.b16 %v3370
    %v3658 = vunpack.c.h.b16 %v3370
    %v3659 = vunpack.c.l.b16 %v3371
    %v3660 = vunpack.c.h.b16 %v3371
    %v3661 = vunpack.c.l.b16 %v3372
    %v3662 = vunpack.c.h.b16 %v3372
    %v3663 = vunpack.c.l.b16 %v3373
    %v3664 = vunpack.c.h.b16 %v3373
    %v3665 = vunpack.c.l.b16 %v3374
    %v3666 = vunpack.c.h.b16 %v3374
    %v3667 = vunpack.c.l.b16 %v3375
    %v3668 = vunpack.c.h.b16 %v3375
    %v3669 = vunpack.c.l.b16 %v3376
    %v3670 = vunpack.c.h.b16 %v3376
    %v3671 = vunpack.c.l.b16 %v3377
    %v3672 = vunpack.c.h.b16 %v3377
    %v3673 = vunpack.c.l.b16 %v3378
    %v3674 = vunpack.c.h.b16 %v3378
    %v3675 = vunpack.c.l.b16 %v3379
    %v3676 = vunpack.c.h.b16 %v3379
    %v3677 = vunpack.c.l.b16 %v3380
    %v3678 = vunpack.c.h.b16 %v3380
    %v3679 = vunpack.c.l.b16 %v3381
    %v3680 = vunpack.c.h.b16 %v3381
    %v3681 = vunpack.c.l.b16 %v3382
    %v3682 = vunpack.c.h.b16 %v3382
    %v3683 = vunpack.c.l.b16 %v3383
    %v3684 = vunpack.c.h.b16 %v3383
    %v3685 = vunpack.c.l.b16 %v3384
    %v3686 = vunpack.c.h.b16 %v3384
    %v3687 = vunpack.c.l.b16 %v3385
    %v3688 = vunpack.c.h.b16 %v3385
    %v3689 = vunpack.c.l.b16 %v3386
    %v3690 = vunpack.c.h.b16 %v3386
    %v3691 = vunpack.c.l.b16 %v3387
    %v3692 = vunpack.c.h.b16 %v3387
    %v3693 = vunpack.c.l.b16 %v3388
    %v3694 = vunpack.c.h.b16 %v3388
    %v3695 = vunpack.c.l.b16 %v3389
    %v3696 = vunpack.c.h.b16 %v3389
    %v3697 = vunpack.c.l.b16 %v3390
    %v3698 = vunpack.c.h.b16 %v3390
    %v3699 = vunpack.c.l.b16 %v3391
    %v3700 = vunpack.c.h.b16 %v3391
    %v3701 = vunpack.c.l.b16 %v3392
    %v3702 = vunpack.c.h.b16 %v3392
    %v3703 = vunpack.c.l.b16 %v3393
    %v3704 = vunpack.c.h.b16 %v3393
    %v3705 = vunpack.c.l.b16 %v3394
    %v3706 = vunpack.c.h.b16 %v3394
    %v3707 = vunpack.c.l.b16 %v3395
    %v3708 = vunpack.c.h.b16 %v3395
    %v3709 = vunpack.c.l.b16 %v3396
    %v3710 = vunpack.c.h.b16 %v3396
    %v3711 = vunpack.c.l.b16 %v3397
    %v3712 = vunpack.c.h.b16 %v3397
    %v3713 = vunpack.c.l.b16 %v3398
    %v3714 = vunpack.c.h.b16 %v3398
    %v3715 = vunpack.c.l.b16 %v3399
    %v3716 = vunpack.c.h.b16 %v3399
    %v3717 = vunpack.c.l.b16 %v3400
    %v3718 = vunpack.c.h.b16 %v3400
    %v3719 = vunpack.c.l.b16 %v3401
    %v3720 = vunpack.c.h.b16 %v3401
    %v3721 = vunpack.c.l.b16 %v3402
    %v3722 = vunpack.c.h.b16 %v3402
    %v3723 = vunpack.c.l.b16 %v3403
    %v3724 = vunpack.c.h.b16 %v3403
    %v3725 = vunpack.c.l.b16 %v3404
    %v3726 = vunpack.c.h.b16 %v3404
    %v3727 = vunpack.c.l.b16 %v3405
    %v3728 = vunpack.c.h.b16 %v3405
    %v3729 = vunpack.c.l.b16 %v3406
    %v3730 = vunpack.c.h.b16 %v3406
    %v3731 = vunpack.c.l.b16 %v3407
    %v3732 = vunpack.c.h.b16 %v3407
    %v3733 = vunpack.c.l.b16 %v3408
    %v3734 = vunpack.c.h.b16 %v3408
    %v3735 = vunpack.c.l.b16 %v3409
    %v3736 = vunpack.c.h.b16 %v3409
    %v3737 = vunpack.c.l.b16 %v3410
    %v3738 = vunpack.c.h.b16 %v3410
    %v3739 = vunpack.c.l.b16 %v3411
    %v3740 = vunpack.c.h.b16 %v3411
    %v3741 = vunpack.c.l.b16 %v3412
    %v3742 = vunpack.c.h.b16 %v3412
    %v3743 = vunpack.c.l.b16 %v3413
    %v3744 = vunpack.c.h.b16 %v3413
    %v3745 = vunpack.c.l.b16 %v3414
    %v3746 = vunpack.c.h.b16 %v3414
    %v3747 = vunpack.c.l.b16 %v3415
    %v3748 = vunpack.c.h.b16 %v3415
    %v3749 = vunpack.c.l.b16 %v3416
    %v3750 = vunpack.c.h.b16 %v3416
    %v3751 = vunpack.c.l.b16 %v3417
    %v3752 = vunpack.c.h.b16 %v3417
    %v3753 = vunpack.c.l.b16 %v3418
    %v3754 = vunpack.c.h.b16 %v3418
    %v3755 = vunpack.c.l.b16 %v3419
    %v3756 = vunpack.c.h.b16 %v3419
    %v3757 = vunpack.c.l.b16 %v3420
    %v3758 = vunpack.c.h.b16 %v3420
    %v3759 = vunpack.c.l.b16 %v3421
    %v3760 = vunpack.c.h.b16 %v3421
    %v3761 = vunpack.c.l.b16 %v3422
    %v3762 = vunpack.c.h.b16 %v3422
    %v3763 = vunpack.c.l.b16 %v3423
    %v3764 = vunpack.c.h.b16 %v3423
    %v3765 = vunpack.c.l.b16 %v3424
    %v3766 = vunpack.c.h.b16 %v3424
    %v3767 = vunpack.c.l.b16 %v3425
    %v3768 = vunpack.c.h.b16 %v3425
    %v3769 = vunpack.c.l.b16 %v3426
    %v3770 = vunpack.c.h.b16 %v3426
    %v3771 = vunpack.c.l.b16 %v3427
    %v3772 = vunpack.c.h.b16 %v3427
    %v3773 = vunpack.c.l.b16 %v3428
    %v3774 = vunpack.c.h.b16 %v3428
    %v3775 = vunpack.c.l.b16 %v3429
    %v3776 = vunpack.c.h.b16 %v3429
    %v3777 = vunpack.c.l.b16 %v3430
    %v3778 = vunpack.c.h.b16 %v3430
    %v3779 = vunpack.c.l.b16 %v3431
    %v3780 = vunpack.c.h.b16 %v3431
    %v3781 = vunpack.c.l.b16 %v3432
    %v3782 = vunpack.c.h.b16 %v3432
    %v3783 = vunpack.c.l.b16 %v3433
    %v3784 = vunpack.c.h.b16 %v3433
    %v3785 = vunpack.c.l.b16 %v3434
    %v3786 = vunpack.c.h.b16 %v3434
    %v3787 = vunpack.c.l.b16 %v3435
    %v3788 = vunpack.c.h.b16 %v3435
    %v3789 = vunpack.c.l.b16 %v3436
    %v3790 = vunpack.c.h.b16 %v3436
    %v3791 = vunpack.c.l.b16 %v3437
    %v3792 = vunpack.c.h.b16 %v3437
    %v3793 = vunpack.c.l.b16 %v3438
    %v3794 = vunpack.c.h.b16 %v3438
    %v3795 = vunpack.c.l.b16 %v3439
    %v3796 = vunpack.c.h.b16 %v3439
    %v3797 = vunpack.c.l.b16 %v3440
    %v3798 = vunpack.c.h.b16 %v3440
    %v3799 = vunpack.c.l.b16 %v3441
    %v3800 = vunpack.c.h.b16 %v3441
    %v3801 = vunpack.c.l.b16 %v3442
    %v3802 = vunpack.c.h.b16 %v3442
    %v3803 = vunpack.c.l.b16 %v3443
    %v3804 = vunpack.c.h.b16 %v3443
    %v3805 = vunpack.c.l.b16 %v3444
    %v3806 = vunpack.c.h.b16 %v3444
    %v3807 = vunpack.c.l.b16 %v3445
    %v3808 = vunpack.c.h.b16 %v3445
    %v3809 = vunpack.c.l.b16 %v3446
    %v3810 = vunpack.c.h.b16 %v3446
    %v3811 = vunpack.c.l.b16 %v3447
    %v3812 = vunpack.c.h.b16 %v3447
    %v3813 = vunpack.c.l.b16 %v3448
    %v3814 = vunpack.c.h.b16 %v3448
    %v3815 = vunpack.c.l.b16 %v3449
    %v3816 = vunpack.c.h.b16 %v3449
    %v3817 = vunpack.c.l.b16 %v3450
    %v3818 = vunpack.c.h.b16 %v3450
    %v3819 = vunpack.c.l.b16 %v3451
    %v3820 = vunpack.c.h.b16 %v3451
    %v3821 = vunpack.c.l.b16 %v3452
    %v3822 = vunpack.c.h.b16 %v3452
    %v3823 = vunpack.c.l.b16 %v3453
    %v3824 = vunpack.c.h.b16 %v3453
    %v3825 = vunpack.c.l.b16 %v3454
    %v3826 = vunpack.c.h.b16 %v3454
    %v3827 = vunpack.c.l.b16 %v3455
    %v3828 = vunpack.c.h.b16 %v3455
    %v3829 = vunpack.c.l.b16 %v3456
    %v3830 = vunpack.c.h.b16 %v3456
    %v3831 = vunpack.c.l.b16 %v3457
    %v3832 = vunpack.c.h.b16 %v3457
    %v3833 = vunpack.c.l.b16 %v3458
    %v3834 = vunpack.c.h.b16 %v3458
    %v3835 = vunpack.c.l.b16 %v3459
    %v3836 = vunpack.c.h.b16 %v3459
    %v3837 = vunpack.c.l.b16 %v3460
    %v3838 = vunpack.c.h.b16 %v3460
    %v3839 = vunpack.c.l.b16 %v3461
    %v3840 = vunpack.c.h.b16 %v3461
    %v3841 = vunpack.c.l.b16 %v3462
    %v3842 = vunpack.c.h.b16 %v3462
    %v3843 = vunpack.c.l.b16 %v3463
    %v3844 = vunpack.c.h.b16 %v3463
    %v3845 = vunpack.c.l.b16 %v3464
    %v3846 = vunpack.c.h.b16 %v3464
    %v3847 = vunpack.c.l.b16 %v3465
    %v3848 = vunpack.c.h.b16 %v3465
    %v3849 = vunpack.c.l.b16 %v3466
    %v3850 = vunpack.c.h.b16 %v3466
    %v3851 = vunpack.c.l.b16 %v3467
    %v3852 = vunpack.c.h.b16 %v3467
    %v3853 = vunpack.c.l.b16 %v3468
    %v3854 = vunpack.c.h.b16 %v3468
    %v3855 = vunpack.c.l.b16 %v3469
    %v3856 = vunpack.c.h.b16 %v3469
    %v3857 = vunpack.c.l.b16 %v3470
    %v3858 = vunpack.c.h.b16 %v3470
    %v3859 = vunpack.c.l.b16 %v3471
    %v3860 = vunpack.c.h.b16 %v3471
    %v3861 = vunpack.c.l.b16 %v3472
    %v3862 = vunpack.c.h.b16 %v3472
    %v3863 = vunpack.c.l.b16 %v3473
    %v3864 = vunpack.c.h.b16 %v3473
    %v3865 = vunpack.c.l.b16 %v3474
    %v3866 = vunpack.c.h.b16 %v3474
    %v3867 = vunpack.c.l.b16 %v3475
    %v3868 = vunpack.c.h.b16 %v3475
    %v3869 = vunpack.c.l.b16 %v3476
    %v3870 = vunpack.c.h.b16 %v3476
    %v3871 = vunpack.c.l.b16 %v3477
    %v3872 = vunpack.c.h.b16 %v3477
    %v3873 = vpack.c.b16 %v3621, %v3617
    %v3874 = vpack.c.b16 %v3622, %v3618
    %v3875 = vpack.c.b16 %v3623, %v3619
    %v3876 = vpack.c.b16 %v3624, %v3620
    %v3877 = vpack.c.b16 %v3629, %v3625
    %v3878 = vpack.c.b16 %v3630, %v3626
    %v3879 = vpack.c.b16 %v3631, %v3627
    %v3880 = vpack.c.b16 %v3632, %v3628
    %v3881 = vpack.c.b16 %v3637, %v3633
    %v3882 = vpack.c.b16 %v3638, %v3634
    %v3883 = vpack.c.b16 %v3639, %v3635
    %v3884 = vpack.c.b16 %v3640, %v3636
    %v3885 = vpack.c.b16 %v3645, %v3641
    %v3886 = vpack.c.b16 %v3646, %v3642
    %v3887 = vpack.c.b16 %v3647, %v3643
    %v3888 = vpack.c.b16 %v3648, %v3644
    %v3889 = vpack.c.b16 %v3653, %v3649
    %v3890 = vpack.c.b16 %v3654, %v3650
    %v3891 = vpack.c.b16 %v3655, %v3651
    %v3892 = vpack.c.b16 %v3656, %v3652
    %v3893 = vpack.c.b16 %v3661, %v3657
    %v3894 = vpack.c.b16 %v3662, %v3658
    %v3895 = vpack.c.b16 %v3663, %v3659
    %v3896 = vpack.c.b16 %v3664, %v3660
    %v3897 = vpack.c.b16 %v3669, %v3665
    %v3898 = vpack.c.b16 %v3670, %v3666
    %v3899 = vpack.c.b16 %v3671, %v3667
    %v3900 = vpack.c.b16 %v3672, %v3668
    %v3901 = vpack.c.b16 %v3677, %v3673
    %v3902 = vpack.c.b16 %v3678, %v3674
    %v3903 = vpack.c.b16 %v3679, %v3675
    %v3904 = vpack.c.b16 %v3680, %v3676
    %v3905 = vpack.c.b16 %v3685, %v3681
    %v3906 = vpack.c.b16 %v3686, %v3682
    %v3907 = vpack.c.b16 %v3687, %v3683
    %v3908 = vpack.c.b16 %v3688, %v3684
    %v3909 = vpack.c.b16 %v3693, %v3689
    %v3910 = vpack.c.b16 %v3694, %v3690
    %v3911 = vpack.c.b16 %v3695, %v3691
    %v3912 = vpack.c.b16 %v3696, %v3692
    %v3913 = vpack.c.b16 %v3701, %v3697
    %v3914 = vpack.c.b16 %v3702, %v3698
    %v3915 = vpack.c.b16 %v3703, %v3699
    %v3916 = vpack.c.b16 %v3704, %v3700
    %v3917 = vpack.c.b16 %v3709, %v3705
    %v3918 = vpack.c.b16 %v3710, %v3706
    %v3919 = vpack.c.b16 %v3711, %v3707
    %v3920 = vpack.c.b16 %v3712, %v3708
    %v3921 = vpack.c.b16 %v3717, %v3713
    %v3922 = vpack.c.b16 %v3718, %v3714
    %v3923 = vpack.c.b16 %v3719, %v3715
    %v3924 = vpack.c.b16 %v3720, %v3716
    %v3925 = vpack.c.b16 %v3725, %v3721
    %v3926 = vpack.c.b16 %v3726, %v3722
    %v3927 = vpack.c.b16 %v3727, %v3723
    %v3928 = vpack.c.b16 %v3728, %v3724
    %v3929 = vpack.c.b16 %v3733, %v3729
    %v3930 = vpack.c.b16 %v3734, %v3730
    %v3931 = vpack.c.b16 %v3735, %v3731
    %v3932 = vpack.c.b16 %v3736, %v3732
    %v3933 = vpack.c.b16 %v3741, %v3737
    %v3934 = vpack.c.b16 %v3742, %v3738
    %v3935 = vpack.c.b16 %v3743, %v3739
    %v3936 = vpack.c.b16 %v3744, %v3740
    %v3937 = vpack.c.b16 %v3749, %v3745
    %v3938 = vpack.c.b16 %v3750, %v3746
    %v3939 = vpack.c.b16 %v3751, %v3747
    %v3940 = vpack.c.b16 %v3752, %v3748
    %v3941 = vpack.c.b16 %v3757, %v3753
    %v3942 = vpack.c.b16 %v3758, %v3754
    %v3943 = vpack.c.b16 %v3759, %v3755
    %v3944 = vpack.c.b16 %v3760, %v3756
    %v3945 = vpack.c.b16 %v3765, %v3761
    %v3946 = vpack.c.b16 %v3766, %v3762
    %v3947 = vpack.c.b16 %v3767, %v3763
    %v3948 = vpack.c.b16 %v3768, %v3764
    %v3949 = vpack.c.b16 %v3773, %v3769
    %v3950 = vpack.c.b16 %v3774, %v3770
    %v3951 = vpack.c.b16 %v3775, %v3771
    %v3952 = vpack.c.b16 %v3776, %v3772
    %v3953 = vpack.c.b16 %v3781, %v3777
    %v3954 = vpack.c.b16 %v3782, %v3778
    %v3955 = vpack.c.b16 %v3783, %v3779
    %v3956 = vpack.c.b16 %v3784, %v3780
    %v3957 = vpack.c.b16 %v3789, %v3785
    %v3958 = vpack.c.b16 %v3790, %v3786
    %v3959 = vpack.c.b16 %v3791, %v3787
    %v3960 = vpack.c.b16 %v3792, %v3788
    %v3961 = vpack.c.b16 %v3797, %v3793
    %v3962 = vpack.c.b16 %v3798, %v3794
    %v3963 = vpack.c.b16 %v3799, %v3795
    %v3964 = vpack.c.b16 %v3800, %v3796
    %v3965 = vpack.c.b16 %v3805, %v3801
    %v3966 = vpack.c.b16 %v3806, %v3802
    %v3967 = vpack.c.b16 %v3807, %v3803
    %v3968 = vpack.c.b16 %v3808, %v3804
    %v3969 = vpack.c.b16 %v3813, %v3809
    %v3970 = vpack.c.b16 %v3814, %v3810
    %v3971 = vpack.c.b16 %v3815, %v3811
    %v3972 = vpack.c.b16 %v3816, %v3812
    %v3973 = vpack.c.b16 %v3821, %v3817
    %v3974 = vpack.c.b16 %v3822, %v3818
    %v3975 = vpack.c.b16 %v3823, %v3819
    %v3976 = vpack.c.b16 %v3824, %v3820
    %v3977 = vpack.c.b16 %v3829, %v3825
    %v3978 = vpack.c.b16 %v3830, %v3826
    %v3979 = vpack.c.b16 %v3831, %v3827
    %v3980 = vpack.c.b16 %v3832, %v3828
    %v3981 = vpack.c.b16 %v3837, %v3833
    %v3982 = vpack.c.b16 %v3838, %v3834
    %v3983 = vpack.c.b16 %v3839, %v3835
    %v3984 = vpack.c.b16 %v3840, %v3836
    %v3985 = vpack.c.b16 %v3845, %v3841
    %v3986 = vpack.c.b16 %v3846, %v3842
    %v3987 = vpack.c.b16 %v3847, %v3843
    %v3988 = vpack.c.b16 %v3848, %v3844
    %v3989 = vpack.c.b16 %v3853, %v3849
    %v3990 = vpack.c.b16 %v3854, %v3850
    %v3991 = vpack.c.b16 %v3855, %v3851
    %v3992 = vpack.c.b16 %v3856, %v3852
    %v3993 = vpack.c.b16 %v3861, %v3857
    %v3994 = vpack.c.b16 %v3862, %v3858
    %v3995 = vpack.c.b16 %v3863, %v3859
    %v3996 = vpack.c.b16 %v3864, %v3860
    %v3997 = vpack.c.b16 %v3869, %v3865
    %v3998 = vpack.c.b16 %v3870, %v3866
    %v3999 = vpack.c.b16 %v3871, %v3867
    %v4000 = vpack.c.b16 %v3872, %v3868
    %4129 = vmatpush.bf16.msra.mxu0 %v3901
    %4130 = vmatpush.bf16.msra.mxu0 %v3897
    %4131 = vmatpush.bf16.msra.mxu0 %v3893
    %4132 = vmatpush.bf16.msra.mxu0 %v3889
    %4133 = vmatpush.bf16.msra.mxu0 %v3885
    %4134 = vmatpush.bf16.msra.mxu0 %v3881
    %4135 = vmatpush.bf16.msra.mxu0 %v3877
    %4136 = vmatpush.bf16.msra.mxu0 %v3873
    %4137 = vmatmul.bf16.gmra.mxu0 %v3345
    %v4138 = vpop.f32.mrf.mxu0
    %v4139 = vadd.f32 %v3481, %v4138
    %v4140 = vpop.f32.mrf.mxu0
    %v4141 = vadd.f32 %v3481, %v4140
    %4142 = vdwg.mxu0
    %4143 = vmatpush.bf16.msra.mxu0 %v3933
    %4144 = vmatpush.bf16.msra.mxu0 %v3929
    %4145 = vmatpush.bf16.msra.mxu0 %v3925
    %4146 = vmatpush.bf16.msra.mxu0 %v3921
    %4147 = vmatpush.bf16.msra.mxu0 %v3917
    %4148 = vmatpush.bf16.msra.mxu0 %v3913
    %4149 = vmatpush.bf16.msra.mxu0 %v3909
    %4150 = vmatpush.bf16.msra.mxu0 %v3905
    %4151 = vmatmul.bf16.gmra.mxu0 %v3346
    %v4152 = vpop.f32.mrf.mxu0
    %v4153 = vadd.f32 %v4139, %v4152
    %v4154 = vpop.f32.mrf.mxu0
    %v4155 = vadd.f32 %v4141, %v4154
    %4156 = vdwg.mxu0
    %4157 = vmatpush.bf16.msra.mxu0 %v3965
    %4158 = vmatpush.bf16.msra.mxu0 %v3961
    %4159 = vmatpush.bf16.msra.mxu0 %v3957
    %4160 = vmatpush.bf16.msra.mxu0 %v3953
    %4161 = vmatpush.bf16.msra.mxu0 %v3949
    %4162 = vmatpush.bf16.msra.mxu0 %v3945
    %4163 = vmatpush.bf16.msra.mxu0 %v3941
    %4164 = vmatpush.bf16.msra.mxu0 %v3937
    %4165 = vmatmul.bf16.gmra.mxu0 %v3347
    %v4166 = vpop.f32.mrf.mxu0
    %v4167 = vadd.f32 %v4153, %v4166
    %v4168 = vpop.f32.mrf.mxu0
    %v4169 = vadd.f32 %v4155, %v4168
    %4170 = vdwg.mxu0
    %4171 = vmatpush.bf16.msra.mxu0 %v3997
    %4172 = vmatpush.bf16.msra.mxu0 %v3993
    %4173 = vmatpush.bf16.msra.mxu0 %v3989
    %4174 = vmatpush.bf16.msra.mxu0 %v3985
    %4175 = vmatpush.bf16.msra.mxu0 %v3981
    %4176 = vmatpush.bf16.msra.mxu0 %v3977
    %4177 = vmatpush.bf16.msra.mxu0 %v3973
    %4178 = vmatpush.bf16.msra.mxu0 %v3969
    %4179 = vmatmul.bf16.gmra.mxu0 %v3348
    %v4180 = vpop.f32.mrf.mxu0
    %v4181 = vadd.f32 %v4167, %v4180
    %v4182 = vpop.f32.mrf.mxu0
    %v4183 = vadd.f32 %v4169, %v4182
    %4184 = vdwg.mxu0
    %4185 = vmatpush.bf16.msra.mxu0 %v3902
    %4186 = vmatpush.bf16.msra.mxu0 %v3898
    %4187 = vmatpush.bf16.msra.mxu0 %v3894
    %4188 = vmatpush.bf16.msra.mxu0 %v3890
    %4189 = vmatpush.bf16.msra.mxu0 %v3886
    %4190 = vmatpush.bf16.msra.mxu0 %v3882
    %4191 = vmatpush.bf16.msra.mxu0 %v3878
    %4192 = vmatpush.bf16.msra.mxu0 %v3874
    %4193 = vmatmul.bf16.gmra.mxu0 %v3345
    %v4194 = vpop.f32.mrf.mxu0
    %v4195 = vadd.f32 %v3482, %v4194
    %v4196 = vpop.f32.mrf.mxu0
    %v4197 = vadd.f32 %v3482, %v4196
    %4198 = vdwg.mxu0
    %4199 = vmatpush.bf16.msra.mxu0 %v3934
    %4200 = vmatpush.bf16.msra.mxu0 %v3930
    %4201 = vmatpush.bf16.msra.mxu0 %v3926
    %4202 = vmatpush.bf16.msra.mxu0 %v3922
    %4203 = vmatpush.bf16.msra.mxu0 %v3918
    %4204 = vmatpush.bf16.msra.mxu0 %v3914
    %4205 = vmatpush.bf16.msra.mxu0 %v3910
    %4206 = vmatpush.bf16.msra.mxu0 %v3906
    %4207 = vmatmul.bf16.gmra.mxu0 %v3346
    %v4208 = vpop.f32.mrf.mxu0
    %v4209 = vadd.f32 %v4195, %v4208
    %v4210 = vpop.f32.mrf.mxu0
    %v4211 = vadd.f32 %v4197, %v4210
    %4212 = vdwg.mxu0
    %4213 = vmatpush.bf16.msra.mxu0 %v3966
    %4214 = vmatpush.bf16.msra.mxu0 %v3962
    %4215 = vmatpush.bf16.msra.mxu0 %v3958
    %4216 = vmatpush.bf16.msra.mxu0 %v3954
    %4217 = vmatpush.bf16.msra.mxu0 %v3950
    %4218 = vmatpush.bf16.msra.mxu0 %v3946
    %4219 = vmatpush.bf16.msra.mxu0 %v3942
    %4220 = vmatpush.bf16.msra.mxu0 %v3938
    %4221 = vmatmul.bf16.gmra.mxu0 %v3347
    %v4222 = vpop.f32.mrf.mxu0
    %v4223 = vadd.f32 %v4209, %v4222
    %v4224 = vpop.f32.mrf.mxu0
    %v4225 = vadd.f32 %v4211, %v4224
    %4226 = vdwg.mxu0
    %4227 = vmatpush.bf16.msra.mxu0 %v3998
    %4228 = vmatpush.bf16.msra.mxu0 %v3994
    %4229 = vmatpush.bf16.msra.mxu0 %v3990
    %4230 = vmatpush.bf16.msra.mxu0 %v3986
    %4231 = vmatpush.bf16.msra.mxu0 %v3982
    %4232 = vmatpush.bf16.msra.mxu0 %v3978
    %4233 = vmatpush.bf16.msra.mxu0 %v3974
    %4234 = vmatpush.bf16.msra.mxu0 %v3970
    %4235 = vmatmul.bf16.gmra.mxu0 %v3348
    %v4236 = vpop.f32.mrf.mxu0
    %v4237 = vadd.f32 %v4223, %v4236
    %v4238 = vpop.f32.mrf.mxu0
    %v4239 = vadd.f32 %v4225, %v4238
    %4240 = vdwg.mxu0
    %4241 = vmatpush.bf16.msra.mxu0 %v3903
    %4242 = vmatpush.bf16.msra.mxu0 %v3899
    %4243 = vmatpush.bf16.msra.mxu0 %v3895
    %4244 = vmatpush.bf16.msra.mxu0 %v3891
    %4245 = vmatpush.bf16.msra.mxu0 %v3887
    %4246 = vmatpush.bf16.msra.mxu0 %v3883
    %4247 = vmatpush.bf16.msra.mxu0 %v3879
    %4248 = vmatpush.bf16.msra.mxu0 %v3875
    %4249 = vmatmul.bf16.gmra.mxu0 %v3345
    %v4250 = vpop.f32.mrf.mxu0
    %v4251 = vadd.f32 %v3483, %v4250
    %v4252 = vpop.f32.mrf.mxu0
    %v4253 = vadd.f32 %v3483, %v4252
    %4254 = vdwg.mxu0
    %4255 = vmatpush.bf16.msra.mxu0 %v3935
    %4256 = vmatpush.bf16.msra.mxu0 %v3931
    %4257 = vmatpush.bf16.msra.mxu0 %v3927
    %4258 = vmatpush.bf16.msra.mxu0 %v3923
    %4259 = vmatpush.bf16.msra.mxu0 %v3919
    %4260 = vmatpush.bf16.msra.mxu0 %v3915
    %4261 = vmatpush.bf16.msra.mxu0 %v3911
    %4262 = vmatpush.bf16.msra.mxu0 %v3907
    %4263 = vmatmul.bf16.gmra.mxu0 %v3346
    %v4264 = vpop.f32.mrf.mxu0
    %v4265 = vadd.f32 %v4251, %v4264
    %v4266 = vpop.f32.mrf.mxu0
    %v4267 = vadd.f32 %v4253, %v4266
    %4268 = vdwg.mxu0
    %4269 = vmatpush.bf16.msra.mxu0 %v3967
    %4270 = vmatpush.bf16.msra.mxu0 %v3963
    %4271 = vmatpush.bf16.msra.mxu0 %v3959
    %4272 = vmatpush.bf16.msra.mxu0 %v3955
    %4273 = vmatpush.bf16.msra.mxu0 %v3951
    %4274 = vmatpush.bf16.msra.mxu0 %v3947
    %4275 = vmatpush.bf16.msra.mxu0 %v3943
    %4276 = vmatpush.bf16.msra.mxu0 %v3939
    %4277 = vmatmul.bf16.gmra.mxu0 %v3347
    %v4278 = vpop.f32.mrf.mxu0
    %v4279 = vadd.f32 %v4265, %v4278
    %v4280 = vpop.f32.mrf.mxu0
    %v4281 = vadd.f32 %v4267, %v4280
    %4282 = vdwg.mxu0
    %4283 = vmatpush.bf16.msra.mxu0 %v3999
    %4284 = vmatpush.bf16.msra.mxu0 %v3995
    %4285 = vmatpush.bf16.msra.mxu0 %v3991
    %4286 = vmatpush.bf16.msra.mxu0 %v3987
    %4287 = vmatpush.bf16.msra.mxu0 %v3983
    %4288 = vmatpush.bf16.msra.mxu0 %v3979
    %4289 = vmatpush.bf16.msra.mxu0 %v3975
    %4290 = vmatpush.bf16.msra.mxu0 %v3971
    %4291 = vmatmul.bf16.gmra.mxu0 %v3348
    %v4292 = vpop.f32.mrf.mxu0
    %v4293 = vadd.f32 %v4279, %v4292
    %v4294 = vpop.f32.mrf.mxu0
    %v4295 = vadd.f32 %v4281, %v4294
    %4296 = vdwg.mxu0
    %4297 = vmatpush.bf16.msra.mxu0 %v3904
    %4298 = vmatpush.bf16.msra.mxu0 %v3900
    %4299 = vmatpush.bf16.msra.mxu0 %v3896
    %4300 = vmatpush.bf16.msra.mxu0 %v3892
    %4301 = vmatpush.bf16.msra.mxu0 %v3888
    %4302 = vmatpush.bf16.msra.mxu0 %v3884
    %4303 = vmatpush.bf16.msra.mxu0 %v3880
    %4304 = vmatpush.bf16.msra.mxu0 %v3876
    %4305 = vmatmul.bf16.gmra.mxu0 %v3345
    %v4306 = vpop.f32.mrf.mxu0
    %v4307 = vadd.f32 %v3484, %v4306
    %v4308 = vpop.f32.mrf.mxu0
    %v4309 = vadd.f32 %v3484, %v4308
    %4310 = vdwg.mxu0
    %4311 = vmatpush.bf16.msra.mxu0 %v3936
    %4312 = vmatpush.bf16.msra.mxu0 %v3932
    %4313 = vmatpush.bf16.msra.mxu0 %v3928
    %4314 = vmatpush.bf16.msra.mxu0 %v3924
    %4315 = vmatpush.bf16.msra.mxu0 %v3920
    %4316 = vmatpush.bf16.msra.mxu0 %v3916
    %4317 = vmatpush.bf16.msra.mxu0 %v3912
    %4318 = vmatpush.bf16.msra.mxu0 %v3908
    %4319 = vmatmul.bf16.gmra.mxu0 %v3346
    %v4320 = vpop.f32.mrf.mxu0
    %v4321 = vadd.f32 %v4307, %v4320
    %v4322 = vpop.f32.mrf.mxu0
    %v4323 = vadd.f32 %v4309, %v4322
    %4324 = vdwg.mxu0
    %4325 = vmatpush.bf16.msra.mxu0 %v3968
    %4326 = vmatpush.bf16.msra.mxu0 %v3964
    %4327 = vmatpush.bf16.msra.mxu0 %v3960
    %4328 = vmatpush.bf16.msra.mxu0 %v3956
    %4329 = vmatpush.bf16.msra.mxu0 %v3952
    %4330 = vmatpush.bf16.msra.mxu0 %v3948
    %4331 = vmatpush.bf16.msra.mxu0 %v3944
    %4332 = vmatpush.bf16.msra.mxu0 %v3940
    %4333 = vmatmul.bf16.gmra.mxu0 %v3347
    %v4334 = vpop.f32.mrf.mxu0
    %v4335 = vadd.f32 %v4321, %v4334
    %v4336 = vpop.f32.mrf.mxu0
    %v4337 = vadd.f32 %v4323, %v4336
    %4338 = vdwg.mxu0
    %4339 = vmatpush.bf16.msra.mxu0 %v4000
    %4340 = vmatpush.bf16.msra.mxu0 %v3996
    %4341 = vmatpush.bf16.msra.mxu0 %v3992
    %4342 = vmatpush.bf16.msra.mxu0 %v3988
    %4343 = vmatpush.bf16.msra.mxu0 %v3984
    %4344 = vmatpush.bf16.msra.mxu0 %v3980
    %4345 = vmatpush.bf16.msra.mxu0 %v3976
    %4346 = vmatpush.bf16.msra.mxu0 %v3972
    %4347 = vmatmul.bf16.gmra.mxu0 %v3348
    %v4348 = vpop.f32.mrf.mxu0
    %v4349 = vadd.f32 %v4335, %v4348
    %v4350 = vpop.f32.mrf.mxu0
    %v4351 = vadd.f32 %v4337, %v4350
    %4352 = vdwg.mxu0
    %v4353 = vmax.f32 %v4181, 0.0
    %v4354 = vmax.f32 %v4237, 0.0
    %v4355 = vmax.f32 %v4293, 0.0
    %v4356 = vmax.f32 %v4349, 0.0
    %v4357 = vmax.f32 %v4183, 0.0
    %v4358 = vmax.f32 %v4239, 0.0
    %v4359 = vmax.f32 %v4295, 0.0
    %v4360 = vmax.f32 %v4351, 0.0
    %v4361 = vadd.f32 %v2321, %v4353
    %v4362 = vadd.f32 %v2322, %v4354
    %v4363 = vadd.f32 %v2323, %v4355
    %v4364 = vadd.f32 %v2324, %v4356
    %v4365 = vadd.f32 %v2325, %v4357
    %v4366 = vadd.f32 %v2326, %v4358
    %v4367 = vadd.f32 %v2327, %v4359
    %v4368 = vadd.f32 %v2328, %v4360
    %v4369 = vpack.c.bf16 %v4365, %v4361
    %v4370 = vpack.c.bf16 %v4366, %v4362
    %v4371 = vpack.c.bf16 %v4367, %v4363
    %v4372 = vpack.c.bf16 %v4368, %v4364
    %s4373 = scalar_lea.vmem [#allocation8], 4096
    %v4374 = vld [vmem:[%s4373] sm:$0xff]
    %v4375 = vld [vmem:[%s4373 + $0x8] sm:$0xff]
    %v4376 = vld [vmem:[%s4373 + $0x10] sm:$0xff]
    %v4377 = vld [vmem:[%s4373 + $0x18] sm:$0xff]
    %v4378 = vld [vmem:[%s4373 + $0x20] sm:$0xff]
    %v4379 = vld [vmem:[%s4373 + $0x28] sm:$0xff]
    %v4380 = vld [vmem:[%s4373 + $0x30] sm:$0xff]
    %v4381 = vld [vmem:[%s4373 + $0x38] sm:$0xff]
    %v4382 = vld [vmem:[%s4373 + $0x40] sm:$0xff]
    %v4383 = vld [vmem:[%s4373 + $0x48] sm:$0xff]
    %v4384 = vld [vmem:[%s4373 + $0x50] sm:$0xff]
    %v4385 = vld [vmem:[%s4373 + $0x58] sm:$0xff]
    %v4386 = vld [vmem:[%s4373 + $0x60] sm:$0xff]
    %v4387 = vld [vmem:[%s4373 + $0x68] sm:$0xff]
    %v4388 = vld [vmem:[%s4373 + $0x70] sm:$0xff]
    %v4389 = vld [vmem:[%s4373 + $0x78] sm:$0xff]
    %v4390 = vld [vmem:[%s4373 + $0x80] sm:$0xff]
    %v4391 = vld [vmem:[%s4373 + $0x88] sm:$0xff]
    %v4392 = vld [vmem:[%s4373 + $0x90] sm:$0xff]
    %v4393 = vld [vmem:[%s4373 + $0x98] sm:$0xff]
    %v4394 = vld [vmem:[%s4373 + $0xa0] sm:$0xff]
    %v4395 = vld [vmem:[%s4373 + $0xa8] sm:$0xff]
    %v4396 = vld [vmem:[%s4373 + $0xb0] sm:$0xff]
    %v4397 = vld [vmem:[%s4373 + $0xb8] sm:$0xff]
    %v4398 = vld [vmem:[%s4373 + $0xc0] sm:$0xff]
    %v4399 = vld [vmem:[%s4373 + $0xc8] sm:$0xff]
    %v4400 = vld [vmem:[%s4373 + $0xd0] sm:$0xff]
    %v4401 = vld [vmem:[%s4373 + $0xd8] sm:$0xff]
    %v4402 = vld [vmem:[%s4373 + $0xe0] sm:$0xff]
    %v4403 = vld [vmem:[%s4373 + $0xe8] sm:$0xff]
    %v4404 = vld [vmem:[%s4373 + $0xf0] sm:$0xff]
    %v4405 = vld [vmem:[%s4373 + $0xf8] sm:$0xff]
    %v4406 = vld [vmem:[%s4373 + $0x100] sm:$0xff]
    %v4407 = vld [vmem:[%s4373 + $0x108] sm:$0xff]
    %v4408 = vld [vmem:[%s4373 + $0x110] sm:$0xff]
    %v4409 = vld [vmem:[%s4373 + $0x118] sm:$0xff]
    %v4410 = vld [vmem:[%s4373 + $0x120] sm:$0xff]
    %v4411 = vld [vmem:[%s4373 + $0x128] sm:$0xff]
    %v4412 = vld [vmem:[%s4373 + $0x130] sm:$0xff]
    %v4413 = vld [vmem:[%s4373 + $0x138] sm:$0xff]
    %v4414 = vld [vmem:[%s4373 + $0x140] sm:$0xff]
    %v4415 = vld [vmem:[%s4373 + $0x148] sm:$0xff]
    %v4416 = vld [vmem:[%s4373 + $0x150] sm:$0xff]
    %v4417 = vld [vmem:[%s4373 + $0x158] sm:$0xff]
    %v4418 = vld [vmem:[%s4373 + $0x160] sm:$0xff]
    %v4419 = vld [vmem:[%s4373 + $0x168] sm:$0xff]
    %v4420 = vld [vmem:[%s4373 + $0x170] sm:$0xff]
    %v4421 = vld [vmem:[%s4373 + $0x178] sm:$0xff]
    %v4422 = vld [vmem:[%s4373 + $0x180] sm:$0xff]
    %v4423 = vld [vmem:[%s4373 + $0x188] sm:$0xff]
    %v4424 = vld [vmem:[%s4373 + $0x190] sm:$0xff]
    %v4425 = vld [vmem:[%s4373 + $0x198] sm:$0xff]
    %v4426 = vld [vmem:[%s4373 + $0x1a0] sm:$0xff]
    %v4427 = vld [vmem:[%s4373 + $0x1a8] sm:$0xff]
    %v4428 = vld [vmem:[%s4373 + $0x1b0] sm:$0xff]
    %v4429 = vld [vmem:[%s4373 + $0x1b8] sm:$0xff]
    %v4430 = vld [vmem:[%s4373 + $0x1c0] sm:$0xff]
    %v4431 = vld [vmem:[%s4373 + $0x1c8] sm:$0xff]
    %v4432 = vld [vmem:[%s4373 + $0x1d0] sm:$0xff]
    %v4433 = vld [vmem:[%s4373 + $0x1d8] sm:$0xff]
    %v4434 = vld [vmem:[%s4373 + $0x1e0] sm:$0xff]
    %v4435 = vld [vmem:[%s4373 + $0x1e8] sm:$0xff]
    %v4436 = vld [vmem:[%s4373 + $0x1f0] sm:$0xff]
    %v4437 = vld [vmem:[%s4373 + $0x1f8] sm:$0xff]
    %v4438 = vld [vmem:[%s4373 + $0x200] sm:$0xff]
    %v4439 = vld [vmem:[%s4373 + $0x208] sm:$0xff]
    %v4440 = vld [vmem:[%s4373 + $0x210] sm:$0xff]
    %v4441 = vld [vmem:[%s4373 + $0x218] sm:$0xff]
    %v4442 = vld [vmem:[%s4373 + $0x220] sm:$0xff]
    %v4443 = vld [vmem:[%s4373 + $0x228] sm:$0xff]
    %v4444 = vld [vmem:[%s4373 + $0x230] sm:$0xff]
    %v4445 = vld [vmem:[%s4373 + $0x238] sm:$0xff]
    %v4446 = vld [vmem:[%s4373 + $0x240] sm:$0xff]
    %v4447 = vld [vmem:[%s4373 + $0x248] sm:$0xff]
    %v4448 = vld [vmem:[%s4373 + $0x250] sm:$0xff]
    %v4449 = vld [vmem:[%s4373 + $0x258] sm:$0xff]
    %v4450 = vld [vmem:[%s4373 + $0x260] sm:$0xff]
    %v4451 = vld [vmem:[%s4373 + $0x268] sm:$0xff]
    %v4452 = vld [vmem:[%s4373 + $0x270] sm:$0xff]
    %v4453 = vld [vmem:[%s4373 + $0x278] sm:$0xff]
    %v4454 = vld [vmem:[%s4373 + $0x280] sm:$0xff]
    %v4455 = vld [vmem:[%s4373 + $0x288] sm:$0xff]
    %v4456 = vld [vmem:[%s4373 + $0x290] sm:$0xff]
    %v4457 = vld [vmem:[%s4373 + $0x298] sm:$0xff]
    %v4458 = vld [vmem:[%s4373 + $0x2a0] sm:$0xff]
    %v4459 = vld [vmem:[%s4373 + $0x2a8] sm:$0xff]
    %v4460 = vld [vmem:[%s4373 + $0x2b0] sm:$0xff]
    %v4461 = vld [vmem:[%s4373 + $0x2b8] sm:$0xff]
    %v4462 = vld [vmem:[%s4373 + $0x2c0] sm:$0xff]
    %v4463 = vld [vmem:[%s4373 + $0x2c8] sm:$0xff]
    %v4464 = vld [vmem:[%s4373 + $0x2d0] sm:$0xff]
    %v4465 = vld [vmem:[%s4373 + $0x2d8] sm:$0xff]
    %v4466 = vld [vmem:[%s4373 + $0x2e0] sm:$0xff]
    %v4467 = vld [vmem:[%s4373 + $0x2e8] sm:$0xff]
    %v4468 = vld [vmem:[%s4373 + $0x2f0] sm:$0xff]
    %v4469 = vld [vmem:[%s4373 + $0x2f8] sm:$0xff]
    %v4470 = vld [vmem:[%s4373 + $0x300] sm:$0xff]
    %v4471 = vld [vmem:[%s4373 + $0x308] sm:$0xff]
    %v4472 = vld [vmem:[%s4373 + $0x310] sm:$0xff]
    %v4473 = vld [vmem:[%s4373 + $0x318] sm:$0xff]
    %v4474 = vld [vmem:[%s4373 + $0x320] sm:$0xff]
    %v4475 = vld [vmem:[%s4373 + $0x328] sm:$0xff]
    %v4476 = vld [vmem:[%s4373 + $0x330] sm:$0xff]
    %v4477 = vld [vmem:[%s4373 + $0x338] sm:$0xff]
    %v4478 = vld [vmem:[%s4373 + $0x340] sm:$0xff]
    %v4479 = vld [vmem:[%s4373 + $0x348] sm:$0xff]
    %v4480 = vld [vmem:[%s4373 + $0x350] sm:$0xff]
    %v4481 = vld [vmem:[%s4373 + $0x358] sm:$0xff]
    %v4482 = vld [vmem:[%s4373 + $0x360] sm:$0xff]
    %v4483 = vld [vmem:[%s4373 + $0x368] sm:$0xff]
    %v4484 = vld [vmem:[%s4373 + $0x370] sm:$0xff]
    %v4485 = vld [vmem:[%s4373 + $0x378] sm:$0xff]
    %v4486 = vld [vmem:[%s4373 + $0x380] sm:$0xff]
    %v4487 = vld [vmem:[%s4373 + $0x388] sm:$0xff]
    %v4488 = vld [vmem:[%s4373 + $0x390] sm:$0xff]
    %v4489 = vld [vmem:[%s4373 + $0x398] sm:$0xff]
    %v4490 = vld [vmem:[%s4373 + $0x3a0] sm:$0xff]
    %v4491 = vld [vmem:[%s4373 + $0x3a8] sm:$0xff]
    %v4492 = vld [vmem:[%s4373 + $0x3b0] sm:$0xff]
    %v4493 = vld [vmem:[%s4373 + $0x3b8] sm:$0xff]
    %v4494 = vld [vmem:[%s4373 + $0x3c0] sm:$0xff]
    %v4495 = vld [vmem:[%s4373 + $0x3c8] sm:$0xff]
    %v4496 = vld [vmem:[%s4373 + $0x3d0] sm:$0xff]
    %v4497 = vld [vmem:[%s4373 + $0x3d8] sm:$0xff]
    %v4498 = vld [vmem:[%s4373 + $0x3e0] sm:$0xff]
    %v4499 = vld [vmem:[%s4373 + $0x3e8] sm:$0xff]
    %v4500 = vld [vmem:[%s4373 + $0x3f0] sm:$0xff]
    %v4501 = vld [vmem:[%s4373 + $0x3f8] sm:$0xff]
    %s4502 = scalar_lea.vmem [#allocation10], 16
    %v4503 = vld [vmem:[%s4502] sm:$0xf]
    %v4505 = vperm.slane %v4503, 0
    %v4506 = vperm.slane %v4503, 1
    %v4507 = vperm.slane %v4503, 2
    %v4508 = vperm.slane %v4503, 3
    %v4641 = vunpack.c.l.b16 %v4374
    %v4642 = vunpack.c.h.b16 %v4374
    %v4643 = vunpack.c.l.b16 %v4375
    %v4644 = vunpack.c.h.b16 %v4375
    %v4645 = vunpack.c.l.b16 %v4376
    %v4646 = vunpack.c.h.b16 %v4376
    %v4647 = vunpack.c.l.b16 %v4377
    %v4648 = vunpack.c.h.b16 %v4377
    %v4649 = vunpack.c.l.b16 %v4378
    %v4650 = vunpack.c.h.b16 %v4378
    %v4651 = vunpack.c.l.b16 %v4379
    %v4652 = vunpack.c.h.b16 %v4379
    %v4653 = vunpack.c.l.b16 %v4380
    %v4654 = vunpack.c.h.b16 %v4380
    %v4655 = vunpack.c.l.b16 %v4381
    %v4656 = vunpack.c.h.b16 %v4381
    %v4657 = vunpack.c.l.b16 %v4382
    %v4658 = vunpack.c.h.b16 %v4382
    %v4659 = vunpack.c.l.b16 %v4383
    %v4660 = vunpack.c.h.b16 %v4383
    %v4661 = vunpack.c.l.b16 %v4384
    %v4662 = vunpack.c.h.b16 %v4384
    %v4663 = vunpack.c.l.b16 %v4385
    %v4664 = vunpack.c.h.b16 %v4385
    %v4665 = vunpack.c.l.b16 %v4386
    %v4666 = vunpack.c.h.b16 %v4386
    %v4667 = vunpack.c.l.b16 %v4387
    %v4668 = vunpack.c.h.b16 %v4387
    %v4669 = vunpack.c.l.b16 %v4388
    %v4670 = vunpack.c.h.b16 %v4388
    %v4671 = vunpack.c.l.b16 %v4389
    %v4672 = vunpack.c.h.b16 %v4389
    %v4673 = vunpack.c.l.b16 %v4390
    %v4674 = vunpack.c.h.b16 %v4390
    %v4675 = vunpack.c.l.b16 %v4391
    %v4676 = vunpack.c.h.b16 %v4391
    %v4677 = vunpack.c.l.b16 %v4392
    %v4678 = vunpack.c.h.b16 %v4392
    %v4679 = vunpack.c.l.b16 %v4393
    %v4680 = vunpack.c.h.b16 %v4393
    %v4681 = vunpack.c.l.b16 %v4394
    %v4682 = vunpack.c.h.b16 %v4394
    %v4683 = vunpack.c.l.b16 %v4395
    %v4684 = vunpack.c.h.b16 %v4395
    %v4685 = vunpack.c.l.b16 %v4396
    %v4686 = vunpack.c.h.b16 %v4396
    %v4687 = vunpack.c.l.b16 %v4397
    %v4688 = vunpack.c.h.b16 %v4397
    %v4689 = vunpack.c.l.b16 %v4398
    %v4690 = vunpack.c.h.b16 %v4398
    %v4691 = vunpack.c.l.b16 %v4399
    %v4692 = vunpack.c.h.b16 %v4399
    %v4693 = vunpack.c.l.b16 %v4400
    %v4694 = vunpack.c.h.b16 %v4400
    %v4695 = vunpack.c.l.b16 %v4401
    %v4696 = vunpack.c.h.b16 %v4401
    %v4697 = vunpack.c.l.b16 %v4402
    %v4698 = vunpack.c.h.b16 %v4402
    %v4699 = vunpack.c.l.b16 %v4403
    %v4700 = vunpack.c.h.b16 %v4403
    %v4701 = vunpack.c.l.b16 %v4404
    %v4702 = vunpack.c.h.b16 %v4404
    %v4703 = vunpack.c.l.b16 %v4405
    %v4704 = vunpack.c.h.b16 %v4405
    %v4705 = vunpack.c.l.b16 %v4406
    %v4706 = vunpack.c.h.b16 %v4406
    %v4707 = vunpack.c.l.b16 %v4407
    %v4708 = vunpack.c.h.b16 %v4407
    %v4709 = vunpack.c.l.b16 %v4408
    %v4710 = vunpack.c.h.b16 %v4408
    %v4711 = vunpack.c.l.b16 %v4409
    %v4712 = vunpack.c.h.b16 %v4409
    %v4713 = vunpack.c.l.b16 %v4410
    %v4714 = vunpack.c.h.b16 %v4410
    %v4715 = vunpack.c.l.b16 %v4411
    %v4716 = vunpack.c.h.b16 %v4411
    %v4717 = vunpack.c.l.b16 %v4412
    %v4718 = vunpack.c.h.b16 %v4412
    %v4719 = vunpack.c.l.b16 %v4413
    %v4720 = vunpack.c.h.b16 %v4413
    %v4721 = vunpack.c.l.b16 %v4414
    %v4722 = vunpack.c.h.b16 %v4414
    %v4723 = vunpack.c.l.b16 %v4415
    %v4724 = vunpack.c.h.b16 %v4415
    %v4725 = vunpack.c.l.b16 %v4416
    %v4726 = vunpack.c.h.b16 %v4416
    %v4727 = vunpack.c.l.b16 %v4417
    %v4728 = vunpack.c.h.b16 %v4417
    %v4729 = vunpack.c.l.b16 %v4418
    %v4730 = vunpack.c.h.b16 %v4418
    %v4731 = vunpack.c.l.b16 %v4419
    %v4732 = vunpack.c.h.b16 %v4419
    %v4733 = vunpack.c.l.b16 %v4420
    %v4734 = vunpack.c.h.b16 %v4420
    %v4735 = vunpack.c.l.b16 %v4421
    %v4736 = vunpack.c.h.b16 %v4421
    %v4737 = vunpack.c.l.b16 %v4422
    %v4738 = vunpack.c.h.b16 %v4422
    %v4739 = vunpack.c.l.b16 %v4423
    %v4740 = vunpack.c.h.b16 %v4423
    %v4741 = vunpack.c.l.b16 %v4424
    %v4742 = vunpack.c.h.b16 %v4424
    %v4743 = vunpack.c.l.b16 %v4425
    %v4744 = vunpack.c.h.b16 %v4425
    %v4745 = vunpack.c.l.b16 %v4426
    %v4746 = vunpack.c.h.b16 %v4426
    %v4747 = vunpack.c.l.b16 %v4427
    %v4748 = vunpack.c.h.b16 %v4427
    %v4749 = vunpack.c.l.b16 %v4428
    %v4750 = vunpack.c.h.b16 %v4428
    %v4751 = vunpack.c.l.b16 %v4429
    %v4752 = vunpack.c.h.b16 %v4429
    %v4753 = vunpack.c.l.b16 %v4430
    %v4754 = vunpack.c.h.b16 %v4430
    %v4755 = vunpack.c.l.b16 %v4431
    %v4756 = vunpack.c.h.b16 %v4431
    %v4757 = vunpack.c.l.b16 %v4432
    %v4758 = vunpack.c.h.b16 %v4432
    %v4759 = vunpack.c.l.b16 %v4433
    %v4760 = vunpack.c.h.b16 %v4433
    %v4761 = vunpack.c.l.b16 %v4434
    %v4762 = vunpack.c.h.b16 %v4434
    %v4763 = vunpack.c.l.b16 %v4435
    %v4764 = vunpack.c.h.b16 %v4435
    %v4765 = vunpack.c.l.b16 %v4436
    %v4766 = vunpack.c.h.b16 %v4436
    %v4767 = vunpack.c.l.b16 %v4437
    %v4768 = vunpack.c.h.b16 %v4437
    %v4769 = vunpack.c.l.b16 %v4438
    %v4770 = vunpack.c.h.b16 %v4438
    %v4771 = vunpack.c.l.b16 %v4439
    %v4772 = vunpack.c.h.b16 %v4439
    %v4773 = vunpack.c.l.b16 %v4440
    %v4774 = vunpack.c.h.b16 %v4440
    %v4775 = vunpack.c.l.b16 %v4441
    %v4776 = vunpack.c.h.b16 %v4441
    %v4777 = vunpack.c.l.b16 %v4442
    %v4778 = vunpack.c.h.b16 %v4442
    %v4779 = vunpack.c.l.b16 %v4443
    %v4780 = vunpack.c.h.b16 %v4443
    %v4781 = vunpack.c.l.b16 %v4444
    %v4782 = vunpack.c.h.b16 %v4444
    %v4783 = vunpack.c.l.b16 %v4445
    %v4784 = vunpack.c.h.b16 %v4445
    %v4785 = vunpack.c.l.b16 %v4446
    %v4786 = vunpack.c.h.b16 %v4446
    %v4787 = vunpack.c.l.b16 %v4447
    %v4788 = vunpack.c.h.b16 %v4447
    %v4789 = vunpack.c.l.b16 %v4448
    %v4790 = vunpack.c.h.b16 %v4448
    %v4791 = vunpack.c.l.b16 %v4449
    %v4792 = vunpack.c.h.b16 %v4449
    %v4793 = vunpack.c.l.b16 %v4450
    %v4794 = vunpack.c.h.b16 %v4450
    %v4795 = vunpack.c.l.b16 %v4451
    %v4796 = vunpack.c.h.b16 %v4451
    %v4797 = vunpack.c.l.b16 %v4452
    %v4798 = vunpack.c.h.b16 %v4452
    %v4799 = vunpack.c.l.b16 %v4453
    %v4800 = vunpack.c.h.b16 %v4453
    %v4801 = vunpack.c.l.b16 %v4454
    %v4802 = vunpack.c.h.b16 %v4454
    %v4803 = vunpack.c.l.b16 %v4455
    %v4804 = vunpack.c.h.b16 %v4455
    %v4805 = vunpack.c.l.b16 %v4456
    %v4806 = vunpack.c.h.b16 %v4456
    %v4807 = vunpack.c.l.b16 %v4457
    %v4808 = vunpack.c.h.b16 %v4457
    %v4809 = vunpack.c.l.b16 %v4458
    %v4810 = vunpack.c.h.b16 %v4458
    %v4811 = vunpack.c.l.b16 %v4459
    %v4812 = vunpack.c.h.b16 %v4459
    %v4813 = vunpack.c.l.b16 %v4460
    %v4814 = vunpack.c.h.b16 %v4460
    %v4815 = vunpack.c.l.b16 %v4461
    %v4816 = vunpack.c.h.b16 %v4461
    %v4817 = vunpack.c.l.b16 %v4462
    %v4818 = vunpack.c.h.b16 %v4462
    %v4819 = vunpack.c.l.b16 %v4463
    %v4820 = vunpack.c.h.b16 %v4463
    %v4821 = vunpack.c.l.b16 %v4464
    %v4822 = vunpack.c.h.b16 %v4464
    %v4823 = vunpack.c.l.b16 %v4465
    %v4824 = vunpack.c.h.b16 %v4465
    %v4825 = vunpack.c.l.b16 %v4466
    %v4826 = vunpack.c.h.b16 %v4466
    %v4827 = vunpack.c.l.b16 %v4467
    %v4828 = vunpack.c.h.b16 %v4467
    %v4829 = vunpack.c.l.b16 %v4468
    %v4830 = vunpack.c.h.b16 %v4468
    %v4831 = vunpack.c.l.b16 %v4469
    %v4832 = vunpack.c.h.b16 %v4469
    %v4833 = vunpack.c.l.b16 %v4470
    %v4834 = vunpack.c.h.b16 %v4470
    %v4835 = vunpack.c.l.b16 %v4471
    %v4836 = vunpack.c.h.b16 %v4471
    %v4837 = vunpack.c.l.b16 %v4472
    %v4838 = vunpack.c.h.b16 %v4472
    %v4839 = vunpack.c.l.b16 %v4473
    %v4840 = vunpack.c.h.b16 %v4473
    %v4841 = vunpack.c.l.b16 %v4474
    %v4842 = vunpack.c.h.b16 %v4474
    %v4843 = vunpack.c.l.b16 %v4475
    %v4844 = vunpack.c.h.b16 %v4475
    %v4845 = vunpack.c.l.b16 %v4476
    %v4846 = vunpack.c.h.b16 %v4476
    %v4847 = vunpack.c.l.b16 %v4477
    %v4848 = vunpack.c.h.b16 %v4477
    %v4849 = vunpack.c.l.b16 %v4478
    %v4850 = vunpack.c.h.b16 %v4478
    %v4851 = vunpack.c.l.b16 %v4479
    %v4852 = vunpack.c.h.b16 %v4479
    %v4853 = vunpack.c.l.b16 %v4480
    %v4854 = vunpack.c.h.b16 %v4480
    %v4855 = vunpack.c.l.b16 %v4481
    %v4856 = vunpack.c.h.b16 %v4481
    %v4857 = vunpack.c.l.b16 %v4482
    %v4858 = vunpack.c.h.b16 %v4482
    %v4859 = vunpack.c.l.b16 %v4483
    %v4860 = vunpack.c.h.b16 %v4483
    %v4861 = vunpack.c.l.b16 %v4484
    %v4862 = vunpack.c.h.b16 %v4484
    %v4863 = vunpack.c.l.b16 %v4485
    %v4864 = vunpack.c.h.b16 %v4485
    %v4865 = vunpack.c.l.b16 %v4486
    %v4866 = vunpack.c.h.b16 %v4486
    %v4867 = vunpack.c.l.b16 %v4487
    %v4868 = vunpack.c.h.b16 %v4487
    %v4869 = vunpack.c.l.b16 %v4488
    %v4870 = vunpack.c.h.b16 %v4488
    %v4871 = vunpack.c.l.b16 %v4489
    %v4872 = vunpack.c.h.b16 %v4489
    %v4873 = vunpack.c.l.b16 %v4490
    %v4874 = vunpack.c.h.b16 %v4490
    %v4875 = vunpack.c.l.b16 %v4491
    %v4876 = vunpack.c.h.b16 %v4491
    %v4877 = vunpack.c.l.b16 %v4492
    %v4878 = vunpack.c.h.b16 %v4492
    %v4879 = vunpack.c.l.b16 %v4493
    %v4880 = vunpack.c.h.b16 %v4493
    %v4881 = vunpack.c.l.b16 %v4494
    %v4882 = vunpack.c.h.b16 %v4494
    %v4883 = vunpack.c.l.b16 %v4495
    %v4884 = vunpack.c.h.b16 %v4495
    %v4885 = vunpack.c.l.b16 %v4496
    %v4886 = vunpack.c.h.b16 %v4496
    %v4887 = vunpack.c.l.b16 %v4497
    %v4888 = vunpack.c.h.b16 %v4497
    %v4889 = vunpack.c.l.b16 %v4498
    %v4890 = vunpack.c.h.b16 %v4498
    %v4891 = vunpack.c.l.b16 %v4499
    %v4892 = vunpack.c.h.b16 %v4499
    %v4893 = vunpack.c.l.b16 %v4500
    %v4894 = vunpack.c.h.b16 %v4500
    %v4895 = vunpack.c.l.b16 %v4501
    %v4896 = vunpack.c.h.b16 %v4501
    %v4897 = vpack.c.b16 %v4645, %v4641
    %v4898 = vpack.c.b16 %v4646, %v4642
    %v4899 = vpack.c.b16 %v4647, %v4643
    %v4900 = vpack.c.b16 %v4648, %v4644
    %v4901 = vpack.c.b16 %v4653, %v4649
    %v4902 = vpack.c.b16 %v4654, %v4650
    %v4903 = vpack.c.b16 %v4655, %v4651
    %v4904 = vpack.c.b16 %v4656, %v4652
    %v4905 = vpack.c.b16 %v4661, %v4657
    %v4906 = vpack.c.b16 %v4662, %v4658
    %v4907 = vpack.c.b16 %v4663, %v4659
    %v4908 = vpack.c.b16 %v4664, %v4660
    %v4909 = vpack.c.b16 %v4669, %v4665
    %v4910 = vpack.c.b16 %v4670, %v4666
    %v4911 = vpack.c.b16 %v4671, %v4667
    %v4912 = vpack.c.b16 %v4672, %v4668
    %v4913 = vpack.c.b16 %v4677, %v4673
    %v4914 = vpack.c.b16 %v4678, %v4674
    %v4915 = vpack.c.b16 %v4679, %v4675
    %v4916 = vpack.c.b16 %v4680, %v4676
    %v4917 = vpack.c.b16 %v4685, %v4681
    %v4918 = vpack.c.b16 %v4686, %v4682
    %v4919 = vpack.c.b16 %v4687, %v4683
    %v4920 = vpack.c.b16 %v4688, %v4684
    %v4921 = vpack.c.b16 %v4693, %v4689
    %v4922 = vpack.c.b16 %v4694, %v4690
    %v4923 = vpack.c.b16 %v4695, %v4691
    %v4924 = vpack.c.b16 %v4696, %v4692
    %v4925 = vpack.c.b16 %v4701, %v4697
    %v4926 = vpack.c.b16 %v4702, %v4698
    %v4927 = vpack.c.b16 %v4703, %v4699
    %v4928 = vpack.c.b16 %v4704, %v4700
    %v4929 = vpack.c.b16 %v4709, %v4705
    %v4930 = vpack.c.b16 %v4710, %v4706
    %v4931 = vpack.c.b16 %v4711, %v4707
    %v4932 = vpack.c.b16 %v4712, %v4708
    %v4933 = vpack.c.b16 %v4717, %v4713
    %v4934 = vpack.c.b16 %v4718, %v4714
    %v4935 = vpack.c.b16 %v4719, %v4715
    %v4936 = vpack.c.b16 %v4720, %v4716
    %v4937 = vpack.c.b16 %v4725, %v4721
    %v4938 = vpack.c.b16 %v4726, %v4722
    %v4939 = vpack.c.b16 %v4727, %v4723
    %v4940 = vpack.c.b16 %v4728, %v4724
    %v4941 = vpack.c.b16 %v4733, %v4729
    %v4942 = vpack.c.b16 %v4734, %v4730
    %v4943 = vpack.c.b16 %v4735, %v4731
    %v4944 = vpack.c.b16 %v4736, %v4732
    %v4945 = vpack.c.b16 %v4741, %v4737
    %v4946 = vpack.c.b16 %v4742, %v4738
    %v4947 = vpack.c.b16 %v4743, %v4739
    %v4948 = vpack.c.b16 %v4744, %v4740
    %v4949 = vpack.c.b16 %v4749, %v4745
    %v4950 = vpack.c.b16 %v4750, %v4746
    %v4951 = vpack.c.b16 %v4751, %v4747
    %v4952 = vpack.c.b16 %v4752, %v4748
    %v4953 = vpack.c.b16 %v4757, %v4753
    %v4954 = vpack.c.b16 %v4758, %v4754
    %v4955 = vpack.c.b16 %v4759, %v4755
    %v4956 = vpack.c.b16 %v4760, %v4756
    %v4957 = vpack.c.b16 %v4765, %v4761
    %v4958 = vpack.c.b16 %v4766, %v4762
    %v4959 = vpack.c.b16 %v4767, %v4763
    %v4960 = vpack.c.b16 %v4768, %v4764
    %v4961 = vpack.c.b16 %v4773, %v4769
    %v4962 = vpack.c.b16 %v4774, %v4770
    %v4963 = vpack.c.b16 %v4775, %v4771
    %v4964 = vpack.c.b16 %v4776, %v4772
    %v4965 = vpack.c.b16 %v4781, %v4777
    %v4966 = vpack.c.b16 %v4782, %v4778
    %v4967 = vpack.c.b16 %v4783, %v4779
    %v4968 = vpack.c.b16 %v4784, %v4780
    %v4969 = vpack.c.b16 %v4789, %v4785
    %v4970 = vpack.c.b16 %v4790, %v4786
    %v4971 = vpack.c.b16 %v4791, %v4787
    %v4972 = vpack.c.b16 %v4792, %v4788
    %v4973 = vpack.c.b16 %v4797, %v4793
    %v4974 = vpack.c.b16 %v4798, %v4794
    %v4975 = vpack.c.b16 %v4799, %v4795
    %v4976 = vpack.c.b16 %v4800, %v4796
    %v4977 = vpack.c.b16 %v4805, %v4801
    %v4978 = vpack.c.b16 %v4806, %v4802
    %v4979 = vpack.c.b16 %v4807, %v4803
    %v4980 = vpack.c.b16 %v4808, %v4804
    %v4981 = vpack.c.b16 %v4813, %v4809
    %v4982 = vpack.c.b16 %v4814, %v4810
    %v4983 = vpack.c.b16 %v4815, %v4811
    %v4984 = vpack.c.b16 %v4816, %v4812
    %v4985 = vpack.c.b16 %v4821, %v4817
    %v4986 = vpack.c.b16 %v4822, %v4818
    %v4987 = vpack.c.b16 %v4823, %v4819
    %v4988 = vpack.c.b16 %v4824, %v4820
    %v4989 = vpack.c.b16 %v4829, %v4825
    %v4990 = vpack.c.b16 %v4830, %v4826
    %v4991 = vpack.c.b16 %v4831, %v4827
    %v4992 = vpack.c.b16 %v4832, %v4828
    %v4993 = vpack.c.b16 %v4837, %v4833
    %v4994 = vpack.c.b16 %v4838, %v4834
    %v4995 = vpack.c.b16 %v4839, %v4835
    %v4996 = vpack.c.b16 %v4840, %v4836
    %v4997 = vpack.c.b16 %v4845, %v4841
    %v4998 = vpack.c.b16 %v4846, %v4842
    %v4999 = vpack.c.b16 %v4847, %v4843
    %v5000 = vpack.c.b16 %v4848, %v4844
    %v5001 = vpack.c.b16 %v4853, %v4849
    %v5002 = vpack.c.b16 %v4854, %v4850
    %v5003 = vpack.c.b16 %v4855, %v4851
    %v5004 = vpack.c.b16 %v4856, %v4852
    %v5005 = vpack.c.b16 %v4861, %v4857
    %v5006 = vpack.c.b16 %v4862, %v4858
    %v5007 = vpack.c.b16 %v4863, %v4859
    %v5008 = vpack.c.b16 %v4864, %v4860
    %v5009 = vpack.c.b16 %v4869, %v4865
    %v5010 = vpack.c.b16 %v4870, %v4866
    %v5011 = vpack.c.b16 %v4871, %v4867
    %v5012 = vpack.c.b16 %v4872, %v4868
    %v5013 = vpack.c.b16 %v4877, %v4873
    %v5014 = vpack.c.b16 %v4878, %v4874
    %v5015 = vpack.c.b16 %v4879, %v4875
    %v5016 = vpack.c.b16 %v4880, %v4876
    %v5017 = vpack.c.b16 %v4885, %v4881
    %v5018 = vpack.c.b16 %v4886, %v4882
    %v5019 = vpack.c.b16 %v4887, %v4883
    %v5020 = vpack.c.b16 %v4888, %v4884
    %v5021 = vpack.c.b16 %v4893, %v4889
    %v5022 = vpack.c.b16 %v4894, %v4890
    %v5023 = vpack.c.b16 %v4895, %v4891
    %v5024 = vpack.c.b16 %v4896, %v4892
    %5153 = vmatpush.bf16.msra.mxu0 %v4925
    %5154 = vmatpush.bf16.msra.mxu0 %v4921
    %5155 = vmatpush.bf16.msra.mxu0 %v4917
    %5156 = vmatpush.bf16.msra.mxu0 %v4913
    %5157 = vmatpush.bf16.msra.mxu0 %v4909
    %5158 = vmatpush.bf16.msra.mxu0 %v4905
    %5159 = vmatpush.bf16.msra.mxu0 %v4901
    %5160 = vmatpush.bf16.msra.mxu0 %v4897
    %5161 = vmatmul.bf16.gmra.mxu0 %v4369
    %v5162 = vpop.f32.mrf.mxu0
    %v5163 = vadd.f32 %v4505, %v5162
    %v5164 = vpop.f32.mrf.mxu0
    %v5165 = vadd.f32 %v4505, %v5164
    %5166 = vdwg.mxu0
    %5167 = vmatpush.bf16.msra.mxu0 %v4957
    %5168 = vmatpush.bf16.msra.mxu0 %v4953
    %5169 = vmatpush.bf16.msra.mxu0 %v4949
    %5170 = vmatpush.bf16.msra.mxu0 %v4945
    %5171 = vmatpush.bf16.msra.mxu0 %v4941
    %5172 = vmatpush.bf16.msra.mxu0 %v4937
    %5173 = vmatpush.bf16.msra.mxu0 %v4933
    %5174 = vmatpush.bf16.msra.mxu0 %v4929
    %5175 = vmatmul.bf16.gmra.mxu0 %v4370
    %v5176 = vpop.f32.mrf.mxu0
    %v5177 = vadd.f32 %v5163, %v5176
    %v5178 = vpop.f32.mrf.mxu0
    %v5179 = vadd.f32 %v5165, %v5178
    %5180 = vdwg.mxu0
    %5181 = vmatpush.bf16.msra.mxu0 %v4989
    %5182 = vmatpush.bf16.msra.mxu0 %v4985
    %5183 = vmatpush.bf16.msra.mxu0 %v4981
    %5184 = vmatpush.bf16.msra.mxu0 %v4977
    %5185 = vmatpush.bf16.msra.mxu0 %v4973
    %5186 = vmatpush.bf16.msra.mxu0 %v4969
    %5187 = vmatpush.bf16.msra.mxu0 %v4965
    %5188 = vmatpush.bf16.msra.mxu0 %v4961
    %5189 = vmatmul.bf16.gmra.mxu0 %v4371
    %v5190 = vpop.f32.mrf.mxu0
    %v5191 = vadd.f32 %v5177, %v5190
    %v5192 = vpop.f32.mrf.mxu0
    %v5193 = vadd.f32 %v5179, %v5192
    %5194 = vdwg.mxu0
    %5195 = vmatpush.bf16.msra.mxu0 %v5021
    %5196 = vmatpush.bf16.msra.mxu0 %v5017
    %5197 = vmatpush.bf16.msra.mxu0 %v5013
    %5198 = vmatpush.bf16.msra.mxu0 %v5009
    %5199 = vmatpush.bf16.msra.mxu0 %v5005
    %5200 = vmatpush.bf16.msra.mxu0 %v5001
    %5201 = vmatpush.bf16.msra.mxu0 %v4997
    %5202 = vmatpush.bf16.msra.mxu0 %v4993
    %5203 = vmatmul.bf16.gmra.mxu0 %v4372
    %v5204 = vpop.f32.mrf.mxu0
    %v5205 = vadd.f32 %v5191, %v5204
    %v5206 = vpop.f32.mrf.mxu0
    %v5207 = vadd.f32 %v5193, %v5206
    %5208 = vdwg.mxu0
    %5209 = vmatpush.bf16.msra.mxu0 %v4926
    %5210 = vmatpush.bf16.msra.mxu0 %v4922
    %5211 = vmatpush.bf16.msra.mxu0 %v4918
    %5212 = vmatpush.bf16.msra.mxu0 %v4914
    %5213 = vmatpush.bf16.msra.mxu0 %v4910
    %5214 = vmatpush.bf16.msra.mxu0 %v4906
    %5215 = vmatpush.bf16.msra.mxu0 %v4902
    %5216 = vmatpush.bf16.msra.mxu0 %v4898
    %5217 = vmatmul.bf16.gmra.mxu0 %v4369
    %v5218 = vpop.f32.mrf.mxu0
    %v5219 = vadd.f32 %v4506, %v5218
    %v5220 = vpop.f32.mrf.mxu0
    %v5221 = vadd.f32 %v4506, %v5220
    %5222 = vdwg.mxu0
    %5223 = vmatpush.bf16.msra.mxu0 %v4958
    %5224 = vmatpush.bf16.msra.mxu0 %v4954
    %5225 = vmatpush.bf16.msra.mxu0 %v4950
    %5226 = vmatpush.bf16.msra.mxu0 %v4946
    %5227 = vmatpush.bf16.msra.mxu0 %v4942
    %5228 = vmatpush.bf16.msra.mxu0 %v4938
    %5229 = vmatpush.bf16.msra.mxu0 %v4934
    %5230 = vmatpush.bf16.msra.mxu0 %v4930
    %5231 = vmatmul.bf16.gmra.mxu0 %v4370
    %v5232 = vpop.f32.mrf.mxu0
    %v5233 = vadd.f32 %v5219, %v5232
    %v5234 = vpop.f32.mrf.mxu0
    %v5235 = vadd.f32 %v5221, %v5234
    %5236 = vdwg.mxu0
    %5237 = vmatpush.bf16.msra.mxu0 %v4990
    %5238 = vmatpush.bf16.msra.mxu0 %v4986
    %5239 = vmatpush.bf16.msra.mxu0 %v4982
    %5240 = vmatpush.bf16.msra.mxu0 %v4978
    %5241 = vmatpush.bf16.msra.mxu0 %v4974
    %5242 = vmatpush.bf16.msra.mxu0 %v4970
    %5243 = vmatpush.bf16.msra.mxu0 %v4966
    %5244 = vmatpush.bf16.msra.mxu0 %v4962
    %5245 = vmatmul.bf16.gmra.mxu0 %v4371
    %v5246 = vpop.f32.mrf.mxu0
    %v5247 = vadd.f32 %v5233, %v5246
    %v5248 = vpop.f32.mrf.mxu0
    %v5249 = vadd.f32 %v5235, %v5248
    %5250 = vdwg.mxu0
    %5251 = vmatpush.bf16.msra.mxu0 %v5022
    %5252 = vmatpush.bf16.msra.mxu0 %v5018
    %5253 = vmatpush.bf16.msra.mxu0 %v5014
    %5254 = vmatpush.bf16.msra.mxu0 %v5010
    %5255 = vmatpush.bf16.msra.mxu0 %v5006
    %5256 = vmatpush.bf16.msra.mxu0 %v5002
    %5257 = vmatpush.bf16.msra.mxu0 %v4998
    %5258 = vmatpush.bf16.msra.mxu0 %v4994
    %5259 = vmatmul.bf16.gmra.mxu0 %v4372
    %v5260 = vpop.f32.mrf.mxu0
    %v5261 = vadd.f32 %v5247, %v5260
    %v5262 = vpop.f32.mrf.mxu0
    %v5263 = vadd.f32 %v5249, %v5262
    %5264 = vdwg.mxu0
    %5265 = vmatpush.bf16.msra.mxu0 %v4927
    %5266 = vmatpush.bf16.msra.mxu0 %v4923
    %5267 = vmatpush.bf16.msra.mxu0 %v4919
    %5268 = vmatpush.bf16.msra.mxu0 %v4915
    %5269 = vmatpush.bf16.msra.mxu0 %v4911
    %5270 = vmatpush.bf16.msra.mxu0 %v4907
    %5271 = vmatpush.bf16.msra.mxu0 %v4903
    %5272 = vmatpush.bf16.msra.mxu0 %v4899
    %5273 = vmatmul.bf16.gmra.mxu0 %v4369
    %v5274 = vpop.f32.mrf.mxu0
    %v5275 = vadd.f32 %v4507, %v5274
    %v5276 = vpop.f32.mrf.mxu0
    %v5277 = vadd.f32 %v4507, %v5276
    %5278 = vdwg.mxu0
    %5279 = vmatpush.bf16.msra.mxu0 %v4959
    %5280 = vmatpush.bf16.msra.mxu0 %v4955
    %5281 = vmatpush.bf16.msra.mxu0 %v4951
    %5282 = vmatpush.bf16.msra.mxu0 %v4947
    %5283 = vmatpush.bf16.msra.mxu0 %v4943
    %5284 = vmatpush.bf16.msra.mxu0 %v4939
    %5285 = vmatpush.bf16.msra.mxu0 %v4935
    %5286 = vmatpush.bf16.msra.mxu0 %v4931
    %5287 = vmatmul.bf16.gmra.mxu0 %v4370
    %v5288 = vpop.f32.mrf.mxu0
    %v5289 = vadd.f32 %v5275, %v5288
    %v5290 = vpop.f32.mrf.mxu0
    %v5291 = vadd.f32 %v5277, %v5290
    %5292 = vdwg.mxu0
    %5293 = vmatpush.bf16.msra.mxu0 %v4991
    %5294 = vmatpush.bf16.msra.mxu0 %v4987
    %5295 = vmatpush.bf16.msra.mxu0 %v4983
    %5296 = vmatpush.bf16.msra.mxu0 %v4979
    %5297 = vmatpush.bf16.msra.mxu0 %v4975
    %5298 = vmatpush.bf16.msra.mxu0 %v4971
    %5299 = vmatpush.bf16.msra.mxu0 %v4967
    %5300 = vmatpush.bf16.msra.mxu0 %v4963
    %5301 = vmatmul.bf16.gmra.mxu0 %v4371
    %v5302 = vpop.f32.mrf.mxu0
    %v5303 = vadd.f32 %v5289, %v5302
    %v5304 = vpop.f32.mrf.mxu0
    %v5305 = vadd.f32 %v5291, %v5304
    %5306 = vdwg.mxu0
    %5307 = vmatpush.bf16.msra.mxu0 %v5023
    %5308 = vmatpush.bf16.msra.mxu0 %v5019
    %5309 = vmatpush.bf16.msra.mxu0 %v5015
    %5310 = vmatpush.bf16.msra.mxu0 %v5011
    %5311 = vmatpush.bf16.msra.mxu0 %v5007
    %5312 = vmatpush.bf16.msra.mxu0 %v5003
    %5313 = vmatpush.bf16.msra.mxu0 %v4999
    %5314 = vmatpush.bf16.msra.mxu0 %v4995
    %5315 = vmatmul.bf16.gmra.mxu0 %v4372
    %v5316 = vpop.f32.mrf.mxu0
    %v5317 = vadd.f32 %v5303, %v5316
    %v5318 = vpop.f32.mrf.mxu0
    %v5319 = vadd.f32 %v5305, %v5318
    %5320 = vdwg.mxu0
    %5321 = vmatpush.bf16.msra.mxu0 %v4928
    %5322 = vmatpush.bf16.msra.mxu0 %v4924
    %5323 = vmatpush.bf16.msra.mxu0 %v4920
    %5324 = vmatpush.bf16.msra.mxu0 %v4916
    %5325 = vmatpush.bf16.msra.mxu0 %v4912
    %5326 = vmatpush.bf16.msra.mxu0 %v4908
    %5327 = vmatpush.bf16.msra.mxu0 %v4904
    %5328 = vmatpush.bf16.msra.mxu0 %v4900
    %5329 = vmatmul.bf16.gmra.mxu0 %v4369
    %v5330 = vpop.f32.mrf.mxu0
    %v5331 = vadd.f32 %v4508, %v5330
    %v5332 = vpop.f32.mrf.mxu0
    %v5333 = vadd.f32 %v4508, %v5332
    %5334 = vdwg.mxu0
    %5335 = vmatpush.bf16.msra.mxu0 %v4960
    %5336 = vmatpush.bf16.msra.mxu0 %v4956
    %5337 = vmatpush.bf16.msra.mxu0 %v4952
    %5338 = vmatpush.bf16.msra.mxu0 %v4948
    %5339 = vmatpush.bf16.msra.mxu0 %v4944
    %5340 = vmatpush.bf16.msra.mxu0 %v4940
    %5341 = vmatpush.bf16.msra.mxu0 %v4936
    %5342 = vmatpush.bf16.msra.mxu0 %v4932
    %5343 = vmatmul.bf16.gmra.mxu0 %v4370
    %v5344 = vpop.f32.mrf.mxu0
    %v5345 = vadd.f32 %v5331, %v5344
    %v5346 = vpop.f32.mrf.mxu0
    %v5347 = vadd.f32 %v5333, %v5346
    %5348 = vdwg.mxu0
    %5349 = vmatpush.bf16.msra.mxu0 %v4992
    %5350 = vmatpush.bf16.msra.mxu0 %v4988
    %5351 = vmatpush.bf16.msra.mxu0 %v4984
    %5352 = vmatpush.bf16.msra.mxu0 %v4980
    %5353 = vmatpush.bf16.msra.mxu0 %v4976
    %5354 = vmatpush.bf16.msra.mxu0 %v4972
    %5355 = vmatpush.bf16.msra.mxu0 %v4968
    %5356 = vmatpush.bf16.msra.mxu0 %v4964
    %5357 = vmatmul.bf16.gmra.mxu0 %v4371
    %v5358 = vpop.f32.mrf.mxu0
    %v5359 = vadd.f32 %v5345, %v5358
    %v5360 = vpop.f32.mrf.mxu0
    %v5361 = vadd.f32 %v5347, %v5360
    %5362 = vdwg.mxu0
    %5363 = vmatpush.bf16.msra.mxu0 %v5024
    %5364 = vmatpush.bf16.msra.mxu0 %v5020
    %5365 = vmatpush.bf16.msra.mxu0 %v5016
    %5366 = vmatpush.bf16.msra.mxu0 %v5012
    %5367 = vmatpush.bf16.msra.mxu0 %v5008
    %5368 = vmatpush.bf16.msra.mxu0 %v5004
    %5369 = vmatpush.bf16.msra.mxu0 %v5000
    %5370 = vmatpush.bf16.msra.mxu0 %v4996
    %5371 = vmatmul.bf16.gmra.mxu0 %v4372
    %v5372 = vpop.f32.mrf.mxu0
    %v5373 = vadd.f32 %v5359, %v5372
    %v5374 = vpop.f32.mrf.mxu0
    %v5375 = vadd.f32 %v5361, %v5374
    %5376 = vdwg.mxu0
    %v5377 = vmax.f32 %v5205, 0.0
    %v5378 = vmax.f32 %v5261, 0.0
    %v5379 = vmax.f32 %v5317, 0.0
    %v5380 = vmax.f32 %v5373, 0.0
    %v5381 = vmax.f32 %v5207, 0.0
    %v5382 = vmax.f32 %v5263, 0.0
    %v5383 = vmax.f32 %v5319, 0.0
    %v5384 = vmax.f32 %v5375, 0.0
    %v5385 = vpack.c.bf16 %v5381, %v5377
    %v5386 = vpack.c.bf16 %v5382, %v5378
    %v5387 = vpack.c.bf16 %v5383, %v5379
    %v5388 = vpack.c.bf16 %v5384, %v5380
    %s5389 = scalar_lea.vmem [#allocation8], 5120
    %v5390 = vld [vmem:[%s5389] sm:$0xff]
    %v5391 = vld [vmem:[%s5389 + $0x8] sm:$0xff]
    %v5392 = vld [vmem:[%s5389 + $0x10] sm:$0xff]
    %v5393 = vld [vmem:[%s5389 + $0x18] sm:$0xff]
    %v5394 = vld [vmem:[%s5389 + $0x20] sm:$0xff]
    %v5395 = vld [vmem:[%s5389 + $0x28] sm:$0xff]
    %v5396 = vld [vmem:[%s5389 + $0x30] sm:$0xff]
    %v5397 = vld [vmem:[%s5389 + $0x38] sm:$0xff]
    %v5398 = vld [vmem:[%s5389 + $0x40] sm:$0xff]
    %v5399 = vld [vmem:[%s5389 + $0x48] sm:$0xff]
    %v5400 = vld [vmem:[%s5389 + $0x50] sm:$0xff]
    %v5401 = vld [vmem:[%s5389 + $0x58] sm:$0xff]
    %v5402 = vld [vmem:[%s5389 + $0x60] sm:$0xff]
    %v5403 = vld [vmem:[%s5389 + $0x68] sm:$0xff]
    %v5404 = vld [vmem:[%s5389 + $0x70] sm:$0xff]
    %v5405 = vld [vmem:[%s5389 + $0x78] sm:$0xff]
    %v5406 = vld [vmem:[%s5389 + $0x80] sm:$0xff]
    %v5407 = vld [vmem:[%s5389 + $0x88] sm:$0xff]
    %v5408 = vld [vmem:[%s5389 + $0x90] sm:$0xff]
    %v5409 = vld [vmem:[%s5389 + $0x98] sm:$0xff]
    %v5410 = vld [vmem:[%s5389 + $0xa0] sm:$0xff]
    %v5411 = vld [vmem:[%s5389 + $0xa8] sm:$0xff]
    %v5412 = vld [vmem:[%s5389 + $0xb0] sm:$0xff]
    %v5413 = vld [vmem:[%s5389 + $0xb8] sm:$0xff]
    %v5414 = vld [vmem:[%s5389 + $0xc0] sm:$0xff]
    %v5415 = vld [vmem:[%s5389 + $0xc8] sm:$0xff]
    %v5416 = vld [vmem:[%s5389 + $0xd0] sm:$0xff]
    %v5417 = vld [vmem:[%s5389 + $0xd8] sm:$0xff]
    %v5418 = vld [vmem:[%s5389 + $0xe0] sm:$0xff]
    %v5419 = vld [vmem:[%s5389 + $0xe8] sm:$0xff]
    %v5420 = vld [vmem:[%s5389 + $0xf0] sm:$0xff]
    %v5421 = vld [vmem:[%s5389 + $0xf8] sm:$0xff]
    %v5422 = vld [vmem:[%s5389 + $0x100] sm:$0xff]
    %v5423 = vld [vmem:[%s5389 + $0x108] sm:$0xff]
    %v5424 = vld [vmem:[%s5389 + $0x110] sm:$0xff]
    %v5425 = vld [vmem:[%s5389 + $0x118] sm:$0xff]
    %v5426 = vld [vmem:[%s5389 + $0x120] sm:$0xff]
    %v5427 = vld [vmem:[%s5389 + $0x128] sm:$0xff]
    %v5428 = vld [vmem:[%s5389 + $0x130] sm:$0xff]
    %v5429 = vld [vmem:[%s5389 + $0x138] sm:$0xff]
    %v5430 = vld [vmem:[%s5389 + $0x140] sm:$0xff]
    %v5431 = vld [vmem:[%s5389 + $0x148] sm:$0xff]
    %v5432 = vld [vmem:[%s5389 + $0x150] sm:$0xff]
    %v5433 = vld [vmem:[%s5389 + $0x158] sm:$0xff]
    %v5434 = vld [vmem:[%s5389 + $0x160] sm:$0xff]
    %v5435 = vld [vmem:[%s5389 + $0x168] sm:$0xff]
    %v5436 = vld [vmem:[%s5389 + $0x170] sm:$0xff]
    %v5437 = vld [vmem:[%s5389 + $0x178] sm:$0xff]
    %v5438 = vld [vmem:[%s5389 + $0x180] sm:$0xff]
    %v5439 = vld [vmem:[%s5389 + $0x188] sm:$0xff]
    %v5440 = vld [vmem:[%s5389 + $0x190] sm:$0xff]
    %v5441 = vld [vmem:[%s5389 + $0x198] sm:$0xff]
    %v5442 = vld [vmem:[%s5389 + $0x1a0] sm:$0xff]
    %v5443 = vld [vmem:[%s5389 + $0x1a8] sm:$0xff]
    %v5444 = vld [vmem:[%s5389 + $0x1b0] sm:$0xff]
    %v5445 = vld [vmem:[%s5389 + $0x1b8] sm:$0xff]
    %v5446 = vld [vmem:[%s5389 + $0x1c0] sm:$0xff]
    %v5447 = vld [vmem:[%s5389 + $0x1c8] sm:$0xff]
    %v5448 = vld [vmem:[%s5389 + $0x1d0] sm:$0xff]
    %v5449 = vld [vmem:[%s5389 + $0x1d8] sm:$0xff]
    %v5450 = vld [vmem:[%s5389 + $0x1e0] sm:$0xff]
    %v5451 = vld [vmem:[%s5389 + $0x1e8] sm:$0xff]
    %v5452 = vld [vmem:[%s5389 + $0x1f0] sm:$0xff]
    %v5453 = vld [vmem:[%s5389 + $0x1f8] sm:$0xff]
    %v5454 = vld [vmem:[%s5389 + $0x200] sm:$0xff]
    %v5455 = vld [vmem:[%s5389 + $0x208] sm:$0xff]
    %v5456 = vld [vmem:[%s5389 + $0x210] sm:$0xff]
    %v5457 = vld [vmem:[%s5389 + $0x218] sm:$0xff]
    %v5458 = vld [vmem:[%s5389 + $0x220] sm:$0xff]
    %v5459 = vld [vmem:[%s5389 + $0x228] sm:$0xff]
    %v5460 = vld [vmem:[%s5389 + $0x230] sm:$0xff]
    %v5461 = vld [vmem:[%s5389 + $0x238] sm:$0xff]
    %v5462 = vld [vmem:[%s5389 + $0x240] sm:$0xff]
    %v5463 = vld [vmem:[%s5389 + $0x248] sm:$0xff]
    %v5464 = vld [vmem:[%s5389 + $0x250] sm:$0xff]
    %v5465 = vld [vmem:[%s5389 + $0x258] sm:$0xff]
    %v5466 = vld [vmem:[%s5389 + $0x260] sm:$0xff]
    %v5467 = vld [vmem:[%s5389 + $0x268] sm:$0xff]
    %v5468 = vld [vmem:[%s5389 + $0x270] sm:$0xff]
    %v5469 = vld [vmem:[%s5389 + $0x278] sm:$0xff]
    %v5470 = vld [vmem:[%s5389 + $0x280] sm:$0xff]
    %v5471 = vld [vmem:[%s5389 + $0x288] sm:$0xff]
    %v5472 = vld [vmem:[%s5389 + $0x290] sm:$0xff]
    %v5473 = vld [vmem:[%s5389 + $0x298] sm:$0xff]
    %v5474 = vld [vmem:[%s5389 + $0x2a0] sm:$0xff]
    %v5475 = vld [vmem:[%s5389 + $0x2a8] sm:$0xff]
    %v5476 = vld [vmem:[%s5389 + $0x2b0] sm:$0xff]
    %v5477 = vld [vmem:[%s5389 + $0x2b8] sm:$0xff]
    %v5478 = vld [vmem:[%s5389 + $0x2c0] sm:$0xff]
    %v5479 = vld [vmem:[%s5389 + $0x2c8] sm:$0xff]
    %v5480 = vld [vmem:[%s5389 + $0x2d0] sm:$0xff]
    %v5481 = vld [vmem:[%s5389 + $0x2d8] sm:$0xff]
    %v5482 = vld [vmem:[%s5389 + $0x2e0] sm:$0xff]
    %v5483 = vld [vmem:[%s5389 + $0x2e8] sm:$0xff]
    %v5484 = vld [vmem:[%s5389 + $0x2f0] sm:$0xff]
    %v5485 = vld [vmem:[%s5389 + $0x2f8] sm:$0xff]
    %v5486 = vld [vmem:[%s5389 + $0x300] sm:$0xff]
    %v5487 = vld [vmem:[%s5389 + $0x308] sm:$0xff]
    %v5488 = vld [vmem:[%s5389 + $0x310] sm:$0xff]
    %v5489 = vld [vmem:[%s5389 + $0x318] sm:$0xff]
    %v5490 = vld [vmem:[%s5389 + $0x320] sm:$0xff]
    %v5491 = vld [vmem:[%s5389 + $0x328] sm:$0xff]
    %v5492 = vld [vmem:[%s5389 + $0x330] sm:$0xff]
    %v5493 = vld [vmem:[%s5389 + $0x338] sm:$0xff]
    %v5494 = vld [vmem:[%s5389 + $0x340] sm:$0xff]
    %v5495 = vld [vmem:[%s5389 + $0x348] sm:$0xff]
    %v5496 = vld [vmem:[%s5389 + $0x350] sm:$0xff]
    %v5497 = vld [vmem:[%s5389 + $0x358] sm:$0xff]
    %v5498 = vld [vmem:[%s5389 + $0x360] sm:$0xff]
    %v5499 = vld [vmem:[%s5389 + $0x368] sm:$0xff]
    %v5500 = vld [vmem:[%s5389 + $0x370] sm:$0xff]
    %v5501 = vld [vmem:[%s5389 + $0x378] sm:$0xff]
    %v5502 = vld [vmem:[%s5389 + $0x380] sm:$0xff]
    %v5503 = vld [vmem:[%s5389 + $0x388] sm:$0xff]
    %v5504 = vld [vmem:[%s5389 + $0x390] sm:$0xff]
    %v5505 = vld [vmem:[%s5389 + $0x398] sm:$0xff]
    %v5506 = vld [vmem:[%s5389 + $0x3a0] sm:$0xff]
    %v5507 = vld [vmem:[%s5389 + $0x3a8] sm:$0xff]
    %v5508 = vld [vmem:[%s5389 + $0x3b0] sm:$0xff]
    %v5509 = vld [vmem:[%s5389 + $0x3b8] sm:$0xff]
    %v5510 = vld [vmem:[%s5389 + $0x3c0] sm:$0xff]
    %v5511 = vld [vmem:[%s5389 + $0x3c8] sm:$0xff]
    %v5512 = vld [vmem:[%s5389 + $0x3d0] sm:$0xff]
    %v5513 = vld [vmem:[%s5389 + $0x3d8] sm:$0xff]
    %v5514 = vld [vmem:[%s5389 + $0x3e0] sm:$0xff]
    %v5515 = vld [vmem:[%s5389 + $0x3e8] sm:$0xff]
    %v5516 = vld [vmem:[%s5389 + $0x3f0] sm:$0xff]
    %v5517 = vld [vmem:[%s5389 + $0x3f8] sm:$0xff]
    %s5518 = scalar_lea.vmem [#allocation10], 20
    %v5519 = vld [vmem:[%s5518] sm:$0xf]
    %v5521 = vperm.slane %v5519, 0
    %v5522 = vperm.slane %v5519, 1
    %v5523 = vperm.slane %v5519, 2
    %v5524 = vperm.slane %v5519, 3
    %v5657 = vunpack.c.l.b16 %v5390
    %v5658 = vunpack.c.h.b16 %v5390
    %v5659 = vunpack.c.l.b16 %v5391
    %v5660 = vunpack.c.h.b16 %v5391
    %v5661 = vunpack.c.l.b16 %v5392
    %v5662 = vunpack.c.h.b16 %v5392
    %v5663 = vunpack.c.l.b16 %v5393
    %v5664 = vunpack.c.h.b16 %v5393
    %v5665 = vunpack.c.l.b16 %v5394
    %v5666 = vunpack.c.h.b16 %v5394
    %v5667 = vunpack.c.l.b16 %v5395
    %v5668 = vunpack.c.h.b16 %v5395
    %v5669 = vunpack.c.l.b16 %v5396
    %v5670 = vunpack.c.h.b16 %v5396
    %v5671 = vunpack.c.l.b16 %v5397
    %v5672 = vunpack.c.h.b16 %v5397
    %v5673 = vunpack.c.l.b16 %v5398
    %v5674 = vunpack.c.h.b16 %v5398
    %v5675 = vunpack.c.l.b16 %v5399
    %v5676 = vunpack.c.h.b16 %v5399
    %v5677 = vunpack.c.l.b16 %v5400
    %v5678 = vunpack.c.h.b16 %v5400
    %v5679 = vunpack.c.l.b16 %v5401
    %v5680 = vunpack.c.h.b16 %v5401
    %v5681 = vunpack.c.l.b16 %v5402
    %v5682 = vunpack.c.h.b16 %v5402
    %v5683 = vunpack.c.l.b16 %v5403
    %v5684 = vunpack.c.h.b16 %v5403
    %v5685 = vunpack.c.l.b16 %v5404
    %v5686 = vunpack.c.h.b16 %v5404
    %v5687 = vunpack.c.l.b16 %v5405
    %v5688 = vunpack.c.h.b16 %v5405
    %v5689 = vunpack.c.l.b16 %v5406
    %v5690 = vunpack.c.h.b16 %v5406
    %v5691 = vunpack.c.l.b16 %v5407
    %v5692 = vunpack.c.h.b16 %v5407
    %v5693 = vunpack.c.l.b16 %v5408
    %v5694 = vunpack.c.h.b16 %v5408
    %v5695 = vunpack.c.l.b16 %v5409
    %v5696 = vunpack.c.h.b16 %v5409
    %v5697 = vunpack.c.l.b16 %v5410
    %v5698 = vunpack.c.h.b16 %v5410
    %v5699 = vunpack.c.l.b16 %v5411
    %v5700 = vunpack.c.h.b16 %v5411
    %v5701 = vunpack.c.l.b16 %v5412
    %v5702 = vunpack.c.h.b16 %v5412
    %v5703 = vunpack.c.l.b16 %v5413
    %v5704 = vunpack.c.h.b16 %v5413
    %v5705 = vunpack.c.l.b16 %v5414
    %v5706 = vunpack.c.h.b16 %v5414
    %v5707 = vunpack.c.l.b16 %v5415
    %v5708 = vunpack.c.h.b16 %v5415
    %v5709 = vunpack.c.l.b16 %v5416
    %v5710 = vunpack.c.h.b16 %v5416
    %v5711 = vunpack.c.l.b16 %v5417
    %v5712 = vunpack.c.h.b16 %v5417
    %v5713 = vunpack.c.l.b16 %v5418
    %v5714 = vunpack.c.h.b16 %v5418
    %v5715 = vunpack.c.l.b16 %v5419
    %v5716 = vunpack.c.h.b16 %v5419
    %v5717 = vunpack.c.l.b16 %v5420
    %v5718 = vunpack.c.h.b16 %v5420
    %v5719 = vunpack.c.l.b16 %v5421
    %v5720 = vunpack.c.h.b16 %v5421
    %v5721 = vunpack.c.l.b16 %v5422
    %v5722 = vunpack.c.h.b16 %v5422
    %v5723 = vunpack.c.l.b16 %v5423
    %v5724 = vunpack.c.h.b16 %v5423
    %v5725 = vunpack.c.l.b16 %v5424
    %v5726 = vunpack.c.h.b16 %v5424
    %v5727 = vunpack.c.l.b16 %v5425
    %v5728 = vunpack.c.h.b16 %v5425
    %v5729 = vunpack.c.l.b16 %v5426
    %v5730 = vunpack.c.h.b16 %v5426
    %v5731 = vunpack.c.l.b16 %v5427
    %v5732 = vunpack.c.h.b16 %v5427
    %v5733 = vunpack.c.l.b16 %v5428
    %v5734 = vunpack.c.h.b16 %v5428
    %v5735 = vunpack.c.l.b16 %v5429
    %v5736 = vunpack.c.h.b16 %v5429
    %v5737 = vunpack.c.l.b16 %v5430
    %v5738 = vunpack.c.h.b16 %v5430
    %v5739 = vunpack.c.l.b16 %v5431
    %v5740 = vunpack.c.h.b16 %v5431
    %v5741 = vunpack.c.l.b16 %v5432
    %v5742 = vunpack.c.h.b16 %v5432
    %v5743 = vunpack.c.l.b16 %v5433
    %v5744 = vunpack.c.h.b16 %v5433
    %v5745 = vunpack.c.l.b16 %v5434
    %v5746 = vunpack.c.h.b16 %v5434
    %v5747 = vunpack.c.l.b16 %v5435
    %v5748 = vunpack.c.h.b16 %v5435
    %v5749 = vunpack.c.l.b16 %v5436
    %v5750 = vunpack.c.h.b16 %v5436
    %v5751 = vunpack.c.l.b16 %v5437
    %v5752 = vunpack.c.h.b16 %v5437
    %v5753 = vunpack.c.l.b16 %v5438
    %v5754 = vunpack.c.h.b16 %v5438
    %v5755 = vunpack.c.l.b16 %v5439
    %v5756 = vunpack.c.h.b16 %v5439
    %v5757 = vunpack.c.l.b16 %v5440
    %v5758 = vunpack.c.h.b16 %v5440
    %v5759 = vunpack.c.l.b16 %v5441
    %v5760 = vunpack.c.h.b16 %v5441
    %v5761 = vunpack.c.l.b16 %v5442
    %v5762 = vunpack.c.h.b16 %v5442
    %v5763 = vunpack.c.l.b16 %v5443
    %v5764 = vunpack.c.h.b16 %v5443
    %v5765 = vunpack.c.l.b16 %v5444
    %v5766 = vunpack.c.h.b16 %v5444
    %v5767 = vunpack.c.l.b16 %v5445
    %v5768 = vunpack.c.h.b16 %v5445
    %v5769 = vunpack.c.l.b16 %v5446
    %v5770 = vunpack.c.h.b16 %v5446
    %v5771 = vunpack.c.l.b16 %v5447
    %v5772 = vunpack.c.h.b16 %v5447
    %v5773 = vunpack.c.l.b16 %v5448
    %v5774 = vunpack.c.h.b16 %v5448
    %v5775 = vunpack.c.l.b16 %v5449
    %v5776 = vunpack.c.h.b16 %v5449
    %v5777 = vunpack.c.l.b16 %v5450
    %v5778 = vunpack.c.h.b16 %v5450
    %v5779 = vunpack.c.l.b16 %v5451
    %v5780 = vunpack.c.h.b16 %v5451
    %v5781 = vunpack.c.l.b16 %v5452
    %v5782 = vunpack.c.h.b16 %v5452
    %v5783 = vunpack.c.l.b16 %v5453
    %v5784 = vunpack.c.h.b16 %v5453
    %v5785 = vunpack.c.l.b16 %v5454
    %v5786 = vunpack.c.h.b16 %v5454
    %v5787 = vunpack.c.l.b16 %v5455
    %v5788 = vunpack.c.h.b16 %v5455
    %v5789 = vunpack.c.l.b16 %v5456
    %v5790 = vunpack.c.h.b16 %v5456
    %v5791 = vunpack.c.l.b16 %v5457
    %v5792 = vunpack.c.h.b16 %v5457
    %v5793 = vunpack.c.l.b16 %v5458
    %v5794 = vunpack.c.h.b16 %v5458
    %v5795 = vunpack.c.l.b16 %v5459
    %v5796 = vunpack.c.h.b16 %v5459
    %v5797 = vunpack.c.l.b16 %v5460
    %v5798 = vunpack.c.h.b16 %v5460
    %v5799 = vunpack.c.l.b16 %v5461
    %v5800 = vunpack.c.h.b16 %v5461
    %v5801 = vunpack.c.l.b16 %v5462
    %v5802 = vunpack.c.h.b16 %v5462
    %v5803 = vunpack.c.l.b16 %v5463
    %v5804 = vunpack.c.h.b16 %v5463
    %v5805 = vunpack.c.l.b16 %v5464
    %v5806 = vunpack.c.h.b16 %v5464
    %v5807 = vunpack.c.l.b16 %v5465
    %v5808 = vunpack.c.h.b16 %v5465
    %v5809 = vunpack.c.l.b16 %v5466
    %v5810 = vunpack.c.h.b16 %v5466
    %v5811 = vunpack.c.l.b16 %v5467
    %v5812 = vunpack.c.h.b16 %v5467
    %v5813 = vunpack.c.l.b16 %v5468
    %v5814 = vunpack.c.h.b16 %v5468
    %v5815 = vunpack.c.l.b16 %v5469
    %v5816 = vunpack.c.h.b16 %v5469
    %v5817 = vunpack.c.l.b16 %v5470
    %v5818 = vunpack.c.h.b16 %v5470
    %v5819 = vunpack.c.l.b16 %v5471
    %v5820 = vunpack.c.h.b16 %v5471
    %v5821 = vunpack.c.l.b16 %v5472
    %v5822 = vunpack.c.h.b16 %v5472
    %v5823 = vunpack.c.l.b16 %v5473
    %v5824 = vunpack.c.h.b16 %v5473
    %v5825 = vunpack.c.l.b16 %v5474
    %v5826 = vunpack.c.h.b16 %v5474
    %v5827 = vunpack.c.l.b16 %v5475
    %v5828 = vunpack.c.h.b16 %v5475
    %v5829 = vunpack.c.l.b16 %v5476
    %v5830 = vunpack.c.h.b16 %v5476
    %v5831 = vunpack.c.l.b16 %v5477
    %v5832 = vunpack.c.h.b16 %v5477
    %v5833 = vunpack.c.l.b16 %v5478
    %v5834 = vunpack.c.h.b16 %v5478
    %v5835 = vunpack.c.l.b16 %v5479
    %v5836 = vunpack.c.h.b16 %v5479
    %v5837 = vunpack.c.l.b16 %v5480
    %v5838 = vunpack.c.h.b16 %v5480
    %v5839 = vunpack.c.l.b16 %v5481
    %v5840 = vunpack.c.h.b16 %v5481
    %v5841 = vunpack.c.l.b16 %v5482
    %v5842 = vunpack.c.h.b16 %v5482
    %v5843 = vunpack.c.l.b16 %v5483
    %v5844 = vunpack.c.h.b16 %v5483
    %v5845 = vunpack.c.l.b16 %v5484
    %v5846 = vunpack.c.h.b16 %v5484
    %v5847 = vunpack.c.l.b16 %v5485
    %v5848 = vunpack.c.h.b16 %v5485
    %v5849 = vunpack.c.l.b16 %v5486
    %v5850 = vunpack.c.h.b16 %v5486
    %v5851 = vunpack.c.l.b16 %v5487
    %v5852 = vunpack.c.h.b16 %v5487
    %v5853 = vunpack.c.l.b16 %v5488
    %v5854 = vunpack.c.h.b16 %v5488
    %v5855 = vunpack.c.l.b16 %v5489
    %v5856 = vunpack.c.h.b16 %v5489
    %v5857 = vunpack.c.l.b16 %v5490
    %v5858 = vunpack.c.h.b16 %v5490
    %v5859 = vunpack.c.l.b16 %v5491
    %v5860 = vunpack.c.h.b16 %v5491
    %v5861 = vunpack.c.l.b16 %v5492
    %v5862 = vunpack.c.h.b16 %v5492
    %v5863 = vunpack.c.l.b16 %v5493
    %v5864 = vunpack.c.h.b16 %v5493
    %v5865 = vunpack.c.l.b16 %v5494
    %v5866 = vunpack.c.h.b16 %v5494
    %v5867 = vunpack.c.l.b16 %v5495
    %v5868 = vunpack.c.h.b16 %v5495
    %v5869 = vunpack.c.l.b16 %v5496
    %v5870 = vunpack.c.h.b16 %v5496
    %v5871 = vunpack.c.l.b16 %v5497
    %v5872 = vunpack.c.h.b16 %v5497
    %v5873 = vunpack.c.l.b16 %v5498
    %v5874 = vunpack.c.h.b16 %v5498
    %v5875 = vunpack.c.l.b16 %v5499
    %v5876 = vunpack.c.h.b16 %v5499
    %v5877 = vunpack.c.l.b16 %v5500
    %v5878 = vunpack.c.h.b16 %v5500
    %v5879 = vunpack.c.l.b16 %v5501
    %v5880 = vunpack.c.h.b16 %v5501
    %v5881 = vunpack.c.l.b16 %v5502
    %v5882 = vunpack.c.h.b16 %v5502
    %v5883 = vunpack.c.l.b16 %v5503
    %v5884 = vunpack.c.h.b16 %v5503
    %v5885 = vunpack.c.l.b16 %v5504
    %v5886 = vunpack.c.h.b16 %v5504
    %v5887 = vunpack.c.l.b16 %v5505
    %v5888 = vunpack.c.h.b16 %v5505
    %v5889 = vunpack.c.l.b16 %v5506
    %v5890 = vunpack.c.h.b16 %v5506
    %v5891 = vunpack.c.l.b16 %v5507
    %v5892 = vunpack.c.h.b16 %v5507
    %v5893 = vunpack.c.l.b16 %v5508
    %v5894 = vunpack.c.h.b16 %v5508
    %v5895 = vunpack.c.l.b16 %v5509
    %v5896 = vunpack.c.h.b16 %v5509
    %v5897 = vunpack.c.l.b16 %v5510
    %v5898 = vunpack.c.h.b16 %v5510
    %v5899 = vunpack.c.l.b16 %v5511
    %v5900 = vunpack.c.h.b16 %v5511
    %v5901 = vunpack.c.l.b16 %v5512
    %v5902 = vunpack.c.h.b16 %v5512
    %v5903 = vunpack.c.l.b16 %v5513
    %v5904 = vunpack.c.h.b16 %v5513
    %v5905 = vunpack.c.l.b16 %v5514
    %v5906 = vunpack.c.h.b16 %v5514
    %v5907 = vunpack.c.l.b16 %v5515
    %v5908 = vunpack.c.h.b16 %v5515
    %v5909 = vunpack.c.l.b16 %v5516
    %v5910 = vunpack.c.h.b16 %v5516
    %v5911 = vunpack.c.l.b16 %v5517
    %v5912 = vunpack.c.h.b16 %v5517
    %v5913 = vpack.c.b16 %v5661, %v5657
    %v5914 = vpack.c.b16 %v5662, %v5658
    %v5915 = vpack.c.b16 %v5663, %v5659
    %v5916 = vpack.c.b16 %v5664, %v5660
    %v5917 = vpack.c.b16 %v5669, %v5665
    %v5918 = vpack.c.b16 %v5670, %v5666
    %v5919 = vpack.c.b16 %v5671, %v5667
    %v5920 = vpack.c.b16 %v5672, %v5668
    %v5921 = vpack.c.b16 %v5677, %v5673
    %v5922 = vpack.c.b16 %v5678, %v5674
    %v5923 = vpack.c.b16 %v5679, %v5675
    %v5924 = vpack.c.b16 %v5680, %v5676
    %v5925 = vpack.c.b16 %v5685, %v5681
    %v5926 = vpack.c.b16 %v5686, %v5682
    %v5927 = vpack.c.b16 %v5687, %v5683
    %v5928 = vpack.c.b16 %v5688, %v5684
    %v5929 = vpack.c.b16 %v5693, %v5689
    %v5930 = vpack.c.b16 %v5694, %v5690
    %v5931 = vpack.c.b16 %v5695, %v5691
    %v5932 = vpack.c.b16 %v5696, %v5692
    %v5933 = vpack.c.b16 %v5701, %v5697
    %v5934 = vpack.c.b16 %v5702, %v5698
    %v5935 = vpack.c.b16 %v5703, %v5699
    %v5936 = vpack.c.b16 %v5704, %v5700
    %v5937 = vpack.c.b16 %v5709, %v5705
    %v5938 = vpack.c.b16 %v5710, %v5706
    %v5939 = vpack.c.b16 %v5711, %v5707
    %v5940 = vpack.c.b16 %v5712, %v5708
    %v5941 = vpack.c.b16 %v5717, %v5713
    %v5942 = vpack.c.b16 %v5718, %v5714
    %v5943 = vpack.c.b16 %v5719, %v5715
    %v5944 = vpack.c.b16 %v5720, %v5716
    %v5945 = vpack.c.b16 %v5725, %v5721
    %v5946 = vpack.c.b16 %v5726, %v5722
    %v5947 = vpack.c.b16 %v5727, %v5723
    %v5948 = vpack.c.b16 %v5728, %v5724
    %v5949 = vpack.c.b16 %v5733, %v5729
    %v5950 = vpack.c.b16 %v5734, %v5730
    %v5951 = vpack.c.b16 %v5735, %v5731
    %v5952 = vpack.c.b16 %v5736, %v5732
    %v5953 = vpack.c.b16 %v5741, %v5737
    %v5954 = vpack.c.b16 %v5742, %v5738
    %v5955 = vpack.c.b16 %v5743, %v5739
    %v5956 = vpack.c.b16 %v5744, %v5740
    %v5957 = vpack.c.b16 %v5749, %v5745
    %v5958 = vpack.c.b16 %v5750, %v5746
    %v5959 = vpack.c.b16 %v5751, %v5747
    %v5960 = vpack.c.b16 %v5752, %v5748
    %v5961 = vpack.c.b16 %v5757, %v5753
    %v5962 = vpack.c.b16 %v5758, %v5754
    %v5963 = vpack.c.b16 %v5759, %v5755
    %v5964 = vpack.c.b16 %v5760, %v5756
    %v5965 = vpack.c.b16 %v5765, %v5761
    %v5966 = vpack.c.b16 %v5766, %v5762
    %v5967 = vpack.c.b16 %v5767, %v5763
    %v5968 = vpack.c.b16 %v5768, %v5764
    %v5969 = vpack.c.b16 %v5773, %v5769
    %v5970 = vpack.c.b16 %v5774, %v5770
    %v5971 = vpack.c.b16 %v5775, %v5771
    %v5972 = vpack.c.b16 %v5776, %v5772
    %v5973 = vpack.c.b16 %v5781, %v5777
    %v5974 = vpack.c.b16 %v5782, %v5778
    %v5975 = vpack.c.b16 %v5783, %v5779
    %v5976 = vpack.c.b16 %v5784, %v5780
    %v5977 = vpack.c.b16 %v5789, %v5785
    %v5978 = vpack.c.b16 %v5790, %v5786
    %v5979 = vpack.c.b16 %v5791, %v5787
    %v5980 = vpack.c.b16 %v5792, %v5788
    %v5981 = vpack.c.b16 %v5797, %v5793
    %v5982 = vpack.c.b16 %v5798, %v5794
    %v5983 = vpack.c.b16 %v5799, %v5795
    %v5984 = vpack.c.b16 %v5800, %v5796
    %v5985 = vpack.c.b16 %v5805, %v5801
    %v5986 = vpack.c.b16 %v5806, %v5802
    %v5987 = vpack.c.b16 %v5807, %v5803
    %v5988 = vpack.c.b16 %v5808, %v5804
    %v5989 = vpack.c.b16 %v5813, %v5809
    %v5990 = vpack.c.b16 %v5814, %v5810
    %v5991 = vpack.c.b16 %v5815, %v5811
    %v5992 = vpack.c.b16 %v5816, %v5812
    %v5993 = vpack.c.b16 %v5821, %v5817
    %v5994 = vpack.c.b16 %v5822, %v5818
    %v5995 = vpack.c.b16 %v5823, %v5819
    %v5996 = vpack.c.b16 %v5824, %v5820
    %v5997 = vpack.c.b16 %v5829, %v5825
    %v5998 = vpack.c.b16 %v5830, %v5826
    %v5999 = vpack.c.b16 %v5831, %v5827
    %v6000 = vpack.c.b16 %v5832, %v5828
    %v6001 = vpack.c.b16 %v5837, %v5833
    %v6002 = vpack.c.b16 %v5838, %v5834
    %v6003 = vpack.c.b16 %v5839, %v5835
    %v6004 = vpack.c.b16 %v5840, %v5836
    %v6005 = vpack.c.b16 %v5845, %v5841
    %v6006 = vpack.c.b16 %v5846, %v5842
    %v6007 = vpack.c.b16 %v5847, %v5843
    %v6008 = vpack.c.b16 %v5848, %v5844
    %v6009 = vpack.c.b16 %v5853, %v5849
    %v6010 = vpack.c.b16 %v5854, %v5850
    %v6011 = vpack.c.b16 %v5855, %v5851
    %v6012 = vpack.c.b16 %v5856, %v5852
    %v6013 = vpack.c.b16 %v5861, %v5857
    %v6014 = vpack.c.b16 %v5862, %v5858
    %v6015 = vpack.c.b16 %v5863, %v5859
    %v6016 = vpack.c.b16 %v5864, %v5860
    %v6017 = vpack.c.b16 %v5869, %v5865
    %v6018 = vpack.c.b16 %v5870, %v5866
    %v6019 = vpack.c.b16 %v5871, %v5867
    %v6020 = vpack.c.b16 %v5872, %v5868
    %v6021 = vpack.c.b16 %v5877, %v5873
    %v6022 = vpack.c.b16 %v5878, %v5874
    %v6023 = vpack.c.b16 %v5879, %v5875
    %v6024 = vpack.c.b16 %v5880, %v5876
    %v6025 = vpack.c.b16 %v5885, %v5881
    %v6026 = vpack.c.b16 %v5886, %v5882
    %v6027 = vpack.c.b16 %v5887, %v5883
    %v6028 = vpack.c.b16 %v5888, %v5884
    %v6029 = vpack.c.b16 %v5893, %v5889
    %v6030 = vpack.c.b16 %v5894, %v5890
    %v6031 = vpack.c.b16 %v5895, %v5891
    %v6032 = vpack.c.b16 %v5896, %v5892
    %v6033 = vpack.c.b16 %v5901, %v5897
    %v6034 = vpack.c.b16 %v5902, %v5898
    %v6035 = vpack.c.b16 %v5903, %v5899
    %v6036 = vpack.c.b16 %v5904, %v5900
    %v6037 = vpack.c.b16 %v5909, %v5905
    %v6038 = vpack.c.b16 %v5910, %v5906
    %v6039 = vpack.c.b16 %v5911, %v5907
    %v6040 = vpack.c.b16 %v5912, %v5908
    %6169 = vmatpush.bf16.msra.mxu0 %v5941
    %6170 = vmatpush.bf16.msra.mxu0 %v5937
    %6171 = vmatpush.bf16.msra.mxu0 %v5933
    %6172 = vmatpush.bf16.msra.mxu0 %v5929
    %6173 = vmatpush.bf16.msra.mxu0 %v5925
    %6174 = vmatpush.bf16.msra.mxu0 %v5921
    %6175 = vmatpush.bf16.msra.mxu0 %v5917
    %6176 = vmatpush.bf16.msra.mxu0 %v5913
    %6177 = vmatmul.bf16.gmra.mxu0 %v5385
    %v6178 = vpop.f32.mrf.mxu0
    %v6179 = vadd.f32 %v5521, %v6178
    %v6180 = vpop.f32.mrf.mxu0
    %v6181 = vadd.f32 %v5521, %v6180
    %6182 = vdwg.mxu0
    %6183 = vmatpush.bf16.msra.mxu0 %v5973
    %6184 = vmatpush.bf16.msra.mxu0 %v5969
    %6185 = vmatpush.bf16.msra.mxu0 %v5965
    %6186 = vmatpush.bf16.msra.mxu0 %v5961
    %6187 = vmatpush.bf16.msra.mxu0 %v5957
    %6188 = vmatpush.bf16.msra.mxu0 %v5953
    %6189 = vmatpush.bf16.msra.mxu0 %v5949
    %6190 = vmatpush.bf16.msra.mxu0 %v5945
    %6191 = vmatmul.bf16.gmra.mxu0 %v5386
    %v6192 = vpop.f32.mrf.mxu0
    %v6193 = vadd.f32 %v6179, %v6192
    %v6194 = vpop.f32.mrf.mxu0
    %v6195 = vadd.f32 %v6181, %v6194
    %6196 = vdwg.mxu0
    %6197 = vmatpush.bf16.msra.mxu0 %v6005
    %6198 = vmatpush.bf16.msra.mxu0 %v6001
    %6199 = vmatpush.bf16.msra.mxu0 %v5997
    %6200 = vmatpush.bf16.msra.mxu0 %v5993
    %6201 = vmatpush.bf16.msra.mxu0 %v5989
    %6202 = vmatpush.bf16.msra.mxu0 %v5985
    %6203 = vmatpush.bf16.msra.mxu0 %v5981
    %6204 = vmatpush.bf16.msra.mxu0 %v5977
    %6205 = vmatmul.bf16.gmra.mxu0 %v5387
    %v6206 = vpop.f32.mrf.mxu0
    %v6207 = vadd.f32 %v6193, %v6206
    %v6208 = vpop.f32.mrf.mxu0
    %v6209 = vadd.f32 %v6195, %v6208
    %6210 = vdwg.mxu0
    %6211 = vmatpush.bf16.msra.mxu0 %v6037
    %6212 = vmatpush.bf16.msra.mxu0 %v6033
    %6213 = vmatpush.bf16.msra.mxu0 %v6029
    %6214 = vmatpush.bf16.msra.mxu0 %v6025
    %6215 = vmatpush.bf16.msra.mxu0 %v6021
    %6216 = vmatpush.bf16.msra.mxu0 %v6017
    %6217 = vmatpush.bf16.msra.mxu0 %v6013
    %6218 = vmatpush.bf16.msra.mxu0 %v6009
    %6219 = vmatmul.bf16.gmra.mxu0 %v5388
    %v6220 = vpop.f32.mrf.mxu0
    %v6221 = vadd.f32 %v6207, %v6220
    %v6222 = vpop.f32.mrf.mxu0
    %v6223 = vadd.f32 %v6209, %v6222
    %6224 = vdwg.mxu0
    %6225 = vmatpush.bf16.msra.mxu0 %v5942
    %6226 = vmatpush.bf16.msra.mxu0 %v5938
    %6227 = vmatpush.bf16.msra.mxu0 %v5934
    %6228 = vmatpush.bf16.msra.mxu0 %v5930
    %6229 = vmatpush.bf16.msra.mxu0 %v5926
    %6230 = vmatpush.bf16.msra.mxu0 %v5922
    %6231 = vmatpush.bf16.msra.mxu0 %v5918
    %6232 = vmatpush.bf16.msra.mxu0 %v5914
    %6233 = vmatmul.bf16.gmra.mxu0 %v5385
    %v6234 = vpop.f32.mrf.mxu0
    %v6235 = vadd.f32 %v5522, %v6234
    %v6236 = vpop.f32.mrf.mxu0
    %v6237 = vadd.f32 %v5522, %v6236
    %6238 = vdwg.mxu0
    %6239 = vmatpush.bf16.msra.mxu0 %v5974
    %6240 = vmatpush.bf16.msra.mxu0 %v5970
    %6241 = vmatpush.bf16.msra.mxu0 %v5966
    %6242 = vmatpush.bf16.msra.mxu0 %v5962
    %6243 = vmatpush.bf16.msra.mxu0 %v5958
    %6244 = vmatpush.bf16.msra.mxu0 %v5954
    %6245 = vmatpush.bf16.msra.mxu0 %v5950
    %6246 = vmatpush.bf16.msra.mxu0 %v5946
    %6247 = vmatmul.bf16.gmra.mxu0 %v5386
    %v6248 = vpop.f32.mrf.mxu0
    %v6249 = vadd.f32 %v6235, %v6248
    %v6250 = vpop.f32.mrf.mxu0
    %v6251 = vadd.f32 %v6237, %v6250
    %6252 = vdwg.mxu0
    %6253 = vmatpush.bf16.msra.mxu0 %v6006
    %6254 = vmatpush.bf16.msra.mxu0 %v6002
    %6255 = vmatpush.bf16.msra.mxu0 %v5998
    %6256 = vmatpush.bf16.msra.mxu0 %v5994
    %6257 = vmatpush.bf16.msra.mxu0 %v5990
    %6258 = vmatpush.bf16.msra.mxu0 %v5986
    %6259 = vmatpush.bf16.msra.mxu0 %v5982
    %6260 = vmatpush.bf16.msra.mxu0 %v5978
    %6261 = vmatmul.bf16.gmra.mxu0 %v5387
    %v6262 = vpop.f32.mrf.mxu0
    %v6263 = vadd.f32 %v6249, %v6262
    %v6264 = vpop.f32.mrf.mxu0
    %v6265 = vadd.f32 %v6251, %v6264
    %6266 = vdwg.mxu0
    %6267 = vmatpush.bf16.msra.mxu0 %v6038
    %6268 = vmatpush.bf16.msra.mxu0 %v6034
    %6269 = vmatpush.bf16.msra.mxu0 %v6030
    %6270 = vmatpush.bf16.msra.mxu0 %v6026
    %6271 = vmatpush.bf16.msra.mxu0 %v6022
    %6272 = vmatpush.bf16.msra.mxu0 %v6018
    %6273 = vmatpush.bf16.msra.mxu0 %v6014
    %6274 = vmatpush.bf16.msra.mxu0 %v6010
    %6275 = vmatmul.bf16.gmra.mxu0 %v5388
    %v6276 = vpop.f32.mrf.mxu0
    %v6277 = vadd.f32 %v6263, %v6276
    %v6278 = vpop.f32.mrf.mxu0
    %v6279 = vadd.f32 %v6265, %v6278
    %6280 = vdwg.mxu0
    %6281 = vmatpush.bf16.msra.mxu0 %v5943
    %6282 = vmatpush.bf16.msra.mxu0 %v5939
    %6283 = vmatpush.bf16.msra.mxu0 %v5935
    %6284 = vmatpush.bf16.msra.mxu0 %v5931
    %6285 = vmatpush.bf16.msra.mxu0 %v5927
    %6286 = vmatpush.bf16.msra.mxu0 %v5923
    %6287 = vmatpush.bf16.msra.mxu0 %v5919
    %6288 = vmatpush.bf16.msra.mxu0 %v5915
    %6289 = vmatmul.bf16.gmra.mxu0 %v5385
    %v6290 = vpop.f32.mrf.mxu0
    %v6291 = vadd.f32 %v5523, %v6290
    %v6292 = vpop.f32.mrf.mxu0
    %v6293 = vadd.f32 %v5523, %v6292
    %6294 = vdwg.mxu0
    %6295 = vmatpush.bf16.msra.mxu0 %v5975
    %6296 = vmatpush.bf16.msra.mxu0 %v5971
    %6297 = vmatpush.bf16.msra.mxu0 %v5967
    %6298 = vmatpush.bf16.msra.mxu0 %v5963
    %6299 = vmatpush.bf16.msra.mxu0 %v5959
    %6300 = vmatpush.bf16.msra.mxu0 %v5955
    %6301 = vmatpush.bf16.msra.mxu0 %v5951
    %6302 = vmatpush.bf16.msra.mxu0 %v5947
    %6303 = vmatmul.bf16.gmra.mxu0 %v5386
    %v6304 = vpop.f32.mrf.mxu0
    %v6305 = vadd.f32 %v6291, %v6304
    %v6306 = vpop.f32.mrf.mxu0
    %v6307 = vadd.f32 %v6293, %v6306
    %6308 = vdwg.mxu0
    %6309 = vmatpush.bf16.msra.mxu0 %v6007
    %6310 = vmatpush.bf16.msra.mxu0 %v6003
    %6311 = vmatpush.bf16.msra.mxu0 %v5999
    %6312 = vmatpush.bf16.msra.mxu0 %v5995
    %6313 = vmatpush.bf16.msra.mxu0 %v5991
    %6314 = vmatpush.bf16.msra.mxu0 %v5987
    %6315 = vmatpush.bf16.msra.mxu0 %v5983
    %6316 = vmatpush.bf16.msra.mxu0 %v5979
    %6317 = vmatmul.bf16.gmra.mxu0 %v5387
    %v6318 = vpop.f32.mrf.mxu0
    %v6319 = vadd.f32 %v6305, %v6318
    %v6320 = vpop.f32.mrf.mxu0
    %v6321 = vadd.f32 %v6307, %v6320
    %6322 = vdwg.mxu0
    %6323 = vmatpush.bf16.msra.mxu0 %v6039
    %6324 = vmatpush.bf16.msra.mxu0 %v6035
    %6325 = vmatpush.bf16.msra.mxu0 %v6031
    %6326 = vmatpush.bf16.msra.mxu0 %v6027
    %6327 = vmatpush.bf16.msra.mxu0 %v6023
    %6328 = vmatpush.bf16.msra.mxu0 %v6019
    %6329 = vmatpush.bf16.msra.mxu0 %v6015
    %6330 = vmatpush.bf16.msra.mxu0 %v6011
    %6331 = vmatmul.bf16.gmra.mxu0 %v5388
    %v6332 = vpop.f32.mrf.mxu0
    %v6333 = vadd.f32 %v6319, %v6332
    %v6334 = vpop.f32.mrf.mxu0
    %v6335 = vadd.f32 %v6321, %v6334
    %6336 = vdwg.mxu0
    %6337 = vmatpush.bf16.msra.mxu0 %v5944
    %6338 = vmatpush.bf16.msra.mxu0 %v5940
    %6339 = vmatpush.bf16.msra.mxu0 %v5936
    %6340 = vmatpush.bf16.msra.mxu0 %v5932
    %6341 = vmatpush.bf16.msra.mxu0 %v5928
    %6342 = vmatpush.bf16.msra.mxu0 %v5924
    %6343 = vmatpush.bf16.msra.mxu0 %v5920
    %6344 = vmatpush.bf16.msra.mxu0 %v5916
    %6345 = vmatmul.bf16.gmra.mxu0 %v5385
    %v6346 = vpop.f32.mrf.mxu0
    %v6347 = vadd.f32 %v5524, %v6346
    %v6348 = vpop.f32.mrf.mxu0
    %v6349 = vadd.f32 %v5524, %v6348
    %6350 = vdwg.mxu0
    %6351 = vmatpush.bf16.msra.mxu0 %v5976
    %6352 = vmatpush.bf16.msra.mxu0 %v5972
    %6353 = vmatpush.bf16.msra.mxu0 %v5968
    %6354 = vmatpush.bf16.msra.mxu0 %v5964
    %6355 = vmatpush.bf16.msra.mxu0 %v5960
    %6356 = vmatpush.bf16.msra.mxu0 %v5956
    %6357 = vmatpush.bf16.msra.mxu0 %v5952
    %6358 = vmatpush.bf16.msra.mxu0 %v5948
    %6359 = vmatmul.bf16.gmra.mxu0 %v5386
    %v6360 = vpop.f32.mrf.mxu0
    %v6361 = vadd.f32 %v6347, %v6360
    %v6362 = vpop.f32.mrf.mxu0
    %v6363 = vadd.f32 %v6349, %v6362
    %6364 = vdwg.mxu0
    %6365 = vmatpush.bf16.msra.mxu0 %v6008
    %6366 = vmatpush.bf16.msra.mxu0 %v6004
    %6367 = vmatpush.bf16.msra.mxu0 %v6000
    %6368 = vmatpush.bf16.msra.mxu0 %v5996
    %6369 = vmatpush.bf16.msra.mxu0 %v5992
    %6370 = vmatpush.bf16.msra.mxu0 %v5988
    %6371 = vmatpush.bf16.msra.mxu0 %v5984
    %6372 = vmatpush.bf16.msra.mxu0 %v5980
    %6373 = vmatmul.bf16.gmra.mxu0 %v5387
    %v6374 = vpop.f32.mrf.mxu0
    %v6375 = vadd.f32 %v6361, %v6374
    %v6376 = vpop.f32.mrf.mxu0
    %v6377 = vadd.f32 %v6363, %v6376
    %6378 = vdwg.mxu0
    %6379 = vmatpush.bf16.msra.mxu0 %v6040
    %6380 = vmatpush.bf16.msra.mxu0 %v6036
    %6381 = vmatpush.bf16.msra.mxu0 %v6032
    %6382 = vmatpush.bf16.msra.mxu0 %v6028
    %6383 = vmatpush.bf16.msra.mxu0 %v6024
    %6384 = vmatpush.bf16.msra.mxu0 %v6020
    %6385 = vmatpush.bf16.msra.mxu0 %v6016
    %6386 = vmatpush.bf16.msra.mxu0 %v6012
    %6387 = vmatmul.bf16.gmra.mxu0 %v5388
    %v6388 = vpop.f32.mrf.mxu0
    %v6389 = vadd.f32 %v6375, %v6388
    %v6390 = vpop.f32.mrf.mxu0
    %v6391 = vadd.f32 %v6377, %v6390
    %6392 = vdwg.mxu0
    %v6393 = vmax.f32 %v6221, 0.0
    %v6394 = vmax.f32 %v6277, 0.0
    %v6395 = vmax.f32 %v6333, 0.0
    %v6396 = vmax.f32 %v6389, 0.0
    %v6397 = vmax.f32 %v6223, 0.0
    %v6398 = vmax.f32 %v6279, 0.0
    %v6399 = vmax.f32 %v6335, 0.0
    %v6400 = vmax.f32 %v6391, 0.0
    %v6401 = vadd.f32 %v4361, %v6393
    %v6402 = vadd.f32 %v4362, %v6394
    %v6403 = vadd.f32 %v4363, %v6395
    %v6404 = vadd.f32 %v4364, %v6396
    %v6405 = vadd.f32 %v4365, %v6397
    %v6406 = vadd.f32 %v4366, %v6398
    %v6407 = vadd.f32 %v4367, %v6399
    %v6408 = vadd.f32 %v4368, %v6400
    %v6409 = vpack.c.bf16 %v6405, %v6401
    %v6410 = vpack.c.bf16 %v6406, %v6402
    %v6411 = vpack.c.bf16 %v6407, %v6403
    %v6412 = vpack.c.bf16 %v6408, %v6404
    %s6413 = scalar_lea.vmem [#allocation8], 6144
    %v6414 = vld [vmem:[%s6413] sm:$0xff]
    %v6415 = vld [vmem:[%s6413 + $0x8] sm:$0xff]
    %v6416 = vld [vmem:[%s6413 + $0x10] sm:$0xff]
    %v6417 = vld [vmem:[%s6413 + $0x18] sm:$0xff]
    %v6418 = vld [vmem:[%s6413 + $0x20] sm:$0xff]
    %v6419 = vld [vmem:[%s6413 + $0x28] sm:$0xff]
    %v6420 = vld [vmem:[%s6413 + $0x30] sm:$0xff]
    %v6421 = vld [vmem:[%s6413 + $0x38] sm:$0xff]
    %v6422 = vld [vmem:[%s6413 + $0x40] sm:$0xff]
    %v6423 = vld [vmem:[%s6413 + $0x48] sm:$0xff]
    %v6424 = vld [vmem:[%s6413 + $0x50] sm:$0xff]
    %v6425 = vld [vmem:[%s6413 + $0x58] sm:$0xff]
    %v6426 = vld [vmem:[%s6413 + $0x60] sm:$0xff]
    %v6427 = vld [vmem:[%s6413 + $0x68] sm:$0xff]
    %v6428 = vld [vmem:[%s6413 + $0x70] sm:$0xff]
    %v6429 = vld [vmem:[%s6413 + $0x78] sm:$0xff]
    %v6430 = vld [vmem:[%s6413 + $0x80] sm:$0xff]
    %v6431 = vld [vmem:[%s6413 + $0x88] sm:$0xff]
    %v6432 = vld [vmem:[%s6413 + $0x90] sm:$0xff]
    %v6433 = vld [vmem:[%s6413 + $0x98] sm:$0xff]
    %v6434 = vld [vmem:[%s6413 + $0xa0] sm:$0xff]
    %v6435 = vld [vmem:[%s6413 + $0xa8] sm:$0xff]
    %v6436 = vld [vmem:[%s6413 + $0xb0] sm:$0xff]
    %v6437 = vld [vmem:[%s6413 + $0xb8] sm:$0xff]
    %v6438 = vld [vmem:[%s6413 + $0xc0] sm:$0xff]
    %v6439 = vld [vmem:[%s6413 + $0xc8] sm:$0xff]
    %v6440 = vld [vmem:[%s6413 + $0xd0] sm:$0xff]
    %v6441 = vld [vmem:[%s6413 + $0xd8] sm:$0xff]
    %v6442 = vld [vmem:[%s6413 + $0xe0] sm:$0xff]
    %v6443 = vld [vmem:[%s6413 + $0xe8] sm:$0xff]
    %v6444 = vld [vmem:[%s6413 + $0xf0] sm:$0xff]
    %v6445 = vld [vmem:[%s6413 + $0xf8] sm:$0xff]
    %v6446 = vld [vmem:[%s6413 + $0x100] sm:$0xff]
    %v6447 = vld [vmem:[%s6413 + $0x108] sm:$0xff]
    %v6448 = vld [vmem:[%s6413 + $0x110] sm:$0xff]
    %v6449 = vld [vmem:[%s6413 + $0x118] sm:$0xff]
    %v6450 = vld [vmem:[%s6413 + $0x120] sm:$0xff]
    %v6451 = vld [vmem:[%s6413 + $0x128] sm:$0xff]
    %v6452 = vld [vmem:[%s6413 + $0x130] sm:$0xff]
    %v6453 = vld [vmem:[%s6413 + $0x138] sm:$0xff]
    %v6454 = vld [vmem:[%s6413 + $0x140] sm:$0xff]
    %v6455 = vld [vmem:[%s6413 + $0x148] sm:$0xff]
    %v6456 = vld [vmem:[%s6413 + $0x150] sm:$0xff]
    %v6457 = vld [vmem:[%s6413 + $0x158] sm:$0xff]
    %v6458 = vld [vmem:[%s6413 + $0x160] sm:$0xff]
    %v6459 = vld [vmem:[%s6413 + $0x168] sm:$0xff]
    %v6460 = vld [vmem:[%s6413 + $0x170] sm:$0xff]
    %v6461 = vld [vmem:[%s6413 + $0x178] sm:$0xff]
    %v6462 = vld [vmem:[%s6413 + $0x180] sm:$0xff]
    %v6463 = vld [vmem:[%s6413 + $0x188] sm:$0xff]
    %v6464 = vld [vmem:[%s6413 + $0x190] sm:$0xff]
    %v6465 = vld [vmem:[%s6413 + $0x198] sm:$0xff]
    %v6466 = vld [vmem:[%s6413 + $0x1a0] sm:$0xff]
    %v6467 = vld [vmem:[%s6413 + $0x1a8] sm:$0xff]
    %v6468 = vld [vmem:[%s6413 + $0x1b0] sm:$0xff]
    %v6469 = vld [vmem:[%s6413 + $0x1b8] sm:$0xff]
    %v6470 = vld [vmem:[%s6413 + $0x1c0] sm:$0xff]
    %v6471 = vld [vmem:[%s6413 + $0x1c8] sm:$0xff]
    %v6472 = vld [vmem:[%s6413 + $0x1d0] sm:$0xff]
    %v6473 = vld [vmem:[%s6413 + $0x1d8] sm:$0xff]
    %v6474 = vld [vmem:[%s6413 + $0x1e0] sm:$0xff]
    %v6475 = vld [vmem:[%s6413 + $0x1e8] sm:$0xff]
    %v6476 = vld [vmem:[%s6413 + $0x1f0] sm:$0xff]
    %v6477 = vld [vmem:[%s6413 + $0x1f8] sm:$0xff]
    %v6478 = vld [vmem:[%s6413 + $0x200] sm:$0xff]
    %v6479 = vld [vmem:[%s6413 + $0x208] sm:$0xff]
    %v6480 = vld [vmem:[%s6413 + $0x210] sm:$0xff]
    %v6481 = vld [vmem:[%s6413 + $0x218] sm:$0xff]
    %v6482 = vld [vmem:[%s6413 + $0x220] sm:$0xff]
    %v6483 = vld [vmem:[%s6413 + $0x228] sm:$0xff]
    %v6484 = vld [vmem:[%s6413 + $0x230] sm:$0xff]
    %v6485 = vld [vmem:[%s6413 + $0x238] sm:$0xff]
    %v6486 = vld [vmem:[%s6413 + $0x240] sm:$0xff]
    %v6487 = vld [vmem:[%s6413 + $0x248] sm:$0xff]
    %v6488 = vld [vmem:[%s6413 + $0x250] sm:$0xff]
    %v6489 = vld [vmem:[%s6413 + $0x258] sm:$0xff]
    %v6490 = vld [vmem:[%s6413 + $0x260] sm:$0xff]
    %v6491 = vld [vmem:[%s6413 + $0x268] sm:$0xff]
    %v6492 = vld [vmem:[%s6413 + $0x270] sm:$0xff]
    %v6493 = vld [vmem:[%s6413 + $0x278] sm:$0xff]
    %v6494 = vld [vmem:[%s6413 + $0x280] sm:$0xff]
    %v6495 = vld [vmem:[%s6413 + $0x288] sm:$0xff]
    %v6496 = vld [vmem:[%s6413 + $0x290] sm:$0xff]
    %v6497 = vld [vmem:[%s6413 + $0x298] sm:$0xff]
    %v6498 = vld [vmem:[%s6413 + $0x2a0] sm:$0xff]
    %v6499 = vld [vmem:[%s6413 + $0x2a8] sm:$0xff]
    %v6500 = vld [vmem:[%s6413 + $0x2b0] sm:$0xff]
    %v6501 = vld [vmem:[%s6413 + $0x2b8] sm:$0xff]
    %v6502 = vld [vmem:[%s6413 + $0x2c0] sm:$0xff]
    %v6503 = vld [vmem:[%s6413 + $0x2c8] sm:$0xff]
    %v6504 = vld [vmem:[%s6413 + $0x2d0] sm:$0xff]
    %v6505 = vld [vmem:[%s6413 + $0x2d8] sm:$0xff]
    %v6506 = vld [vmem:[%s6413 + $0x2e0] sm:$0xff]
    %v6507 = vld [vmem:[%s6413 + $0x2e8] sm:$0xff]
    %v6508 = vld [vmem:[%s6413 + $0x2f0] sm:$0xff]
    %v6509 = vld [vmem:[%s6413 + $0x2f8] sm:$0xff]
    %v6510 = vld [vmem:[%s6413 + $0x300] sm:$0xff]
    %v6511 = vld [vmem:[%s6413 + $0x308] sm:$0xff]
    %v6512 = vld [vmem:[%s6413 + $0x310] sm:$0xff]
    %v6513 = vld [vmem:[%s6413 + $0x318] sm:$0xff]
    %v6514 = vld [vmem:[%s6413 + $0x320] sm:$0xff]
    %v6515 = vld [vmem:[%s6413 + $0x328] sm:$0xff]
    %v6516 = vld [vmem:[%s6413 + $0x330] sm:$0xff]
    %v6517 = vld [vmem:[%s6413 + $0x338] sm:$0xff]
    %v6518 = vld [vmem:[%s6413 + $0x340] sm:$0xff]
    %v6519 = vld [vmem:[%s6413 + $0x348] sm:$0xff]
    %v6520 = vld [vmem:[%s6413 + $0x350] sm:$0xff]
    %v6521 = vld [vmem:[%s6413 + $0x358] sm:$0xff]
    %v6522 = vld [vmem:[%s6413 + $0x360] sm:$0xff]
    %v6523 = vld [vmem:[%s6413 + $0x368] sm:$0xff]
    %v6524 = vld [vmem:[%s6413 + $0x370] sm:$0xff]
    %v6525 = vld [vmem:[%s6413 + $0x378] sm:$0xff]
    %v6526 = vld [vmem:[%s6413 + $0x380] sm:$0xff]
    %v6527 = vld [vmem:[%s6413 + $0x388] sm:$0xff]
    %v6528 = vld [vmem:[%s6413 + $0x390] sm:$0xff]
    %v6529 = vld [vmem:[%s6413 + $0x398] sm:$0xff]
    %v6530 = vld [vmem:[%s6413 + $0x3a0] sm:$0xff]
    %v6531 = vld [vmem:[%s6413 + $0x3a8] sm:$0xff]
    %v6532 = vld [vmem:[%s6413 + $0x3b0] sm:$0xff]
    %v6533 = vld [vmem:[%s6413 + $0x3b8] sm:$0xff]
    %v6534 = vld [vmem:[%s6413 + $0x3c0] sm:$0xff]
    %v6535 = vld [vmem:[%s6413 + $0x3c8] sm:$0xff]
    %v6536 = vld [vmem:[%s6413 + $0x3d0] sm:$0xff]
    %v6537 = vld [vmem:[%s6413 + $0x3d8] sm:$0xff]
    %v6538 = vld [vmem:[%s6413 + $0x3e0] sm:$0xff]
    %v6539 = vld [vmem:[%s6413 + $0x3e8] sm:$0xff]
    %v6540 = vld [vmem:[%s6413 + $0x3f0] sm:$0xff]
    %v6541 = vld [vmem:[%s6413 + $0x3f8] sm:$0xff]
    %s6542 = scalar_lea.vmem [#allocation10], 24
    %v6543 = vld [vmem:[%s6542] sm:$0xf]
    %v6545 = vperm.slane %v6543, 0
    %v6546 = vperm.slane %v6543, 1
    %v6547 = vperm.slane %v6543, 2
    %v6548 = vperm.slane %v6543, 3
    %v6681 = vunpack.c.l.b16 %v6414
    %v6682 = vunpack.c.h.b16 %v6414
    %v6683 = vunpack.c.l.b16 %v6415
    %v6684 = vunpack.c.h.b16 %v6415
    %v6685 = vunpack.c.l.b16 %v6416
    %v6686 = vunpack.c.h.b16 %v6416
    %v6687 = vunpack.c.l.b16 %v6417
    %v6688 = vunpack.c.h.b16 %v6417
    %v6689 = vunpack.c.l.b16 %v6418
    %v6690 = vunpack.c.h.b16 %v6418
    %v6691 = vunpack.c.l.b16 %v6419
    %v6692 = vunpack.c.h.b16 %v6419
    %v6693 = vunpack.c.l.b16 %v6420
    %v6694 = vunpack.c.h.b16 %v6420
    %v6695 = vunpack.c.l.b16 %v6421
    %v6696 = vunpack.c.h.b16 %v6421
    %v6697 = vunpack.c.l.b16 %v6422
    %v6698 = vunpack.c.h.b16 %v6422
    %v6699 = vunpack.c.l.b16 %v6423
    %v6700 = vunpack.c.h.b16 %v6423
    %v6701 = vunpack.c.l.b16 %v6424
    %v6702 = vunpack.c.h.b16 %v6424
    %v6703 = vunpack.c.l.b16 %v6425
    %v6704 = vunpack.c.h.b16 %v6425
    %v6705 = vunpack.c.l.b16 %v6426
    %v6706 = vunpack.c.h.b16 %v6426
    %v6707 = vunpack.c.l.b16 %v6427
    %v6708 = vunpack.c.h.b16 %v6427
    %v6709 = vunpack.c.l.b16 %v6428
    %v6710 = vunpack.c.h.b16 %v6428
    %v6711 = vunpack.c.l.b16 %v6429
    %v6712 = vunpack.c.h.b16 %v6429
    %v6713 = vunpack.c.l.b16 %v6430
    %v6714 = vunpack.c.h.b16 %v6430
    %v6715 = vunpack.c.l.b16 %v6431
    %v6716 = vunpack.c.h.b16 %v6431
    %v6717 = vunpack.c.l.b16 %v6432
    %v6718 = vunpack.c.h.b16 %v6432
    %v6719 = vunpack.c.l.b16 %v6433
    %v6720 = vunpack.c.h.b16 %v6433
    %v6721 = vunpack.c.l.b16 %v6434
    %v6722 = vunpack.c.h.b16 %v6434
    %v6723 = vunpack.c.l.b16 %v6435
    %v6724 = vunpack.c.h.b16 %v6435
    %v6725 = vunpack.c.l.b16 %v6436
    %v6726 = vunpack.c.h.b16 %v6436
    %v6727 = vunpack.c.l.b16 %v6437
    %v6728 = vunpack.c.h.b16 %v6437
    %v6729 = vunpack.c.l.b16 %v6438
    %v6730 = vunpack.c.h.b16 %v6438
    %v6731 = vunpack.c.l.b16 %v6439
    %v6732 = vunpack.c.h.b16 %v6439
    %v6733 = vunpack.c.l.b16 %v6440
    %v6734 = vunpack.c.h.b16 %v6440
    %v6735 = vunpack.c.l.b16 %v6441
    %v6736 = vunpack.c.h.b16 %v6441
    %v6737 = vunpack.c.l.b16 %v6442
    %v6738 = vunpack.c.h.b16 %v6442
    %v6739 = vunpack.c.l.b16 %v6443
    %v6740 = vunpack.c.h.b16 %v6443
    %v6741 = vunpack.c.l.b16 %v6444
    %v6742 = vunpack.c.h.b16 %v6444
    %v6743 = vunpack.c.l.b16 %v6445
    %v6744 = vunpack.c.h.b16 %v6445
    %v6745 = vunpack.c.l.b16 %v6446
    %v6746 = vunpack.c.h.b16 %v6446
    %v6747 = vunpack.c.l.b16 %v6447
    %v6748 = vunpack.c.h.b16 %v6447
    %v6749 = vunpack.c.l.b16 %v6448
    %v6750 = vunpack.c.h.b16 %v6448
    %v6751 = vunpack.c.l.b16 %v6449
    %v6752 = vunpack.c.h.b16 %v6449
    %v6753 = vunpack.c.l.b16 %v6450
    %v6754 = vunpack.c.h.b16 %v6450
    %v6755 = vunpack.c.l.b16 %v6451
    %v6756 = vunpack.c.h.b16 %v6451
    %v6757 = vunpack.c.l.b16 %v6452
    %v6758 = vunpack.c.h.b16 %v6452
    %v6759 = vunpack.c.l.b16 %v6453
    %v6760 = vunpack.c.h.b16 %v6453
    %v6761 = vunpack.c.l.b16 %v6454
    %v6762 = vunpack.c.h.b16 %v6454
    %v6763 = vunpack.c.l.b16 %v6455
    %v6764 = vunpack.c.h.b16 %v6455
    %v6765 = vunpack.c.l.b16 %v6456
    %v6766 = vunpack.c.h.b16 %v6456
    %v6767 = vunpack.c.l.b16 %v6457
    %v6768 = vunpack.c.h.b16 %v6457
    %v6769 = vunpack.c.l.b16 %v6458
    %v6770 = vunpack.c.h.b16 %v6458
    %v6771 = vunpack.c.l.b16 %v6459
    %v6772 = vunpack.c.h.b16 %v6459
    %v6773 = vunpack.c.l.b16 %v6460
    %v6774 = vunpack.c.h.b16 %v6460
    %v6775 = vunpack.c.l.b16 %v6461
    %v6776 = vunpack.c.h.b16 %v6461
    %v6777 = vunpack.c.l.b16 %v6462
    %v6778 = vunpack.c.h.b16 %v6462
    %v6779 = vunpack.c.l.b16 %v6463
    %v6780 = vunpack.c.h.b16 %v6463
    %v6781 = vunpack.c.l.b16 %v6464
    %v6782 = vunpack.c.h.b16 %v6464
    %v6783 = vunpack.c.l.b16 %v6465
    %v6784 = vunpack.c.h.b16 %v6465
    %v6785 = vunpack.c.l.b16 %v6466
    %v6786 = vunpack.c.h.b16 %v6466
    %v6787 = vunpack.c.l.b16 %v6467
    %v6788 = vunpack.c.h.b16 %v6467
    %v6789 = vunpack.c.l.b16 %v6468
    %v6790 = vunpack.c.h.b16 %v6468
    %v6791 = vunpack.c.l.b16 %v6469
    %v6792 = vunpack.c.h.b16 %v6469
    %v6793 = vunpack.c.l.b16 %v6470
    %v6794 = vunpack.c.h.b16 %v6470
    %v6795 = vunpack.c.l.b16 %v6471
    %v6796 = vunpack.c.h.b16 %v6471
    %v6797 = vunpack.c.l.b16 %v6472
    %v6798 = vunpack.c.h.b16 %v6472
    %v6799 = vunpack.c.l.b16 %v6473
    %v6800 = vunpack.c.h.b16 %v6473
    %v6801 = vunpack.c.l.b16 %v6474
    %v6802 = vunpack.c.h.b16 %v6474
    %v6803 = vunpack.c.l.b16 %v6475
    %v6804 = vunpack.c.h.b16 %v6475
    %v6805 = vunpack.c.l.b16 %v6476
    %v6806 = vunpack.c.h.b16 %v6476
    %v6807 = vunpack.c.l.b16 %v6477
    %v6808 = vunpack.c.h.b16 %v6477
    %v6809 = vunpack.c.l.b16 %v6478
    %v6810 = vunpack.c.h.b16 %v6478
    %v6811 = vunpack.c.l.b16 %v6479
    %v6812 = vunpack.c.h.b16 %v6479
    %v6813 = vunpack.c.l.b16 %v6480
    %v6814 = vunpack.c.h.b16 %v6480
    %v6815 = vunpack.c.l.b16 %v6481
    %v6816 = vunpack.c.h.b16 %v6481
    %v6817 = vunpack.c.l.b16 %v6482
    %v6818 = vunpack.c.h.b16 %v6482
    %v6819 = vunpack.c.l.b16 %v6483
    %v6820 = vunpack.c.h.b16 %v6483
    %v6821 = vunpack.c.l.b16 %v6484
    %v6822 = vunpack.c.h.b16 %v6484
    %v6823 = vunpack.c.l.b16 %v6485
    %v6824 = vunpack.c.h.b16 %v6485
    %v6825 = vunpack.c.l.b16 %v6486
    %v6826 = vunpack.c.h.b16 %v6486
    %v6827 = vunpack.c.l.b16 %v6487
    %v6828 = vunpack.c.h.b16 %v6487
    %v6829 = vunpack.c.l.b16 %v6488
    %v6830 = vunpack.c.h.b16 %v6488
    %v6831 = vunpack.c.l.b16 %v6489
    %v6832 = vunpack.c.h.b16 %v6489
    %v6833 = vunpack.c.l.b16 %v6490
    %v6834 = vunpack.c.h.b16 %v6490
    %v6835 = vunpack.c.l.b16 %v6491
    %v6836 = vunpack.c.h.b16 %v6491
    %v6837 = vunpack.c.l.b16 %v6492
    %v6838 = vunpack.c.h.b16 %v6492
    %v6839 = vunpack.c.l.b16 %v6493
    %v6840 = vunpack.c.h.b16 %v6493
    %v6841 = vunpack.c.l.b16 %v6494
    %v6842 = vunpack.c.h.b16 %v6494
    %v6843 = vunpack.c.l.b16 %v6495
    %v6844 = vunpack.c.h.b16 %v6495
    %v6845 = vunpack.c.l.b16 %v6496
    %v6846 = vunpack.c.h.b16 %v6496
    %v6847 = vunpack.c.l.b16 %v6497
    %v6848 = vunpack.c.h.b16 %v6497
    %v6849 = vunpack.c.l.b16 %v6498
    %v6850 = vunpack.c.h.b16 %v6498
    %v6851 = vunpack.c.l.b16 %v6499
    %v6852 = vunpack.c.h.b16 %v6499
    %v6853 = vunpack.c.l.b16 %v6500
    %v6854 = vunpack.c.h.b16 %v6500
    %v6855 = vunpack.c.l.b16 %v6501
    %v6856 = vunpack.c.h.b16 %v6501
    %v6857 = vunpack.c.l.b16 %v6502
    %v6858 = vunpack.c.h.b16 %v6502
    %v6859 = vunpack.c.l.b16 %v6503
    %v6860 = vunpack.c.h.b16 %v6503
    %v6861 = vunpack.c.l.b16 %v6504
    %v6862 = vunpack.c.h.b16 %v6504
    %v6863 = vunpack.c.l.b16 %v6505
    %v6864 = vunpack.c.h.b16 %v6505
    %v6865 = vunpack.c.l.b16 %v6506
    %v6866 = vunpack.c.h.b16 %v6506
    %v6867 = vunpack.c.l.b16 %v6507
    %v6868 = vunpack.c.h.b16 %v6507
    %v6869 = vunpack.c.l.b16 %v6508
    %v6870 = vunpack.c.h.b16 %v6508
    %v6871 = vunpack.c.l.b16 %v6509
    %v6872 = vunpack.c.h.b16 %v6509
    %v6873 = vunpack.c.l.b16 %v6510
    %v6874 = vunpack.c.h.b16 %v6510
    %v6875 = vunpack.c.l.b16 %v6511
    %v6876 = vunpack.c.h.b16 %v6511
    %v6877 = vunpack.c.l.b16 %v6512
    %v6878 = vunpack.c.h.b16 %v6512
    %v6879 = vunpack.c.l.b16 %v6513
    %v6880 = vunpack.c.h.b16 %v6513
    %v6881 = vunpack.c.l.b16 %v6514
    %v6882 = vunpack.c.h.b16 %v6514
    %v6883 = vunpack.c.l.b16 %v6515
    %v6884 = vunpack.c.h.b16 %v6515
    %v6885 = vunpack.c.l.b16 %v6516
    %v6886 = vunpack.c.h.b16 %v6516
    %v6887 = vunpack.c.l.b16 %v6517
    %v6888 = vunpack.c.h.b16 %v6517
    %v6889 = vunpack.c.l.b16 %v6518
    %v6890 = vunpack.c.h.b16 %v6518
    %v6891 = vunpack.c.l.b16 %v6519
    %v6892 = vunpack.c.h.b16 %v6519
    %v6893 = vunpack.c.l.b16 %v6520
    %v6894 = vunpack.c.h.b16 %v6520
    %v6895 = vunpack.c.l.b16 %v6521
    %v6896 = vunpack.c.h.b16 %v6521
    %v6897 = vunpack.c.l.b16 %v6522
    %v6898 = vunpack.c.h.b16 %v6522
    %v6899 = vunpack.c.l.b16 %v6523
    %v6900 = vunpack.c.h.b16 %v6523
    %v6901 = vunpack.c.l.b16 %v6524
    %v6902 = vunpack.c.h.b16 %v6524
    %v6903 = vunpack.c.l.b16 %v6525
    %v6904 = vunpack.c.h.b16 %v6525
    %v6905 = vunpack.c.l.b16 %v6526
    %v6906 = vunpack.c.h.b16 %v6526
    %v6907 = vunpack.c.l.b16 %v6527
    %v6908 = vunpack.c.h.b16 %v6527
    %v6909 = vunpack.c.l.b16 %v6528
    %v6910 = vunpack.c.h.b16 %v6528
    %v6911 = vunpack.c.l.b16 %v6529
    %v6912 = vunpack.c.h.b16 %v6529
    %v6913 = vunpack.c.l.b16 %v6530
    %v6914 = vunpack.c.h.b16 %v6530
    %v6915 = vunpack.c.l.b16 %v6531
    %v6916 = vunpack.c.h.b16 %v6531
    %v6917 = vunpack.c.l.b16 %v6532
    %v6918 = vunpack.c.h.b16 %v6532
    %v6919 = vunpack.c.l.b16 %v6533
    %v6920 = vunpack.c.h.b16 %v6533
    %v6921 = vunpack.c.l.b16 %v6534
    %v6922 = vunpack.c.h.b16 %v6534
    %v6923 = vunpack.c.l.b16 %v6535
    %v6924 = vunpack.c.h.b16 %v6535
    %v6925 = vunpack.c.l.b16 %v6536
    %v6926 = vunpack.c.h.b16 %v6536
    %v6927 = vunpack.c.l.b16 %v6537
    %v6928 = vunpack.c.h.b16 %v6537
    %v6929 = vunpack.c.l.b16 %v6538
    %v6930 = vunpack.c.h.b16 %v6538
    %v6931 = vunpack.c.l.b16 %v6539
    %v6932 = vunpack.c.h.b16 %v6539
    %v6933 = vunpack.c.l.b16 %v6540
    %v6934 = vunpack.c.h.b16 %v6540
    %v6935 = vunpack.c.l.b16 %v6541
    %v6936 = vunpack.c.h.b16 %v6541
    %v6937 = vpack.c.b16 %v6685, %v6681
    %v6938 = vpack.c.b16 %v6686, %v6682
    %v6939 = vpack.c.b16 %v6687, %v6683
    %v6940 = vpack.c.b16 %v6688, %v6684
    %v6941 = vpack.c.b16 %v6693, %v6689
    %v6942 = vpack.c.b16 %v6694, %v6690
    %v6943 = vpack.c.b16 %v6695, %v6691
    %v6944 = vpack.c.b16 %v6696, %v6692
    %v6945 = vpack.c.b16 %v6701, %v6697
    %v6946 = vpack.c.b16 %v6702, %v6698
    %v6947 = vpack.c.b16 %v6703, %v6699
    %v6948 = vpack.c.b16 %v6704, %v6700
    %v6949 = vpack.c.b16 %v6709, %v6705
    %v6950 = vpack.c.b16 %v6710, %v6706
    %v6951 = vpack.c.b16 %v6711, %v6707
    %v6952 = vpack.c.b16 %v6712, %v6708
    %v6953 = vpack.c.b16 %v6717, %v6713
    %v6954 = vpack.c.b16 %v6718, %v6714
    %v6955 = vpack.c.b16 %v6719, %v6715
    %v6956 = vpack.c.b16 %v6720, %v6716
    %v6957 = vpack.c.b16 %v6725, %v6721
    %v6958 = vpack.c.b16 %v6726, %v6722
    %v6959 = vpack.c.b16 %v6727, %v6723
    %v6960 = vpack.c.b16 %v6728, %v6724
    %v6961 = vpack.c.b16 %v6733, %v6729
    %v6962 = vpack.c.b16 %v6734, %v6730
    %v6963 = vpack.c.b16 %v6735, %v6731
    %v6964 = vpack.c.b16 %v6736, %v6732
    %v6965 = vpack.c.b16 %v6741, %v6737
    %v6966 = vpack.c.b16 %v6742, %v6738
    %v6967 = vpack.c.b16 %v6743, %v6739
    %v6968 = vpack.c.b16 %v6744, %v6740
    %v6969 = vpack.c.b16 %v6749, %v6745
    %v6970 = vpack.c.b16 %v6750, %v6746
    %v6971 = vpack.c.b16 %v6751, %v6747
    %v6972 = vpack.c.b16 %v6752, %v6748
    %v6973 = vpack.c.b16 %v6757, %v6753
    %v6974 = vpack.c.b16 %v6758, %v6754
    %v6975 = vpack.c.b16 %v6759, %v6755
    %v6976 = vpack.c.b16 %v6760, %v6756
    %v6977 = vpack.c.b16 %v6765, %v6761
    %v6978 = vpack.c.b16 %v6766, %v6762
    %v6979 = vpack.c.b16 %v6767, %v6763
    %v6980 = vpack.c.b16 %v6768, %v6764
    %v6981 = vpack.c.b16 %v6773, %v6769
    %v6982 = vpack.c.b16 %v6774, %v6770
    %v6983 = vpack.c.b16 %v6775, %v6771
    %v6984 = vpack.c.b16 %v6776, %v6772
    %v6985 = vpack.c.b16 %v6781, %v6777
    %v6986 = vpack.c.b16 %v6782, %v6778
    %v6987 = vpack.c.b16 %v6783, %v6779
    %v6988 = vpack.c.b16 %v6784, %v6780
    %v6989 = vpack.c.b16 %v6789, %v6785
    %v6990 = vpack.c.b16 %v6790, %v6786
    %v6991 = vpack.c.b16 %v6791, %v6787
    %v6992 = vpack.c.b16 %v6792, %v6788
    %v6993 = vpack.c.b16 %v6797, %v6793
    %v6994 = vpack.c.b16 %v6798, %v6794
    %v6995 = vpack.c.b16 %v6799, %v6795
    %v6996 = vpack.c.b16 %v6800, %v6796
    %v6997 = vpack.c.b16 %v6805, %v6801
    %v6998 = vpack.c.b16 %v6806, %v6802
    %v6999 = vpack.c.b16 %v6807, %v6803
    %v7000 = vpack.c.b16 %v6808, %v6804
    %v7001 = vpack.c.b16 %v6813, %v6809
    %v7002 = vpack.c.b16 %v6814, %v6810
    %v7003 = vpack.c.b16 %v6815, %v6811
    %v7004 = vpack.c.b16 %v6816, %v6812
    %v7005 = vpack.c.b16 %v6821, %v6817
    %v7006 = vpack.c.b16 %v6822, %v6818
    %v7007 = vpack.c.b16 %v6823, %v6819
    %v7008 = vpack.c.b16 %v6824, %v6820
    %v7009 = vpack.c.b16 %v6829, %v6825
    %v7010 = vpack.c.b16 %v6830, %v6826
    %v7011 = vpack.c.b16 %v6831, %v6827
    %v7012 = vpack.c.b16 %v6832, %v6828
    %v7013 = vpack.c.b16 %v6837, %v6833
    %v7014 = vpack.c.b16 %v6838, %v6834
    %v7015 = vpack.c.b16 %v6839, %v6835
    %v7016 = vpack.c.b16 %v6840, %v6836
    %v7017 = vpack.c.b16 %v6845, %v6841
    %v7018 = vpack.c.b16 %v6846, %v6842
    %v7019 = vpack.c.b16 %v6847, %v6843
    %v7020 = vpack.c.b16 %v6848, %v6844
    %v7021 = vpack.c.b16 %v6853, %v6849
    %v7022 = vpack.c.b16 %v6854, %v6850
    %v7023 = vpack.c.b16 %v6855, %v6851
    %v7024 = vpack.c.b16 %v6856, %v6852
    %v7025 = vpack.c.b16 %v6861, %v6857
    %v7026 = vpack.c.b16 %v6862, %v6858
    %v7027 = vpack.c.b16 %v6863, %v6859
    %v7028 = vpack.c.b16 %v6864, %v6860
    %v7029 = vpack.c.b16 %v6869, %v6865
    %v7030 = vpack.c.b16 %v6870, %v6866
    %v7031 = vpack.c.b16 %v6871, %v6867
    %v7032 = vpack.c.b16 %v6872, %v6868
    %v7033 = vpack.c.b16 %v6877, %v6873
    %v7034 = vpack.c.b16 %v6878, %v6874
    %v7035 = vpack.c.b16 %v6879, %v6875
    %v7036 = vpack.c.b16 %v6880, %v6876
    %v7037 = vpack.c.b16 %v6885, %v6881
    %v7038 = vpack.c.b16 %v6886, %v6882
    %v7039 = vpack.c.b16 %v6887, %v6883
    %v7040 = vpack.c.b16 %v6888, %v6884
    %v7041 = vpack.c.b16 %v6893, %v6889
    %v7042 = vpack.c.b16 %v6894, %v6890
    %v7043 = vpack.c.b16 %v6895, %v6891
    %v7044 = vpack.c.b16 %v6896, %v6892
    %v7045 = vpack.c.b16 %v6901, %v6897
    %v7046 = vpack.c.b16 %v6902, %v6898
    %v7047 = vpack.c.b16 %v6903, %v6899
    %v7048 = vpack.c.b16 %v6904, %v6900
    %v7049 = vpack.c.b16 %v6909, %v6905
    %v7050 = vpack.c.b16 %v6910, %v6906
    %v7051 = vpack.c.b16 %v6911, %v6907
    %v7052 = vpack.c.b16 %v6912, %v6908
    %v7053 = vpack.c.b16 %v6917, %v6913
    %v7054 = vpack.c.b16 %v6918, %v6914
    %v7055 = vpack.c.b16 %v6919, %v6915
    %v7056 = vpack.c.b16 %v6920, %v6916
    %v7057 = vpack.c.b16 %v6925, %v6921
    %v7058 = vpack.c.b16 %v6926, %v6922
    %v7059 = vpack.c.b16 %v6927, %v6923
    %v7060 = vpack.c.b16 %v6928, %v6924
    %v7061 = vpack.c.b16 %v6933, %v6929
    %v7062 = vpack.c.b16 %v6934, %v6930
    %v7063 = vpack.c.b16 %v6935, %v6931
    %v7064 = vpack.c.b16 %v6936, %v6932
    %7193 = vmatpush.bf16.msra.mxu0 %v6965
    %7194 = vmatpush.bf16.msra.mxu0 %v6961
    %7195 = vmatpush.bf16.msra.mxu0 %v6957
    %7196 = vmatpush.bf16.msra.mxu0 %v6953
    %7197 = vmatpush.bf16.msra.mxu0 %v6949
    %7198 = vmatpush.bf16.msra.mxu0 %v6945
    %7199 = vmatpush.bf16.msra.mxu0 %v6941
    %7200 = vmatpush.bf16.msra.mxu0 %v6937
    %7201 = vmatmul.bf16.gmra.mxu0 %v6409
    %v7202 = vpop.f32.mrf.mxu0
    %v7203 = vadd.f32 %v6545, %v7202
    %v7204 = vpop.f32.mrf.mxu0
    %v7205 = vadd.f32 %v6545, %v7204
    %7206 = vdwg.mxu0
    %7207 = vmatpush.bf16.msra.mxu0 %v6997
    %7208 = vmatpush.bf16.msra.mxu0 %v6993
    %7209 = vmatpush.bf16.msra.mxu0 %v6989
    %7210 = vmatpush.bf16.msra.mxu0 %v6985
    %7211 = vmatpush.bf16.msra.mxu0 %v6981
    %7212 = vmatpush.bf16.msra.mxu0 %v6977
    %7213 = vmatpush.bf16.msra.mxu0 %v6973
    %7214 = vmatpush.bf16.msra.mxu0 %v6969
    %7215 = vmatmul.bf16.gmra.mxu0 %v6410
    %v7216 = vpop.f32.mrf.mxu0
    %v7217 = vadd.f32 %v7203, %v7216
    %v7218 = vpop.f32.mrf.mxu0
    %v7219 = vadd.f32 %v7205, %v7218
    %7220 = vdwg.mxu0
    %7221 = vmatpush.bf16.msra.mxu0 %v7029
    %7222 = vmatpush.bf16.msra.mxu0 %v7025
    %7223 = vmatpush.bf16.msra.mxu0 %v7021
    %7224 = vmatpush.bf16.msra.mxu0 %v7017
    %7225 = vmatpush.bf16.msra.mxu0 %v7013
    %7226 = vmatpush.bf16.msra.mxu0 %v7009
    %7227 = vmatpush.bf16.msra.mxu0 %v7005
    %7228 = vmatpush.bf16.msra.mxu0 %v7001
    %7229 = vmatmul.bf16.gmra.mxu0 %v6411
    %v7230 = vpop.f32.mrf.mxu0
    %v7231 = vadd.f32 %v7217, %v7230
    %v7232 = vpop.f32.mrf.mxu0
    %v7233 = vadd.f32 %v7219, %v7232
    %7234 = vdwg.mxu0
    %7235 = vmatpush.bf16.msra.mxu0 %v7061
    %7236 = vmatpush.bf16.msra.mxu0 %v7057
    %7237 = vmatpush.bf16.msra.mxu0 %v7053
    %7238 = vmatpush.bf16.msra.mxu0 %v7049
    %7239 = vmatpush.bf16.msra.mxu0 %v7045
    %7240 = vmatpush.bf16.msra.mxu0 %v7041
    %7241 = vmatpush.bf16.msra.mxu0 %v7037
    %7242 = vmatpush.bf16.msra.mxu0 %v7033
    %7243 = vmatmul.bf16.gmra.mxu0 %v6412
    %v7244 = vpop.f32.mrf.mxu0
    %v7245 = vadd.f32 %v7231, %v7244
    %v7246 = vpop.f32.mrf.mxu0
    %v7247 = vadd.f32 %v7233, %v7246
    %7248 = vdwg.mxu0
    %7249 = vmatpush.bf16.msra.mxu0 %v6966
    %7250 = vmatpush.bf16.msra.mxu0 %v6962
    %7251 = vmatpush.bf16.msra.mxu0 %v6958
    %7252 = vmatpush.bf16.msra.mxu0 %v6954
    %7253 = vmatpush.bf16.msra.mxu0 %v6950
    %7254 = vmatpush.bf16.msra.mxu0 %v6946
    %7255 = vmatpush.bf16.msra.mxu0 %v6942
    %7256 = vmatpush.bf16.msra.mxu0 %v6938
    %7257 = vmatmul.bf16.gmra.mxu0 %v6409
    %v7258 = vpop.f32.mrf.mxu0
    %v7259 = vadd.f32 %v6546, %v7258
    %v7260 = vpop.f32.mrf.mxu0
    %v7261 = vadd.f32 %v6546, %v7260
    %7262 = vdwg.mxu0
    %7263 = vmatpush.bf16.msra.mxu0 %v6998
    %7264 = vmatpush.bf16.msra.mxu0 %v6994
    %7265 = vmatpush.bf16.msra.mxu0 %v6990
    %7266 = vmatpush.bf16.msra.mxu0 %v6986
    %7267 = vmatpush.bf16.msra.mxu0 %v6982
    %7268 = vmatpush.bf16.msra.mxu0 %v6978
    %7269 = vmatpush.bf16.msra.mxu0 %v6974
    %7270 = vmatpush.bf16.msra.mxu0 %v6970
    %7271 = vmatmul.bf16.gmra.mxu0 %v6410
    %v7272 = vpop.f32.mrf.mxu0
    %v7273 = vadd.f32 %v7259, %v7272
    %v7274 = vpop.f32.mrf.mxu0
    %v7275 = vadd.f32 %v7261, %v7274
    %7276 = vdwg.mxu0
    %7277 = vmatpush.bf16.msra.mxu0 %v7030
    %7278 = vmatpush.bf16.msra.mxu0 %v7026
    %7279 = vmatpush.bf16.msra.mxu0 %v7022
    %7280 = vmatpush.bf16.msra.mxu0 %v7018
    %7281 = vmatpush.bf16.msra.mxu0 %v7014
    %7282 = vmatpush.bf16.msra.mxu0 %v7010
    %7283 = vmatpush.bf16.msra.mxu0 %v7006
    %7284 = vmatpush.bf16.msra.mxu0 %v7002
    %7285 = vmatmul.bf16.gmra.mxu0 %v6411
    %v7286 = vpop.f32.mrf.mxu0
    %v7287 = vadd.f32 %v7273, %v7286
    %v7288 = vpop.f32.mrf.mxu0
    %v7289 = vadd.f32 %v7275, %v7288
    %7290 = vdwg.mxu0
    %7291 = vmatpush.bf16.msra.mxu0 %v7062
    %7292 = vmatpush.bf16.msra.mxu0 %v7058
    %7293 = vmatpush.bf16.msra.mxu0 %v7054
    %7294 = vmatpush.bf16.msra.mxu0 %v7050
    %7295 = vmatpush.bf16.msra.mxu0 %v7046
    %7296 = vmatpush.bf16.msra.mxu0 %v7042
    %7297 = vmatpush.bf16.msra.mxu0 %v7038
    %7298 = vmatpush.bf16.msra.mxu0 %v7034
    %7299 = vmatmul.bf16.gmra.mxu0 %v6412
    %v7300 = vpop.f32.mrf.mxu0
    %v7301 = vadd.f32 %v7287, %v7300
    %v7302 = vpop.f32.mrf.mxu0
    %v7303 = vadd.f32 %v7289, %v7302
    %7304 = vdwg.mxu0
    %7305 = vmatpush.bf16.msra.mxu0 %v6967
    %7306 = vmatpush.bf16.msra.mxu0 %v6963
    %7307 = vmatpush.bf16.msra.mxu0 %v6959
    %7308 = vmatpush.bf16.msra.mxu0 %v6955
    %7309 = vmatpush.bf16.msra.mxu0 %v6951
    %7310 = vmatpush.bf16.msra.mxu0 %v6947
    %7311 = vmatpush.bf16.msra.mxu0 %v6943
    %7312 = vmatpush.bf16.msra.mxu0 %v6939
    %7313 = vmatmul.bf16.gmra.mxu0 %v6409
    %v7314 = vpop.f32.mrf.mxu0
    %v7315 = vadd.f32 %v6547, %v7314
    %v7316 = vpop.f32.mrf.mxu0
    %v7317 = vadd.f32 %v6547, %v7316
    %7318 = vdwg.mxu0
    %7319 = vmatpush.bf16.msra.mxu0 %v6999
    %7320 = vmatpush.bf16.msra.mxu0 %v6995
    %7321 = vmatpush.bf16.msra.mxu0 %v6991
    %7322 = vmatpush.bf16.msra.mxu0 %v6987
    %7323 = vmatpush.bf16.msra.mxu0 %v6983
    %7324 = vmatpush.bf16.msra.mxu0 %v6979
    %7325 = vmatpush.bf16.msra.mxu0 %v6975
    %7326 = vmatpush.bf16.msra.mxu0 %v6971
    %7327 = vmatmul.bf16.gmra.mxu0 %v6410
    %v7328 = vpop.f32.mrf.mxu0
    %v7329 = vadd.f32 %v7315, %v7328
    %v7330 = vpop.f32.mrf.mxu0
    %v7331 = vadd.f32 %v7317, %v7330
    %7332 = vdwg.mxu0
    %7333 = vmatpush.bf16.msra.mxu0 %v7031
    %7334 = vmatpush.bf16.msra.mxu0 %v7027
    %7335 = vmatpush.bf16.msra.mxu0 %v7023
    %7336 = vmatpush.bf16.msra.mxu0 %v7019
    %7337 = vmatpush.bf16.msra.mxu0 %v7015
    %7338 = vmatpush.bf16.msra.mxu0 %v7011
    %7339 = vmatpush.bf16.msra.mxu0 %v7007
    %7340 = vmatpush.bf16.msra.mxu0 %v7003
    %7341 = vmatmul.bf16.gmra.mxu0 %v6411
    %v7342 = vpop.f32.mrf.mxu0
    %v7343 = vadd.f32 %v7329, %v7342
    %v7344 = vpop.f32.mrf.mxu0
    %v7345 = vadd.f32 %v7331, %v7344
    %7346 = vdwg.mxu0
    %7347 = vmatpush.bf16.msra.mxu0 %v7063
    %7348 = vmatpush.bf16.msra.mxu0 %v7059
    %7349 = vmatpush.bf16.msra.mxu0 %v7055
    %7350 = vmatpush.bf16.msra.mxu0 %v7051
    %7351 = vmatpush.bf16.msra.mxu0 %v7047
    %7352 = vmatpush.bf16.msra.mxu0 %v7043
    %7353 = vmatpush.bf16.msra.mxu0 %v7039
    %7354 = vmatpush.bf16.msra.mxu0 %v7035
    %7355 = vmatmul.bf16.gmra.mxu0 %v6412
    %v7356 = vpop.f32.mrf.mxu0
    %v7357 = vadd.f32 %v7343, %v7356
    %v7358 = vpop.f32.mrf.mxu0
    %v7359 = vadd.f32 %v7345, %v7358
    %7360 = vdwg.mxu0
    %7361 = vmatpush.bf16.msra.mxu0 %v6968
    %7362 = vmatpush.bf16.msra.mxu0 %v6964
    %7363 = vmatpush.bf16.msra.mxu0 %v6960
    %7364 = vmatpush.bf16.msra.mxu0 %v6956
    %7365 = vmatpush.bf16.msra.mxu0 %v6952
    %7366 = vmatpush.bf16.msra.mxu0 %v6948
    %7367 = vmatpush.bf16.msra.mxu0 %v6944
    %7368 = vmatpush.bf16.msra.mxu0 %v6940
    %7369 = vmatmul.bf16.gmra.mxu0 %v6409
    %v7370 = vpop.f32.mrf.mxu0
    %v7371 = vadd.f32 %v6548, %v7370
    %v7372 = vpop.f32.mrf.mxu0
    %v7373 = vadd.f32 %v6548, %v7372
    %7374 = vdwg.mxu0
    %7375 = vmatpush.bf16.msra.mxu0 %v7000
    %7376 = vmatpush.bf16.msra.mxu0 %v6996
    %7377 = vmatpush.bf16.msra.mxu0 %v6992
    %7378 = vmatpush.bf16.msra.mxu0 %v6988
    %7379 = vmatpush.bf16.msra.mxu0 %v6984
    %7380 = vmatpush.bf16.msra.mxu0 %v6980
    %7381 = vmatpush.bf16.msra.mxu0 %v6976
    %7382 = vmatpush.bf16.msra.mxu0 %v6972
    %7383 = vmatmul.bf16.gmra.mxu0 %v6410
    %v7384 = vpop.f32.mrf.mxu0
    %v7385 = vadd.f32 %v7371, %v7384
    %v7386 = vpop.f32.mrf.mxu0
    %v7387 = vadd.f32 %v7373, %v7386
    %7388 = vdwg.mxu0
    %7389 = vmatpush.bf16.msra.mxu0 %v7032
    %7390 = vmatpush.bf16.msra.mxu0 %v7028
    %7391 = vmatpush.bf16.msra.mxu0 %v7024
    %7392 = vmatpush.bf16.msra.mxu0 %v7020
    %7393 = vmatpush.bf16.msra.mxu0 %v7016
    %7394 = vmatpush.bf16.msra.mxu0 %v7012
    %7395 = vmatpush.bf16.msra.mxu0 %v7008
    %7396 = vmatpush.bf16.msra.mxu0 %v7004
    %7397 = vmatmul.bf16.gmra.mxu0 %v6411
    %v7398 = vpop.f32.mrf.mxu0
    %v7399 = vadd.f32 %v7385, %v7398
    %v7400 = vpop.f32.mrf.mxu0
    %v7401 = vadd.f32 %v7387, %v7400
    %7402 = vdwg.mxu0
    %7403 = vmatpush.bf16.msra.mxu0 %v7064
    %7404 = vmatpush.bf16.msra.mxu0 %v7060
    %7405 = vmatpush.bf16.msra.mxu0 %v7056
    %7406 = vmatpush.bf16.msra.mxu0 %v7052
    %7407 = vmatpush.bf16.msra.mxu0 %v7048
    %7408 = vmatpush.bf16.msra.mxu0 %v7044
    %7409 = vmatpush.bf16.msra.mxu0 %v7040
    %7410 = vmatpush.bf16.msra.mxu0 %v7036
    %7411 = vmatmul.bf16.gmra.mxu0 %v6412
    %v7412 = vpop.f32.mrf.mxu0
    %v7413 = vadd.f32 %v7399, %v7412
    %v7414 = vpop.f32.mrf.mxu0
    %v7415 = vadd.f32 %v7401, %v7414
    %7416 = vdwg.mxu0
    %v7417 = vmax.f32 %v7245, 0.0
    %v7418 = vmax.f32 %v7301, 0.0
    %v7419 = vmax.f32 %v7357, 0.0
    %v7420 = vmax.f32 %v7413, 0.0
    %v7421 = vmax.f32 %v7247, 0.0
    %v7422 = vmax.f32 %v7303, 0.0
    %v7423 = vmax.f32 %v7359, 0.0
    %v7424 = vmax.f32 %v7415, 0.0
    %v7425 = vpack.c.bf16 %v7421, %v7417
    %v7426 = vpack.c.bf16 %v7422, %v7418
    %v7427 = vpack.c.bf16 %v7423, %v7419
    %v7428 = vpack.c.bf16 %v7424, %v7420
    %v7429 = vld [vmem:[#allocation11] sm:$0xf]
    %v7430 = vld [vmem:[#allocation11 + $0x4] sm:$0xf]
    %v7431 = vld [vmem:[#allocation11 + $0x8] sm:$0xf]
    %v7432 = vld [vmem:[#allocation11 + $0xc] sm:$0xf]
    %v7433 = vld [vmem:[#allocation11 + $0x10] sm:$0xf]
    %v7434 = vld [vmem:[#allocation11 + $0x14] sm:$0xf]
    %v7435 = vld [vmem:[#allocation11 + $0x18] sm:$0xf]
    %v7436 = vld [vmem:[#allocation11 + $0x1c] sm:$0xf]
    %v7437 = vld [vmem:[#allocation11 + $0x20] sm:$0xf]
    %v7438 = vld [vmem:[#allocation11 + $0x24] sm:$0xf]
    %v7439 = vld [vmem:[#allocation11 + $0x28] sm:$0xf]
    %v7440 = vld [vmem:[#allocation11 + $0x2c] sm:$0xf]
    %v7441 = vld [vmem:[#allocation11 + $0x30] sm:$0xf]
    %v7442 = vld [vmem:[#allocation11 + $0x34] sm:$0xf]
    %v7443 = vld [vmem:[#allocation11 + $0x38] sm:$0xf]
    %v7444 = vld [vmem:[#allocation11 + $0x3c] sm:$0xf]
    %v7445 = vld [vmem:[#allocation11 + $0x40] sm:$0xf]
    %v7446 = vld [vmem:[#allocation11 + $0x44] sm:$0xf]
    %v7447 = vld [vmem:[#allocation11 + $0x48] sm:$0xf]
    %v7448 = vld [vmem:[#allocation11 + $0x4c] sm:$0xf]
    %v7449 = vld [vmem:[#allocation11 + $0x50] sm:$0xf]
    %v7450 = vld [vmem:[#allocation11 + $0x54] sm:$0xf]
    %v7451 = vld [vmem:[#allocation11 + $0x58] sm:$0xf]
    %v7452 = vld [vmem:[#allocation11 + $0x5c] sm:$0xf]
    %v7453 = vld [vmem:[#allocation11 + $0x60] sm:$0xf]
    %v7454 = vld [vmem:[#allocation11 + $0x64] sm:$0xf]
    %v7455 = vld [vmem:[#allocation11 + $0x68] sm:$0xf]
    %v7456 = vld [vmem:[#allocation11 + $0x6c] sm:$0xf]
    %v7457 = vld [vmem:[#allocation11 + $0x70] sm:$0xf]
    %v7458 = vld [vmem:[#allocation11 + $0x74] sm:$0xf]
    %v7459 = vld [vmem:[#allocation11 + $0x78] sm:$0xf]
    %v7460 = vld [vmem:[#allocation11 + $0x7c] sm:$0xf]
    %v7461 = vld [vmem:[#allocation11 + $0x80] sm:$0xf]
    %v7462 = vld [vmem:[#allocation11 + $0x84] sm:$0xf]
    %v7463 = vld [vmem:[#allocation11 + $0x88] sm:$0xf]
    %v7464 = vld [vmem:[#allocation11 + $0x8c] sm:$0xf]
    %v7465 = vld [vmem:[#allocation11 + $0x90] sm:$0xf]
    %v7466 = vld [vmem:[#allocation11 + $0x94] sm:$0xf]
    %v7467 = vld [vmem:[#allocation11 + $0x98] sm:$0xf]
    %v7468 = vld [vmem:[#allocation11 + $0x9c] sm:$0xf]
    %v7469 = vld [vmem:[#allocation11 + $0xa0] sm:$0xf]
    %v7470 = vld [vmem:[#allocation11 + $0xa4] sm:$0xf]
    %v7471 = vld [vmem:[#allocation11 + $0xa8] sm:$0xf]
    %v7472 = vld [vmem:[#allocation11 + $0xac] sm:$0xf]
    %v7473 = vld [vmem:[#allocation11 + $0xb0] sm:$0xf]
    %v7474 = vld [vmem:[#allocation11 + $0xb4] sm:$0xf]
    %v7475 = vld [vmem:[#allocation11 + $0xb8] sm:$0xf]
    %v7476 = vld [vmem:[#allocation11 + $0xbc] sm:$0xf]
    %v7477 = vld [vmem:[#allocation11 + $0xc0] sm:$0xf]
    %v7478 = vld [vmem:[#allocation11 + $0xc4] sm:$0xf]
    %v7479 = vld [vmem:[#allocation11 + $0xc8] sm:$0xf]
    %v7480 = vld [vmem:[#allocation11 + $0xcc] sm:$0xf]
    %v7481 = vld [vmem:[#allocation11 + $0xd0] sm:$0xf]
    %v7482 = vld [vmem:[#allocation11 + $0xd4] sm:$0xf]
    %v7483 = vld [vmem:[#allocation11 + $0xd8] sm:$0xf]
    %v7484 = vld [vmem:[#allocation11 + $0xdc] sm:$0xf]
    %v7485 = vld [vmem:[#allocation11 + $0xe0] sm:$0xf]
    %v7486 = vld [vmem:[#allocation11 + $0xe4] sm:$0xf]
    %v7487 = vld [vmem:[#allocation11 + $0xe8] sm:$0xf]
    %v7488 = vld [vmem:[#allocation11 + $0xec] sm:$0xf]
    %v7489 = vld [vmem:[#allocation11 + $0xf0] sm:$0xf]
    %v7490 = vld [vmem:[#allocation11 + $0xf4] sm:$0xf]
    %v7491 = vld [vmem:[#allocation11 + $0xf8] sm:$0xf]
    %v7492 = vld [vmem:[#allocation11 + $0xfc] sm:$0xf]
    %v7493 = vld [vmem:[#allocation13] sm:$0x1]
    %v7495 = vperm.slane %v7493, 0
    %v7561 = vunpack.c.l.b16 %v7429
    %v7562 = vunpack.c.l.b16 %v7430
    %v7563 = vunpack.c.l.b16 %v7431
    %v7564 = vunpack.c.l.b16 %v7432
    %v7565 = vunpack.c.l.b16 %v7433
    %v7566 = vunpack.c.l.b16 %v7434
    %v7567 = vunpack.c.l.b16 %v7435
    %v7568 = vunpack.c.l.b16 %v7436
    %v7569 = vunpack.c.l.b16 %v7437
    %v7570 = vunpack.c.l.b16 %v7438
    %v7571 = vunpack.c.l.b16 %v7439
    %v7572 = vunpack.c.l.b16 %v7440
    %v7573 = vunpack.c.l.b16 %v7441
    %v7574 = vunpack.c.l.b16 %v7442
    %v7575 = vunpack.c.l.b16 %v7443
    %v7576 = vunpack.c.l.b16 %v7444
    %v7577 = vunpack.c.l.b16 %v7445
    %v7578 = vunpack.c.l.b16 %v7446
    %v7579 = vunpack.c.l.b16 %v7447
    %v7580 = vunpack.c.l.b16 %v7448
    %v7581 = vunpack.c.l.b16 %v7449
    %v7582 = vunpack.c.l.b16 %v7450
    %v7583 = vunpack.c.l.b16 %v7451
    %v7584 = vunpack.c.l.b16 %v7452
    %v7585 = vunpack.c.l.b16 %v7453
    %v7586 = vunpack.c.l.b16 %v7454
    %v7587 = vunpack.c.l.b16 %v7455
    %v7588 = vunpack.c.l.b16 %v7456
    %v7589 = vunpack.c.l.b16 %v7457
    %v7590 = vunpack.c.l.b16 %v7458
    %v7591 = vunpack.c.l.b16 %v7459
    %v7592 = vunpack.c.l.b16 %v7460
    %v7593 = vunpack.c.l.b16 %v7461
    %v7594 = vunpack.c.l.b16 %v7462
    %v7595 = vunpack.c.l.b16 %v7463
    %v7596 = vunpack.c.l.b16 %v7464
    %v7597 = vunpack.c.l.b16 %v7465
    %v7598 = vunpack.c.l.b16 %v7466
    %v7599 = vunpack.c.l.b16 %v7467
    %v7600 = vunpack.c.l.b16 %v7468
    %v7601 = vunpack.c.l.b16 %v7469
    %v7602 = vunpack.c.l.b16 %v7470
    %v7603 = vunpack.c.l.b16 %v7471
    %v7604 = vunpack.c.l.b16 %v7472
    %v7605 = vunpack.c.l.b16 %v7473
    %v7606 = vunpack.c.l.b16 %v7474
    %v7607 = vunpack.c.l.b16 %v7475
    %v7608 = vunpack.c.l.b16 %v7476
    %v7609 = vunpack.c.l.b16 %v7477
    %v7610 = vunpack.c.l.b16 %v7478
    %v7611 = vunpack.c.l.b16 %v7479
    %v7612 = vunpack.c.l.b16 %v7480
    %v7613 = vunpack.c.l.b16 %v7481
    %v7614 = vunpack.c.l.b16 %v7482
    %v7615 = vunpack.c.l.b16 %v7483
    %v7616 = vunpack.c.l.b16 %v7484
    %v7617 = vunpack.c.l.b16 %v7485
    %v7618 = vunpack.c.l.b16 %v7486
    %v7619 = vunpack.c.l.b16 %v7487
    %v7620 = vunpack.c.l.b16 %v7488
    %v7621 = vunpack.c.l.b16 %v7489
    %v7622 = vunpack.c.l.b16 %v7490
    %v7623 = vunpack.c.l.b16 %v7491
    %v7624 = vunpack.c.l.b16 %v7492
    %v7625 = vpack.c.b16 %v7562, %v7561
    %v7626 = vpack.c.b16 %v7564, %v7563
    %v7627 = vpack.c.b16 %v7566, %v7565
    %v7628 = vpack.c.b16 %v7568, %v7567
    %v7629 = vpack.c.b16 %v7570, %v7569
    %v7630 = vpack.c.b16 %v7572, %v7571
    %v7631 = vpack.c.b16 %v7574, %v7573
    %v7632 = vpack.c.b16 %v7576, %v7575
    %v7633 = vpack.c.b16 %v7578, %v7577
    %v7634 = vpack.c.b16 %v7580, %v7579
    %v7635 = vpack.c.b16 %v7582, %v7581
    %v7636 = vpack.c.b16 %v7584, %v7583
    %v7637 = vpack.c.b16 %v7586, %v7585
    %v7638 = vpack.c.b16 %v7588, %v7587
    %v7639 = vpack.c.b16 %v7590, %v7589
    %v7640 = vpack.c.b16 %v7592, %v7591
    %v7641 = vpack.c.b16 %v7594, %v7593
    %v7642 = vpack.c.b16 %v7596, %v7595
    %v7643 = vpack.c.b16 %v7598, %v7597
    %v7644 = vpack.c.b16 %v7600, %v7599
    %v7645 = vpack.c.b16 %v7602, %v7601
    %v7646 = vpack.c.b16 %v7604, %v7603
    %v7647 = vpack.c.b16 %v7606, %v7605
    %v7648 = vpack.c.b16 %v7608, %v7607
    %v7649 = vpack.c.b16 %v7610, %v7609
    %v7650 = vpack.c.b16 %v7612, %v7611
    %v7651 = vpack.c.b16 %v7614, %v7613
    %v7652 = vpack.c.b16 %v7616, %v7615
    %v7653 = vpack.c.b16 %v7618, %v7617
    %v7654 = vpack.c.b16 %v7620, %v7619
    %v7655 = vpack.c.b16 %v7622, %v7621
    %v7656 = vpack.c.b16 %v7624, %v7623
    %7689 = vmatpush.bf16.msra.mxu0 %v7632
    %7690 = vmatpush.bf16.msra.mxu0 %v7631
    %7691 = vmatpush.bf16.msra.mxu0 %v7630
    %7692 = vmatpush.bf16.msra.mxu0 %v7629
    %7693 = vmatpush.bf16.msra.mxu0 %v7628
    %7694 = vmatpush.bf16.msra.mxu0 %v7627
    %7695 = vmatpush.bf16.msra.mxu0 %v7626
    %7696 = vmatpush.bf16.msra.mxu0 %v7625
    %7697 = vmatmul.bf16.gmra.mxu0 %v7425
    %v7698 = vpop.f32.mrf.mxu0
    %v7699 = vadd.f32 %v7495, %v7698
    %v7700 = vpop.f32.mrf.mxu0
    %v7701 = vadd.f32 %v7495, %v7700
    %7702 = vdwg.mxu0
    %7703 = vmatpush.bf16.msra.mxu0 %v7640
    %7704 = vmatpush.bf16.msra.mxu0 %v7639
    %7705 = vmatpush.bf16.msra.mxu0 %v7638
    %7706 = vmatpush.bf16.msra.mxu0 %v7637
    %7707 = vmatpush.bf16.msra.mxu0 %v7636
    %7708 = vmatpush.bf16.msra.mxu0 %v7635
    %7709 = vmatpush.bf16.msra.mxu0 %v7634
    %7710 = vmatpush.bf16.msra.mxu0 %v7633
    %7711 = vmatmul.bf16.gmra.mxu0 %v7426
    %v7712 = vpop.f32.mrf.mxu0
    %v7713 = vadd.f32 %v7699, %v7712
    %v7714 = vpop.f32.mrf.mxu0
    %v7715 = vadd.f32 %v7701, %v7714
    %7716 = vdwg.mxu0
    %7717 = vmatpush.bf16.msra.mxu0 %v7648
    %7718 = vmatpush.bf16.msra.mxu0 %v7647
    %7719 = vmatpush.bf16.msra.mxu0 %v7646
    %7720 = vmatpush.bf16.msra.mxu0 %v7645
    %7721 = vmatpush.bf16.msra.mxu0 %v7644
    %7722 = vmatpush.bf16.msra.mxu0 %v7643
    %7723 = vmatpush.bf16.msra.mxu0 %v7642
    %7724 = vmatpush.bf16.msra.mxu0 %v7641
    %7725 = vmatmul.bf16.gmra.mxu0 %v7427
    %v7726 = vpop.f32.mrf.mxu0
    %v7727 = vadd.f32 %v7713, %v7726
    %v7728 = vpop.f32.mrf.mxu0
    %v7729 = vadd.f32 %v7715, %v7728
    %7730 = vdwg.mxu0
    %7731 = vmatpush.bf16.msra.mxu0 %v7656
    %7732 = vmatpush.bf16.msra.mxu0 %v7655
    %7733 = vmatpush.bf16.msra.mxu0 %v7654
    %7734 = vmatpush.bf16.msra.mxu0 %v7653
    %7735 = vmatpush.bf16.msra.mxu0 %v7652
    %7736 = vmatpush.bf16.msra.mxu0 %v7651
    %7737 = vmatpush.bf16.msra.mxu0 %v7650
    %7738 = vmatpush.bf16.msra.mxu0 %v7649
    %7739 = vmatmul.bf16.gmra.mxu0 %v7428
    %v7740 = vpop.f32.mrf.mxu0
    %v7741 = vadd.f32 %v7727, %v7740
    %v7742 = vpop.f32.mrf.mxu0
    %v7743 = vadd.f32 %v7729, %v7742
    %7744 = vdwg.mxu0
    %7745 = vst [vmem:[#allocation14] sm:$0xff] %v7741
    %7746 = vst [vmem:[#allocation14 + $0x8] sm:$0xff] %v7743
    // Predicated region
    $region58: #{tpu_custom_call.1} parent=1 // pred_check
      _
    $region59: #{tpu_custom_call.1} parent=1 // pred_check_branch
      %7748 = sbr.rel (0) target = $region61
    $region60: #{tpu_custom_call.1} parent=1 // pred_region
      %7750 = vsyncadd [#allocation4], 0
      %s7751 = sshll.u32 [#allocation14], 4
      %s7752 = int_to_ptr.vmem [resolvable:$true] %s7751
      %s7753 = sshll.u32 %s7, 4
      %s7754 = int_to_ptr.hbm [resolvable:$true] %s7753
      %7759 = dma.vmem_to_hbm [thread:$0]  %s7752, 256, %s7754, [#allocation4], 128, 128, 8
    $region61: #{tpu_custom_call.1} parent=1 // pred_fallthru
      _
    // Predicated region
    $region62: #{tpu_custom_call.1} parent=1 // pred_check
      _
    $region63: #{tpu_custom_call.1} parent=1 // pred_check_branch
      %7761 = sbr.rel (0) target = $region65
    $region64: #{tpu_custom_call.1} parent=1 // pred_region
      %7763 = dma.done [#allocation4], 256
    $region65: #{tpu_custom_call.1} parent=1 // pred_fallthru
      _
    %7764 = vsyncpa [#allocation3], 1
    %7765 = vsyncpa [#allocation6], 1
    %7766 = vsyncpa [#allocation9], 1
    %7767 = vsyncpa [#allocation12], 1
    %7768 = vsyncpa [#allocation4], 1

</llo_original>
